<compile_context>
chip_gen: v6e
topology: v6e:2x2x1
jax: 0.10.0
libtpu: 0.0.40
codegen_flags: <defaults>
</compile_context>

<pallas_src>
import functools
import math

import jax
import jax.numpy as jnp
from jax import lax
from jax.experimental import pallas as pl
from jax.experimental.pallas import tpu as pltpu

_MIB = 1024 * 1024


def _cparams(est_bytes):
    limit = int(min(max(4 * est_bytes, 32 * _MIB), 64 * _MIB))
    return pltpu.CompilerParams(
        dimension_semantics=("parallel",),
        vmem_limit_bytes=limit,
    )


# ----------------------------------------------------------------------------
# In-kernel helpers (operate on values held in VMEM)
# ----------------------------------------------------------------------------
def _leaky(x):
    return jnp.where(x >= 0, x, 0.2 * x)


def _pad_hw1(x):
    """Zero-pad 1 pixel on H and W of an (H, W, C) value, entirely in VMEM."""
    H, W, C = x.shape
    zr = jnp.zeros((1, W, C), x.dtype)
    x = jnp.concatenate([zr, x, zr], axis=0)          # (H+2, W, C)
    zc = jnp.zeros((H + 2, 1, C), x.dtype)
    x = jnp.concatenate([zc, x, zc], axis=1)          # (H+2, W+2, C)
    return x


def _conv3x3_mm(xf, w_val, b_val, H, W):
    """3x3 'same' conv as one im2col matmul.

    xf:    (H, W, Cin) float32 values
    w_val: (9*Cin, Cout) bf16   (flattened (ky, kx, cin) -> 9*Cin)
    b_val: (1, Cout) float32 or None
    returns (H*W, Cout) float32
    """
    Cin = xf.shape[-1]
    xp = _pad_hw1(xf)                                 # (H+2, W+2, Cin)
    slabs = []
    for dy in range(3):
        r = xp[dy:dy + H]                             # (H, W+2, Cin)  major-dim slice
        slabs.append(jnp.concatenate(
            [r[:, 0:W], r[:, 1:W + 1], r[:, 2:W + 2]], axis=-1))     # (H, W, 3*Cin)
    patches = jnp.concatenate(slabs, axis=-1)         # (H, W, 9*Cin), (dy, dx, cin) order
    patches = patches.reshape(H * W, 9 * Cin).astype(jnp.bfloat16)
    acc = jnp.dot(patches, w_val, preferred_element_type=jnp.float32)  # (H*W, Cout)
    if b_val is not None:
        acc = acc + b_val
    return acc


# ----------------------------------------------------------------------------
# Pallas kernels (one batch element per grid step)
# ----------------------------------------------------------------------------
def _conv_img_kernel(x_ref, w_ref, b_ref, o_ref, *, H, W):
    xf = x_ref[0].astype(jnp.float32)                 # (H, W, Cin)
    acc = _conv3x3_mm(xf, w_ref[...], b_ref[...], H, W)
    o_ref[0] = acc.reshape(H, W, acc.shape[-1]).astype(o_ref.dtype)


def _resblock_kernel(*refs, H, W, has_ws):
    """Fused Ac_ResnetBlock: out = shortcut(x) + 0.1 * conv1(act(conv0(act(x))))."""
    if has_ws:
        x_ref, w0_ref, b0_ref, w1_ref, b1_ref, ws_ref, o_ref = refs
    else:
        x_ref, w0_ref, b0_ref, w1_ref, b1_ref, o_ref = refs
        ws_ref = None

    cin = x_ref.shape[-1]
    cout = o_ref.shape[-1]
    fh = b0_ref.shape[-1]

    xf = x_ref[0].astype(jnp.float32)                 # (H, W, Cin)

    # shortcut (stays in VMEM, never hits HBM)
    if ws_ref is not None:
        x2 = xf.reshape(H * W, cin).astype(jnp.bfloat16)
        x_s = jnp.dot(x2, ws_ref[...], preferred_element_type=jnp.float32)
    else:
        x_s = xf.reshape(H * W, cout)                 # cin == cout

    dx0 = _conv3x3_mm(_leaky(xf), w0_ref[...], b0_ref[...], H, W)     # (H*W, fh) f32
    h1 = _leaky(dx0).reshape(H, W, fh)
    dx1 = _conv3x3_mm(h1, w1_ref[...], b1_ref[...], H, W)             # (H*W, cout) f32

    out = x_s + 0.1 * dx1
    o_ref[0] = out.reshape(H, W, cout).astype(o_ref.dtype)


def _avgpool3s2_kernel(x_ref, o_ref, *, H, W, Ho, Wo):
    """AvgPool2d(3, stride=2, padding=1, count_include_pad=True), fused subsample."""
    x = x_ref[0].astype(jnp.float32)                  # (H, W, C)
    C = x.shape[-1]

    # vertical 3-tap sum at output rows 2i (leading-dim split, no strided access)
    xr = x.reshape(Ho, 2, W, C)
    rows_even = xr[:, 0]                              # rows 2i
    rows_odd = xr[:, 1]                               # rows 2i+1
    rows_up = jnp.concatenate(                        # rows 2i-1 (zero pad at top)
        [jnp.zeros((1, W, C), jnp.float32), rows_odd[:Ho - 1]], axis=0)
    v = rows_even + rows_odd + rows_up                # (Ho, W, C)

    # horizontal 3-tap sum + stride-2 subsample as a small batched matmul:
    # sel[i, j, w] = 1 iff w in {2j-1, 2j, 2j+1}
    j_idx = lax.broadcasted_iota(jnp.int32, (Ho, Wo, W), 1)
    w_idx = lax.broadcasted_iota(jnp.int32, (Ho, Wo, W), 2)
    d = w_idx - 2 * j_idx
    sel = ((d >= -1) & (d <= 1)).astype(jnp.float32)  # (Ho, Wo, W)

    out = jnp.einsum("ijw,iwc->ijc", sel, v,
                     preferred_element_type=jnp.float32)              # (Ho, Wo, C)
    o_ref[0] = (out * (1.0 / 9.0)).astype(o_ref.dtype)


def _conv1x1_kernel(x_ref, w_ref, b_ref, o_ref, *, H, W):
    cin = x_ref.shape[-1]
    xf = x_ref[0].astype(jnp.float32)
    x2 = xf.reshape(H * W, cin).astype(jnp.bfloat16)
    acc = jnp.dot(x2, w_ref[...], preferred_element_type=jnp.float32) + b_ref[...]
    o_ref[0] = acc.reshape(H, W, acc.shape[-1]).astype(o_ref.dtype)


# ----------------------------------------------------------------------------
# Pallas wrappers (NHWC, bf16 activations)
# ----------------------------------------------------------------------------
def conv_img(x, w, b):
    """x: (B,H,W,Cin) bf16, w: (3,3,Cin,Cout) f32, b: (Cout,) f32 -> bf16 (B,H,W,Cout)."""
    B, H, W, Cin = x.shape
    Cout = w.shape[-1]
    w9 = w.reshape(9 * Cin, Cout).astype(jnp.bfloat16)
    b2 = b.reshape(1, Cout).astype(jnp.float32)
    est = H * W * 4 * (12 * Cin + 3 * Cout)
    return pl.pallas_call(
        functools.partial(_conv_img_kernel, H=H, W=W),
        out_shape=jax.ShapeDtypeStruct((B, H, W, Cout), jnp.bfloat16),
        grid=(B,),
        in_specs=[
            pl.BlockSpec((1, H, W, Cin), lambda i: (i, 0, 0, 0)),
            pl.BlockSpec((9 * Cin, Cout), lambda i: (0, 0)),
            pl.BlockSpec((1, Cout), lambda i: (0, 0)),
        ],
        out_specs=pl.BlockSpec((1, H, W, Cout), lambda i: (i, 0, 0, 0)),
        compiler_params=_cparams(est),
    )(x, w9, b2)


def resnet_block(x, p):
    """Fused Ac_ResnetBlock on bf16 NHWC activations."""
    B, H, W, Cin = x.shape
    Fh = p["w0"].shape[-1]
    Cout = p["w1"].shape[-1]
    w0 = p["w0"].reshape(9 * Cin, Fh).astype(jnp.bfloat16)
    b0 = p["b0"].reshape(1, Fh).astype(jnp.float32)
    w1 = p["w1"].reshape(9 * Fh, Cout).astype(jnp.bfloat16)
    b1 = p["b1"].reshape(1, Cout).astype(jnp.float32)

    inputs = [x, w0, b0, w1, b1]
    in_specs = [
        pl.BlockSpec((1, H, W, Cin), lambda i: (i, 0, 0, 0)),
        pl.BlockSpec((9 * Cin, Fh), lambda i: (0, 0)),
        pl.BlockSpec((1, Fh), lambda i: (0, 0)),
        pl.BlockSpec((9 * Fh, Cout), lambda i: (0, 0)),
        pl.BlockSpec((1, Cout), lambda i: (0, 0)),
    ]
    has_ws = "ws" in p
    if has_ws:
        inputs.append(p["ws"].astype(jnp.bfloat16))
        in_specs.append(pl.BlockSpec((Cin, Cout), lambda i: (0, 0)))

    est = H * W * 4 * (12 * Cin + 12 * Fh + 4 * Cout)
    return pl.pallas_call(
        functools.partial(_resblock_kernel, H=H, W=W, has_ws=has_ws),
        out_shape=jax.ShapeDtypeStruct((B, H, W, Cout), jnp.bfloat16),
        grid=(B,),
        in_specs=in_specs,
        out_specs=pl.BlockSpec((1, H, W, Cout), lambda i: (i, 0, 0, 0)),
        compiler_params=_cparams(est),
    )(*inputs)


def avgpool3_s2(x):
    """nn.AvgPool2d(3, stride=2, padding=1), writes only the half-resolution output."""
    B, H, W, C = x.shape
    assert H % 2 == 0 and W % 2 == 0
    Ho, Wo = H // 2, W // 2
    est = H * W * C * 4 * 4
    return pl.pallas_call(
        functools.partial(_avgpool3s2_kernel, H=H, W=W, Ho=Ho, Wo=Wo),
        out_shape=jax.ShapeDtypeStruct((B, Ho, Wo, C), jnp.bfloat16),
        grid=(B,),
        in_specs=[pl.BlockSpec((1, H, W, C), lambda i: (i, 0, 0, 0))],
        out_specs=pl.BlockSpec((1, Ho, Wo, C), lambda i: (i, 0, 0, 0)),
        compiler_params=_cparams(est),
    )(x)


def conv1x1(x, w, b, out_dtype=jnp.float32):
    """Final 1x1 conv (per-pixel matmul). x: (B,H,W,Cin) bf16, w: (Cin,Cout) f32."""
    B, H, W, Cin = x.shape
    Cout = w.shape[-1]
    wq = w.astype(jnp.bfloat16)
    b2 = b.reshape(1, Cout).astype(jnp.float32)
    est = H * W * 4 * (2 * Cin + 2 * Cout)
    return pl.pallas_call(
        functools.partial(_conv1x1_kernel, H=H, W=W),
        out_shape=jax.ShapeDtypeStruct((B, H, W, Cout), out_dtype),
        grid=(B,),
        in_specs=[
            pl.BlockSpec((1, H, W, Cin), lambda i: (i, 0, 0, 0)),
            pl.BlockSpec((Cin, Cout), lambda i: (0, 0)),
            pl.BlockSpec((1, Cout), lambda i: (0, 0)),
        ],
        out_specs=pl.BlockSpec((1, H, W, Cout), lambda i: (i, 0, 0, 0)),
        compiler_params=_cparams(est),
    )(x, wq, b2)


# ----------------------------------------------------------------------------
# Model (parameters + forward), mirroring the PyTorch Discriminator
# ----------------------------------------------------------------------------
def init_params(key, *, input_dim, nlabels, size, s0, nf, nf_max):
    keys = iter(jax.random.split(key, 64))

    def convw(kh, kw, cin, cout):
        scale = 1.0 / math.sqrt(kh * kw * cin)
        return jax.random.normal(next(keys), (kh, kw, cin, cout), jnp.float32) * scale

    def bias(cout):
        return jax.random.normal(next(keys), (cout,), jnp.float32) * 0.1

    def block(fin, fout):
        fh = min(fin, fout)
        p = {"w0": convw(3, 3, fin, fh), "b0": bias(fh),
             "w1": convw(3, 3, fh, fout), "b1": bias(fout)}
        if fin != fout:  # learned shortcut, 1x1, no bias
            p["ws"] = convw(1, 1, fin, fout).reshape(fin, fout)
        return p

    nlayers = int(math.log2(size / s0))
    params = {"conv_img_w": convw(3, 3, input_dim, nf), "conv_img_b": bias(nf)}
    blocks = [block(nf, nf * 2), block(nf * 2, nf * 2)]
    nf = nf * 2
    nf1 = nf
    for i in range(nlayers):
        nf0 = min(nf * 2 ** i, nf_max)
        nf1 = min(nf * 2 ** (i + 1), nf_max)
        blocks += ["pool", block(nf0, nf1), block(nf1, nf1)]
    params["blocks"] = blocks
    params["final_w"] = convw(1, 1, nf1, nlabels).reshape(nf1, nlabels)
    params["final_b"] = bias(nlabels)
    return params


def discriminator_forward(params, x_nchw, y):
    x = jnp.transpose(x_nchw, (0, 2, 3, 1)).astype(jnp.bfloat16)   # NCHW -> NHWC, bf16
    out = conv_img(x, params["conv_img_w"], params["conv_img_b"])
    for blk in params["blocks"]:
        out = avgpool3_s2(out) if blk == "pool" else resnet_block(out, blk)
    out_feature = out                                              # bf16 NHWC
    pred = conv1x1(out_feature, params["final_w"], params["final_b"])   # f32
    pred_nchw = jnp.transpose(pred, (0, 3, 1, 2))                  # (B, nlabels, H', W')
    out_real_fake = pred_nchw[:, y.astype(jnp.int32), :, :]        # (B, B, H', W') torch semantics
    out_feature_nchw = jnp.transpose(out_feature, (0, 3, 1, 2)).astype(jnp.float32)
    return out_real_fake, out_feature_nchw


# ----------------------------------------------------------------------------
# Pure-JAX reference (NCHW) mirroring the kernel's bf16 quantization points
# ----------------------------------------------------------------------------
def _qb(x):
    return x.astype(jnp.bfloat16).astype(jnp.float32)


def _ref_leaky(x):
    return jnp.where(x >= 0, x, 0.2 * x)


def _ref_conv(x, w_hwio, b, pad):
    w_oihw = jnp.transpose(w_hwio, (3, 2, 0, 1))
    out = lax.conv_general_dilated(x, w_oihw, (1, 1), [(pad, pad), (pad, pad)],
                                   dimension_numbers=("NCHW", "OIHW", "NCHW"),
                                   precision=lax.Precision.HIGHEST)
    if b is not None:
        out = out + b.reshape(1, -1, 1, 1)
    return out


def _ref_avgpool(x):
    s = lax.reduce_window(x, 0.0, lax.add, (1, 1, 3, 3), (1, 1, 2, 2),
                          [(0, 0), (0, 0), (1, 1), (1, 1)])
    return s * (1.0 / 9.0)


def _ref_block(x, p):
    if "ws" in p:
        fin, fout = p["ws"].shape
        x_s = _ref_conv(x, _qb(p["ws"]).reshape(1, 1, fin, fout), None, 0)
    else:
        x_s = x
    dx = _ref_conv(_qb(_ref_leaky(x)), _qb(p["w0"]), p["b0"], 1)
    dx = _ref_conv(_qb(_ref_leaky(dx)), _qb(p["w1"]), p["b1"], 1)
    return _qb(x_s + 0.1 * dx)


def ref_forward(params, x, y):
    out = _qb(_ref_conv(_qb(x), _qb(params["conv_img_w"]), params["conv_img_b"], 1))
    for blk in params["blocks"]:
        out = _qb(_ref_avgpool(out)) if blk == "pool" else _ref_block(out, blk)
    feat = out
    fin, nl = params["final_w"].shape
    pred = _ref_conv(feat, _qb(params["final_w"]).reshape(1, 1, fin, nl),
                     params["final_b"], 0)
    return pred[:, y, :, :], feat


# ----------------------------------------------------------------------------
if __name__ == "__main__":
    key = jax.random.PRNGKey(0)
    kp, kx, ky = jax.random.split(key, 3)

    B, input_dim, size, nlabels = 2, 4, 16, 3
    params = init_params(kp, input_dim=input_dim, nlabels=nlabels, size=size,
                         s0=8, nf=8, nf_max=32)

    x = jax.random.normal(kx, (B, input_dim, size, size), jnp.float32)
    y = jax.random.randint(ky, (B,), 0, nlabels)

    fwd = jax.jit(lambda xx, yy: discriminator_forward(params, xx, yy))
    out_rf, out_feat = fwd(x, y)
    jax.block_until_ready((out_rf, out_feat))

    assert out_rf.shape == (B, B, 8, 8), out_rf.shape
    assert out_feat.shape == (B, 32, 8, 8), out_feat.shape

    ref_rf, ref_feat = ref_forward(params, x, y)

    def _check(a, b):
        err = float(jnp.max(jnp.abs(a.astype(jnp.float32) - b)))
        tol = 2e-2 + 3e-2 * float(jnp.max(jnp.abs(b)))
        assert err < tol, (err, tol)

    _check(out_rf, ref_rf)
    _check(out_feat, ref_feat)

    print("KERNEL_OK")
</pallas_src>

<mosaic_0001>
module attributes {stable_mosaic.version = 11 : i64} {
  func.func @_conv_img_kernel(%arg0: i32, %arg1: memref<1x16x16x4xbf16, #tpu.memory_space<vmem>>, %arg2: memref<36x8xbf16, #tpu.memory_space<vmem>>, %arg3: memref<1x8xf32, #tpu.memory_space<vmem>>, %arg4: memref<1x16x16x8xbf16, #tpu.memory_space<vmem>>) attributes {dimension_semantics = [#tpu.dimension_semantics<parallel>], iteration_bounds = array<i64: 2>, scalar_prefetch = 0 : i64, scratch_operands = 0 : i64, tpu.core_type = #tpu.core_type<tc>, window_params = [{transform_indices = @transform_0, window_bounds = array<i64: 1, 16, 16, 4>}, {pipeline_mode = #tpu.pipeline_mode<synchronous>, transform_indices = @transform_1, window_bounds = array<i64: 36, 8>}, {pipeline_mode = #tpu.pipeline_mode<synchronous>, transform_indices = @transform_2, window_bounds = array<i64: 1, 8>}, {transform_indices = @transform_3, window_bounds = array<i64: 1, 16, 16, 8>}]} {
    %c0 = arith.constant 0 : index
    %c0_0 = arith.constant 0 : index
    %c0_1 = arith.constant 0 : index
    %c0_2 = arith.constant 0 : index
    %0 = vector.load %arg1[%c0, %c0_0, %c0_1, %c0_2] : memref<1x16x16x4xbf16, #tpu.memory_space<vmem>>, vector<1x16x16x4xbf16>
    %1 = vector.shape_cast %0 : vector<1x16x16x4xbf16> to vector<16x16x4xbf16>
    %2 = arith.extf %1 : vector<16x16x4xbf16> to vector<16x16x4xf32>
    %c0_3 = arith.constant 0 : index
    %c0_4 = arith.constant 0 : index
    %3 = vector.load %arg2[%c0_3, %c0_4] : memref<36x8xbf16, #tpu.memory_space<vmem>>, vector<36x8xbf16>
    %c0_5 = arith.constant 0 : index
    %c0_6 = arith.constant 0 : index
    %4 = vector.load %arg3[%c0_5, %c0_6] : memref<1x8xf32, #tpu.memory_space<vmem>>, vector<1x8xf32>
    %cst = arith.constant 0.000000e+00 : f32
    %5 = vector.broadcast %cst : f32 to vector<1x16x4xf32>
    %6 = tpu.concatenate %5, %2, %5 in 0 : vector<1x16x4xf32>, vector<16x16x4xf32>, vector<1x16x4xf32> -> vector<18x16x4xf32>
    %cst_7 = arith.constant 0.000000e+00 : f32
    %7 = vector.broadcast %cst_7 : f32 to vector<18x1x4xf32>
    %8 = tpu.concatenate %7, %6, %7 in 1 : vector<18x1x4xf32>, vector<18x16x4xf32>, vector<18x1x4xf32> -> vector<18x18x4xf32>
    %9 = vector.extract_strided_slice %8 {offsets = [0, 0, 0], sizes = [16, 18, 4], strides = [1, 1, 1]} : vector<18x18x4xf32> to vector<16x18x4xf32>
    %10 = vector.extract_strided_slice %9 {offsets = [0, 0, 0], sizes = [16, 16, 4], strides = [1, 1, 1]} : vector<16x18x4xf32> to vector<16x16x4xf32>
    %11 = vector.extract_strided_slice %9 {offsets = [0, 1, 0], sizes = [16, 16, 4], strides = [1, 1, 1]} : vector<16x18x4xf32> to vector<16x16x4xf32>
    %12 = vector.extract_strided_slice %9 {offsets = [0, 2, 0], sizes = [16, 16, 4], strides = [1, 1, 1]} : vector<16x18x4xf32> to vector<16x16x4xf32>
    %13 = tpu.concatenate %10, %11, %12 in 2 : vector<16x16x4xf32>, vector<16x16x4xf32>, vector<16x16x4xf32> -> vector<16x16x12xf32>
    %14 = vector.extract_strided_slice %8 {offsets = [1, 0, 0], sizes = [16, 18, 4], strides = [1, 1, 1]} : vector<18x18x4xf32> to vector<16x18x4xf32>
    %15 = vector.extract_strided_slice %14 {offsets = [0, 0, 0], sizes = [16, 16, 4], strides = [1, 1, 1]} : vector<16x18x4xf32> to vector<16x16x4xf32>
    %16 = vector.extract_strided_slice %14 {offsets = [0, 1, 0], sizes = [16, 16, 4], strides = [1, 1, 1]} : vector<16x18x4xf32> to vector<16x16x4xf32>
    %17 = vector.extract_strided_slice %14 {offsets = [0, 2, 0], sizes = [16, 16, 4], strides = [1, 1, 1]} : vector<16x18x4xf32> to vector<16x16x4xf32>
    %18 = tpu.concatenate %15, %16, %17 in 2 : vector<16x16x4xf32>, vector<16x16x4xf32>, vector<16x16x4xf32> -> vector<16x16x12xf32>
    %19 = vector.extract_strided_slice %8 {offsets = [2, 0, 0], sizes = [16, 18, 4], strides = [1, 1, 1]} : vector<18x18x4xf32> to vector<16x18x4xf32>
    %20 = vector.extract_strided_slice %19 {offsets = [0, 0, 0], sizes = [16, 16, 4], strides = [1, 1, 1]} : vector<16x18x4xf32> to vector<16x16x4xf32>
    %21 = vector.extract_strided_slice %19 {offsets = [0, 1, 0], sizes = [16, 16, 4], strides = [1, 1, 1]} : vector<16x18x4xf32> to vector<16x16x4xf32>
    %22 = vector.extract_strided_slice %19 {offsets = [0, 2, 0], sizes = [16, 16, 4], strides = [1, 1, 1]} : vector<16x18x4xf32> to vector<16x16x4xf32>
    %23 = tpu.concatenate %20, %21, %22 in 2 : vector<16x16x4xf32>, vector<16x16x4xf32>, vector<16x16x4xf32> -> vector<16x16x12xf32>
    %24 = tpu.concatenate %13, %18, %23 in 2 : vector<16x16x12xf32>, vector<16x16x12xf32>, vector<16x16x12xf32> -> vector<16x16x36xf32>
    %25 = vector.shape_cast %24 : vector<16x16x36xf32> to vector<256x36xf32>
    %26 = arith.truncf %25 : vector<256x36xf32> to vector<256x36xbf16>
    %cst_8 = arith.constant dense<0.000000e+00> : vector<256x8xf32>
    %27 = tpu.matmul %26, %3, %cst_8 {dimension_numbers = #tpu.dot_dimension_numbers<[1], [0], [0], [1], [0, 0, 1, 1], [], []>} : vector<256x36xbf16>, vector<36x8xbf16>, vector<256x8xf32> -> vector<256x8xf32>
    %28 = vector.broadcast %4 : vector<1x8xf32> to vector<256x8xf32>
    %29 = arith.addf %27, %28 : vector<256x8xf32>
    %30 = vector.shape_cast %29 : vector<256x8xf32> to vector<16x16x8xf32>
    %31 = arith.truncf %30 : vector<16x16x8xf32> to vector<16x16x8xbf16>
    %c0_9 = arith.constant 0 : index
    %c0_10 = arith.constant 0 : index
    %c0_11 = arith.constant 0 : index
    %c0_12 = arith.constant 0 : index
    %32 = vector.load %arg4[%c0_9, %c0_10, %c0_11, %c0_12] : memref<1x16x16x8xbf16, #tpu.memory_space<vmem>>, vector<1x16x16x8xbf16>
    %33 = vector.shape_cast %32 : vector<1x16x16x8xbf16> to vector<16x16x8xbf16>
    %34 = vector.shape_cast %31 : vector<16x16x8xbf16> to vector<1x16x16x8xbf16>
    tpu.vector_store %arg4[%c0_9, %c0_10, %c0_11, %c0_12], %34 {strides = array<i32>} : memref<1x16x16x8xbf16, #tpu.memory_space<vmem>>, vector<1x16x16x8xbf16>,
    return
  }
  func.func @transform_0(%arg0: i32) -> (i32, i32, i32, i32) {
    %c0_i32 = arith.constant 0 : i32
    %c0_i32_0 = arith.constant 0 : i32
    %c0_i32_1 = arith.constant 0 : i32
    %c0_i32_2 = arith.constant 0 : i32
    return %arg0, %c0_i32, %c0_i32_0, %c0_i32_1 : i32, i32, i32, i32
  }
  func.func @transform_1(%arg0: i32) -> (i32, i32) {
    %c0_i32 = arith.constant 0 : i32
    %c0_i32_0 = arith.constant 0 : i32
    %c0_i32_1 = arith.constant 0 : i32
    return %c0_i32, %c0_i32_0 : i32, i32
  }
  func.func @transform_2(%arg0: i32) -> (i32, i32) {
    %c0_i32 = arith.constant 0 : i32
    %c0_i32_0 = arith.constant 0 : i32
    %c0_i32_1 = arith.constant 0 : i32
    return %c0_i32, %c0_i32_0 : i32, i32
  }
  func.func @transform_3(%arg0: i32) -> (i32, i32, i32, i32) {
    %c0_i32 = arith.constant 0 : i32
    %c0_i32_0 = arith.constant 0 : i32
    %c0_i32_1 = arith.constant 0 : i32
    %c0_i32_2 = arith.constant 0 : i32
    return %arg0, %c0_i32, %c0_i32_0, %c0_i32_1 : i32, i32, i32, i32
  }
}

module attributes {stable_mosaic.version = 11 : i64} {
  func.func @_resblock_kernel(%arg0: i32, %arg1: memref<1x16x16x8xbf16, #tpu.memory_space<vmem>>, %arg2: memref<72x8xbf16, #tpu.memory_space<vmem>>, %arg3: memref<1x8xf32, #tpu.memory_space<vmem>>, %arg4: memref<72x16xbf16, #tpu.memory_space<vmem>>, %arg5: memref<1x16xf32, #tpu.memory_space<vmem>>, %arg6: memref<8x16xbf16, #tpu.memory_space<vmem>>, %arg7: memref<1x16x16x16xbf16, #tpu.memory_space<vmem>>) attributes {dimension_semantics = [#tpu.dimension_semantics<parallel>], iteration_bounds = array<i64: 2>, scalar_prefetch = 0 : i64, scratch_operands = 0 : i64, tpu.core_type = #tpu.core_type<tc>, window_params = [{transform_indices = @transform_0, window_bounds = array<i64: 1, 16, 16, 8>}, {pipeline_mode = #tpu.pipeline_mode<synchronous>, transform_indices = @transform_1, window_bounds = array<i64: 72, 8>}, {pipeline_mode = #tpu.pipeline_mode<synchronous>, transform_indices = @transform_2, window_bounds = array<i64: 1, 8>}, {pipeline_mode = #tpu.pipeline_mode<synchronous>, transform_indices = @transform_3, window_bounds = array<i64: 72, 16>}, {pipeline_mode = #tpu.pipeline_mode<synchronous>, transform_indices = @transform_4, window_bounds = array<i64: 1, 16>}, {pipeline_mode = #tpu.pipeline_mode<synchronous>, transform_indices = @transform_5, window_bounds = array<i64: 8, 16>}, {transform_indices = @transform_6, window_bounds = array<i64: 1, 16, 16, 16>}]} {
    %c0 = arith.constant 0 : index
    %c0_0 = arith.constant 0 : index
    %c0_1 = arith.constant 0 : index
    %c0_2 = arith.constant 0 : index
    %0 = vector.load %arg1[%c0, %c0_0, %c0_1, %c0_2] : memref<1x16x16x8xbf16, #tpu.memory_space<vmem>>, vector<1x16x16x8xbf16>
    %1 = vector.shape_cast %0 : vector<1x16x16x8xbf16> to vector<16x16x8xbf16>
    %2 = arith.extf %1 : vector<16x16x8xbf16> to vector<16x16x8xf32>
    %3 = vector.shape_cast %2 : vector<16x16x8xf32> to vector<256x8xf32>
    %4 = arith.truncf %3 : vector<256x8xf32> to vector<256x8xbf16>
    %c0_3 = arith.constant 0 : index
    %c0_4 = arith.constant 0 : index
    %5 = vector.load %arg6[%c0_3, %c0_4] : memref<8x16xbf16, #tpu.memory_space<vmem>>, vector<8x16xbf16>
    %cst = arith.constant dense<0.000000e+00> : vector<256x16xf32>
    %6 = tpu.matmul %4, %5, %cst {dimension_numbers = #tpu.dot_dimension_numbers<[1], [0], [0], [1], [0, 0, 1, 1], [], []>} : vector<256x8xbf16>, vector<8x16xbf16>, vector<256x16xf32> -> vector<256x16xf32>
    %cst_5 = arith.constant 0.000000e+00 : f32
    %7 = vector.broadcast %cst_5 : f32 to vector<16x16x8xf32>
    %8 = arith.cmpf oge, %2, %7 : vector<16x16x8xf32>
    %cst_6 = arith.constant 2.000000e-01 : f32
    %9 = vector.broadcast %cst_6 : f32 to vector<16x16x8xf32>
    %10 = arith.mulf %9, %2 : vector<16x16x8xf32>
    %11 = arith.select %8, %2, %10 : vector<16x16x8xi1>, vector<16x16x8xf32>
    %c0_7 = arith.constant 0 : index
    %c0_8 = arith.constant 0 : index
    %12 = vector.load %arg2[%c0_7, %c0_8] : memref<72x8xbf16, #tpu.memory_space<vmem>>, vector<72x8xbf16>
    %c0_9 = arith.constant 0 : index
    %c0_10 = arith.constant 0 : index
    %13 = vector.load %arg3[%c0_9, %c0_10] : memref<1x8xf32, #tpu.memory_space<vmem>>, vector<1x8xf32>
    %cst_11 = arith.constant 0.000000e+00 : f32
    %14 = vector.broadcast %cst_11 : f32 to vector<1x16x8xf32>
    %15 = tpu.concatenate %14, %11, %14 in 0 : vector<1x16x8xf32>, vector<16x16x8xf32>, vector<1x16x8xf32> -> vector<18x16x8xf32>
    %cst_12 = arith.constant 0.000000e+00 : f32
    %16 = vector.broadcast %cst_12 : f32 to vector<18x1x8xf32>
    %17 = tpu.concatenate %16, %15, %16 in 1 : vector<18x1x8xf32>, vector<18x16x8xf32>, vector<18x1x8xf32> -> vector<18x18x8xf32>
    %18 = vector.extract_strided_slice %17 {offsets = [0, 0, 0], sizes = [16, 18, 8], strides = [1, 1, 1]} : vector<18x18x8xf32> to vector<16x18x8xf32>
    %19 = vector.extract_strided_slice %18 {offsets = [0, 0, 0], sizes = [16, 16, 8], strides = [1, 1, 1]} : vector<16x18x8xf32> to vector<16x16x8xf32>
    %20 = vector.extract_strided_slice %18 {offsets = [0, 1, 0], sizes = [16, 16, 8], strides = [1, 1, 1]} : vector<16x18x8xf32> to vector<16x16x8xf32>
    %21 = vector.extract_strided_slice %18 {offsets = [0, 2, 0], sizes = [16, 16, 8], strides = [1, 1, 1]} : vector<16x18x8xf32> to vector<16x16x8xf32>
    %22 = tpu.concatenate %19, %20, %21 in 2 : vector<16x16x8xf32>, vector<16x16x8xf32>, vector<16x16x8xf32> -> vector<16x16x24xf32>
    %23 = vector.extract_strided_slice %17 {offsets = [1, 0, 0], sizes = [16, 18, 8], strides = [1, 1, 1]} : vector<18x18x8xf32> to vector<16x18x8xf32>
    %24 = vector.extract_strided_slice %23 {offsets = [0, 0, 0], sizes = [16, 16, 8], strides = [1, 1, 1]} : vector<16x18x8xf32> to vector<16x16x8xf32>
    %25 = vector.extract_strided_slice %23 {offsets = [0, 1, 0], sizes = [16, 16, 8], strides = [1, 1, 1]} : vector<16x18x8xf32> to vector<16x16x8xf32>
    %26 = vector.extract_strided_slice %23 {offsets = [0, 2, 0], sizes = [16, 16, 8], strides = [1, 1, 1]} : vector<16x18x8xf32> to vector<16x16x8xf32>
    %27 = tpu.concatenate %24, %25, %26 in 2 : vector<16x16x8xf32>, vector<16x16x8xf32>, vector<16x16x8xf32> -> vector<16x16x24xf32>
    %28 = vector.extract_strided_slice %17 {offsets = [2, 0, 0], sizes = [16, 18, 8], strides = [1, 1, 1]} : vector<18x18x8xf32> to vector<16x18x8xf32>
    %29 = vector.extract_strided_slice %28 {offsets = [0, 0, 0], sizes = [16, 16, 8], strides = [1, 1, 1]} : vector<16x18x8xf32> to vector<16x16x8xf32>
    %30 = vector.extract_strided_slice %28 {offsets = [0, 1, 0], sizes = [16, 16, 8], strides = [1, 1, 1]} : vector<16x18x8xf32> to vector<16x16x8xf32>
    %31 = vector.extract_strided_slice %28 {offsets = [0, 2, 0], sizes = [16, 16, 8], strides = [1, 1, 1]} : vector<16x18x8xf32> to vector<16x16x8xf32>
    %32 = tpu.concatenate %29, %30, %31 in 2 : vector<16x16x8xf32>, vector<16x16x8xf32>, vector<16x16x8xf32> -> vector<16x16x24xf32>
    %33 = tpu.concatenate %22, %27, %32 in 2 : vector<16x16x24xf32>, vector<16x16x24xf32>, vector<16x16x24xf32> -> vector<16x16x72xf32>
    %34 = vector.shape_cast %33 : vector<16x16x72xf32> to vector<256x72xf32>
    %35 = arith.truncf %34 : vector<256x72xf32> to vector<256x72xbf16>
    %cst_13 = arith.constant dense<0.000000e+00> : vector<256x8xf32>
    %36 = tpu.matmul %35, %12, %cst_13 {dimension_numbers = #tpu.dot_dimension_numbers<[1], [0], [0], [1], [0, 0, 1, 1], [], []>} : vector<256x72xbf16>, vector<72x8xbf16>, vector<256x8xf32> -> vector<256x8xf32>
    %37 = vector.broadcast %13 : vector<1x8xf32> to vector<256x8xf32>
    %38 = arith.addf %36, %37 : vector<256x8xf32>
    %cst_14 = arith.constant 0.000000e+00 : f32
    %39 = vector.broadcast %cst_14 : f32 to vector<256x8xf32>
    %40 = arith.cmpf oge, %38, %39 : vector<256x8xf32>
    %cst_15 = arith.constant 2.000000e-01 : f32
    %41 = vector.broadcast %cst_15 : f32 to vector<256x8xf32>
    %42 = arith.mulf %41, %38 : vector<256x8xf32>
    %43 = arith.select %40, %38, %42 : vector<256x8xi1>, vector<256x8xf32>
    %44 = vector.shape_cast %43 : vector<256x8xf32> to vector<16x16x8xf32>
    %c0_16 = arith.constant 0 : index
    %c0_17 = arith.constant 0 : index
    %45 = vector.load %arg4[%c0_16, %c0_17] : memref<72x16xbf16, #tpu.memory_space<vmem>>, vector<72x16xbf16>
    %c0_18 = arith.constant 0 : index
    %c0_19 = arith.constant 0 : index
    %46 = vector.load %arg5[%c0_18, %c0_19] : memref<1x16xf32, #tpu.memory_space<vmem>>, vector<1x16xf32>
    %cst_20 = arith.constant 0.000000e+00 : f32
    %47 = vector.broadcast %cst_20 : f32 to vector<1x16x8xf32>
    %48 = tpu.concatenate %47, %44, %47 in 0 : vector<1x16x8xf32>, vector<16x16x8xf32>, vector<1x16x8xf32> -> vector<18x16x8xf32>
    %cst_21 = arith.constant 0.000000e+00 : f32
    %49 = vector.broadcast %cst_21 : f32 to vector<18x1x8xf32>
    %50 = tpu.concatenate %49, %48, %49 in 1 : vector<18x1x8xf32>, vector<18x16x8xf32>, vector<18x1x8xf32> -> vector<18x18x8xf32>
    %51 = vector.extract_strided_slice %50 {offsets = [0, 0, 0], sizes = [16, 18, 8], strides = [1, 1, 1]} : vector<18x18x8xf32> to vector<16x18x8xf32>
    %52 = vector.extract_strided_slice %51 {offsets = [0, 0, 0], sizes = [16, 16, 8], strides = [1, 1, 1]} : vector<16x18x8xf32> to vector<16x16x8xf32>
    %53 = vector.extract_strided_slice %51 {offsets = [0, 1, 0], sizes = [16, 16, 8], strides = [1, 1, 1]} : vector<16x18x8xf32> to vector<16x16x8xf32>
    %54 = vector.extract_strided_slice %51 {offsets = [0, 2, 0], sizes = [16, 16, 8], strides = [1, 1, 1]} : vector<16x18x8xf32> to vector<16x16x8xf32>
    %55 = tpu.concatenate %52, %53, %54 in 2 : vector<16x16x8xf32>, vector<16x16x8xf32>, vector<16x16x8xf32> -> vector<16x16x24xf32>
    %56 = vector.extract_strided_slice %50 {offsets = [1, 0, 0], sizes = [16, 18, 8], strides = [1, 1, 1]} : vector<18x18x8xf32> to vector<16x18x8xf32>
    %57 = vector.extract_strided_slice %56 {offsets = [0, 0, 0], sizes = [16, 16, 8], strides = [1, 1, 1]} : vector<16x18x8xf32> to vector<16x16x8xf32>
    %58 = vector.extract_strided_slice %56 {offsets = [0, 1, 0], sizes = [16, 16, 8], strides = [1, 1, 1]} : vector<16x18x8xf32> to vector<16x16x8xf32>
    %59 = vector.extract_strided_slice %56 {offsets = [0, 2, 0], sizes = [16, 16, 8], strides = [1, 1, 1]} : vector<16x18x8xf32> to vector<16x16x8xf32>
    %60 = tpu.concatenate %57, %58, %59 in 2 : vector<16x16x8xf32>, vector<16x16x8xf32>, vector<16x16x8xf32> -> vector<16x16x24xf32>
    %61 = vector.extract_strided_slice %50 {offsets = [2, 0, 0], sizes = [16, 18, 8], strides = [1, 1, 1]} : vector<18x18x8xf32> to vector<16x18x8xf32>
    %62 = vector.extract_strided_slice %61 {offsets = [0, 0, 0], sizes = [16, 16, 8], strides = [1, 1, 1]} : vector<16x18x8xf32> to vector<16x16x8xf32>
    %63 = vector.extract_strided_slice %61 {offsets = [0, 1, 0], sizes = [16, 16, 8], strides = [1, 1, 1]} : vector<16x18x8xf32> to vector<16x16x8xf32>
    %64 = vector.extract_strided_slice %61 {offsets = [0, 2, 0], sizes = [16, 16, 8], strides = [1, 1, 1]} : vector<16x18x8xf32> to vector<16x16x8xf32>
    %65 = tpu.concatenate %62, %63, %64 in 2 : vector<16x16x8xf32>, vector<16x16x8xf32>, vector<16x16x8xf32> -> vector<16x16x24xf32>
    %66 = tpu.concatenate %55, %60, %65 in 2 : vector<16x16x24xf32>, vector<16x16x24xf32>, vector<16x16x24xf32> -> vector<16x16x72xf32>
    %67 = vector.shape_cast %66 : vector<16x16x72xf32> to vector<256x72xf32>
    %68 = arith.truncf %67 : vector<256x72xf32> to vector<256x72xbf16>
    %cst_22 = arith.constant dense<0.000000e+00> : vector<256x16xf32>
    %69 = tpu.matmul %68, %45, %cst_22 {dimension_numbers = #tpu.dot_dimension_numbers<[1], [0], [0], [1], [0, 0, 1, 1], [], []>} : vector<256x72xbf16>, vector<72x16xbf16>, vector<256x16xf32> -> vector<256x16xf32>
    %70 = vector.broadcast %46 : vector<1x16xf32> to vector<256x16xf32>
    %71 = arith.addf %69, %70 : vector<256x16xf32>
    %cst_23 = arith.constant 1.000000e-01 : f32
    %72 = vector.broadcast %cst_23 : f32 to vector<256x16xf32>
    %73 = arith.mulf %72, %71 : vector<256x16xf32>
    %74 = arith.addf %6, %73 : vector<256x16xf32>
    %75 = vector.shape_cast %74 : vector<256x16xf32> to vector<16x16x16xf32>
    %76 = arith.truncf %75 : vector<16x16x16xf32> to vector<16x16x16xbf16>
    %c0_24 = arith.constant 0 : index
    %c0_25 = arith.constant 0 : index
    %c0_26 = arith.constant 0 : index
    %c0_27 = arith.constant 0 : index
    %77 = vector.load %arg7[%c0_24, %c0_25, %c0_26, %c0_27] : memref<1x16x16x16xbf16, #tpu.memory_space<vmem>>, vector<1x16x16x16xbf16>
    %78 = vector.shape_cast %77 : vector<1x16x16x16xbf16> to vector<16x16x16xbf16>
    %79 = vector.shape_cast %76 : vector<16x16x16xbf16> to vector<1x16x16x16xbf16>
    tpu.vector_store %arg7[%c0_24, %c0_25, %c0_26, %c0_27], %79 {strides = array<i32>} : memref<1x16x16x16xbf16, #tpu.memory_space<vmem>>, vector<1x16x16x16xbf16>,
    return
  }
  func.func @transform_0(%arg0: i32) -> (i32, i32, i32, i32) {
    %c0_i32 = arith.constant 0 : i32
    %c0_i32_0 = arith.constant 0 : i32
    %c0_i32_1 = arith.constant 0 : i32
    %c0_i32_2 = arith.constant 0 : i32
    return %arg0, %c0_i32, %c0_i32_0, %c0_i32_1 : i32, i32, i32, i32
  }
  func.func @transform_1(%arg0: i32) -> (i32, i32) {
    %c0_i32 = arith.constant 0 : i32
    %c0_i32_0 = arith.constant 0 : i32
    %c0_i32_1 = arith.constant 0 : i32
    return %c0_i32, %c0_i32_0 : i32, i32
  }
  func.func @transform_2(%arg0: i32) -> (i32, i32) {
    %c0_i32 = arith.constant 0 : i32
    %c0_i32_0 = arith.constant 0 : i32
    %c0_i32_1 = arith.constant 0 : i32
    return %c0_i32, %c0_i32_0 : i32, i32
  }
  func.func @transform_3(%arg0: i32) -> (i32, i32) {
    %c0_i32 = arith.constant 0 : i32
    %c0_i32_0 = arith.constant 0 : i32
    %c0_i32_1 = arith.constant 0 : i32
    return %c0_i32, %c0_i32_0 : i32, i32
  }
  func.func @transform_4(%arg0: i32) -> (i32, i32) {
    %c0_i32 = arith.constant 0 : i32
    %c0_i32_0 = arith.constant 0 : i32
    %c0_i32_1 = arith.constant 0 : i32
    return %c0_i32, %c0_i32_0 : i32, i32
  }
  func.func @transform_5(%arg0: i32) -> (i32, i32) {
    %c0_i32 = arith.constant 0 : i32
    %c0_i32_0 = arith.constant 0 : i32
    %c0_i32_1 = arith.constant 0 : i32
    return %c0_i32, %c0_i32_0 : i32, i32
  }
  func.func @transform_6(%arg0: i32) -> (i32, i32, i32, i32) {
    %c0_i32 = arith.constant 0 : i32
    %c0_i32_0 = arith.constant 0 : i32
    %c0_i32_1 = arith.constant 0 : i32
    %c0_i32_2 = arith.constant 0 : i32
    return %arg0, %c0_i32, %c0_i32_0, %c0_i32_1 : i32, i32, i32, i32
  }
}

module attributes {stable_mosaic.version = 11 : i64} {
  func.func @_resblock_kernel(%arg0: i32, %arg1: memref<1x16x16x16xbf16, #tpu.memory_space<vmem>>, %arg2: memref<144x16xbf16, #tpu.memory_space<vmem>>, %arg3: memref<1x16xf32, #tpu.memory_space<vmem>>, %arg4: memref<144x16xbf16, #tpu.memory_space<vmem>>, %arg5: memref<1x16xf32, #tpu.memory_space<vmem>>, %arg6: memref<1x16x16x16xbf16, #tpu.memory_space<vmem>>) attributes {dimension_semantics = [#tpu.dimension_semantics<parallel>], iteration_bounds = array<i64: 2>, scalar_prefetch = 0 : i64, scratch_operands = 0 : i64, tpu.core_type = #tpu.core_type<tc>, window_params = [{transform_indices = @transform_0, window_bounds = array<i64: 1, 16, 16, 16>}, {pipeline_mode = #tpu.pipeline_mode<synchronous>, transform_indices = @transform_1, window_bounds = array<i64: 144, 16>}, {pipeline_mode = #tpu.pipeline_mode<synchronous>, transform_indices = @transform_2, window_bounds = array<i64: 1, 16>}, {pipeline_mode = #tpu.pipeline_mode<synchronous>, transform_indices = @transform_3, window_bounds = array<i64: 144, 16>}, {pipeline_mode = #tpu.pipeline_mode<synchronous>, transform_indices = @transform_4, window_bounds = array<i64: 1, 16>}, {transform_indices = @transform_5, window_bounds = array<i64: 1, 16, 16, 16>}]} {
    %c0 = arith.constant 0 : index
    %c0_0 = arith.constant 0 : index
    %c0_1 = arith.constant 0 : index
    %c0_2 = arith.constant 0 : index
    %0 = vector.load %arg1[%c0, %c0_0, %c0_1, %c0_2] : memref<1x16x16x16xbf16, #tpu.memory_space<vmem>>, vector<1x16x16x16xbf16>
    %1 = vector.shape_cast %0 : vector<1x16x16x16xbf16> to vector<16x16x16xbf16>
    %2 = arith.extf %1 : vector<16x16x16xbf16> to vector<16x16x16xf32>
    %3 = vector.shape_cast %2 : vector<16x16x16xf32> to vector<256x16xf32>
    %cst = arith.constant 0.000000e+00 : f32
    %4 = vector.broadcast %cst : f32 to vector<16x16x16xf32>
    %5 = arith.cmpf oge, %2, %4 : vector<16x16x16xf32>
    %cst_3 = arith.constant 2.000000e-01 : f32
    %6 = vector.broadcast %cst_3 : f32 to vector<16x16x16xf32>
    %7 = arith.mulf %6, %2 : vector<16x16x16xf32>
    %8 = arith.select %5, %2, %7 : vector<16x16x16xi1>, vector<16x16x16xf32>
    %c0_4 = arith.constant 0 : index
    %c0_5 = arith.constant 0 : index
    %9 = vector.load %arg2[%c0_4, %c0_5] : memref<144x16xbf16, #tpu.memory_space<vmem>>, vector<144x16xbf16>
    %c0_6 = arith.constant 0 : index
    %c0_7 = arith.constant 0 : index
    %10 = vector.load %arg3[%c0_6, %c0_7] : memref<1x16xf32, #tpu.memory_space<vmem>>, vector<1x16xf32>
    %cst_8 = arith.constant 0.000000e+00 : f32
    %11 = vector.broadcast %cst_8 : f32 to vector<1x16x16xf32>
    %12 = tpu.concatenate %11, %8, %11 in 0 : vector<1x16x16xf32>, vector<16x16x16xf32>, vector<1x16x16xf32> -> vector<18x16x16xf32>
    %cst_9 = arith.constant 0.000000e+00 : f32
    %13 = vector.broadcast %cst_9 : f32 to vector<18x1x16xf32>
    %14 = tpu.concatenate %13, %12, %13 in 1 : vector<18x1x16xf32>, vector<18x16x16xf32>, vector<18x1x16xf32> -> vector<18x18x16xf32>
    %15 = vector.extract_strided_slice %14 {offsets = [0, 0, 0], sizes = [16, 18, 16], strides = [1, 1, 1]} : vector<18x18x16xf32> to vector<16x18x16xf32>
    %16 = vector.extract_strided_slice %15 {offsets = [0, 0, 0], sizes = [16, 16, 16], strides = [1, 1, 1]} : vector<16x18x16xf32> to vector<16x16x16xf32>
    %17 = vector.extract_strided_slice %15 {offsets = [0, 1, 0], sizes = [16, 16, 16], strides = [1, 1, 1]} : vector<16x18x16xf32> to vector<16x16x16xf32>
    %18 = vector.extract_strided_slice %15 {offsets = [0, 2, 0], sizes = [16, 16, 16], strides = [1, 1, 1]} : vector<16x18x16xf32> to vector<16x16x16xf32>
    %19 = tpu.concatenate %16, %17, %18 in 2 : vector<16x16x16xf32>, vector<16x16x16xf32>, vector<16x16x16xf32> -> vector<16x16x48xf32>
    %20 = vector.extract_strided_slice %14 {offsets = [1, 0, 0], sizes = [16, 18, 16], strides = [1, 1, 1]} : vector<18x18x16xf32> to vector<16x18x16xf32>
    %21 = vector.extract_strided_slice %20 {offsets = [0, 0, 0], sizes = [16, 16, 16], strides = [1, 1, 1]} : vector<16x18x16xf32> to vector<16x16x16xf32>
    %22 = vector.extract_strided_slice %20 {offsets = [0, 1, 0], sizes = [16, 16, 16], strides = [1, 1, 1]} : vector<16x18x16xf32> to vector<16x16x16xf32>
    %23 = vector.extract_strided_slice %20 {offsets = [0, 2, 0], sizes = [16, 16, 16], strides = [1, 1, 1]} : vector<16x18x16xf32> to vector<16x16x16xf32>
    %24 = tpu.concatenate %21, %22, %23 in 2 : vector<16x16x16xf32>, vector<16x16x16xf32>, vector<16x16x16xf32> -> vector<16x16x48xf32>
    %25 = vector.extract_strided_slice %14 {offsets = [2, 0, 0], sizes = [16, 18, 16], strides = [1, 1, 1]} : vector<18x18x16xf32> to vector<16x18x16xf32>
    %26 = vector.extract_strided_slice %25 {offsets = [0, 0, 0], sizes = [16, 16, 16], strides = [1, 1, 1]} : vector<16x18x16xf32> to vector<16x16x16xf32>
    %27 = vector.extract_strided_slice %25 {offsets = [0, 1, 0], sizes = [16, 16, 16], strides = [1, 1, 1]} : vector<16x18x16xf32> to vector<16x16x16xf32>
    %28 = vector.extract_strided_slice %25 {offsets = [0, 2, 0], sizes = [16, 16, 16], strides = [1, 1, 1]} : vector<16x18x16xf32> to vector<16x16x16xf32>
    %29 = tpu.concatenate %26, %27, %28 in 2 : vector<16x16x16xf32>, vector<16x16x16xf32>, vector<16x16x16xf32> -> vector<16x16x48xf32>
    %30 = tpu.concatenate %19, %24, %29 in 2 : vector<16x16x48xf32>, vector<16x16x48xf32>, vector<16x16x48xf32> -> vector<16x16x144xf32>
    %31 = vector.shape_cast %30 : vector<16x16x144xf32> to vector<256x144xf32>
    %32 = arith.truncf %31 : vector<256x144xf32> to vector<256x144xbf16>
    %cst_10 = arith.constant dense<0.000000e+00> : vector<256x16xf32>
    %33 = tpu.matmul %32, %9, %cst_10 {dimension_numbers = #tpu.dot_dimension_numbers<[1], [0], [0], [1], [0, 0, 1, 1], [], []>} : vector<256x144xbf16>, vector<144x16xbf16>, vector<256x16xf32> -> vector<256x16xf32>
    %34 = vector.broadcast %10 : vector<1x16xf32> to vector<256x16xf32>
    %35 = arith.addf %33, %34 : vector<256x16xf32>
    %cst_11 = arith.constant 0.000000e+00 : f32
    %36 = vector.broadcast %cst_11 : f32 to vector<256x16xf32>
    %37 = arith.cmpf oge, %35, %36 : vector<256x16xf32>
    %cst_12 = arith.constant 2.000000e-01 : f32
    %38 = vector.broadcast %cst_12 : f32 to vector<256x16xf32>
    %39 = arith.mulf %38, %35 : vector<256x16xf32>
    %40 = arith.select %37, %35, %39 : vector<256x16xi1>, vector<256x16xf32>
    %41 = vector.shape_cast %40 : vector<256x16xf32> to vector<16x16x16xf32>
    %c0_13 = arith.constant 0 : index
    %c0_14 = arith.constant 0 : index
    %42 = vector.load %arg4[%c0_13, %c0_14] : memref<144x16xbf16, #tpu.memory_space<vmem>>, vector<144x16xbf16>
    %c0_15 = arith.constant 0 : index
    %c0_16 = arith.constant 0 : index
    %43 = vector.load %arg5[%c0_15, %c0_16] : memref<1x16xf32, #tpu.memory_space<vmem>>, vector<1x16xf32>
    %cst_17 = arith.constant 0.000000e+00 : f32
    %44 = vector.broadcast %cst_17 : f32 to vector<1x16x16xf32>
    %45 = tpu.concatenate %44, %41, %44 in 0 : vector<1x16x16xf32>, vector<16x16x16xf32>, vector<1x16x16xf32> -> vector<18x16x16xf32>
    %cst_18 = arith.constant 0.000000e+00 : f32
    %46 = vector.broadcast %cst_18 : f32 to vector<18x1x16xf32>
    %47 = tpu.concatenate %46, %45, %46 in 1 : vector<18x1x16xf32>, vector<18x16x16xf32>, vector<18x1x16xf32> -> vector<18x18x16xf32>
    %48 = vector.extract_strided_slice %47 {offsets = [0, 0, 0], sizes = [16, 18, 16], strides = [1, 1, 1]} : vector<18x18x16xf32> to vector<16x18x16xf32>
    %49 = vector.extract_strided_slice %48 {offsets = [0, 0, 0], sizes = [16, 16, 16], strides = [1, 1, 1]} : vector<16x18x16xf32> to vector<16x16x16xf32>
    %50 = vector.extract_strided_slice %48 {offsets = [0, 1, 0], sizes = [16, 16, 16], strides = [1, 1, 1]} : vector<16x18x16xf32> to vector<16x16x16xf32>
    %51 = vector.extract_strided_slice %48 {offsets = [0, 2, 0], sizes = [16, 16, 16], strides = [1, 1, 1]} : vector<16x18x16xf32> to vector<16x16x16xf32>
    %52 = tpu.concatenate %49, %50, %51 in 2 : vector<16x16x16xf32>, vector<16x16x16xf32>, vector<16x16x16xf32> -> vector<16x16x48xf32>
    %53 = vector.extract_strided_slice %47 {offsets = [1, 0, 0], sizes = [16, 18, 16], strides = [1, 1, 1]} : vector<18x18x16xf32> to vector<16x18x16xf32>
    %54 = vector.extract_strided_slice %53 {offsets = [0, 0, 0], sizes = [16, 16, 16], strides = [1, 1, 1]} : vector<16x18x16xf32> to vector<16x16x16xf32>
    %55 = vector.extract_strided_slice %53 {offsets = [0, 1, 0], sizes = [16, 16, 16], strides = [1, 1, 1]} : vector<16x18x16xf32> to vector<16x16x16xf32>
    %56 = vector.extract_strided_slice %53 {offsets = [0, 2, 0], sizes = [16, 16, 16], strides = [1, 1, 1]} : vector<16x18x16xf32> to vector<16x16x16xf32>
    %57 = tpu.concatenate %54, %55, %56 in 2 : vector<16x16x16xf32>, vector<16x16x16xf32>, vector<16x16x16xf32> -> vector<16x16x48xf32>
    %58 = vector.extract_strided_slice %47 {offsets = [2, 0, 0], sizes = [16, 18, 16], strides = [1, 1, 1]} : vector<18x18x16xf32> to vector<16x18x16xf32>
    %59 = vector.extract_strided_slice %58 {offsets = [0, 0, 0], sizes = [16, 16, 16], strides = [1, 1, 1]} : vector<16x18x16xf32> to vector<16x16x16xf32>
    %60 = vector.extract_strided_slice %58 {offsets = [0, 1, 0], sizes = [16, 16, 16], strides = [1, 1, 1]} : vector<16x18x16xf32> to vector<16x16x16xf32>
    %61 = vector.extract_strided_slice %58 {offsets = [0, 2, 0], sizes = [16, 16, 16], strides = [1, 1, 1]} : vector<16x18x16xf32> to vector<16x16x16xf32>
    %62 = tpu.concatenate %59, %60, %61 in 2 : vector<16x16x16xf32>, vector<16x16x16xf32>, vector<16x16x16xf32> -> vector<16x16x48xf32>
    %63 = tpu.concatenate %52, %57, %62 in 2 : vector<16x16x48xf32>, vector<16x16x48xf32>, vector<16x16x48xf32> -> vector<16x16x144xf32>
    %64 = vector.shape_cast %63 : vector<16x16x144xf32> to vector<256x144xf32>
    %65 = arith.truncf %64 : vector<256x144xf32> to vector<256x144xbf16>
    %cst_19 = arith.constant dense<0.000000e+00> : vector<256x16xf32>
    %66 = tpu.matmul %65, %42, %cst_19 {dimension_numbers = #tpu.dot_dimension_numbers<[1], [0], [0], [1], [0, 0, 1, 1], [], []>} : vector<256x144xbf16>, vector<144x16xbf16>, vector<256x16xf32> -> vector<256x16xf32>
    %67 = vector.broadcast %43 : vector<1x16xf32> to vector<256x16xf32>
    %68 = arith.addf %66, %67 : vector<256x16xf32>
    %cst_20 = arith.constant 1.000000e-01 : f32
    %69 = vector.broadcast %cst_20 : f32 to vector<256x16xf32>
    %70 = arith.mulf %69, %68 : vector<256x16xf32>
    %71 = arith.addf %3, %70 : vector<256x16xf32>
    %72 = vector.shape_cast %71 : vector<256x16xf32> to vector<16x16x16xf32>
    %73 = arith.truncf %72 : vector<16x16x16xf32> to vector<16x16x16xbf16>
    %c0_21 = arith.constant 0 : index
    %c0_22 = arith.constant 0 : index
    %c0_23 = arith.constant 0 : index
    %c0_24 = arith.constant 0 : index
    %74 = vector.load %arg6[%c0_21, %c0_22, %c0_23, %c0_24] : memref<1x16x16x16xbf16, #tpu.memory_space<vmem>>, vector<1x16x16x16xbf16>
    %75 = vector.shape_cast %74 : vector<1x16x16x16xbf16> to vector<16x16x16xbf16>
    %76 = vector.shape_cast %73 : vector<16x16x16xbf16> to vector<1x16x16x16xbf16>
    tpu.vector_store %arg6[%c0_21, %c0_22, %c0_23, %c0_24], %76 {strides = array<i32>} : memref<1x16x16x16xbf16, #tpu.memory_space<vmem>>, vector<1x16x16x16xbf16>,
    return
  }
  func.func @transform_0(%arg0: i32) -> (i32, i32, i32, i32) {
    %c0_i32 = arith.constant 0 : i32
    %c0_i32_0 = arith.constant 0 : i32
    %c0_i32_1 = arith.constant 0 : i32
    %c0_i32_2 = arith.constant 0 : i32
    return %arg0, %c0_i32, %c0_i32_0, %c0_i32_1 : i32, i32, i32, i32
  }
  func.func @transform_1(%arg0: i32) -> (i32, i32) {
    %c0_i32 = arith.constant 0 : i32
    %c0_i32_0 = arith.constant 0 : i32
    %c0_i32_1 = arith.constant 0 : i32
    return %c0_i32, %c0_i32_0 : i32, i32
  }
  func.func @transform_2(%arg0: i32) -> (i32, i32) {
    %c0_i32 = arith.constant 0 : i32
    %c0_i32_0 = arith.constant 0 : i32
    %c0_i32_1 = arith.constant 0 : i32
    return %c0_i32, %c0_i32_0 : i32, i32
  }
  func.func @transform_3(%arg0: i32) -> (i32, i32) {
    %c0_i32 = arith.constant 0 : i32
    %c0_i32_0 = arith.constant 0 : i32
    %c0_i32_1 = arith.constant 0 : i32
    return %c0_i32, %c0_i32_0 : i32, i32
  }
  func.func @transform_4(%arg0: i32) -> (i32, i32) {
    %c0_i32 = arith.constant 0 : i32
    %c0_i32_0 = arith.constant 0 : i32
    %c0_i32_1 = arith.constant 0 : i32
    return %c0_i32, %c0_i32_0 : i32, i32
  }
  func.func @transform_5(%arg0: i32) -> (i32, i32, i32, i32) {
    %c0_i32 = arith.constant 0 : i32
    %c0_i32_0 = arith.constant 0 : i32
    %c0_i32_1 = arith.constant 0 : i32
    %c0_i32_2 = arith.constant 0 : i32
    return %arg0, %c0_i32, %c0_i32_0, %c0_i32_1 : i32, i32, i32, i32
  }
}

module attributes {stable_mosaic.version = 11 : i64} {
  func.func @_avgpool3s2_kernel(%arg0: i32, %arg1: memref<1x16x16x16xbf16, #tpu.memory_space<vmem>>, %arg2: memref<1x8x8x16xbf16, #tpu.memory_space<vmem>>) attributes {dimension_semantics = [#tpu.dimension_semantics<parallel>], iteration_bounds = array<i64: 2>, scalar_prefetch = 0 : i64, scratch_operands = 0 : i64, tpu.core_type = #tpu.core_type<tc>, window_params = [{transform_indices = @transform_0, window_bounds = array<i64: 1, 16, 16, 16>}, {transform_indices = @transform_1, window_bounds = array<i64: 1, 8, 8, 16>}]} {
    %c0 = arith.constant 0 : index
    %c0_0 = arith.constant 0 : index
    %c0_1 = arith.constant 0 : index
    %c0_2 = arith.constant 0 : index
    %0 = vector.load %arg1[%c0, %c0_0, %c0_1, %c0_2] : memref<1x16x16x16xbf16, #tpu.memory_space<vmem>>, vector<1x16x16x16xbf16>
    %1 = vector.shape_cast %0 : vector<1x16x16x16xbf16> to vector<16x16x16xbf16>
    %2 = arith.extf %1 : vector<16x16x16xbf16> to vector<16x16x16xf32>
    %3 = vector.shape_cast %2 : vector<16x16x16xf32> to vector<8x2x16x16xf32>
    %4 = vector.extract_strided_slice %3 {offsets = [0, 0, 0, 0], sizes = [8, 1, 16, 16], strides = [1, 1, 1, 1]} : vector<8x2x16x16xf32> to vector<8x1x16x16xf32>
    %5 = vector.shape_cast %4 : vector<8x1x16x16xf32> to vector<8x16x16xf32>
    %6 = vector.extract_strided_slice %3 {offsets = [0, 1, 0, 0], sizes = [8, 1, 16, 16], strides = [1, 1, 1, 1]} : vector<8x2x16x16xf32> to vector<8x1x16x16xf32>
    %7 = vector.shape_cast %6 : vector<8x1x16x16xf32> to vector<8x16x16xf32>
    %cst = arith.constant 0.000000e+00 : f32
    %8 = vector.broadcast %cst : f32 to vector<1x16x16xf32>
    %9 = vector.extract_strided_slice %7 {offsets = [0, 0, 0], sizes = [7, 16, 16], strides = [1, 1, 1]} : vector<8x16x16xf32> to vector<7x16x16xf32>
    %10 = tpu.concatenate %8, %9 in 0 : vector<1x16x16xf32>, vector<7x16x16xf32> -> vector<8x16x16xf32>
    %11 = arith.addf %5, %7 : vector<8x16x16xf32>
    %12 = arith.addf %11, %10 : vector<8x16x16xf32>
    %13 = tpu.iota {dimensions = array<i32: 1>} : vector<8x8x16xi32>
    %14 = tpu.iota {dimensions = array<i32: 2>} : vector<8x8x16xi32>
    %c2_i32 = arith.constant 2 : i32
    %15 = vector.broadcast %c2_i32 : i32 to vector<8x8x16xi32>
    %16 = arith.muli %15, %13 : vector<8x8x16xi32>
    %17 = arith.subi %14, %16 : vector<8x8x16xi32>
    %c-1_i32 = arith.constant -1 : i32
    %18 = vector.broadcast %c-1_i32 : i32 to vector<8x8x16xi32>
    %19 = arith.cmpi sge, %17, %18 : vector<8x8x16xi32>
    %c1_i32 = arith.constant 1 : i32
    %20 = vector.broadcast %c1_i32 : i32 to vector<8x8x16xi32>
    %21 = arith.cmpi sle, %17, %20 : vector<8x8x16xi32>
    %22 = arith.andi %19, %21 : vector<8x8x16xi1>
    %23 = arith.extui %22 : vector<8x8x16xi1> to vector<8x8x16xi32>
    %24 = arith.sitofp %23 : vector<8x8x16xi32> to vector<8x8x16xf32>
    "tpu.trace_start"() <{level = 10 : i32, message = "ijw,iwc->ijc"}> : () -> ()
    %cst_3 = arith.constant dense<0.000000e+00> : vector<8x8x16xf32>
    %25 = tpu.matmul %24, %12, %cst_3 {dimension_numbers = #tpu.dot_dimension_numbers<[2], [1], [1], [2], [0, 0, 0, 1, 1, 2], [0], [0]>} : vector<8x8x16xf32>, vector<8x16x16xf32>, vector<8x8x16xf32> -> vector<8x8x16xf32>
    "tpu.trace_stop"() : () -> ()
    %cst_4 = arith.constant 0.111111112 : f32
    %26 = vector.broadcast %cst_4 : f32 to vector<8x8x16xf32>
    %27 = arith.mulf %25, %26 : vector<8x8x16xf32>
    %28 = arith.truncf %27 : vector<8x8x16xf32> to vector<8x8x16xbf16>
    %c0_5 = arith.constant 0 : index
    %c0_6 = arith.constant 0 : index
    %c0_7 = arith.constant 0 : index
    %c0_8 = arith.constant 0 : index
    %29 = vector.load %arg2[%c0_5, %c0_6, %c0_7, %c0_8] : memref<1x8x8x16xbf16, #tpu.memory_space<vmem>>, vector<1x8x8x16xbf16>
    %30 = vector.shape_cast %29 : vector<1x8x8x16xbf16> to vector<8x8x16xbf16>
    %31 = vector.shape_cast %28 : vector<8x8x16xbf16> to vector<1x8x8x16xbf16>
    tpu.vector_store %arg2[%c0_5, %c0_6, %c0_7, %c0_8], %31 {strides = array<i32>} : memref<1x8x8x16xbf16, #tpu.memory_space<vmem>>, vector<1x8x8x16xbf16>,
    return
  }
  func.func @transform_0(%arg0: i32) -> (i32, i32, i32, i32) {
    %c0_i32 = arith.constant 0 : i32
    %c0_i32_0 = arith.constant 0 : i32
    %c0_i32_1 = arith.constant 0 : i32
    %c0_i32_2 = arith.constant 0 : i32
    return %arg0, %c0_i32, %c0_i32_0, %c0_i32_1 : i32, i32, i32, i32
  }
  func.func @transform_1(%arg0: i32) -> (i32, i32, i32, i32) {
    %c0_i32 = arith.constant 0 : i32
    %c0_i32_0 = arith.constant 0 : i32
    %c0_i32_1 = arith.constant 0 : i32
    %c0_i32_2 = arith.constant 0 : i32
    return %arg0, %c0_i32, %c0_i32_0, %c0_i32_1 : i32, i32, i32, i32
  }
}

module attributes {stable_mosaic.version = 11 : i64} {
  func.func @_resblock_kernel(%arg0: i32, %arg1: memref<1x8x8x16xbf16, #tpu.memory_space<vmem>>, %arg2: memref<144x16xbf16, #tpu.memory_space<vmem>>, %arg3: memref<1x16xf32, #tpu.memory_space<vmem>>, %arg4: memref<144x32xbf16, #tpu.memory_space<vmem>>, %arg5: memref<1x32xf32, #tpu.memory_space<vmem>>, %arg6: memref<16x32xbf16, #tpu.memory_space<vmem>>, %arg7: memref<1x8x8x32xbf16, #tpu.memory_space<vmem>>) attributes {dimension_semantics = [#tpu.dimension_semantics<parallel>], iteration_bounds = array<i64: 2>, scalar_prefetch = 0 : i64, scratch_operands = 0 : i64, tpu.core_type = #tpu.core_type<tc>, window_params = [{transform_indices = @transform_0, window_bounds = array<i64: 1, 8, 8, 16>}, {pipeline_mode = #tpu.pipeline_mode<synchronous>, transform_indices = @transform_1, window_bounds = array<i64: 144, 16>}, {pipeline_mode = #tpu.pipeline_mode<synchronous>, transform_indices = @transform_2, window_bounds = array<i64: 1, 16>}, {pipeline_mode = #tpu.pipeline_mode<synchronous>, transform_indices = @transform_3, window_bounds = array<i64: 144, 32>}, {pipeline_mode = #tpu.pipeline_mode<synchronous>, transform_indices = @transform_4, window_bounds = array<i64: 1, 32>}, {pipeline_mode = #tpu.pipeline_mode<synchronous>, transform_indices = @transform_5, window_bounds = array<i64: 16, 32>}, {transform_indices = @transform_6, window_bounds = array<i64: 1, 8, 8, 32>}]} {
    %c0 = arith.constant 0 : index
    %c0_0 = arith.constant 0 : index
    %c0_1 = arith.constant 0 : index
    %c0_2 = arith.constant 0 : index
    %0 = vector.load %arg1[%c0, %c0_0, %c0_1, %c0_2] : memref<1x8x8x16xbf16, #tpu.memory_space<vmem>>, vector<1x8x8x16xbf16>
    %1 = vector.shape_cast %0 : vector<1x8x8x16xbf16> to vector<8x8x16xbf16>
    %2 = arith.extf %1 : vector<8x8x16xbf16> to vector<8x8x16xf32>
    %3 = vector.shape_cast %2 : vector<8x8x16xf32> to vector<64x16xf32>
    %4 = arith.truncf %3 : vector<64x16xf32> to vector<64x16xbf16>
    %c0_3 = arith.constant 0 : index
    %c0_4 = arith.constant 0 : index
    %5 = vector.load %arg6[%c0_3, %c0_4] : memref<16x32xbf16, #tpu.memory_space<vmem>>, vector<16x32xbf16>
    %cst = arith.constant dense<0.000000e+00> : vector<64x32xf32>
    %6 = tpu.matmul %4, %5, %cst {dimension_numbers = #tpu.dot_dimension_numbers<[1], [0], [0], [1], [0, 0, 1, 1], [], []>} : vector<64x16xbf16>, vector<16x32xbf16>, vector<64x32xf32> -> vector<64x32xf32>
    %cst_5 = arith.constant 0.000000e+00 : f32
    %7 = vector.broadcast %cst_5 : f32 to vector<8x8x16xf32>
    %8 = arith.cmpf oge, %2, %7 : vector<8x8x16xf32>
    %cst_6 = arith.constant 2.000000e-01 : f32
    %9 = vector.broadcast %cst_6 : f32 to vector<8x8x16xf32>
    %10 = arith.mulf %9, %2 : vector<8x8x16xf32>
    %11 = arith.select %8, %2, %10 : vector<8x8x16xi1>, vector<8x8x16xf32>
    %c0_7 = arith.constant 0 : index
    %c0_8 = arith.constant 0 : index
    %12 = vector.load %arg2[%c0_7, %c0_8] : memref<144x16xbf16, #tpu.memory_space<vmem>>, vector<144x16xbf16>
    %c0_9 = arith.constant 0 : index
    %c0_10 = arith.constant 0 : index
    %13 = vector.load %arg3[%c0_9, %c0_10] : memref<1x16xf32, #tpu.memory_space<vmem>>, vector<1x16xf32>
    %cst_11 = arith.constant 0.000000e+00 : f32
    %14 = vector.broadcast %cst_11 : f32 to vector<1x8x16xf32>
    %15 = tpu.concatenate %14, %11, %14 in 0 : vector<1x8x16xf32>, vector<8x8x16xf32>, vector<1x8x16xf32> -> vector<10x8x16xf32>
    %cst_12 = arith.constant 0.000000e+00 : f32
    %16 = vector.broadcast %cst_12 : f32 to vector<10x1x16xf32>
    %17 = tpu.concatenate %16, %15, %16 in 1 : vector<10x1x16xf32>, vector<10x8x16xf32>, vector<10x1x16xf32> -> vector<10x10x16xf32>
    %18 = vector.extract_strided_slice %17 {offsets = [0, 0, 0], sizes = [8, 10, 16], strides = [1, 1, 1]} : vector<10x10x16xf32> to vector<8x10x16xf32>
    %19 = vector.extract_strided_slice %18 {offsets = [0, 0, 0], sizes = [8, 8, 16], strides = [1, 1, 1]} : vector<8x10x16xf32> to vector<8x8x16xf32>
    %20 = vector.extract_strided_slice %18 {offsets = [0, 1, 0], sizes = [8, 8, 16], strides = [1, 1, 1]} : vector<8x10x16xf32> to vector<8x8x16xf32>
    %21 = vector.extract_strided_slice %18 {offsets = [0, 2, 0], sizes = [8, 8, 16], strides = [1, 1, 1]} : vector<8x10x16xf32> to vector<8x8x16xf32>
    %22 = tpu.concatenate %19, %20, %21 in 2 : vector<8x8x16xf32>, vector<8x8x16xf32>, vector<8x8x16xf32> -> vector<8x8x48xf32>
    %23 = vector.extract_strided_slice %17 {offsets = [1, 0, 0], sizes = [8, 10, 16], strides = [1, 1, 1]} : vector<10x10x16xf32> to vector<8x10x16xf32>
    %24 = vector.extract_strided_slice %23 {offsets = [0, 0, 0], sizes = [8, 8, 16], strides = [1, 1, 1]} : vector<8x10x16xf32> to vector<8x8x16xf32>
    %25 = vector.extract_strided_slice %23 {offsets = [0, 1, 0], sizes = [8, 8, 16], strides = [1, 1, 1]} : vector<8x10x16xf32> to vector<8x8x16xf32>
    %26 = vector.extract_strided_slice %23 {offsets = [0, 2, 0], sizes = [8, 8, 16], strides = [1, 1, 1]} : vector<8x10x16xf32> to vector<8x8x16xf32>
    %27 = tpu.concatenate %24, %25, %26 in 2 : vector<8x8x16xf32>, vector<8x8x16xf32>, vector<8x8x16xf32> -> vector<8x8x48xf32>
    %28 = vector.extract_strided_slice %17 {offsets = [2, 0, 0], sizes = [8, 10, 16], strides = [1, 1, 1]} : vector<10x10x16xf32> to vector<8x10x16xf32>
    %29 = vector.extract_strided_slice %28 {offsets = [0, 0, 0], sizes = [8, 8, 16], strides = [1, 1, 1]} : vector<8x10x16xf32> to vector<8x8x16xf32>
    %30 = vector.extract_strided_slice %28 {offsets = [0, 1, 0], sizes = [8, 8, 16], strides = [1, 1, 1]} : vector<8x10x16xf32> to vector<8x8x16xf32>
    %31 = vector.extract_strided_slice %28 {offsets = [0, 2, 0], sizes = [8, 8, 16], strides = [1, 1, 1]} : vector<8x10x16xf32> to vector<8x8x16xf32>
    %32 = tpu.concatenate %29, %30, %31 in 2 : vector<8x8x16xf32>, vector<8x8x16xf32>, vector<8x8x16xf32> -> vector<8x8x48xf32>
    %33 = tpu.concatenate %22, %27, %32 in 2 : vector<8x8x48xf32>, vector<8x8x48xf32>, vector<8x8x48xf32> -> vector<8x8x144xf32>
    %34 = vector.shape_cast %33 : vector<8x8x144xf32> to vector<64x144xf32>
    %35 = arith.truncf %34 : vector<64x144xf32> to vector<64x144xbf16>
    %cst_13 = arith.constant dense<0.000000e+00> : vector<64x16xf32>
    %36 = tpu.matmul %35, %12, %cst_13 {dimension_numbers = #tpu.dot_dimension_numbers<[1], [0], [0], [1], [0, 0, 1, 1], [], []>} : vector<64x144xbf16>, vector<144x16xbf16>, vector<64x16xf32> -> vector<64x16xf32>
    %37 = vector.broadcast %13 : vector<1x16xf32> to vector<64x16xf32>
    %38 = arith.addf %36, %37 : vector<64x16xf32>
    %cst_14 = arith.constant 0.000000e+00 : f32
    %39 = vector.broadcast %cst_14 : f32 to vector<64x16xf32>
    %40 = arith.cmpf oge, %38, %39 : vector<64x16xf32>
    %cst_15 = arith.constant 2.000000e-01 : f32
    %41 = vector.broadcast %cst_15 : f32 to vector<64x16xf32>
    %42 = arith.mulf %41, %38 : vector<64x16xf32>
    %43 = arith.select %40, %38, %42 : vector<64x16xi1>, vector<64x16xf32>
    %44 = vector.shape_cast %43 : vector<64x16xf32> to vector<8x8x16xf32>
    %c0_16 = arith.constant 0 : index
    %c0_17 = arith.constant 0 : index
    %45 = vector.load %arg4[%c0_16, %c0_17] : memref<144x32xbf16, #tpu.memory_space<vmem>>, vector<144x32xbf16>
    %c0_18 = arith.constant 0 : index
    %c0_19 = arith.constant 0 : index
    %46 = vector.load %arg5[%c0_18, %c0_19] : memref<1x32xf32, #tpu.memory_space<vmem>>, vector<1x32xf32>
    %cst_20 = arith.constant 0.000000e+00 : f32
    %47 = vector.broadcast %cst_20 : f32 to vector<1x8x16xf32>
    %48 = tpu.concatenate %47, %44, %47 in 0 : vector<1x8x16xf32>, vector<8x8x16xf32>, vector<1x8x16xf32> -> vector<10x8x16xf32>
    %cst_21 = arith.constant 0.000000e+00 : f32
    %49 = vector.broadcast %cst_21 : f32 to vector<10x1x16xf32>
    %50 = tpu.concatenate %49, %48, %49 in 1 : vector<10x1x16xf32>, vector<10x8x16xf32>, vector<10x1x16xf32> -> vector<10x10x16xf32>
    %51 = vector.extract_strided_slice %50 {offsets = [0, 0, 0], sizes = [8, 10, 16], strides = [1, 1, 1]} : vector<10x10x16xf32> to vector<8x10x16xf32>
    %52 = vector.extract_strided_slice %51 {offsets = [0, 0, 0], sizes = [8, 8, 16], strides = [1, 1, 1]} : vector<8x10x16xf32> to vector<8x8x16xf32>
    %53 = vector.extract_strided_slice %51 {offsets = [0, 1, 0], sizes = [8, 8, 16], strides = [1, 1, 1]} : vector<8x10x16xf32> to vector<8x8x16xf32>
    %54 = vector.extract_strided_slice %51 {offsets = [0, 2, 0], sizes = [8, 8, 16], strides = [1, 1, 1]} : vector<8x10x16xf32> to vector<8x8x16xf32>
    %55 = tpu.concatenate %52, %53, %54 in 2 : vector<8x8x16xf32>, vector<8x8x16xf32>, vector<8x8x16xf32> -> vector<8x8x48xf32>
    %56 = vector.extract_strided_slice %50 {offsets = [1, 0, 0], sizes = [8, 10, 16], strides = [1, 1, 1]} : vector<10x10x16xf32> to vector<8x10x16xf32>
    %57 = vector.extract_strided_slice %56 {offsets = [0, 0, 0], sizes = [8, 8, 16], strides = [1, 1, 1]} : vector<8x10x16xf32> to vector<8x8x16xf32>
    %58 = vector.extract_strided_slice %56 {offsets = [0, 1, 0], sizes = [8, 8, 16], strides = [1, 1, 1]} : vector<8x10x16xf32> to vector<8x8x16xf32>
    %59 = vector.extract_strided_slice %56 {offsets = [0, 2, 0], sizes = [8, 8, 16], strides = [1, 1, 1]} : vector<8x10x16xf32> to vector<8x8x16xf32>
    %60 = tpu.concatenate %57, %58, %59 in 2 : vector<8x8x16xf32>, vector<8x8x16xf32>, vector<8x8x16xf32> -> vector<8x8x48xf32>
    %61 = vector.extract_strided_slice %50 {offsets = [2, 0, 0], sizes = [8, 10, 16], strides = [1, 1, 1]} : vector<10x10x16xf32> to vector<8x10x16xf32>
    %62 = vector.extract_strided_slice %61 {offsets = [0, 0, 0], sizes = [8, 8, 16], strides = [1, 1, 1]} : vector<8x10x16xf32> to vector<8x8x16xf32>
    %63 = vector.extract_strided_slice %61 {offsets = [0, 1, 0], sizes = [8, 8, 16], strides = [1, 1, 1]} : vector<8x10x16xf32> to vector<8x8x16xf32>
    %64 = vector.extract_strided_slice %61 {offsets = [0, 2, 0], sizes = [8, 8, 16], strides = [1, 1, 1]} : vector<8x10x16xf32> to vector<8x8x16xf32>
    %65 = tpu.concatenate %62, %63, %64 in 2 : vector<8x8x16xf32>, vector<8x8x16xf32>, vector<8x8x16xf32> -> vector<8x8x48xf32>
    %66 = tpu.concatenate %55, %60, %65 in 2 : vector<8x8x48xf32>, vector<8x8x48xf32>, vector<8x8x48xf32> -> vector<8x8x144xf32>
    %67 = vector.shape_cast %66 : vector<8x8x144xf32> to vector<64x144xf32>
    %68 = arith.truncf %67 : vector<64x144xf32> to vector<64x144xbf16>
    %cst_22 = arith.constant dense<0.000000e+00> : vector<64x32xf32>
    %69 = tpu.matmul %68, %45, %cst_22 {dimension_numbers = #tpu.dot_dimension_numbers<[1], [0], [0], [1], [0, 0, 1, 1], [], []>} : vector<64x144xbf16>, vector<144x32xbf16>, vector<64x32xf32> -> vector<64x32xf32>
    %70 = vector.broadcast %46 : vector<1x32xf32> to vector<64x32xf32>
    %71 = arith.addf %69, %70 : vector<64x32xf32>
    %cst_23 = arith.constant 1.000000e-01 : f32
    %72 = vector.broadcast %cst_23 : f32 to vector<64x32xf32>
    %73 = arith.mulf %72, %71 : vector<64x32xf32>
    %74 = arith.addf %6, %73 : vector<64x32xf32>
    %75 = vector.shape_cast %74 : vector<64x32xf32> to vector<8x8x32xf32>
    %76 = arith.truncf %75 : vector<8x8x32xf32> to vector<8x8x32xbf16>
    %c0_24 = arith.constant 0 : index
    %c0_25 = arith.constant 0 : index
    %c0_26 = arith.constant 0 : index
    %c0_27 = arith.constant 0 : index
    %77 = vector.load %arg7[%c0_24, %c0_25, %c0_26, %c0_27] : memref<1x8x8x32xbf16, #tpu.memory_space<vmem>>, vector<1x8x8x32xbf16>
    %78 = vector.shape_cast %77 : vector<1x8x8x32xbf16> to vector<8x8x32xbf16>
    %79 = vector.shape_cast %76 : vector<8x8x32xbf16> to vector<1x8x8x32xbf16>
    tpu.vector_store %arg7[%c0_24, %c0_25, %c0_26, %c0_27], %79 {strides = array<i32>} : memref<1x8x8x32xbf16, #tpu.memory_space<vmem>>, vector<1x8x8x32xbf16>,
    return
  }
  func.func @transform_0(%arg0: i32) -> (i32, i32, i32, i32) {
    %c0_i32 = arith.constant 0 : i32
    %c0_i32_0 = arith.constant 0 : i32
    %c0_i32_1 = arith.constant 0 : i32
    %c0_i32_2 = arith.constant 0 : i32
    return %arg0, %c0_i32, %c0_i32_0, %c0_i32_1 : i32, i32, i32, i32
  }
  func.func @transform_1(%arg0: i32) -> (i32, i32) {
    %c0_i32 = arith.constant 0 : i32
    %c0_i32_0 = arith.constant 0 : i32
    %c0_i32_1 = arith.constant 0 : i32
    return %c0_i32, %c0_i32_0 : i32, i32
  }
  func.func @transform_2(%arg0: i32) -> (i32, i32) {
    %c0_i32 = arith.constant 0 : i32
    %c0_i32_0 = arith.constant 0 : i32
    %c0_i32_1 = arith.constant 0 : i32
    return %c0_i32, %c0_i32_0 : i32, i32
  }
  func.func @transform_3(%arg0: i32) -> (i32, i32) {
    %c0_i32 = arith.constant 0 : i32
    %c0_i32_0 = arith.constant 0 : i32
    %c0_i32_1 = arith.constant 0 : i32
    return %c0_i32, %c0_i32_0 : i32, i32
  }
  func.func @transform_4(%arg0: i32) -> (i32, i32) {
    %c0_i32 = arith.constant 0 : i32
    %c0_i32_0 = arith.constant 0 : i32
    %c0_i32_1 = arith.constant 0 : i32
    return %c0_i32, %c0_i32_0 : i32, i32
  }
  func.func @transform_5(%arg0: i32) -> (i32, i32) {
    %c0_i32 = arith.constant 0 : i32
    %c0_i32_0 = arith.constant 0 : i32
    %c0_i32_1 = arith.constant 0 : i32
    return %c0_i32, %c0_i32_0 : i32, i32
  }
  func.func @transform_6(%arg0: i32) -> (i32, i32, i32, i32) {
    %c0_i32 = arith.constant 0 : i32
    %c0_i32_0 = arith.constant 0 : i32
    %c0_i32_1 = arith.constant 0 : i32
    %c0_i32_2 = arith.constant 0 : i32
    return %arg0, %c0_i32, %c0_i32_0, %c0_i32_1 : i32, i32, i32, i32
  }
}

module attributes {stable_mosaic.version = 11 : i64} {
  func.func @_resblock_kernel(%arg0: i32, %arg1: memref<1x8x8x32xbf16, #tpu.memory_space<vmem>>, %arg2: memref<288x32xbf16, #tpu.memory_space<vmem>>, %arg3: memref<1x32xf32, #tpu.memory_space<vmem>>, %arg4: memref<288x32xbf16, #tpu.memory_space<vmem>>, %arg5: memref<1x32xf32, #tpu.memory_space<vmem>>, %arg6: memref<1x8x8x32xbf16, #tpu.memory_space<vmem>>) attributes {dimension_semantics = [#tpu.dimension_semantics<parallel>], iteration_bounds = array<i64: 2>, scalar_prefetch = 0 : i64, scratch_operands = 0 : i64, tpu.core_type = #tpu.core_type<tc>, window_params = [{transform_indices = @transform_0, window_bounds = array<i64: 1, 8, 8, 32>}, {pipeline_mode = #tpu.pipeline_mode<synchronous>, transform_indices = @transform_1, window_bounds = array<i64: 288, 32>}, {pipeline_mode = #tpu.pipeline_mode<synchronous>, transform_indices = @transform_2, window_bounds = array<i64: 1, 32>}, {pipeline_mode = #tpu.pipeline_mode<synchronous>, transform_indices = @transform_3, window_bounds = array<i64: 288, 32>}, {pipeline_mode = #tpu.pipeline_mode<synchronous>, transform_indices = @transform_4, window_bounds = array<i64: 1, 32>}, {transform_indices = @transform_5, window_bounds = array<i64: 1, 8, 8, 32>}]} {
    %c0 = arith.constant 0 : index
    %c0_0 = arith.constant 0 : index
    %c0_1 = arith.constant 0 : index
    %c0_2 = arith.constant 0 : index
    %0 = vector.load %arg1[%c0, %c0_0, %c0_1, %c0_2] : memref<1x8x8x32xbf16, #tpu.memory_space<vmem>>, vector<1x8x8x32xbf16>
    %1 = vector.shape_cast %0 : vector<1x8x8x32xbf16> to vector<8x8x32xbf16>
    %2 = arith.extf %1 : vector<8x8x32xbf16> to vector<8x8x32xf32>
    %3 = vector.shape_cast %2 : vector<8x8x32xf32> to vector<64x32xf32>
    %cst = arith.constant 0.000000e+00 : f32
    %4 = vector.broadcast %cst : f32 to vector<8x8x32xf32>
    %5 = arith.cmpf oge, %2, %4 : vector<8x8x32xf32>
    %cst_3 = arith.constant 2.000000e-01 : f32
    %6 = vector.broadcast %cst_3 : f32 to vector<8x8x32xf32>
    %7 = arith.mulf %6, %2 : vector<8x8x32xf32>
    %8 = arith.select %5, %2, %7 : vector<8x8x32xi1>, vector<8x8x32xf32>
    %c0_4 = arith.constant 0 : index
    %c0_5 = arith.constant 0 : index
    %9 = vector.load %arg2[%c0_4, %c0_5] : memref<288x32xbf16, #tpu.memory_space<vmem>>, vector<288x32xbf16>
    %c0_6 = arith.constant 0 : index
    %c0_7 = arith.constant 0 : index
    %10 = vector.load %arg3[%c0_6, %c0_7] : memref<1x32xf32, #tpu.memory_space<vmem>>, vector<1x32xf32>
    %cst_8 = arith.constant 0.000000e+00 : f32
    %11 = vector.broadcast %cst_8 : f32 to vector<1x8x32xf32>
    %12 = tpu.concatenate %11, %8, %11 in 0 : vector<1x8x32xf32>, vector<8x8x32xf32>, vector<1x8x32xf32> -> vector<10x8x32xf32>
    %cst_9 = arith.constant 0.000000e+00 : f32
    %13 = vector.broadcast %cst_9 : f32 to vector<10x1x32xf32>
    %14 = tpu.concatenate %13, %12, %13 in 1 : vector<10x1x32xf32>, vector<10x8x32xf32>, vector<10x1x32xf32> -> vector<10x10x32xf32>
    %15 = vector.extract_strided_slice %14 {offsets = [0, 0, 0], sizes = [8, 10, 32], strides = [1, 1, 1]} : vector<10x10x32xf32> to vector<8x10x32xf32>
    %16 = vector.extract_strided_slice %15 {offsets = [0, 0, 0], sizes = [8, 8, 32], strides = [1, 1, 1]} : vector<8x10x32xf32> to vector<8x8x32xf32>
    %17 = vector.extract_strided_slice %15 {offsets = [0, 1, 0], sizes = [8, 8, 32], strides = [1, 1, 1]} : vector<8x10x32xf32> to vector<8x8x32xf32>
    %18 = vector.extract_strided_slice %15 {offsets = [0, 2, 0], sizes = [8, 8, 32], strides = [1, 1, 1]} : vector<8x10x32xf32> to vector<8x8x32xf32>
    %19 = tpu.concatenate %16, %17, %18 in 2 : vector<8x8x32xf32>, vector<8x8x32xf32>, vector<8x8x32xf32> -> vector<8x8x96xf32>
    %20 = vector.extract_strided_slice %14 {offsets = [1, 0, 0], sizes = [8, 10, 32], strides = [1, 1, 1]} : vector<10x10x32xf32> to vector<8x10x32xf32>
    %21 = vector.extract_strided_slice %20 {offsets = [0, 0, 0], sizes = [8, 8, 32], strides = [1, 1, 1]} : vector<8x10x32xf32> to vector<8x8x32xf32>
    %22 = vector.extract_strided_slice %20 {offsets = [0, 1, 0], sizes = [8, 8, 32], strides = [1, 1, 1]} : vector<8x10x32xf32> to vector<8x8x32xf32>
    %23 = vector.extract_strided_slice %20 {offsets = [0, 2, 0], sizes = [8, 8, 32], strides = [1, 1, 1]} : vector<8x10x32xf32> to vector<8x8x32xf32>
    %24 = tpu.concatenate %21, %22, %23 in 2 : vector<8x8x32xf32>, vector<8x8x32xf32>, vector<8x8x32xf32> -> vector<8x8x96xf32>
    %25 = vector.extract_strided_slice %14 {offsets = [2, 0, 0], sizes = [8, 10, 32], strides = [1, 1, 1]} : vector<10x10x32xf32> to vector<8x10x32xf32>
    %26 = vector.extract_strided_slice %25 {offsets = [0, 0, 0], sizes = [8, 8, 32], strides = [1, 1, 1]} : vector<8x10x32xf32> to vector<8x8x32xf32>
    %27 = vector.extract_strided_slice %25 {offsets = [0, 1, 0], sizes = [8, 8, 32], strides = [1, 1, 1]} : vector<8x10x32xf32> to vector<8x8x32xf32>
    %28 = vector.extract_strided_slice %25 {offsets = [0, 2, 0], sizes = [8, 8, 32], strides = [1, 1, 1]} : vector<8x10x32xf32> to vector<8x8x32xf32>
    %29 = tpu.concatenate %26, %27, %28 in 2 : vector<8x8x32xf32>, vector<8x8x32xf32>, vector<8x8x32xf32> -> vector<8x8x96xf32>
    %30 = tpu.concatenate %19, %24, %29 in 2 : vector<8x8x96xf32>, vector<8x8x96xf32>, vector<8x8x96xf32> -> vector<8x8x288xf32>
    %31 = vector.shape_cast %30 : vector<8x8x288xf32> to vector<64x288xf32>
    %32 = arith.truncf %31 : vector<64x288xf32> to vector<64x288xbf16>
    %cst_10 = arith.constant dense<0.000000e+00> : vector<64x32xf32>
    %33 = tpu.matmul %32, %9, %cst_10 {dimension_numbers = #tpu.dot_dimension_numbers<[1], [0], [0], [1], [0, 0, 1, 1], [], []>} : vector<64x288xbf16>, vector<288x32xbf16>, vector<64x32xf32> -> vector<64x32xf32>
    %34 = vector.broadcast %10 : vector<1x32xf32> to vector<64x32xf32>
    %35 = arith.addf %33, %34 : vector<64x32xf32>
    %cst_11 = arith.constant 0.000000e+00 : f32
    %36 = vector.broadcast %cst_11 : f32 to vector<64x32xf32>
    %37 = arith.cmpf oge, %35, %36 : vector<64x32xf32>
    %cst_12 = arith.constant 2.000000e-01 : f32
    %38 = vector.broadcast %cst_12 : f32 to vector<64x32xf32>
    %39 = arith.mulf %38, %35 : vector<64x32xf32>
    %40 = arith.select %37, %35, %39 : vector<64x32xi1>, vector<64x32xf32>
    %41 = vector.shape_cast %40 : vector<64x32xf32> to vector<8x8x32xf32>
    %c0_13 = arith.constant 0 : index
    %c0_14 = arith.constant 0 : index
    %42 = vector.load %arg4[%c0_13, %c0_14] : memref<288x32xbf16, #tpu.memory_space<vmem>>, vector<288x32xbf16>
    %c0_15 = arith.constant 0 : index
    %c0_16 = arith.constant 0 : index
    %43 = vector.load %arg5[%c0_15, %c0_16] : memref<1x32xf32, #tpu.memory_space<vmem>>, vector<1x32xf32>
    %cst_17 = arith.constant 0.000000e+00 : f32
    %44 = vector.broadcast %cst_17 : f32 to vector<1x8x32xf32>
    %45 = tpu.concatenate %44, %41, %44 in 0 : vector<1x8x32xf32>, vector<8x8x32xf32>, vector<1x8x32xf32> -> vector<10x8x32xf32>
    %cst_18 = arith.constant 0.000000e+00 : f32
    %46 = vector.broadcast %cst_18 : f32 to vector<10x1x32xf32>
    %47 = tpu.concatenate %46, %45, %46 in 1 : vector<10x1x32xf32>, vector<10x8x32xf32>, vector<10x1x32xf32> -> vector<10x10x32xf32>
    %48 = vector.extract_strided_slice %47 {offsets = [0, 0, 0], sizes = [8, 10, 32], strides = [1, 1, 1]} : vector<10x10x32xf32> to vector<8x10x32xf32>
    %49 = vector.extract_strided_slice %48 {offsets = [0, 0, 0], sizes = [8, 8, 32], strides = [1, 1, 1]} : vector<8x10x32xf32> to vector<8x8x32xf32>
    %50 = vector.extract_strided_slice %48 {offsets = [0, 1, 0], sizes = [8, 8, 32], strides = [1, 1, 1]} : vector<8x10x32xf32> to vector<8x8x32xf32>
    %51 = vector.extract_strided_slice %48 {offsets = [0, 2, 0], sizes = [8, 8, 32], strides = [1, 1, 1]} : vector<8x10x32xf32> to vector<8x8x32xf32>
    %52 = tpu.concatenate %49, %50, %51 in 2 : vector<8x8x32xf32>, vector<8x8x32xf32>, vector<8x8x32xf32> -> vector<8x8x96xf32>
    %53 = vector.extract_strided_slice %47 {offsets = [1, 0, 0], sizes = [8, 10, 32], strides = [1, 1, 1]} : vector<10x10x32xf32> to vector<8x10x32xf32>
    %54 = vector.extract_strided_slice %53 {offsets = [0, 0, 0], sizes = [8, 8, 32], strides = [1, 1, 1]} : vector<8x10x32xf32> to vector<8x8x32xf32>
    %55 = vector.extract_strided_slice %53 {offsets = [0, 1, 0], sizes = [8, 8, 32], strides = [1, 1, 1]} : vector<8x10x32xf32> to vector<8x8x32xf32>
    %56 = vector.extract_strided_slice %53 {offsets = [0, 2, 0], sizes = [8, 8, 32], strides = [1, 1, 1]} : vector<8x10x32xf32> to vector<8x8x32xf32>
    %57 = tpu.concatenate %54, %55, %56 in 2 : vector<8x8x32xf32>, vector<8x8x32xf32>, vector<8x8x32xf32> -> vector<8x8x96xf32>
    %58 = vector.extract_strided_slice %47 {offsets = [2, 0, 0], sizes = [8, 10, 32], strides = [1, 1, 1]} : vector<10x10x32xf32> to vector<8x10x32xf32>
    %59 = vector.extract_strided_slice %58 {offsets = [0, 0, 0], sizes = [8, 8, 32], strides = [1, 1, 1]} : vector<8x10x32xf32> to vector<8x8x32xf32>
    %60 = vector.extract_strided_slice %58 {offsets = [0, 1, 0], sizes = [8, 8, 32], strides = [1, 1, 1]} : vector<8x10x32xf32> to vector<8x8x32xf32>
    %61 = vector.extract_strided_slice %58 {offsets = [0, 2, 0], sizes = [8, 8, 32], strides = [1, 1, 1]} : vector<8x10x32xf32> to vector<8x8x32xf32>
    %62 = tpu.concatenate %59, %60, %61 in 2 : vector<8x8x32xf32>, vector<8x8x32xf32>, vector<8x8x32xf32> -> vector<8x8x96xf32>
    %63 = tpu.concatenate %52, %57, %62 in 2 : vector<8x8x96xf32>, vector<8x8x96xf32>, vector<8x8x96xf32> -> vector<8x8x288xf32>
    %64 = vector.shape_cast %63 : vector<8x8x288xf32> to vector<64x288xf32>
    %65 = arith.truncf %64 : vector<64x288xf32> to vector<64x288xbf16>
    %cst_19 = arith.constant dense<0.000000e+00> : vector<64x32xf32>
    %66 = tpu.matmul %65, %42, %cst_19 {dimension_numbers = #tpu.dot_dimension_numbers<[1], [0], [0], [1], [0, 0, 1, 1], [], []>} : vector<64x288xbf16>, vector<288x32xbf16>, vector<64x32xf32> -> vector<64x32xf32>
    %67 = vector.broadcast %43 : vector<1x32xf32> to vector<64x32xf32>
    %68 = arith.addf %66, %67 : vector<64x32xf32>
    %cst_20 = arith.constant 1.000000e-01 : f32
    %69 = vector.broadcast %cst_20 : f32 to vector<64x32xf32>
    %70 = arith.mulf %69, %68 : vector<64x32xf32>
    %71 = arith.addf %3, %70 : vector<64x32xf32>
    %72 = vector.shape_cast %71 : vector<64x32xf32> to vector<8x8x32xf32>
    %73 = arith.truncf %72 : vector<8x8x32xf32> to vector<8x8x32xbf16>
    %c0_21 = arith.constant 0 : index
    %c0_22 = arith.constant 0 : index
    %c0_23 = arith.constant 0 : index
    %c0_24 = arith.constant 0 : index
    %74 = vector.load %arg6[%c0_21, %c0_22, %c0_23, %c0_24] : memref<1x8x8x32xbf16, #tpu.memory_space<vmem>>, vector<1x8x8x32xbf16>
    %75 = vector.shape_cast %74 : vector<1x8x8x32xbf16> to vector<8x8x32xbf16>
    %76 = vector.shape_cast %73 : vector<8x8x32xbf16> to vector<1x8x8x32xbf16>
    tpu.vector_store %arg6[%c0_21, %c0_22, %c0_23, %c0_24], %76 {strides = array<i32>} : memref<1x8x8x32xbf16, #tpu.memory_space<vmem>>, vector<1x8x8x32xbf16>,
    return
  }
  func.func @transform_0(%arg0: i32) -> (i32, i32, i32, i32) {
    %c0_i32 = arith.constant 0 : i32
    %c0_i32_0 = arith.constant 0 : i32
    %c0_i32_1 = arith.constant 0 : i32
    %c0_i32_2 = arith.constant 0 : i32
    return %arg0, %c0_i32, %c0_i32_0, %c0_i32_1 : i32, i32, i32, i32
  }
  func.func @transform_1(%arg0: i32) -> (i32, i32) {
    %c0_i32 = arith.constant 0 : i32
    %c0_i32_0 = arith.constant 0 : i32
    %c0_i32_1 = arith.constant 0 : i32
    return %c0_i32, %c0_i32_0 : i32, i32
  }
  func.func @transform_2(%arg0: i32) -> (i32, i32) {
    %c0_i32 = arith.constant 0 : i32
    %c0_i32_0 = arith.constant 0 : i32
    %c0_i32_1 = arith.constant 0 : i32
    return %c0_i32, %c0_i32_0 : i32, i32
  }
  func.func @transform_3(%arg0: i32) -> (i32, i32) {
    %c0_i32 = arith.constant 0 : i32
    %c0_i32_0 = arith.constant 0 : i32
    %c0_i32_1 = arith.constant 0 : i32
    return %c0_i32, %c0_i32_0 : i32, i32
  }
  func.func @transform_4(%arg0: i32) -> (i32, i32) {
    %c0_i32 = arith.constant 0 : i32
    %c0_i32_0 = arith.constant 0 : i32
    %c0_i32_1 = arith.constant 0 : i32
    return %c0_i32, %c0_i32_0 : i32, i32
  }
  func.func @transform_5(%arg0: i32) -> (i32, i32, i32, i32) {
    %c0_i32 = arith.constant 0 : i32
    %c0_i32_0 = arith.constant 0 : i32
    %c0_i32_1 = arith.constant 0 : i32
    %c0_i32_2 = arith.constant 0 : i32
    return %arg0, %c0_i32, %c0_i32_0, %c0_i32_1 : i32, i32, i32, i32
  }
}

module attributes {stable_mosaic.version = 11 : i64} {
  func.func @_conv1x1_kernel(%arg0: i32, %arg1: memref<1x8x8x32xbf16, #tpu.memory_space<vmem>>, %arg2: memref<32x3xbf16, #tpu.memory_space<vmem>>, %arg3: memref<1x3xf32, #tpu.memory_space<vmem>>, %arg4: memref<1x8x8x3xf32, #tpu.memory_space<vmem>>) attributes {dimension_semantics = [#tpu.dimension_semantics<parallel>], iteration_bounds = array<i64: 2>, scalar_prefetch = 0 : i64, scratch_operands = 0 : i64, tpu.core_type = #tpu.core_type<tc>, window_params = [{transform_indices = @transform_0, window_bounds = array<i64: 1, 8, 8, 32>}, {pipeline_mode = #tpu.pipeline_mode<synchronous>, transform_indices = @transform_1, window_bounds = array<i64: 32, 3>}, {pipeline_mode = #tpu.pipeline_mode<synchronous>, transform_indices = @transform_2, window_bounds = array<i64: 1, 3>}, {transform_indices = @transform_3, window_bounds = array<i64: 1, 8, 8, 3>}]} {
    %c0 = arith.constant 0 : index
    %c0_0 = arith.constant 0 : index
    %c0_1 = arith.constant 0 : index
    %c0_2 = arith.constant 0 : index
    %0 = vector.load %arg1[%c0, %c0_0, %c0_1, %c0_2] : memref<1x8x8x32xbf16, #tpu.memory_space<vmem>>, vector<1x8x8x32xbf16>
    %1 = vector.shape_cast %0 : vector<1x8x8x32xbf16> to vector<8x8x32xbf16>
    %2 = arith.extf %1 : vector<8x8x32xbf16> to vector<8x8x32xf32>
    %3 = vector.shape_cast %2 : vector<8x8x32xf32> to vector<64x32xf32>
    %4 = arith.truncf %3 : vector<64x32xf32> to vector<64x32xbf16>
    %c0_3 = arith.constant 0 : index
    %c0_4 = arith.constant 0 : index
    %5 = vector.load %arg2[%c0_3, %c0_4] : memref<32x3xbf16, #tpu.memory_space<vmem>>, vector<32x3xbf16>
    %cst = arith.constant dense<0.000000e+00> : vector<64x3xf32>
    %6 = tpu.matmul %4, %5, %cst {dimension_numbers = #tpu.dot_dimension_numbers<[1], [0], [0], [1], [0, 0, 1, 1], [], []>} : vector<64x32xbf16>, vector<32x3xbf16>, vector<64x3xf32> -> vector<64x3xf32>
    %c0_5 = arith.constant 0 : index
    %c0_6 = arith.constant 0 : index
    %7 = vector.load %arg3[%c0_5, %c0_6] : memref<1x3xf32, #tpu.memory_space<vmem>>, vector<1x3xf32>
    %8 = vector.broadcast %7 : vector<1x3xf32> to vector<64x3xf32>
    %9 = arith.addf %6, %8 : vector<64x3xf32>
    %10 = vector.shape_cast %9 : vector<64x3xf32> to vector<8x8x3xf32>
    %c0_7 = arith.constant 0 : index
    %c0_8 = arith.constant 0 : index
    %c0_9 = arith.constant 0 : index
    %c0_10 = arith.constant 0 : index
    %11 = vector.load %arg4[%c0_7, %c0_8, %c0_9, %c0_10] : memref<1x8x8x3xf32, #tpu.memory_space<vmem>>, vector<1x8x8x3xf32>
    %12 = vector.shape_cast %11 : vector<1x8x8x3xf32> to vector<8x8x3xf32>
    %13 = vector.shape_cast %10 : vector<8x8x3xf32> to vector<1x8x8x3xf32>
    tpu.vector_store %arg4[%c0_7, %c0_8, %c0_9, %c0_10], %13 {strides = array<i32>} : memref<1x8x8x3xf32, #tpu.memory_space<vmem>>, vector<1x8x8x3xf32>,
    return
  }
  func.func @transform_0(%arg0: i32) -> (i32, i32, i32, i32) {
    %c0_i32 = arith.constant 0 : i32
    %c0_i32_0 = arith.constant 0 : i32
    %c0_i32_1 = arith.constant 0 : i32
    %c0_i32_2 = arith.constant 0 : i32
    return %arg0, %c0_i32, %c0_i32_0, %c0_i32_1 : i32, i32, i32, i32
  }
  func.func @transform_1(%arg0: i32) -> (i32, i32) {
    %c0_i32 = arith.constant 0 : i32
    %c0_i32_0 = arith.constant 0 : i32
    %c0_i32_1 = arith.constant 0 : i32
    return %c0_i32, %c0_i32_0 : i32, i32
  }
  func.func @transform_2(%arg0: i32) -> (i32, i32) {
    %c0_i32 = arith.constant 0 : i32
    %c0_i32_0 = arith.constant 0 : i32
    %c0_i32_1 = arith.constant 0 : i32
    return %c0_i32, %c0_i32_0 : i32, i32
  }
  func.func @transform_3(%arg0: i32) -> (i32, i32, i32, i32) {
    %c0_i32 = arith.constant 0 : i32
    %c0_i32_0 = arith.constant 0 : i32
    %c0_i32_1 = arith.constant 0 : i32
    %c0_i32_2 = arith.constant 0 : i32
    return %arg0, %c0_i32, %c0_i32_0, %c0_i32_1 : i32, i32, i32, i32
  }
}

</mosaic_0001>

<llo_original>
// kernel: _lambda_.10
$region0: #{_lambda_.10}
  #allocation0 [shape = 'u32[]', space=smem, size = 0x4, offset = 0x4, fixed_abs, tag = 'smem constant byte address 0x4 - core index']
  #allocation1 [shape = 'u32[144,128]{1,0:T(1,128)}', space=vmem, size = 0x12000, scoped, tag = 'internal scratch']
  %s0 = inlined_call_operand.vmem [shape: bf16[2,16,16,16], index: 0, kind: input, shape index: {}]
  %s1 = inlined_call_operand.vmem [shape: bf16[2,8,8,16], index: 1, kind: output, shape index: {}]
  %s2 = sld [smem:[#allocation0]]
  $region37: #{_lambda_.10} parent=0
    _
  %s4 = ssub.s32 1, %s2
  %s5 = scalar_select 0, %s4, %s2
  loop: start=0, step=1, limit=4
  $region2: #{_lambda_.10} parent=0 // loop_pre_header
    _
  $region3: #{_lambda_.10} parent=0 // loop_header
    %s7 = sphi 0, %s11
    %p8 = scmp.ge.s32.totalorder %s7, 4
    %s17 = sphi 0, %s19
    %s20 = sphi 0, %s17
    %s21 = sphi 0, %s20
    %s37 = sphi 0, %s21
    %s43 = sphi 0, %s45
    %s46 = sphi 0, %s43
    %s47 = sphi 0, %s46
    %s63 = sphi 0, %s47
  $region4: #{_lambda_.10} parent=0 // loop_header_branch
    %10 = sbr.rel (%p8) target = $region8
  $region5: #{_lambda_.10} parent=0 // loop_body
    %s12 = ssub.s32 %s7, 1
    %s13 = ssub.s32 %s7, 2
    %s14 = sadd.s32 %s7, 1
    %s15 = ssub.s32 %s7, %s14
    %p16 = scmp.eq.s32.totalorder %s15, 0
    %s18 = sadd.s32 %s17, 1
    %s19 = scalar_select %p16, %s17, %s18
    %p22 = pneg %p16
    %p23 = scmp.eq.s32.totalorder %s7, 1
    %p24 = por %p22, %p23
    %p25 = scmp.ne.s32.totalorder %s17, %s20
    %p26 = scmp.eq.s32.totalorder %s7, 0
    %p27 = por %p25, %p26
    %p28 = scmp.ne.s32.totalorder %s17, %s20
    %p29 = scmp.eq.s32.totalorder %s12, 1
    %p30 = por %p28, %p29
    %p31 = scmp.ne.s32.totalorder %s20, %s21
    %p32 = scmp.eq.s32.totalorder %s12, 0
    %p33 = por %p31, %p32
    %p34 = scmp.ne.s32.totalorder %s20, %s21
    %p35 = scmp.eq.s32.totalorder %s13, 1
    %p36 = por %p34, %p35
    %p38 = scmp.ne.s32.totalorder %s21, %s37
    %p39 = scmp.eq.s32.totalorder %s13, 0
    %p40 = por %p38, %p39
    %s41 = ssub.s32 %s7, %s14
    %p42 = scmp.eq.s32.totalorder %s41, 0
    %s44 = sadd.s32 %s43, 1
    %s45 = scalar_select %p42, %s43, %s44
    %p48 = pneg %p42
    %p49 = scmp.eq.s32.totalorder %s7, 1
    %p50 = por %p48, %p49
    %p51 = scmp.ne.s32.totalorder %s43, %s46
    %p52 = scmp.eq.s32.totalorder %s7, 0
    %p53 = por %p51, %p52
    %p54 = scmp.ne.s32.totalorder %s43, %s46
    %p55 = scmp.eq.s32.totalorder %s12, 1
    %p56 = por %p54, %p55
    %p57 = scmp.ne.s32.totalorder %s46, %s47
    %p58 = scmp.eq.s32.totalorder %s12, 0
    %p59 = por %p57, %p58
    %p60 = scmp.ne.s32.totalorder %s46, %s47
    %p61 = scmp.eq.s32.totalorder %s13, 1
    %p62 = por %p60, %p61
    %p64 = scmp.ne.s32.totalorder %s47, %s63
    %p65 = scmp.eq.s32.totalorder %s13, 0
    %p66 = por %p64, %p65
    %p67 = scmp.le.s32.totalorder 1, %s7
    %p68 = scmp.lt.s32.totalorder %s7, 3
    %p69 = pnand %p67, %p68
    %p70 = pneg %p69
    // Predicated region
    $region9: #{_lambda_.10} parent=5 // pred_check
      _
    $region10: #{_lambda_.10} parent=5 // pred_check_branch
      %72 = sbr.rel (%p69) target = $region12
    $region11: #{_lambda_.10} parent=5 // pred_region
      %s73 = ssub.s32 %s7, 1
    $region12: #{_lambda_.10} parent=5 // pred_fallthru
      _
    %p74 = scmp.lt.s32.totalorder %s7, 2
    // Predicated region
    $region13: #{_lambda_.10} parent=5 // pred_check
      %p75 = pneg %p74
    $region14: #{_lambda_.10} parent=5 // pred_check_branch
      %77 = sbr.rel (%p75) target = $region16
    $region15: #{_lambda_.10} parent=5 // pred_region
      // Predicated region
      $region17: #{_lambda_.10} parent=15 // pred_check
        %p78 = pneg %p27
      $region18: #{_lambda_.10} parent=15 // pred_check_branch
        %80 = sbr.rel (%p78) target = $region20
      $region19: #{_lambda_.10} parent=15 // pred_region
        %p81 = scmp.lt.s32.totalorder %s7, 1
        %s82 = scalar_select %p81, %s7, 1
        %s83 = smul.addr %s82, 32
        %s84 = smul.addr %s83, 4
        %s85 = scalar_lea.vmem %s0, %s84
      $region20: #{_lambda_.10} parent=15 // pred_fallthru
        _
    $region16: #{_lambda_.10} parent=5 // pred_fallthru
      _
    %p86 = scmp.le.s32.totalorder 1, %s7
    %p87 = scmp.lt.s32.totalorder %s7, 3
    %p88 = pnand %p86, %p87
    %p89 = pneg %p88
    // Predicated region
    $region21: #{_lambda_.10} parent=5 // pred_check
      _
    $region22: #{_lambda_.10} parent=5 // pred_check_branch
      %91 = sbr.rel (%p88) target = $region24
    $region23: #{_lambda_.10} parent=5 // pred_region
      %s92 = ssub.s32 %s7, 1
      %p93 = scmp.lt.s32.totalorder %s12, 1
      %s94 = scalar_select %p93, %s12, 1
      %s95 = smul.addr %s94, 32
      %s96 = smul.addr %s95, 4
      %s97 = scalar_lea.vmem %s0, %s96
      %p98 = pneg %p33
      %p99 = pneg %p30
      %p100 = pneg %p59
      %p101 = pneg %p56
      %p102 = scmp.lt.s32.totalorder %s12, 1
      %s103 = scalar_select %p102, %s12, 1
      %s104 = smul.addr %s103, 8
      %s105 = smul.addr %s104, 4
      %s106 = scalar_lea.vmem %s1, %s105
      %p107 = scmp.lt.s32.totalorder %s12, 1
      %s108 = scalar_select %p107, %s12, 1
      %s109 = smul.addr %s108, 32
      %s110 = smul.addr %s109, 4
      %s111 = scalar_lea.vmem %s0, %s110
      %p112 = scmp.lt.s32.totalorder %s12, 1
      %s113 = scalar_select %p112, %s12, 1
      %s114 = smul.addr %s113, 8
      %s115 = smul.addr %s114, 4
      %s116 = scalar_lea.vmem %s1, %s115
      %v117 = vld [vmem:[%s111] sm:$0xf]
      %v118 = vld [vmem:[%s111 + $0x4] sm:$0xf]
      %v119 = vld [vmem:[%s111 + $0x8] sm:$0xf]
      %v120 = vld [vmem:[%s111 + $0xc] sm:$0xf]
      %v121 = vld [vmem:[%s111 + $0x10] sm:$0xf]
      %v122 = vld [vmem:[%s111 + $0x14] sm:$0xf]
      %v123 = vld [vmem:[%s111 + $0x18] sm:$0xf]
      %v124 = vld [vmem:[%s111 + $0x1c] sm:$0xf]
      %v125 = vld [vmem:[%s111 + $0x20] sm:$0xf]
      %v126 = vld [vmem:[%s111 + $0x24] sm:$0xf]
      %v127 = vld [vmem:[%s111 + $0x28] sm:$0xf]
      %v128 = vld [vmem:[%s111 + $0x2c] sm:$0xf]
      %v129 = vld [vmem:[%s111 + $0x30] sm:$0xf]
      %v130 = vld [vmem:[%s111 + $0x34] sm:$0xf]
      %v131 = vld [vmem:[%s111 + $0x38] sm:$0xf]
      %v132 = vld [vmem:[%s111 + $0x3c] sm:$0xf]
      %v133 = vld [vmem:[%s111 + $0x40] sm:$0xf]
      %v134 = vld [vmem:[%s111 + $0x44] sm:$0xf]
      %v135 = vld [vmem:[%s111 + $0x48] sm:$0xf]
      %v136 = vld [vmem:[%s111 + $0x4c] sm:$0xf]
      %v137 = vld [vmem:[%s111 + $0x50] sm:$0xf]
      %v138 = vld [vmem:[%s111 + $0x54] sm:$0xf]
      %v139 = vld [vmem:[%s111 + $0x58] sm:$0xf]
      %v140 = vld [vmem:[%s111 + $0x5c] sm:$0xf]
      %v141 = vld [vmem:[%s111 + $0x60] sm:$0xf]
      %v142 = vld [vmem:[%s111 + $0x64] sm:$0xf]
      %v143 = vld [vmem:[%s111 + $0x68] sm:$0xf]
      %v144 = vld [vmem:[%s111 + $0x6c] sm:$0xf]
      %v145 = vld [vmem:[%s111 + $0x70] sm:$0xf]
      %v146 = vld [vmem:[%s111 + $0x74] sm:$0xf]
      %v147 = vld [vmem:[%s111 + $0x78] sm:$0xf]
      %v148 = vld [vmem:[%s111 + $0x7c] sm:$0xf]
      %v149 = vunpack.c.l.bf16 %v117
      %v150 = vunpack.c.l.bf16 %v118
      %v151 = vunpack.c.l.bf16 %v119
      %v152 = vunpack.c.l.bf16 %v120
      %v153 = vunpack.c.l.bf16 %v121
      %v154 = vunpack.c.l.bf16 %v122
      %v155 = vunpack.c.l.bf16 %v123
      %v156 = vunpack.c.l.bf16 %v124
      %v157 = vunpack.c.l.bf16 %v125
      %v158 = vunpack.c.l.bf16 %v126
      %v159 = vunpack.c.l.bf16 %v127
      %v160 = vunpack.c.l.bf16 %v128
      %v161 = vunpack.c.l.bf16 %v129
      %v162 = vunpack.c.l.bf16 %v130
      %v163 = vunpack.c.l.bf16 %v131
      %v164 = vunpack.c.l.bf16 %v132
      %v165 = vunpack.c.l.bf16 %v133
      %v166 = vunpack.c.l.bf16 %v134
      %v167 = vunpack.c.l.bf16 %v135
      %v168 = vunpack.c.l.bf16 %v136
      %v169 = vunpack.c.l.bf16 %v137
      %v170 = vunpack.c.l.bf16 %v138
      %v171 = vunpack.c.l.bf16 %v139
      %v172 = vunpack.c.l.bf16 %v140
      %v173 = vunpack.c.l.bf16 %v141
      %v174 = vunpack.c.l.bf16 %v142
      %v175 = vunpack.c.l.bf16 %v143
      %v176 = vunpack.c.l.bf16 %v144
      %v177 = vunpack.c.l.bf16 %v145
      %v178 = vunpack.c.l.bf16 %v146
      %v179 = vunpack.c.l.bf16 %v147
      %v180 = vunpack.c.l.bf16 %v148
      %v181 = vadd.f32 %v149, %v151
      %v182 = vadd.f32 %v150, %v152
      %v183 = vadd.f32 %v153, %v155
      %v184 = vadd.f32 %v154, %v156
      %v185 = vadd.f32 %v157, %v159
      %v186 = vadd.f32 %v158, %v160
      %v187 = vadd.f32 %v161, %v163
      %v188 = vadd.f32 %v162, %v164
      %v189 = vadd.f32 %v165, %v167
      %v190 = vadd.f32 %v166, %v168
      %v191 = vadd.f32 %v169, %v171
      %v192 = vadd.f32 %v170, %v172
      %v193 = vadd.f32 %v173, %v175
      %v194 = vadd.f32 %v174, %v176
      %v195 = vadd.f32 %v177, %v179
      %v196 = vadd.f32 %v178, %v180
      %v197 = vadd.f32 %v181, 0.0
      %v198 = vadd.f32 %v182, 0.0
      %v199 = vadd.f32 %v183, %v151
      %v200 = vadd.f32 %v184, %v152
      %v201 = vadd.f32 %v185, %v155
      %v202 = vadd.f32 %v186, %v156
      %v203 = vadd.f32 %v187, %v159
      %v204 = vadd.f32 %v188, %v160
      %v205 = vadd.f32 %v189, %v163
      %v206 = vadd.f32 %v190, %v164
      %v207 = vadd.f32 %v191, %v167
      %v208 = vadd.f32 %v192, %v168
      %v209 = vadd.f32 %v193, %v171
      %v210 = vadd.f32 %v194, %v172
      %v211 = vadd.f32 %v195, %v175
      %v212 = vadd.f32 %v196, %v176
      %v213 = vlaneseq
      %v214 = vshrl.u32 %v213, 7
      %v215 = vlaneseq
      %v216 = vand.u32 %v215, 127
      %v217 = vmul.u32 %v214, 2
      %v218 = vsub.s32 %v216, %v217
      %vm219 = vcmp.ge.s32.totalorder %v218, 4294967295
      %vm220 = vcmp.le.s32.totalorder %v218, 1
      %vm221 = vmand %vm219, %vm220
      %v222 = vsel %vm221, 1, 0
      %v223 = vcvt.s32.f32 %v222
      %vm224 = vcmask 130048
      %v226 = vsel %vm224, %v223, 0
      %228 = vmatprep.subr.mxu0 0.0
      %229 = vmatpush1.msra.mxu0 0.0
      %230 = vmatprep.subr.mxu0 0.0
      %231 = vmatpush1.msra.mxu0 0.0
      %232 = vmatprep.subr.mxu0 0.0
      %233 = vmatpush1.msra.mxu0 0.0
      %234 = vmatprep.subr.mxu0 0.0
      %235 = vmatpush1.msra.mxu0 0.0
      %236 = vmatprep.subr.mxu0 0.0
      %237 = vmatpush1.msra.mxu0 0.0
      %238 = vmatprep.subr.mxu0 0.0
      %239 = vmatpush1.msra.mxu0 0.0
      %240 = vmatprep.subr.mxu0 0.0
      %241 = vmatpush1.msra.mxu0 0.0
      %242 = vmatprep.subr.mxu0 0.0
      %243 = vmatpush1.msra.mxu0 0.0
      %244 = vmatprep.subr.mxu0 0.0
      %245 = vmatpush1.msra.mxu0 0.0
      %246 = vmatprep.subr.mxu0 0.0
      %247 = vmatpush1.msra.mxu0 0.0
      %248 = vmatprep.subr.mxu0 0.0
      %249 = vmatpush1.msra.mxu0 0.0
      %250 = vmatprep.subr.mxu0 0.0
      %251 = vmatpush1.msra.mxu0 0.0
      %252 = vmatprep.subr.mxu0 0.0
      %253 = vmatpush1.msra.mxu0 0.0
      %254 = vmatprep.subr.mxu0 0.0
      %255 = vmatpush1.msra.mxu0 0.0
      %256 = vmatprep.subr.mxu0 0.0
      %257 = vmatpush1.msra.mxu0 %v198
      %258 = vmatprep.subr.mxu0 0.0
      %259 = vmatpush1.msra.mxu0 %v197
      %260 = vmatprep.subr.mxu0 0.0
      %261 = vmatpush2.msra.mxu0 0.0
      %262 = vmatprep.subr.mxu0 0.0
      %263 = vmatpush2.msra.mxu0 0.0
      %264 = vmatprep.subr.mxu0 0.0
      %265 = vmatpush2.msra.mxu0 0.0
      %266 = vmatprep.subr.mxu0 0.0
      %267 = vmatpush2.msra.mxu0 0.0
      %268 = vmatprep.subr.mxu0 0.0
      %269 = vmatpush2.msra.mxu0 0.0
      %270 = vmatprep.subr.mxu0 0.0
      %271 = vmatpush2.msra.mxu0 0.0
      %272 = vmatprep.subr.mxu0 0.0
      %273 = vmatpush2.msra.mxu0 0.0
      %274 = vmatprep.subr.mxu0 0.0
      %275 = vmatpush2.msra.mxu0 0.0
      %276 = vmatprep.subr.mxu0 0.0
      %277 = vmatpush2.msra.mxu0 0.0
      %278 = vmatprep.subr.mxu0 0.0
      %279 = vmatpush2.msra.mxu0 0.0
      %280 = vmatprep.subr.mxu0 0.0
      %281 = vmatpush2.msra.mxu0 0.0
      %282 = vmatprep.subr.mxu0 0.0
      %283 = vmatpush2.msra.mxu0 0.0
      %284 = vmatprep.subr.mxu0 0.0
      %285 = vmatpush2.msra.mxu0 0.0
      %286 = vmatprep.subr.mxu0 0.0
      %287 = vmatpush2.msra.mxu0 0.0
      %288 = vmatprep.subr.mxu0 0.0
      %289 = vmatpush2.msra.mxu0 0.0
      %290 = vmatprep.subr.mxu0 0.0
      %291 = vmatpush2.msra.mxu0 0.0
      %292 = vmatprep.mubr.f32.mxu0 0.0
      %293 = vmatmul.mubr.f32.gmra.mxu0 %v226
      %v294 = vpop.f32.mrf.mxu0
      %v295 = vadd.f32 0.0, %v294
      %v296 = vpop.f32.mrf.mxu0
      %297 = vdwg.mxu0
      %298 = vmatprep.subr.mxu0 0.0
      %299 = vmatpush1.msra.mxu0 0.0
      %300 = vmatprep.subr.mxu0 0.0
      %301 = vmatpush1.msra.mxu0 0.0
      %302 = vmatprep.subr.mxu0 0.0
      %303 = vmatpush1.msra.mxu0 0.0
      %304 = vmatprep.subr.mxu0 0.0
      %305 = vmatpush1.msra.mxu0 0.0
      %306 = vmatprep.subr.mxu0 0.0
      %307 = vmatpush1.msra.mxu0 0.0
      %308 = vmatprep.subr.mxu0 0.0
      %309 = vmatpush1.msra.mxu0 0.0
      %310 = vmatprep.subr.mxu0 0.0
      %311 = vmatpush1.msra.mxu0 0.0
      %312 = vmatprep.subr.mxu0 0.0
      %313 = vmatpush1.msra.mxu0 0.0
      %314 = vmatprep.subr.mxu0 0.0
      %315 = vmatpush1.msra.mxu0 0.0
      %316 = vmatprep.subr.mxu0 0.0
      %317 = vmatpush1.msra.mxu0 0.0
      %318 = vmatprep.subr.mxu0 0.0
      %319 = vmatpush1.msra.mxu0 0.0
      %320 = vmatprep.subr.mxu0 0.0
      %321 = vmatpush1.msra.mxu0 0.0
      %322 = vmatprep.subr.mxu0 0.0
      %323 = vmatpush1.msra.mxu0 0.0
      %324 = vmatprep.subr.mxu0 0.0
      %325 = vmatpush1.msra.mxu0 0.0
      %326 = vmatprep.subr.mxu0 0.0
      %327 = vmatpush1.msra.mxu0 %v200
      %328 = vmatprep.subr.mxu0 0.0
      %329 = vmatpush1.msra.mxu0 %v199
      %330 = vmatprep.subr.mxu0 0.0
      %331 = vmatpush2.msra.mxu0 0.0
      %332 = vmatprep.subr.mxu0 0.0
      %333 = vmatpush2.msra.mxu0 0.0
      %334 = vmatprep.subr.mxu0 0.0
      %335 = vmatpush2.msra.mxu0 0.0
      %336 = vmatprep.subr.mxu0 0.0
      %337 = vmatpush2.msra.mxu0 0.0
      %338 = vmatprep.subr.mxu0 0.0
      %339 = vmatpush2.msra.mxu0 0.0
      %340 = vmatprep.subr.mxu0 0.0
      %341 = vmatpush2.msra.mxu0 0.0
      %342 = vmatprep.subr.mxu0 0.0
      %343 = vmatpush2.msra.mxu0 0.0
      %344 = vmatprep.subr.mxu0 0.0
      %345 = vmatpush2.msra.mxu0 0.0
      %346 = vmatprep.subr.mxu0 0.0
      %347 = vmatpush2.msra.mxu0 0.0
      %348 = vmatprep.subr.mxu0 0.0
      %349 = vmatpush2.msra.mxu0 0.0
      %350 = vmatprep.subr.mxu0 0.0
      %351 = vmatpush2.msra.mxu0 0.0
      %352 = vmatprep.subr.mxu0 0.0
      %353 = vmatpush2.msra.mxu0 0.0
      %354 = vmatprep.subr.mxu0 0.0
      %355 = vmatpush2.msra.mxu0 0.0
      %356 = vmatprep.subr.mxu0 0.0
      %357 = vmatpush2.msra.mxu0 0.0
      %358 = vmatprep.subr.mxu0 0.0
      %359 = vmatpush2.msra.mxu0 0.0
      %360 = vmatprep.subr.mxu0 0.0
      %361 = vmatpush2.msra.mxu0 0.0
      %362 = vmatprep.mubr.f32.mxu0 0.0
      %363 = vmatmul.mubr.f32.gmra.mxu0 %v226
      %v364 = vpop.f32.mrf.mxu0
      %v365 = vadd.f32 0.0, %v364
      %v366 = vpop.f32.mrf.mxu0
      %367 = vdwg.mxu0
      %368 = vmatprep.subr.mxu0 0.0
      %369 = vmatpush1.msra.mxu0 0.0
      %370 = vmatprep.subr.mxu0 0.0
      %371 = vmatpush1.msra.mxu0 0.0
      %372 = vmatprep.subr.mxu0 0.0
      %373 = vmatpush1.msra.mxu0 0.0
      %374 = vmatprep.subr.mxu0 0.0
      %375 = vmatpush1.msra.mxu0 0.0
      %376 = vmatprep.subr.mxu0 0.0
      %377 = vmatpush1.msra.mxu0 0.0
      %378 = vmatprep.subr.mxu0 0.0
      %379 = vmatpush1.msra.mxu0 0.0
      %380 = vmatprep.subr.mxu0 0.0
      %381 = vmatpush1.msra.mxu0 0.0
      %382 = vmatprep.subr.mxu0 0.0
      %383 = vmatpush1.msra.mxu0 0.0
      %384 = vmatprep.subr.mxu0 0.0
      %385 = vmatpush1.msra.mxu0 0.0
      %386 = vmatprep.subr.mxu0 0.0
      %387 = vmatpush1.msra.mxu0 0.0
      %388 = vmatprep.subr.mxu0 0.0
      %389 = vmatpush1.msra.mxu0 0.0
      %390 = vmatprep.subr.mxu0 0.0
      %391 = vmatpush1.msra.mxu0 0.0
      %392 = vmatprep.subr.mxu0 0.0
      %393 = vmatpush1.msra.mxu0 0.0
      %394 = vmatprep.subr.mxu0 0.0
      %395 = vmatpush1.msra.mxu0 0.0
      %396 = vmatprep.subr.mxu0 0.0
      %397 = vmatpush1.msra.mxu0 %v202
      %398 = vmatprep.subr.mxu0 0.0
      %399 = vmatpush1.msra.mxu0 %v201
      %400 = vmatprep.subr.mxu0 0.0
      %401 = vmatpush2.msra.mxu0 0.0
      %402 = vmatprep.subr.mxu0 0.0
      %403 = vmatpush2.msra.mxu0 0.0
      %404 = vmatprep.subr.mxu0 0.0
      %405 = vmatpush2.msra.mxu0 0.0
      %406 = vmatprep.subr.mxu0 0.0
      %407 = vmatpush2.msra.mxu0 0.0
      %408 = vmatprep.subr.mxu0 0.0
      %409 = vmatpush2.msra.mxu0 0.0
      %410 = vmatprep.subr.mxu0 0.0
      %411 = vmatpush2.msra.mxu0 0.0
      %412 = vmatprep.subr.mxu0 0.0
      %413 = vmatpush2.msra.mxu0 0.0
      %414 = vmatprep.subr.mxu0 0.0
      %415 = vmatpush2.msra.mxu0 0.0
      %416 = vmatprep.subr.mxu0 0.0
      %417 = vmatpush2.msra.mxu0 0.0
      %418 = vmatprep.subr.mxu0 0.0
      %419 = vmatpush2.msra.mxu0 0.0
      %420 = vmatprep.subr.mxu0 0.0
      %421 = vmatpush2.msra.mxu0 0.0
      %422 = vmatprep.subr.mxu0 0.0
      %423 = vmatpush2.msra.mxu0 0.0
      %424 = vmatprep.subr.mxu0 0.0
      %425 = vmatpush2.msra.mxu0 0.0
      %426 = vmatprep.subr.mxu0 0.0
      %427 = vmatpush2.msra.mxu0 0.0
      %428 = vmatprep.subr.mxu0 0.0
      %429 = vmatpush2.msra.mxu0 0.0
      %430 = vmatprep.subr.mxu0 0.0
      %431 = vmatpush2.msra.mxu0 0.0
      %432 = vmatprep.mubr.f32.mxu0 0.0
      %433 = vmatmul.mubr.f32.gmra.mxu0 %v226
      %v434 = vpop.f32.mrf.mxu0
      %v435 = vadd.f32 0.0, %v434
      %v436 = vpop.f32.mrf.mxu0
      %437 = vdwg.mxu0
      %438 = vmatprep.subr.mxu0 0.0
      %439 = vmatpush1.msra.mxu0 0.0
      %440 = vmatprep.subr.mxu0 0.0
      %441 = vmatpush1.msra.mxu0 0.0
      %442 = vmatprep.subr.mxu0 0.0
      %443 = vmatpush1.msra.mxu0 0.0
      %444 = vmatprep.subr.mxu0 0.0
      %445 = vmatpush1.msra.mxu0 0.0
      %446 = vmatprep.subr.mxu0 0.0
      %447 = vmatpush1.msra.mxu0 0.0
      %448 = vmatprep.subr.mxu0 0.0
      %449 = vmatpush1.msra.mxu0 0.0
      %450 = vmatprep.subr.mxu0 0.0
      %451 = vmatpush1.msra.mxu0 0.0
      %452 = vmatprep.subr.mxu0 0.0
      %453 = vmatpush1.msra.mxu0 0.0
      %454 = vmatprep.subr.mxu0 0.0
      %455 = vmatpush1.msra.mxu0 0.0
      %456 = vmatprep.subr.mxu0 0.0
      %457 = vmatpush1.msra.mxu0 0.0
      %458 = vmatprep.subr.mxu0 0.0
      %459 = vmatpush1.msra.mxu0 0.0
      %460 = vmatprep.subr.mxu0 0.0
      %461 = vmatpush1.msra.mxu0 0.0
      %462 = vmatprep.subr.mxu0 0.0
      %463 = vmatpush1.msra.mxu0 0.0
      %464 = vmatprep.subr.mxu0 0.0
      %465 = vmatpush1.msra.mxu0 0.0
      %466 = vmatprep.subr.mxu0 0.0
      %467 = vmatpush1.msra.mxu0 %v204
      %468 = vmatprep.subr.mxu0 0.0
      %469 = vmatpush1.msra.mxu0 %v203
      %470 = vmatprep.subr.mxu0 0.0
      %471 = vmatpush2.msra.mxu0 0.0
      %472 = vmatprep.subr.mxu0 0.0
      %473 = vmatpush2.msra.mxu0 0.0
      %474 = vmatprep.subr.mxu0 0.0
      %475 = vmatpush2.msra.mxu0 0.0
      %476 = vmatprep.subr.mxu0 0.0
      %477 = vmatpush2.msra.mxu0 0.0
      %478 = vmatprep.subr.mxu0 0.0
      %479 = vmatpush2.msra.mxu0 0.0
      %480 = vmatprep.subr.mxu0 0.0
      %481 = vmatpush2.msra.mxu0 0.0
      %482 = vmatprep.subr.mxu0 0.0
      %483 = vmatpush2.msra.mxu0 0.0
      %484 = vmatprep.subr.mxu0 0.0
      %485 = vmatpush2.msra.mxu0 0.0
      %486 = vmatprep.subr.mxu0 0.0
      %487 = vmatpush2.msra.mxu0 0.0
      %488 = vmatprep.subr.mxu0 0.0
      %489 = vmatpush2.msra.mxu0 0.0
      %490 = vmatprep.subr.mxu0 0.0
      %491 = vmatpush2.msra.mxu0 0.0
      %492 = vmatprep.subr.mxu0 0.0
      %493 = vmatpush2.msra.mxu0 0.0
      %494 = vmatprep.subr.mxu0 0.0
      %495 = vmatpush2.msra.mxu0 0.0
      %496 = vmatprep.subr.mxu0 0.0
      %497 = vmatpush2.msra.mxu0 0.0
      %498 = vmatprep.subr.mxu0 0.0
      %499 = vmatpush2.msra.mxu0 0.0
      %500 = vmatprep.subr.mxu0 0.0
      %501 = vmatpush2.msra.mxu0 0.0
      %502 = vmatprep.mubr.f32.mxu0 0.0
      %503 = vmatmul.mubr.f32.gmra.mxu0 %v226
      %v504 = vpop.f32.mrf.mxu0
      %v505 = vadd.f32 0.0, %v504
      %v506 = vpop.f32.mrf.mxu0
      %507 = vdwg.mxu0
      %508 = vmatprep.subr.mxu0 0.0
      %509 = vmatpush1.msra.mxu0 0.0
      %510 = vmatprep.subr.mxu0 0.0
      %511 = vmatpush1.msra.mxu0 0.0
      %512 = vmatprep.subr.mxu0 0.0
      %513 = vmatpush1.msra.mxu0 0.0
      %514 = vmatprep.subr.mxu0 0.0
      %515 = vmatpush1.msra.mxu0 0.0
      %516 = vmatprep.subr.mxu0 0.0
      %517 = vmatpush1.msra.mxu0 0.0
      %518 = vmatprep.subr.mxu0 0.0
      %519 = vmatpush1.msra.mxu0 0.0
      %520 = vmatprep.subr.mxu0 0.0
      %521 = vmatpush1.msra.mxu0 0.0
      %522 = vmatprep.subr.mxu0 0.0
      %523 = vmatpush1.msra.mxu0 0.0
      %524 = vmatprep.subr.mxu0 0.0
      %525 = vmatpush1.msra.mxu0 0.0
      %526 = vmatprep.subr.mxu0 0.0
      %527 = vmatpush1.msra.mxu0 0.0
      %528 = vmatprep.subr.mxu0 0.0
      %529 = vmatpush1.msra.mxu0 0.0
      %530 = vmatprep.subr.mxu0 0.0
      %531 = vmatpush1.msra.mxu0 0.0
      %532 = vmatprep.subr.mxu0 0.0
      %533 = vmatpush1.msra.mxu0 0.0
      %534 = vmatprep.subr.mxu0 0.0
      %535 = vmatpush1.msra.mxu0 0.0
      %536 = vmatprep.subr.mxu0 0.0
      %537 = vmatpush1.msra.mxu0 %v206
      %538 = vmatprep.subr.mxu0 0.0
      %539 = vmatpush1.msra.mxu0 %v205
      %540 = vmatprep.subr.mxu0 0.0
      %541 = vmatpush2.msra.mxu0 0.0
      %542 = vmatprep.subr.mxu0 0.0
      %543 = vmatpush2.msra.mxu0 0.0
      %544 = vmatprep.subr.mxu0 0.0
      %545 = vmatpush2.msra.mxu0 0.0
      %546 = vmatprep.subr.mxu0 0.0
      %547 = vmatpush2.msra.mxu0 0.0
      %548 = vmatprep.subr.mxu0 0.0
      %549 = vmatpush2.msra.mxu0 0.0
      %550 = vmatprep.subr.mxu0 0.0
      %551 = vmatpush2.msra.mxu0 0.0
      %552 = vmatprep.subr.mxu0 0.0
      %553 = vmatpush2.msra.mxu0 0.0
      %554 = vmatprep.subr.mxu0 0.0
      %555 = vmatpush2.msra.mxu0 0.0
      %556 = vmatprep.subr.mxu0 0.0
      %557 = vmatpush2.msra.mxu0 0.0
      %558 = vmatprep.subr.mxu0 0.0
      %559 = vmatpush2.msra.mxu0 0.0
      %560 = vmatprep.subr.mxu0 0.0
      %561 = vmatpush2.msra.mxu0 0.0
      %562 = vmatprep.subr.mxu0 0.0
      %563 = vmatpush2.msra.mxu0 0.0
      %564 = vmatprep.subr.mxu0 0.0
      %565 = vmatpush2.msra.mxu0 0.0
      %566 = vmatprep.subr.mxu0 0.0
      %567 = vmatpush2.msra.mxu0 0.0
      %568 = vmatprep.subr.mxu0 0.0
      %569 = vmatpush2.msra.mxu0 0.0
      %570 = vmatprep.subr.mxu0 0.0
      %571 = vmatpush2.msra.mxu0 0.0
      %572 = vmatprep.mubr.f32.mxu0 0.0
      %573 = vmatmul.mubr.f32.gmra.mxu0 %v226
      %v574 = vpop.f32.mrf.mxu0
      %v575 = vadd.f32 0.0, %v574
      %v576 = vpop.f32.mrf.mxu0
      %577 = vdwg.mxu0
      %578 = vmatprep.subr.mxu0 0.0
      %579 = vmatpush1.msra.mxu0 0.0
      %580 = vmatprep.subr.mxu0 0.0
      %581 = vmatpush1.msra.mxu0 0.0
      %582 = vmatprep.subr.mxu0 0.0
      %583 = vmatpush1.msra.mxu0 0.0
      %584 = vmatprep.subr.mxu0 0.0
      %585 = vmatpush1.msra.mxu0 0.0
      %586 = vmatprep.subr.mxu0 0.0
      %587 = vmatpush1.msra.mxu0 0.0
      %588 = vmatprep.subr.mxu0 0.0
      %589 = vmatpush1.msra.mxu0 0.0
      %590 = vmatprep.subr.mxu0 0.0
      %591 = vmatpush1.msra.mxu0 0.0
      %592 = vmatprep.subr.mxu0 0.0
      %593 = vmatpush1.msra.mxu0 0.0
      %594 = vmatprep.subr.mxu0 0.0
      %595 = vmatpush1.msra.mxu0 0.0
      %596 = vmatprep.subr.mxu0 0.0
      %597 = vmatpush1.msra.mxu0 0.0
      %598 = vmatprep.subr.mxu0 0.0
      %599 = vmatpush1.msra.mxu0 0.0
      %600 = vmatprep.subr.mxu0 0.0
      %601 = vmatpush1.msra.mxu0 0.0
      %602 = vmatprep.subr.mxu0 0.0
      %603 = vmatpush1.msra.mxu0 0.0
      %604 = vmatprep.subr.mxu0 0.0
      %605 = vmatpush1.msra.mxu0 0.0
      %606 = vmatprep.subr.mxu0 0.0
      %607 = vmatpush1.msra.mxu0 %v208
      %608 = vmatprep.subr.mxu0 0.0
      %609 = vmatpush1.msra.mxu0 %v207
      %610 = vmatprep.subr.mxu0 0.0
      %611 = vmatpush2.msra.mxu0 0.0
      %612 = vmatprep.subr.mxu0 0.0
      %613 = vmatpush2.msra.mxu0 0.0
      %614 = vmatprep.subr.mxu0 0.0
      %615 = vmatpush2.msra.mxu0 0.0
      %616 = vmatprep.subr.mxu0 0.0
      %617 = vmatpush2.msra.mxu0 0.0
      %618 = vmatprep.subr.mxu0 0.0
      %619 = vmatpush2.msra.mxu0 0.0
      %620 = vmatprep.subr.mxu0 0.0
      %621 = vmatpush2.msra.mxu0 0.0
      %622 = vmatprep.subr.mxu0 0.0
      %623 = vmatpush2.msra.mxu0 0.0
      %624 = vmatprep.subr.mxu0 0.0
      %625 = vmatpush2.msra.mxu0 0.0
      %626 = vmatprep.subr.mxu0 0.0
      %627 = vmatpush2.msra.mxu0 0.0
      %628 = vmatprep.subr.mxu0 0.0
      %629 = vmatpush2.msra.mxu0 0.0
      %630 = vmatprep.subr.mxu0 0.0
      %631 = vmatpush2.msra.mxu0 0.0
      %632 = vmatprep.subr.mxu0 0.0
      %633 = vmatpush2.msra.mxu0 0.0
      %634 = vmatprep.subr.mxu0 0.0
      %635 = vmatpush2.msra.mxu0 0.0
      %636 = vmatprep.subr.mxu0 0.0
      %637 = vmatpush2.msra.mxu0 0.0
      %638 = vmatprep.subr.mxu0 0.0
      %639 = vmatpush2.msra.mxu0 0.0
      %640 = vmatprep.subr.mxu0 0.0
      %641 = vmatpush2.msra.mxu0 0.0
      %642 = vmatprep.mubr.f32.mxu0 0.0
      %643 = vmatmul.mubr.f32.gmra.mxu0 %v226
      %v644 = vpop.f32.mrf.mxu0
      %v645 = vadd.f32 0.0, %v644
      %v646 = vpop.f32.mrf.mxu0
      %647 = vdwg.mxu0
      %648 = vmatprep.subr.mxu0 0.0
      %649 = vmatpush1.msra.mxu0 0.0
      %650 = vmatprep.subr.mxu0 0.0
      %651 = vmatpush1.msra.mxu0 0.0
      %652 = vmatprep.subr.mxu0 0.0
      %653 = vmatpush1.msra.mxu0 0.0
      %654 = vmatprep.subr.mxu0 0.0
      %655 = vmatpush1.msra.mxu0 0.0
      %656 = vmatprep.subr.mxu0 0.0
      %657 = vmatpush1.msra.mxu0 0.0
      %658 = vmatprep.subr.mxu0 0.0
      %659 = vmatpush1.msra.mxu0 0.0
      %660 = vmatprep.subr.mxu0 0.0
      %661 = vmatpush1.msra.mxu0 0.0
      %662 = vmatprep.subr.mxu0 0.0
      %663 = vmatpush1.msra.mxu0 0.0
      %664 = vmatprep.subr.mxu0 0.0
      %665 = vmatpush1.msra.mxu0 0.0
      %666 = vmatprep.subr.mxu0 0.0
      %667 = vmatpush1.msra.mxu0 0.0
      %668 = vmatprep.subr.mxu0 0.0
      %669 = vmatpush1.msra.mxu0 0.0
      %670 = vmatprep.subr.mxu0 0.0
      %671 = vmatpush1.msra.mxu0 0.0
      %672 = vmatprep.subr.mxu0 0.0
      %673 = vmatpush1.msra.mxu0 0.0
      %674 = vmatprep.subr.mxu0 0.0
      %675 = vmatpush1.msra.mxu0 0.0
      %676 = vmatprep.subr.mxu0 0.0
      %677 = vmatpush1.msra.mxu0 %v210
      %678 = vmatprep.subr.mxu0 0.0
      %679 = vmatpush1.msra.mxu0 %v209
      %680 = vmatprep.subr.mxu0 0.0
      %681 = vmatpush2.msra.mxu0 0.0
      %682 = vmatprep.subr.mxu0 0.0
      %683 = vmatpush2.msra.mxu0 0.0
      %684 = vmatprep.subr.mxu0 0.0
      %685 = vmatpush2.msra.mxu0 0.0
      %686 = vmatprep.subr.mxu0 0.0
      %687 = vmatpush2.msra.mxu0 0.0
      %688 = vmatprep.subr.mxu0 0.0
      %689 = vmatpush2.msra.mxu0 0.0
      %690 = vmatprep.subr.mxu0 0.0
      %691 = vmatpush2.msra.mxu0 0.0
      %692 = vmatprep.subr.mxu0 0.0
      %693 = vmatpush2.msra.mxu0 0.0
      %694 = vmatprep.subr.mxu0 0.0
      %695 = vmatpush2.msra.mxu0 0.0
      %696 = vmatprep.subr.mxu0 0.0
      %697 = vmatpush2.msra.mxu0 0.0
      %698 = vmatprep.subr.mxu0 0.0
      %699 = vmatpush2.msra.mxu0 0.0
      %700 = vmatprep.subr.mxu0 0.0
      %701 = vmatpush2.msra.mxu0 0.0
      %702 = vmatprep.subr.mxu0 0.0
      %703 = vmatpush2.msra.mxu0 0.0
      %704 = vmatprep.subr.mxu0 0.0
      %705 = vmatpush2.msra.mxu0 0.0
      %706 = vmatprep.subr.mxu0 0.0
      %707 = vmatpush2.msra.mxu0 0.0
      %708 = vmatprep.subr.mxu0 0.0
      %709 = vmatpush2.msra.mxu0 0.0
      %710 = vmatprep.subr.mxu0 0.0
      %711 = vmatpush2.msra.mxu0 0.0
      %712 = vmatprep.mubr.f32.mxu0 0.0
      %713 = vmatmul.mubr.f32.gmra.mxu0 %v226
      %v714 = vpop.f32.mrf.mxu0
      %v715 = vadd.f32 0.0, %v714
      %v716 = vpop.f32.mrf.mxu0
      %717 = vdwg.mxu0
      %718 = vmatprep.subr.mxu0 0.0
      %719 = vmatpush1.msra.mxu0 0.0
      %720 = vmatprep.subr.mxu0 0.0
      %721 = vmatpush1.msra.mxu0 0.0
      %722 = vmatprep.subr.mxu0 0.0
      %723 = vmatpush1.msra.mxu0 0.0
      %724 = vmatprep.subr.mxu0 0.0
      %725 = vmatpush1.msra.mxu0 0.0
      %726 = vmatprep.subr.mxu0 0.0
      %727 = vmatpush1.msra.mxu0 0.0
      %728 = vmatprep.subr.mxu0 0.0
      %729 = vmatpush1.msra.mxu0 0.0
      %730 = vmatprep.subr.mxu0 0.0
      %731 = vmatpush1.msra.mxu0 0.0
      %732 = vmatprep.subr.mxu0 0.0
      %733 = vmatpush1.msra.mxu0 0.0
      %734 = vmatprep.subr.mxu0 0.0
      %735 = vmatpush1.msra.mxu0 0.0
      %736 = vmatprep.subr.mxu0 0.0
      %737 = vmatpush1.msra.mxu0 0.0
      %738 = vmatprep.subr.mxu0 0.0
      %739 = vmatpush1.msra.mxu0 0.0
      %740 = vmatprep.subr.mxu0 0.0
      %741 = vmatpush1.msra.mxu0 0.0
      %742 = vmatprep.subr.mxu0 0.0
      %743 = vmatpush1.msra.mxu0 0.0
      %744 = vmatprep.subr.mxu0 0.0
      %745 = vmatpush1.msra.mxu0 0.0
      %746 = vmatprep.subr.mxu0 0.0
      %747 = vmatpush1.msra.mxu0 %v212
      %748 = vmatprep.subr.mxu0 0.0
      %749 = vmatpush1.msra.mxu0 %v211
      %750 = vmatprep.subr.mxu0 0.0
      %751 = vmatpush2.msra.mxu0 0.0
      %752 = vmatprep.subr.mxu0 0.0
      %753 = vmatpush2.msra.mxu0 0.0
      %754 = vmatprep.subr.mxu0 0.0
      %755 = vmatpush2.msra.mxu0 0.0
      %756 = vmatprep.subr.mxu0 0.0
      %757 = vmatpush2.msra.mxu0 0.0
      %758 = vmatprep.subr.mxu0 0.0
      %759 = vmatpush2.msra.mxu0 0.0
      %760 = vmatprep.subr.mxu0 0.0
      %761 = vmatpush2.msra.mxu0 0.0
      %762 = vmatprep.subr.mxu0 0.0
      %763 = vmatpush2.msra.mxu0 0.0
      %764 = vmatprep.subr.mxu0 0.0
      %765 = vmatpush2.msra.mxu0 0.0
      %766 = vmatprep.subr.mxu0 0.0
      %767 = vmatpush2.msra.mxu0 0.0
      %768 = vmatprep.subr.mxu0 0.0
      %769 = vmatpush2.msra.mxu0 0.0
      %770 = vmatprep.subr.mxu0 0.0
      %771 = vmatpush2.msra.mxu0 0.0
      %772 = vmatprep.subr.mxu0 0.0
      %773 = vmatpush2.msra.mxu0 0.0
      %774 = vmatprep.subr.mxu0 0.0
      %775 = vmatpush2.msra.mxu0 0.0
      %776 = vmatprep.subr.mxu0 0.0
      %777 = vmatpush2.msra.mxu0 0.0
      %778 = vmatprep.subr.mxu0 0.0
      %779 = vmatpush2.msra.mxu0 0.0
      %780 = vmatprep.subr.mxu0 0.0
      %781 = vmatpush2.msra.mxu0 0.0
      %782 = vmatprep.mubr.f32.mxu0 0.0
      %783 = vmatmul.mubr.f32.gmra.mxu0 %v226
      %v784 = vpop.f32.mrf.mxu0
      %v785 = vadd.f32 0.0, %v784
      %v786 = vpop.f32.mrf.mxu0
      %787 = vdwg.mxu0
      %v788 = vmul.f32 %v295, 0.11111111
      %v789 = vmul.f32 %v365, 0.11111111
      %v790 = vmul.f32 %v435, 0.11111111
      %v791 = vmul.f32 %v505, 0.11111111
      %v792 = vmul.f32 %v575, 0.11111111
      %v793 = vmul.f32 %v645, 0.11111111
      %v794 = vmul.f32 %v715, 0.11111111
      %v795 = vmul.f32 %v785, 0.11111111
      %v796 = vpack.c.bf16 %v788, %v788
      %v797 = vpack.c.bf16 %v789, %v789
      %v798 = vpack.c.bf16 %v790, %v790
      %v799 = vpack.c.bf16 %v791, %v791
      %v800 = vpack.c.bf16 %v792, %v792
      %v801 = vpack.c.bf16 %v793, %v793
      %v802 = vpack.c.bf16 %v794, %v794
      %v803 = vpack.c.bf16 %v795, %v795
      %vm804 = vcmask 125952
      %805 = vst.msk [vmem:[%s116] sm:$0xf] %vm804, %v796
      %806 = vst.msk [vmem:[%s116 + $0x4] sm:$0xf] %vm804, %v797
      %807 = vst.msk [vmem:[%s116 + $0x8] sm:$0xf] %vm804, %v798
      %808 = vst.msk [vmem:[%s116 + $0xc] sm:$0xf] %vm804, %v799
      %809 = vst.msk [vmem:[%s116 + $0x10] sm:$0xf] %vm804, %v800
      %810 = vst.msk [vmem:[%s116 + $0x14] sm:$0xf] %vm804, %v801
      %811 = vst.msk [vmem:[%s116 + $0x18] sm:$0xf] %vm804, %v802
      %812 = vst.msk [vmem:[%s116 + $0x1c] sm:$0xf] %vm804, %v803
      %p813 = scmp.lt.s32.totalorder %s12, 1
      %s814 = scalar_select %p813, %s12, 1
      %s815 = smul.addr %s814, 8
      %s816 = smul.addr %s815, 4
      %s817 = scalar_lea.vmem %s1, %s816
      // Predicated region
      $region25: #{_lambda_.10} parent=23 // pred_check
        %p818 = pneg %p56
      $region26: #{_lambda_.10} parent=23 // pred_check_branch
        %820 = sbr.rel (%p818) target = $region28
      $region27: #{_lambda_.10} parent=23 // pred_region
        _
      $region28: #{_lambda_.10} parent=23 // pred_fallthru
        _
    $region24: #{_lambda_.10} parent=5 // pred_fallthru
      _
    %p821 = scmp.le.s32.totalorder 2, %s7
    // Predicated region
    $region29: #{_lambda_.10} parent=5 // pred_check
      %p822 = pneg %p821
    $region30: #{_lambda_.10} parent=5 // pred_check_branch
      %824 = sbr.rel (%p822) target = $region32
    $region31: #{_lambda_.10} parent=5 // pred_region
      %s825 = ssub.s32 %s7, 2
      // Predicated region
      $region33: #{_lambda_.10} parent=31 // pred_check
        %p826 = pneg %p62
      $region34: #{_lambda_.10} parent=31 // pred_check_branch
        %828 = sbr.rel (%p826) target = $region36
      $region35: #{_lambda_.10} parent=31 // pred_region
        %p829 = scmp.lt.s32.totalorder %s13, 1
        %s830 = scalar_select %p829, %s13, 1
        %s831 = smul.addr %s830, 8
        %s832 = smul.addr %s831, 4
        %s833 = scalar_lea.vmem %s1, %s832
      $region36: #{_lambda_.10} parent=31 // pred_fallthru
        _
    $region32: #{_lambda_.10} parent=5 // pred_fallthru
      _
  $region6: #{_lambda_.10} parent=0 // loop_footer
    %s11 = sadd.s32 1, %s7
  $region7: #{_lambda_.10} parent=0 // loop_footer_branch
    %6 = sbr.rel target = $region3
  $region8: #{_lambda_.10} parent=0 // loop_exit
    _

// kernel: _lambda_.7
$region0: #{_lambda_.7}
  #allocation0 [shape = 'u32[]', space=smem, size = 0x4, offset = 0x4, fixed_abs, tag = 'smem constant byte address 0x4 - core index']
  #allocation1 [shape = 'u32[144,128]{1,0:T(1,128)}', space=vmem, size = 0x12000, scoped, tag = 'internal scratch']
  %s0 = inlined_call_operand.vmem [shape: bf16[2,16,16,4], index: 0, kind: input, shape index: {}]
  %s1 = inlined_call_operand.vmem [shape: bf16[36,8], index: 1, kind: input, shape index: {}]
  %s2 = inlined_call_operand.vmem [shape: f32[1,8], index: 2, kind: input, shape index: {}]
  %s3 = inlined_call_operand.vmem [shape: bf16[2,16,16,8], index: 3, kind: output, shape index: {}]
  %s4 = sld [smem:[#allocation0]]
  $region45: #{_lambda_.7} parent=0
    _
  %s6 = ssub.s32 1, %s4
  %s7 = scalar_select 0, %s6, %s4
  loop: start=0, step=1, limit=4
  $region2: #{_lambda_.7} parent=0 // loop_pre_header
    _
  $region3: #{_lambda_.7} parent=0 // loop_header
    %s9 = sphi 0, %s13
    %p10 = scmp.ge.s32.totalorder %s9, 4
    %s19 = sphi 0, %s21
    %s22 = sphi 0, %s19
    %s23 = sphi 0, %s22
    %s39 = sphi 0, %s23
    %s43 = sphi 0, %s43
    %s45 = sphi 0, %s43
    %s46 = sphi 0, %s45
    %s60 = sphi 0, %s46
    %s64 = sphi 0, %s64
    %s66 = sphi 0, %s64
    %s67 = sphi 0, %s66
    %s81 = sphi 0, %s67
    %s87 = sphi 0, %s89
    %s90 = sphi 0, %s87
    %s91 = sphi 0, %s90
    %s107 = sphi 0, %s91
  $region4: #{_lambda_.7} parent=0 // loop_header_branch
    %12 = sbr.rel (%p10) target = $region8
  $region5: #{_lambda_.7} parent=0 // loop_body
    %s14 = ssub.s32 %s9, 1
    %s15 = ssub.s32 %s9, 2
    %s16 = sadd.s32 %s9, 1
    %s17 = ssub.s32 %s9, %s16
    %p18 = scmp.eq.s32.totalorder %s17, 0
    %s20 = sadd.s32 %s19, 1
    %s21 = scalar_select %p18, %s19, %s20
    %p24 = pneg %p18
    %p25 = scmp.eq.s32.totalorder %s9, 1
    %p26 = por %p24, %p25
    %p27 = scmp.ne.s32.totalorder %s19, %s22
    %p28 = scmp.eq.s32.totalorder %s9, 0
    %p29 = por %p27, %p28
    %p30 = scmp.ne.s32.totalorder %s19, %s22
    %p31 = scmp.eq.s32.totalorder %s14, 1
    %p32 = por %p30, %p31
    %p33 = scmp.ne.s32.totalorder %s22, %s23
    %p34 = scmp.eq.s32.totalorder %s14, 0
    %p35 = por %p33, %p34
    %p36 = scmp.ne.s32.totalorder %s22, %s23
    %p37 = scmp.eq.s32.totalorder %s15, 1
    %p38 = por %p36, %p37
    %p40 = scmp.ne.s32.totalorder %s23, %s39
    %p41 = scmp.eq.s32.totalorder %s15, 0
    %p42 = por %p40, %p41
    %s44 = sadd.s32 %s43, 1
    %p47 = scmp.eq.s32.totalorder %s9, 1
    %p48 = scmp.ne.s32.totalorder %s43, %s45
    %p49 = scmp.eq.s32.totalorder %s9, 0
    %p50 = por %p48, %p49
    %p51 = scmp.ne.s32.totalorder %s43, %s45
    %p52 = scmp.eq.s32.totalorder %s14, 1
    %p53 = por %p51, %p52
    %p54 = scmp.ne.s32.totalorder %s45, %s46
    %p55 = scmp.eq.s32.totalorder %s14, 0
    %p56 = por %p54, %p55
    %p57 = scmp.ne.s32.totalorder %s45, %s46
    %p58 = scmp.eq.s32.totalorder %s15, 1
    %p59 = por %p57, %p58
    %p61 = scmp.ne.s32.totalorder %s46, %s60
    %p62 = scmp.eq.s32.totalorder %s15, 0
    %p63 = por %p61, %p62
    %s65 = sadd.s32 %s64, 1
    %p68 = scmp.eq.s32.totalorder %s9, 1
    %p69 = scmp.ne.s32.totalorder %s64, %s66
    %p70 = scmp.eq.s32.totalorder %s9, 0
    %p71 = por %p69, %p70
    %p72 = scmp.ne.s32.totalorder %s64, %s66
    %p73 = scmp.eq.s32.totalorder %s14, 1
    %p74 = por %p72, %p73
    %p75 = scmp.ne.s32.totalorder %s66, %s67
    %p76 = scmp.eq.s32.totalorder %s14, 0
    %p77 = por %p75, %p76
    %p78 = scmp.ne.s32.totalorder %s66, %s67
    %p79 = scmp.eq.s32.totalorder %s15, 1
    %p80 = por %p78, %p79
    %p82 = scmp.ne.s32.totalorder %s67, %s81
    %p83 = scmp.eq.s32.totalorder %s15, 0
    %p84 = por %p82, %p83
    %s85 = ssub.s32 %s9, %s16
    %p86 = scmp.eq.s32.totalorder %s85, 0
    %s88 = sadd.s32 %s87, 1
    %s89 = scalar_select %p86, %s87, %s88
    %p92 = pneg %p86
    %p93 = scmp.eq.s32.totalorder %s9, 1
    %p94 = por %p92, %p93
    %p95 = scmp.ne.s32.totalorder %s87, %s90
    %p96 = scmp.eq.s32.totalorder %s9, 0
    %p97 = por %p95, %p96
    %p98 = scmp.ne.s32.totalorder %s87, %s90
    %p99 = scmp.eq.s32.totalorder %s14, 1
    %p100 = por %p98, %p99
    %p101 = scmp.ne.s32.totalorder %s90, %s91
    %p102 = scmp.eq.s32.totalorder %s14, 0
    %p103 = por %p101, %p102
    %p104 = scmp.ne.s32.totalorder %s90, %s91
    %p105 = scmp.eq.s32.totalorder %s15, 1
    %p106 = por %p104, %p105
    %p108 = scmp.ne.s32.totalorder %s91, %s107
    %p109 = scmp.eq.s32.totalorder %s15, 0
    %p110 = por %p108, %p109
    %p111 = scmp.le.s32.totalorder 1, %s9
    %p112 = scmp.lt.s32.totalorder %s9, 3
    %p113 = pnand %p111, %p112
    %p114 = pneg %p113
    // Predicated region
    $region9: #{_lambda_.7} parent=5 // pred_check
      _
    $region10: #{_lambda_.7} parent=5 // pred_check_branch
      %116 = sbr.rel (%p113) target = $region12
    $region11: #{_lambda_.7} parent=5 // pred_region
      %s117 = ssub.s32 %s9, 1
      // Predicated region
      $region13: #{_lambda_.7} parent=11 // pred_check
        %p118 = pneg %p56
      $region14: #{_lambda_.7} parent=11 // pred_check_branch
        %120 = sbr.rel (%p118) target = $region16
      $region15: #{_lambda_.7} parent=11 // pred_region
        _
      $region16: #{_lambda_.7} parent=11 // pred_fallthru
        _
      // Predicated region
      $region17: #{_lambda_.7} parent=11 // pred_check
        %p121 = pneg %p77
      $region18: #{_lambda_.7} parent=11 // pred_check_branch
        %123 = sbr.rel (%p121) target = $region20
      $region19: #{_lambda_.7} parent=11 // pred_region
        _
      $region20: #{_lambda_.7} parent=11 // pred_fallthru
        _
    $region12: #{_lambda_.7} parent=5 // pred_fallthru
      _
    %p124 = scmp.lt.s32.totalorder %s9, 2
    // Predicated region
    $region21: #{_lambda_.7} parent=5 // pred_check
      %p125 = pneg %p124
    $region22: #{_lambda_.7} parent=5 // pred_check_branch
      %127 = sbr.rel (%p125) target = $region24
    $region23: #{_lambda_.7} parent=5 // pred_region
      // Predicated region
      $region25: #{_lambda_.7} parent=23 // pred_check
        %p128 = pneg %p29
      $region26: #{_lambda_.7} parent=23 // pred_check_branch
        %130 = sbr.rel (%p128) target = $region28
      $region27: #{_lambda_.7} parent=23 // pred_region
        %p131 = scmp.lt.s32.totalorder %s9, 1
        %s132 = scalar_select %p131, %s9, 1
        %s133 = smul.addr %s132, 32
        %s134 = smul.addr %s133, 4
        %s135 = scalar_lea.vmem %s0, %s134
      $region28: #{_lambda_.7} parent=23 // pred_fallthru
        _
    $region24: #{_lambda_.7} parent=5 // pred_fallthru
      _
    %p136 = scmp.le.s32.totalorder 1, %s9
    %p137 = scmp.lt.s32.totalorder %s9, 3
    %p138 = pnand %p136, %p137
    %p139 = pneg %p138
    // Predicated region
    $region29: #{_lambda_.7} parent=5 // pred_check
      _
    $region30: #{_lambda_.7} parent=5 // pred_check_branch
      %141 = sbr.rel (%p138) target = $region32
    $region31: #{_lambda_.7} parent=5 // pred_region
      %s142 = ssub.s32 %s9, 1
      %p143 = scmp.lt.s32.totalorder %s14, 1
      %s144 = scalar_select %p143, %s14, 1
      %s145 = smul.addr %s144, 32
      %s146 = smul.addr %s145, 4
      %s147 = scalar_lea.vmem %s0, %s146
      %p148 = pneg %p35
      %p149 = pneg %p32
      %p150 = pneg %p56
      %p151 = pneg %p53
      %p152 = pneg %p77
      %p153 = pneg %p74
      %p154 = pneg %p103
      %p155 = pneg %p100
      %p156 = scmp.lt.s32.totalorder %s14, 1
      %s157 = scalar_select %p156, %s14, 1
      %s158 = smul.addr %s157, 32
      %s159 = smul.addr %s158, 4
      %s160 = scalar_lea.vmem %s3, %s159
      %p161 = scmp.lt.s32.totalorder %s14, 1
      %s162 = scalar_select %p161, %s14, 1
      %s163 = smul.addr %s162, 32
      %s164 = smul.addr %s163, 4
      %s165 = scalar_lea.vmem %s0, %s164
      %p166 = scmp.lt.s32.totalorder %s14, 1
      %s167 = scalar_select %p166, %s14, 1
      %s168 = smul.addr %s167, 32
      %s169 = smul.addr %s168, 4
      %s170 = scalar_lea.vmem %s3, %s169
      %v172 = vld [vmem:[%s165] sm:$0xf]
      %v173 = vld [vmem:[%s165 + $0x4] sm:$0xf]
      %v174 = vld [vmem:[%s165 + $0x8] sm:$0xf]
      %v175 = vld [vmem:[%s165 + $0xc] sm:$0xf]
      %v176 = vld [vmem:[%s165 + $0x10] sm:$0xf]
      %v177 = vld [vmem:[%s165 + $0x14] sm:$0xf]
      %v178 = vld [vmem:[%s165 + $0x18] sm:$0xf]
      %v179 = vld [vmem:[%s165 + $0x1c] sm:$0xf]
      %v180 = vld [vmem:[%s165 + $0x20] sm:$0xf]
      %v181 = vld [vmem:[%s165 + $0x24] sm:$0xf]
      %v182 = vld [vmem:[%s165 + $0x28] sm:$0xf]
      %v183 = vld [vmem:[%s165 + $0x2c] sm:$0xf]
      %v184 = vld [vmem:[%s165 + $0x30] sm:$0xf]
      %v185 = vld [vmem:[%s165 + $0x34] sm:$0xf]
      %v186 = vld [vmem:[%s165 + $0x38] sm:$0xf]
      %v187 = vld [vmem:[%s165 + $0x3c] sm:$0xf]
      %v188 = vld [vmem:[%s165 + $0x40] sm:$0xf]
      %v189 = vld [vmem:[%s165 + $0x44] sm:$0xf]
      %v190 = vld [vmem:[%s165 + $0x48] sm:$0xf]
      %v191 = vld [vmem:[%s165 + $0x4c] sm:$0xf]
      %v192 = vld [vmem:[%s165 + $0x50] sm:$0xf]
      %v193 = vld [vmem:[%s165 + $0x54] sm:$0xf]
      %v194 = vld [vmem:[%s165 + $0x58] sm:$0xf]
      %v195 = vld [vmem:[%s165 + $0x5c] sm:$0xf]
      %v196 = vld [vmem:[%s165 + $0x60] sm:$0xf]
      %v197 = vld [vmem:[%s165 + $0x64] sm:$0xf]
      %v198 = vld [vmem:[%s165 + $0x68] sm:$0xf]
      %v199 = vld [vmem:[%s165 + $0x6c] sm:$0xf]
      %v200 = vld [vmem:[%s165 + $0x70] sm:$0xf]
      %v201 = vld [vmem:[%s165 + $0x74] sm:$0xf]
      %v202 = vld [vmem:[%s165 + $0x78] sm:$0xf]
      %v203 = vld [vmem:[%s165 + $0x7c] sm:$0xf]
      %v204 = vunpack.c.l.bf16 %v172
      %v205 = vunpack.c.l.bf16 %v173
      %v206 = vunpack.c.l.bf16 %v174
      %v207 = vunpack.c.l.bf16 %v175
      %v208 = vunpack.c.l.bf16 %v176
      %v209 = vunpack.c.l.bf16 %v177
      %v210 = vunpack.c.l.bf16 %v178
      %v211 = vunpack.c.l.bf16 %v179
      %v212 = vunpack.c.l.bf16 %v180
      %v213 = vunpack.c.l.bf16 %v181
      %v214 = vunpack.c.l.bf16 %v182
      %v215 = vunpack.c.l.bf16 %v183
      %v216 = vunpack.c.l.bf16 %v184
      %v217 = vunpack.c.l.bf16 %v185
      %v218 = vunpack.c.l.bf16 %v186
      %v219 = vunpack.c.l.bf16 %v187
      %v220 = vunpack.c.l.bf16 %v188
      %v221 = vunpack.c.l.bf16 %v189
      %v222 = vunpack.c.l.bf16 %v190
      %v223 = vunpack.c.l.bf16 %v191
      %v224 = vunpack.c.l.bf16 %v192
      %v225 = vunpack.c.l.bf16 %v193
      %v226 = vunpack.c.l.bf16 %v194
      %v227 = vunpack.c.l.bf16 %v195
      %v228 = vunpack.c.l.bf16 %v196
      %v229 = vunpack.c.l.bf16 %v197
      %v230 = vunpack.c.l.bf16 %v198
      %v231 = vunpack.c.l.bf16 %v199
      %v232 = vunpack.c.l.bf16 %v200
      %v233 = vunpack.c.l.bf16 %v201
      %v234 = vunpack.c.l.bf16 %v202
      %v235 = vunpack.c.l.bf16 %v203
      %v236 = vld [vmem:[%s1] sm:$0xf]
      %v237 = vld [vmem:[%s1 + $0x4] sm:$0xf]
      %v238 = vld [vmem:[%s1 + $0x8] sm:$0xf]
      %v239 = vld [vmem:[%s1 + $0xc] sm:$0xf]
      %v240 = vld [vmem:[%s1 + $0x10] sm:$0x3]
      %v241 = vld [vmem:[%s2] sm:$0x1]
      %vm275 = vcmask 1040384
      %v276 = vrot.slane 0.0, 7
      %v277 = vsel %vm275, %v276, %v276
      %v278 = vrot.slane %v204, 7
      %v279 = vrot.slane %v205, 7
      %v280 = vsel %vm275, %v278, %v279
      %v281 = vrot.slane %v206, 7
      %v282 = vrot.slane %v207, 7
      %v283 = vsel %vm275, %v281, %v282
      %v284 = vrot.slane %v208, 7
      %v285 = vrot.slane %v209, 7
      %v286 = vsel %vm275, %v284, %v285
      %v287 = vrot.slane %v210, 7
      %v288 = vrot.slane %v211, 7
      %v289 = vsel %vm275, %v287, %v288
      %v290 = vrot.slane %v212, 7
      %v291 = vrot.slane %v213, 7
      %v292 = vsel %vm275, %v290, %v291
      %v293 = vrot.slane %v214, 7
      %v294 = vrot.slane %v215, 7
      %v295 = vsel %vm275, %v293, %v294
      %v296 = vrot.slane %v216, 7
      %v297 = vrot.slane %v217, 7
      %v298 = vsel %vm275, %v296, %v297
      %v299 = vrot.slane %v218, 7
      %v300 = vrot.slane %v219, 7
      %v301 = vsel %vm275, %v299, %v300
      %v302 = vrot.slane %v220, 7
      %v303 = vrot.slane %v221, 7
      %v304 = vsel %vm275, %v302, %v303
      %v305 = vrot.slane %v222, 7
      %v306 = vrot.slane %v223, 7
      %v307 = vsel %vm275, %v305, %v306
      %v308 = vrot.slane %v224, 7
      %v309 = vrot.slane %v225, 7
      %v310 = vsel %vm275, %v308, %v309
      %v311 = vrot.slane %v226, 7
      %v312 = vrot.slane %v227, 7
      %v313 = vsel %vm275, %v311, %v312
      %v314 = vrot.slane %v228, 7
      %v315 = vrot.slane %v229, 7
      %v316 = vsel %vm275, %v314, %v315
      %v317 = vrot.slane %v230, 7
      %v318 = vrot.slane %v231, 7
      %v319 = vsel %vm275, %v317, %v318
      %v320 = vrot.slane %v232, 7
      %v321 = vrot.slane %v233, 7
      %v322 = vsel %vm275, %v320, %v321
      %v323 = vrot.slane %v234, 7
      %v324 = vrot.slane %v235, 7
      %v325 = vsel %vm275, %v323, %v324
      %v376 = vsel %vm275, 0.0, %v276
      %v377 = vsel %vm275, 0.0, %v278
      %v378 = vsel %vm275, 0.0, %v281
      %v379 = vsel %vm275, 0.0, %v284
      %v380 = vsel %vm275, 0.0, %v287
      %v381 = vsel %vm275, 0.0, %v290
      %v382 = vsel %vm275, 0.0, %v293
      %v383 = vsel %vm275, 0.0, %v296
      %v384 = vsel %vm275, 0.0, %v299
      %v385 = vsel %vm275, 0.0, %v302
      %v386 = vsel %vm275, 0.0, %v305
      %v387 = vsel %vm275, 0.0, %v308
      %v388 = vsel %vm275, 0.0, %v311
      %v389 = vsel %vm275, 0.0, %v314
      %v390 = vsel %vm275, 0.0, %v317
      %v391 = vsel %vm275, 0.0, %v320
      %v392 = vsel %vm275, 0.0, %v323
      %v393 = vsel %vm275, %v276, 0.0
      %v394 = vsel %vm275, %v279, 0.0
      %v395 = vsel %vm275, %v282, 0.0
      %v396 = vsel %vm275, %v285, 0.0
      %v397 = vsel %vm275, %v288, 0.0
      %v398 = vsel %vm275, %v291, 0.0
      %v399 = vsel %vm275, %v294, 0.0
      %v400 = vsel %vm275, %v297, 0.0
      %v401 = vsel %vm275, %v300, 0.0
      %v402 = vsel %vm275, %v303, 0.0
      %v403 = vsel %vm275, %v306, 0.0
      %v404 = vsel %vm275, %v309, 0.0
      %v405 = vsel %vm275, %v312, 0.0
      %v406 = vsel %vm275, %v315, 0.0
      %v407 = vsel %vm275, %v318, 0.0
      %v408 = vsel %vm275, %v321, 0.0
      %v409 = vsel %vm275, %v324, 0.0
      %vm442 = vcmask 1046528
      %v443 = vrot.slane %v376, 1
      %v444 = vrot.slane %v277, 1
      %v445 = vsel %vm442, %v443, %v444
      %v446 = vrot.slane %v393, 1
      %v447 = vsel %vm442, %v444, %v446
      %v448 = vrot.slane %v377, 1
      %v449 = vrot.slane %v280, 1
      %v450 = vsel %vm442, %v448, %v449
      %v451 = vrot.slane %v394, 1
      %v452 = vsel %vm442, %v449, %v451
      %v453 = vrot.slane %v378, 1
      %v454 = vrot.slane %v283, 1
      %v455 = vsel %vm442, %v453, %v454
      %v456 = vrot.slane %v395, 1
      %v457 = vsel %vm442, %v454, %v456
      %v458 = vrot.slane %v379, 1
      %v459 = vrot.slane %v286, 1
      %v460 = vsel %vm442, %v458, %v459
      %v461 = vrot.slane %v396, 1
      %v462 = vsel %vm442, %v459, %v461
      %v463 = vrot.slane %v380, 1
      %v464 = vrot.slane %v289, 1
      %v465 = vsel %vm442, %v463, %v464
      %v466 = vrot.slane %v397, 1
      %v467 = vsel %vm442, %v464, %v466
      %v468 = vrot.slane %v381, 1
      %v469 = vrot.slane %v292, 1
      %v470 = vsel %vm442, %v468, %v469
      %v471 = vrot.slane %v398, 1
      %v472 = vsel %vm442, %v469, %v471
      %v473 = vrot.slane %v382, 1
      %v474 = vrot.slane %v295, 1
      %v475 = vsel %vm442, %v473, %v474
      %v476 = vrot.slane %v399, 1
      %v477 = vsel %vm442, %v474, %v476
      %v478 = vrot.slane %v383, 1
      %v479 = vrot.slane %v298, 1
      %v480 = vsel %vm442, %v478, %v479
      %v481 = vrot.slane %v400, 1
      %v482 = vsel %vm442, %v479, %v481
      %v483 = vrot.slane %v384, 1
      %v484 = vrot.slane %v301, 1
      %v485 = vsel %vm442, %v483, %v484
      %v486 = vrot.slane %v401, 1
      %v487 = vsel %vm442, %v484, %v486
      %v488 = vrot.slane %v385, 1
      %v489 = vrot.slane %v304, 1
      %v490 = vsel %vm442, %v488, %v489
      %v491 = vrot.slane %v402, 1
      %v492 = vsel %vm442, %v489, %v491
      %v493 = vrot.slane %v386, 1
      %v494 = vrot.slane %v307, 1
      %v495 = vsel %vm442, %v493, %v494
      %v496 = vrot.slane %v403, 1
      %v497 = vsel %vm442, %v494, %v496
      %v498 = vrot.slane %v387, 1
      %v499 = vrot.slane %v310, 1
      %v500 = vsel %vm442, %v498, %v499
      %v501 = vrot.slane %v404, 1
      %v502 = vsel %vm442, %v499, %v501
      %v503 = vrot.slane %v388, 1
      %v504 = vrot.slane %v313, 1
      %v505 = vsel %vm442, %v503, %v504
      %v506 = vrot.slane %v405, 1
      %v507 = vsel %vm442, %v504, %v506
      %v508 = vrot.slane %v389, 1
      %v509 = vrot.slane %v316, 1
      %v510 = vsel %vm442, %v508, %v509
      %v511 = vrot.slane %v406, 1
      %v512 = vsel %vm442, %v509, %v511
      %v513 = vrot.slane %v390, 1
      %v514 = vrot.slane %v319, 1
      %v515 = vsel %vm442, %v513, %v514
      %v516 = vrot.slane %v407, 1
      %v517 = vsel %vm442, %v514, %v516
      %v518 = vrot.slane %v391, 1
      %v519 = vrot.slane %v322, 1
      %v520 = vsel %vm442, %v518, %v519
      %v521 = vrot.slane %v408, 1
      %v522 = vsel %vm442, %v519, %v521
      %523 = vrot.lane.b32.xlu0 %v445, 4
      %v524 = vpop.permute.xlu0 %523
      %525 = vrot.lane.b32.xlu0 %v447, 4
      %v526 = vpop.permute.xlu0 %525
      %527 = vrot.lane.b32.xlu0 %v450, 4
      %v528 = vpop.permute.xlu0 %527
      %529 = vrot.lane.b32.xlu0 %v452, 4
      %v530 = vpop.permute.xlu0 %529
      %531 = vrot.lane.b32.xlu0 %v455, 4
      %v532 = vpop.permute.xlu0 %531
      %533 = vrot.lane.b32.xlu0 %v457, 4
      %v534 = vpop.permute.xlu0 %533
      %535 = vrot.lane.b32.xlu0 %v460, 4
      %v536 = vpop.permute.xlu0 %535
      %537 = vrot.lane.b32.xlu0 %v462, 4
      %v538 = vpop.permute.xlu0 %537
      %539 = vrot.lane.b32.xlu0 %v465, 4
      %v540 = vpop.permute.xlu0 %539
      %541 = vrot.lane.b32.xlu0 %v467, 4
      %v542 = vpop.permute.xlu0 %541
      %543 = vrot.lane.b32.xlu0 %v470, 4
      %v544 = vpop.permute.xlu0 %543
      %545 = vrot.lane.b32.xlu0 %v472, 4
      %v546 = vpop.permute.xlu0 %545
      %547 = vrot.lane.b32.xlu0 %v475, 4
      %v548 = vpop.permute.xlu0 %547
      %549 = vrot.lane.b32.xlu0 %v477, 4
      %v550 = vpop.permute.xlu0 %549
      %551 = vrot.lane.b32.xlu0 %v480, 4
      %v552 = vpop.permute.xlu0 %551
      %553 = vrot.lane.b32.xlu0 %v482, 4
      %v554 = vpop.permute.xlu0 %553
      %555 = vrot.lane.b32.xlu0 %v485, 4
      %v556 = vpop.permute.xlu0 %555
      %557 = vrot.lane.b32.xlu0 %v487, 4
      %v558 = vpop.permute.xlu0 %557
      %559 = vrot.lane.b32.xlu0 %v490, 4
      %v560 = vpop.permute.xlu0 %559
      %561 = vrot.lane.b32.xlu0 %v492, 4
      %v562 = vpop.permute.xlu0 %561
      %563 = vrot.lane.b32.xlu0 %v495, 4
      %v564 = vpop.permute.xlu0 %563
      %565 = vrot.lane.b32.xlu0 %v497, 4
      %v566 = vpop.permute.xlu0 %565
      %567 = vrot.lane.b32.xlu0 %v500, 4
      %v568 = vpop.permute.xlu0 %567
      %569 = vrot.lane.b32.xlu0 %v502, 4
      %v570 = vpop.permute.xlu0 %569
      %571 = vrot.lane.b32.xlu0 %v505, 4
      %v572 = vpop.permute.xlu0 %571
      %573 = vrot.lane.b32.xlu0 %v507, 4
      %v574 = vpop.permute.xlu0 %573
      %575 = vrot.lane.b32.xlu0 %v510, 4
      %v576 = vpop.permute.xlu0 %575
      %577 = vrot.lane.b32.xlu0 %v512, 4
      %v578 = vpop.permute.xlu0 %577
      %579 = vrot.lane.b32.xlu0 %v515, 4
      %v580 = vpop.permute.xlu0 %579
      %581 = vrot.lane.b32.xlu0 %v517, 4
      %v582 = vpop.permute.xlu0 %581
      %583 = vrot.lane.b32.xlu0 %v520, 4
      %v584 = vpop.permute.xlu0 %583
      %585 = vrot.lane.b32.xlu0 %v522, 4
      %v586 = vpop.permute.xlu0 %585
      %vm619 = vcmask 1045504
      %v620 = vrot.slane %v376, 2
      %v621 = vrot.slane %v277, 2
      %v622 = vsel %vm619, %v620, %v621
      %v623 = vrot.slane %v393, 2
      %v624 = vsel %vm619, %v621, %v623
      %v625 = vrot.slane %v377, 2
      %v626 = vrot.slane %v280, 2
      %v627 = vsel %vm619, %v625, %v626
      %v628 = vrot.slane %v394, 2
      %v629 = vsel %vm619, %v626, %v628
      %v630 = vrot.slane %v378, 2
      %v631 = vrot.slane %v283, 2
      %v632 = vsel %vm619, %v630, %v631
      %v633 = vrot.slane %v395, 2
      %v634 = vsel %vm619, %v631, %v633
      %v635 = vrot.slane %v379, 2
      %v636 = vrot.slane %v286, 2
      %v637 = vsel %vm619, %v635, %v636
      %v638 = vrot.slane %v396, 2
      %v639 = vsel %vm619, %v636, %v638
      %v640 = vrot.slane %v380, 2
      %v641 = vrot.slane %v289, 2
      %v642 = vsel %vm619, %v640, %v641
      %v643 = vrot.slane %v397, 2
      %v644 = vsel %vm619, %v641, %v643
      %v645 = vrot.slane %v381, 2
      %v646 = vrot.slane %v292, 2
      %v647 = vsel %vm619, %v645, %v646
      %v648 = vrot.slane %v398, 2
      %v649 = vsel %vm619, %v646, %v648
      %v650 = vrot.slane %v382, 2
      %v651 = vrot.slane %v295, 2
      %v652 = vsel %vm619, %v650, %v651
      %v653 = vrot.slane %v399, 2
      %v654 = vsel %vm619, %v651, %v653
      %v655 = vrot.slane %v383, 2
      %v656 = vrot.slane %v298, 2
      %v657 = vsel %vm619, %v655, %v656
      %v658 = vrot.slane %v400, 2
      %v659 = vsel %vm619, %v656, %v658
      %v660 = vrot.slane %v384, 2
      %v661 = vrot.slane %v301, 2
      %v662 = vsel %vm619, %v660, %v661
      %v663 = vrot.slane %v401, 2
      %v664 = vsel %vm619, %v661, %v663
      %v665 = vrot.slane %v385, 2
      %v666 = vrot.slane %v304, 2
      %v667 = vsel %vm619, %v665, %v666
      %v668 = vrot.slane %v402, 2
      %v669 = vsel %vm619, %v666, %v668
      %v670 = vrot.slane %v386, 2
      %v671 = vrot.slane %v307, 2
      %v672 = vsel %vm619, %v670, %v671
      %v673 = vrot.slane %v403, 2
      %v674 = vsel %vm619, %v671, %v673
      %v675 = vrot.slane %v387, 2
      %v676 = vrot.slane %v310, 2
      %v677 = vsel %vm619, %v675, %v676
      %v678 = vrot.slane %v404, 2
      %v679 = vsel %vm619, %v676, %v678
      %v680 = vrot.slane %v388, 2
      %v681 = vrot.slane %v313, 2
      %v682 = vsel %vm619, %v680, %v681
      %v683 = vrot.slane %v405, 2
      %v684 = vsel %vm619, %v681, %v683
      %v685 = vrot.slane %v389, 2
      %v686 = vrot.slane %v316, 2
      %v687 = vsel %vm619, %v685, %v686
      %v688 = vrot.slane %v406, 2
      %v689 = vsel %vm619, %v686, %v688
      %v690 = vrot.slane %v390, 2
      %v691 = vrot.slane %v319, 2
      %v692 = vsel %vm619, %v690, %v691
      %v693 = vrot.slane %v407, 2
      %v694 = vsel %vm619, %v691, %v693
      %v695 = vrot.slane %v391, 2
      %v696 = vrot.slane %v322, 2
      %v697 = vsel %vm619, %v695, %v696
      %v698 = vrot.slane %v408, 2
      %v699 = vsel %vm619, %v696, %v698
      %700 = vrot.lane.b32.xlu0 %v622, 8
      %v701 = vpop.permute.xlu0 %700
      %702 = vrot.lane.b32.xlu0 %v624, 8
      %v703 = vpop.permute.xlu0 %702
      %704 = vrot.lane.b32.xlu0 %v627, 8
      %v705 = vpop.permute.xlu0 %704
      %706 = vrot.lane.b32.xlu0 %v629, 8
      %v707 = vpop.permute.xlu0 %706
      %708 = vrot.lane.b32.xlu0 %v632, 8
      %v709 = vpop.permute.xlu0 %708
      %710 = vrot.lane.b32.xlu0 %v634, 8
      %v711 = vpop.permute.xlu0 %710
      %712 = vrot.lane.b32.xlu0 %v637, 8
      %v713 = vpop.permute.xlu0 %712
      %714 = vrot.lane.b32.xlu0 %v639, 8
      %v715 = vpop.permute.xlu0 %714
      %716 = vrot.lane.b32.xlu0 %v642, 8
      %v717 = vpop.permute.xlu0 %716
      %718 = vrot.lane.b32.xlu0 %v644, 8
      %v719 = vpop.permute.xlu0 %718
      %720 = vrot.lane.b32.xlu0 %v647, 8
      %v721 = vpop.permute.xlu0 %720
      %722 = vrot.lane.b32.xlu0 %v649, 8
      %v723 = vpop.permute.xlu0 %722
      %724 = vrot.lane.b32.xlu0 %v652, 8
      %v725 = vpop.permute.xlu0 %724
      %726 = vrot.lane.b32.xlu0 %v654, 8
      %v727 = vpop.permute.xlu0 %726
      %728 = vrot.lane.b32.xlu0 %v657, 8
      %v729 = vpop.permute.xlu0 %728
      %730 = vrot.lane.b32.xlu0 %v659, 8
      %v731 = vpop.permute.xlu0 %730
      %732 = vrot.lane.b32.xlu0 %v662, 8
      %v733 = vpop.permute.xlu0 %732
      %734 = vrot.lane.b32.xlu0 %v664, 8
      %v735 = vpop.permute.xlu0 %734
      %736 = vrot.lane.b32.xlu0 %v667, 8
      %v737 = vpop.permute.xlu0 %736
      %738 = vrot.lane.b32.xlu0 %v669, 8
      %v739 = vpop.permute.xlu0 %738
      %740 = vrot.lane.b32.xlu0 %v672, 8
      %v741 = vpop.permute.xlu0 %740
      %742 = vrot.lane.b32.xlu0 %v674, 8
      %v743 = vpop.permute.xlu0 %742
      %744 = vrot.lane.b32.xlu0 %v677, 8
      %v745 = vpop.permute.xlu0 %744
      %746 = vrot.lane.b32.xlu0 %v679, 8
      %v747 = vpop.permute.xlu0 %746
      %748 = vrot.lane.b32.xlu0 %v682, 8
      %v749 = vpop.permute.xlu0 %748
      %750 = vrot.lane.b32.xlu0 %v684, 8
      %v751 = vpop.permute.xlu0 %750
      %752 = vrot.lane.b32.xlu0 %v687, 8
      %v753 = vpop.permute.xlu0 %752
      %754 = vrot.lane.b32.xlu0 %v689, 8
      %v755 = vpop.permute.xlu0 %754
      %756 = vrot.lane.b32.xlu0 %v692, 8
      %v757 = vpop.permute.xlu0 %756
      %758 = vrot.lane.b32.xlu0 %v694, 8
      %v759 = vpop.permute.xlu0 %758
      %760 = vrot.lane.b32.xlu0 %v697, 8
      %v761 = vpop.permute.xlu0 %760
      %762 = vrot.lane.b32.xlu0 %v699, 8
      %v763 = vpop.permute.xlu0 %762
      %vm796 = vcmask 31744
      %v797 = vsel %vm796, %v376, %v524
      %v798 = vsel %vm796, %v277, %v526
      %v799 = vsel %vm796, %v377, %v528
      %v800 = vsel %vm796, %v280, %v530
      %v801 = vsel %vm796, %v378, %v532
      %v802 = vsel %vm796, %v283, %v534
      %v803 = vsel %vm796, %v379, %v536
      %v804 = vsel %vm796, %v286, %v538
      %v805 = vsel %vm796, %v380, %v540
      %v806 = vsel %vm796, %v289, %v542
      %v807 = vsel %vm796, %v381, %v544
      %v808 = vsel %vm796, %v292, %v546
      %v809 = vsel %vm796, %v382, %v548
      %v810 = vsel %vm796, %v295, %v550
      %v811 = vsel %vm796, %v383, %v552
      %v812 = vsel %vm796, %v298, %v554
      %v813 = vsel %vm796, %v384, %v556
      %v814 = vsel %vm796, %v301, %v558
      %v815 = vsel %vm796, %v385, %v560
      %v816 = vsel %vm796, %v304, %v562
      %v817 = vsel %vm796, %v386, %v564
      %v818 = vsel %vm796, %v307, %v566
      %v819 = vsel %vm796, %v387, %v568
      %v820 = vsel %vm796, %v310, %v570
      %v821 = vsel %vm796, %v388, %v572
      %v822 = vsel %vm796, %v313, %v574
      %v823 = vsel %vm796, %v389, %v576
      %v824 = vsel %vm796, %v316, %v578
      %v825 = vsel %vm796, %v390, %v580
      %v826 = vsel %vm796, %v319, %v582
      %v827 = vsel %vm796, %v391, %v584
      %v828 = vsel %vm796, %v322, %v586
      %vm829 = vcmask 64512
      %v830 = vsel %vm829, %v797, %v701
      %v831 = vsel %vm829, %v798, %v703
      %v832 = vsel %vm829, %v799, %v705
      %v833 = vsel %vm829, %v800, %v707
      %v834 = vsel %vm829, %v801, %v709
      %v835 = vsel %vm829, %v802, %v711
      %v836 = vsel %vm829, %v803, %v713
      %v837 = vsel %vm829, %v804, %v715
      %v838 = vsel %vm829, %v805, %v717
      %v839 = vsel %vm829, %v806, %v719
      %v840 = vsel %vm829, %v807, %v721
      %v841 = vsel %vm829, %v808, %v723
      %v842 = vsel %vm829, %v809, %v725
      %v843 = vsel %vm829, %v810, %v727
      %v844 = vsel %vm829, %v811, %v729
      %v845 = vsel %vm829, %v812, %v731
      %v846 = vsel %vm829, %v813, %v733
      %v847 = vsel %vm829, %v814, %v735
      %v848 = vsel %vm829, %v815, %v737
      %v849 = vsel %vm829, %v816, %v739
      %v850 = vsel %vm829, %v817, %v741
      %v851 = vsel %vm829, %v818, %v743
      %v852 = vsel %vm829, %v819, %v745
      %v853 = vsel %vm829, %v820, %v747
      %v854 = vsel %vm829, %v821, %v749
      %v855 = vsel %vm829, %v822, %v751
      %v856 = vsel %vm829, %v823, %v753
      %v857 = vsel %vm829, %v824, %v755
      %v858 = vsel %vm829, %v825, %v757
      %v859 = vsel %vm829, %v826, %v759
      %v860 = vsel %vm829, %v827, %v761
      %v861 = vsel %vm829, %v828, %v763
      %v864 = vrot.slane %v392, 1
      %v865 = vrot.slane %v325, 1
      %v866 = vsel %vm442, %v864, %v865
      %v867 = vrot.slane %v409, 1
      %v868 = vsel %vm442, %v865, %v867
      %869 = vrot.lane.b32.xlu0 %v866, 4
      %v870 = vpop.permute.xlu0 %869
      %871 = vrot.lane.b32.xlu0 %v868, 4
      %v872 = vpop.permute.xlu0 %871
      %v875 = vrot.slane %v392, 2
      %v876 = vrot.slane %v325, 2
      %v877 = vsel %vm619, %v875, %v876
      %v878 = vrot.slane %v409, 2
      %v879 = vsel %vm619, %v876, %v878
      %880 = vrot.lane.b32.xlu0 %v877, 8
      %v881 = vpop.permute.xlu0 %880
      %882 = vrot.lane.b32.xlu0 %v879, 8
      %v883 = vpop.permute.xlu0 %882
      %v886 = vsel %vm796, %v392, %v870
      %v887 = vsel %vm796, %v325, %v872
      %v888 = vsel %vm829, %v886, %v881
      %v889 = vsel %vm829, %v887, %v883
      %922 = vrot.lane.b32.xlu0 %v832, 12
      %v923 = vpop.permute.xlu0 %922
      %924 = vrot.lane.b32.xlu0 %v833, 12
      %v925 = vpop.permute.xlu0 %924
      %926 = vrot.lane.b32.xlu0 %v834, 12
      %v927 = vpop.permute.xlu0 %926
      %928 = vrot.lane.b32.xlu0 %v835, 12
      %v929 = vpop.permute.xlu0 %928
      %930 = vrot.lane.b32.xlu0 %v836, 12
      %v931 = vpop.permute.xlu0 %930
      %932 = vrot.lane.b32.xlu0 %v837, 12
      %v933 = vpop.permute.xlu0 %932
      %934 = vrot.lane.b32.xlu0 %v838, 12
      %v935 = vpop.permute.xlu0 %934
      %936 = vrot.lane.b32.xlu0 %v839, 12
      %v937 = vpop.permute.xlu0 %936
      %938 = vrot.lane.b32.xlu0 %v840, 12
      %v939 = vpop.permute.xlu0 %938
      %940 = vrot.lane.b32.xlu0 %v841, 12
      %v941 = vpop.permute.xlu0 %940
      %942 = vrot.lane.b32.xlu0 %v842, 12
      %v943 = vpop.permute.xlu0 %942
      %944 = vrot.lane.b32.xlu0 %v843, 12
      %v945 = vpop.permute.xlu0 %944
      %946 = vrot.lane.b32.xlu0 %v844, 12
      %v947 = vpop.permute.xlu0 %946
      %948 = vrot.lane.b32.xlu0 %v845, 12
      %v949 = vpop.permute.xlu0 %948
      %950 = vrot.lane.b32.xlu0 %v846, 12
      %v951 = vpop.permute.xlu0 %950
      %952 = vrot.lane.b32.xlu0 %v847, 12
      %v953 = vpop.permute.xlu0 %952
      %954 = vrot.lane.b32.xlu0 %v848, 12
      %v955 = vpop.permute.xlu0 %954
      %956 = vrot.lane.b32.xlu0 %v849, 12
      %v957 = vpop.permute.xlu0 %956
      %958 = vrot.lane.b32.xlu0 %v850, 12
      %v959 = vpop.permute.xlu0 %958
      %960 = vrot.lane.b32.xlu0 %v851, 12
      %v961 = vpop.permute.xlu0 %960
      %962 = vrot.lane.b32.xlu0 %v852, 12
      %v963 = vpop.permute.xlu0 %962
      %964 = vrot.lane.b32.xlu0 %v853, 12
      %v965 = vpop.permute.xlu0 %964
      %966 = vrot.lane.b32.xlu0 %v854, 12
      %v967 = vpop.permute.xlu0 %966
      %968 = vrot.lane.b32.xlu0 %v855, 12
      %v969 = vpop.permute.xlu0 %968
      %970 = vrot.lane.b32.xlu0 %v856, 12
      %v971 = vpop.permute.xlu0 %970
      %972 = vrot.lane.b32.xlu0 %v857, 12
      %v973 = vpop.permute.xlu0 %972
      %974 = vrot.lane.b32.xlu0 %v858, 12
      %v975 = vpop.permute.xlu0 %974
      %976 = vrot.lane.b32.xlu0 %v859, 12
      %v977 = vpop.permute.xlu0 %976
      %978 = vrot.lane.b32.xlu0 %v860, 12
      %v979 = vpop.permute.xlu0 %978
      %980 = vrot.lane.b32.xlu0 %v861, 12
      %v981 = vpop.permute.xlu0 %980
      %982 = vrot.lane.b32.xlu0 %v888, 12
      %v983 = vpop.permute.xlu0 %982
      %984 = vrot.lane.b32.xlu0 %v889, 12
      %v985 = vpop.permute.xlu0 %984
      %1020 = vrot.lane.b32.xlu0 %v834, 24
      %v1021 = vpop.permute.xlu0 %1020
      %1022 = vrot.lane.b32.xlu0 %v835, 24
      %v1023 = vpop.permute.xlu0 %1022
      %1024 = vrot.lane.b32.xlu0 %v836, 24
      %v1025 = vpop.permute.xlu0 %1024
      %1026 = vrot.lane.b32.xlu0 %v837, 24
      %v1027 = vpop.permute.xlu0 %1026
      %1028 = vrot.lane.b32.xlu0 %v838, 24
      %v1029 = vpop.permute.xlu0 %1028
      %1030 = vrot.lane.b32.xlu0 %v839, 24
      %v1031 = vpop.permute.xlu0 %1030
      %1032 = vrot.lane.b32.xlu0 %v840, 24
      %v1033 = vpop.permute.xlu0 %1032
      %1034 = vrot.lane.b32.xlu0 %v841, 24
      %v1035 = vpop.permute.xlu0 %1034
      %1036 = vrot.lane.b32.xlu0 %v842, 24
      %v1037 = vpop.permute.xlu0 %1036
      %1038 = vrot.lane.b32.xlu0 %v843, 24
      %v1039 = vpop.permute.xlu0 %1038
      %1040 = vrot.lane.b32.xlu0 %v844, 24
      %v1041 = vpop.permute.xlu0 %1040
      %1042 = vrot.lane.b32.xlu0 %v845, 24
      %v1043 = vpop.permute.xlu0 %1042
      %1044 = vrot.lane.b32.xlu0 %v846, 24
      %v1045 = vpop.permute.xlu0 %1044
      %1046 = vrot.lane.b32.xlu0 %v847, 24
      %v1047 = vpop.permute.xlu0 %1046
      %1048 = vrot.lane.b32.xlu0 %v848, 24
      %v1049 = vpop.permute.xlu0 %1048
      %1050 = vrot.lane.b32.xlu0 %v849, 24
      %v1051 = vpop.permute.xlu0 %1050
      %1052 = vrot.lane.b32.xlu0 %v850, 24
      %v1053 = vpop.permute.xlu0 %1052
      %1054 = vrot.lane.b32.xlu0 %v851, 24
      %v1055 = vpop.permute.xlu0 %1054
      %1056 = vrot.lane.b32.xlu0 %v852, 24
      %v1057 = vpop.permute.xlu0 %1056
      %1058 = vrot.lane.b32.xlu0 %v853, 24
      %v1059 = vpop.permute.xlu0 %1058
      %1060 = vrot.lane.b32.xlu0 %v854, 24
      %v1061 = vpop.permute.xlu0 %1060
      %1062 = vrot.lane.b32.xlu0 %v855, 24
      %v1063 = vpop.permute.xlu0 %1062
      %1064 = vrot.lane.b32.xlu0 %v856, 24
      %v1065 = vpop.permute.xlu0 %1064
      %1066 = vrot.lane.b32.xlu0 %v857, 24
      %v1067 = vpop.permute.xlu0 %1066
      %1068 = vrot.lane.b32.xlu0 %v858, 24
      %v1069 = vpop.permute.xlu0 %1068
      %1070 = vrot.lane.b32.xlu0 %v859, 24
      %v1071 = vpop.permute.xlu0 %1070
      %1072 = vrot.lane.b32.xlu0 %v860, 24
      %v1073 = vpop.permute.xlu0 %1072
      %1074 = vrot.lane.b32.xlu0 %v861, 24
      %v1075 = vpop.permute.xlu0 %1074
      %1076 = vrot.lane.b32.xlu0 %v888, 24
      %v1077 = vpop.permute.xlu0 %1076
      %1078 = vrot.lane.b32.xlu0 %v889, 24
      %v1079 = vpop.permute.xlu0 %1078
      %1080 = vrot.lane.b32.xlu0 %v830, 24
      %v1081 = vpop.permute.xlu0 %1080
      %1082 = vrot.lane.b32.xlu0 %v831, 24
      %v1083 = vpop.permute.xlu0 %1082
      %vm1116 = vcmask 97280
      %v1117 = vsel %vm1116, %v830, %v923
      %v1118 = vsel %vm1116, %v831, %v925
      %v1119 = vsel %vm1116, %v832, %v927
      %v1120 = vsel %vm1116, %v833, %v929
      %v1121 = vsel %vm1116, %v834, %v931
      %v1122 = vsel %vm1116, %v835, %v933
      %v1123 = vsel %vm1116, %v836, %v935
      %v1124 = vsel %vm1116, %v837, %v937
      %v1125 = vsel %vm1116, %v838, %v939
      %v1126 = vsel %vm1116, %v839, %v941
      %v1127 = vsel %vm1116, %v840, %v943
      %v1128 = vsel %vm1116, %v841, %v945
      %v1129 = vsel %vm1116, %v842, %v947
      %v1130 = vsel %vm1116, %v843, %v949
      %v1131 = vsel %vm1116, %v844, %v951
      %v1132 = vsel %vm1116, %v845, %v953
      %v1133 = vsel %vm1116, %v846, %v955
      %v1134 = vsel %vm1116, %v847, %v957
      %v1135 = vsel %vm1116, %v848, %v959
      %v1136 = vsel %vm1116, %v849, %v961
      %v1137 = vsel %vm1116, %v850, %v963
      %v1138 = vsel %vm1116, %v851, %v965
      %v1139 = vsel %vm1116, %v852, %v967
      %v1140 = vsel %vm1116, %v853, %v969
      %v1141 = vsel %vm1116, %v854, %v971
      %v1142 = vsel %vm1116, %v855, %v973
      %v1143 = vsel %vm1116, %v856, %v975
      %v1144 = vsel %vm1116, %v857, %v977
      %v1145 = vsel %vm1116, %v858, %v979
      %v1146 = vsel %vm1116, %v859, %v981
      %v1147 = vsel %vm1116, %v860, %v983
      %v1148 = vsel %vm1116, %v861, %v985
      %vm1149 = vcmask 195584
      %v1150 = vsel %vm1149, %v1117, %v1021
      %v1151 = vsel %vm1149, %v1118, %v1023
      %v1152 = vsel %vm1149, %v1119, %v1025
      %v1153 = vsel %vm1149, %v1120, %v1027
      %v1154 = vsel %vm1149, %v1121, %v1029
      %v1155 = vsel %vm1149, %v1122, %v1031
      %v1156 = vsel %vm1149, %v1123, %v1033
      %v1157 = vsel %vm1149, %v1124, %v1035
      %v1158 = vsel %vm1149, %v1125, %v1037
      %v1159 = vsel %vm1149, %v1126, %v1039
      %v1160 = vsel %vm1149, %v1127, %v1041
      %v1161 = vsel %vm1149, %v1128, %v1043
      %v1162 = vsel %vm1149, %v1129, %v1045
      %v1163 = vsel %vm1149, %v1130, %v1047
      %v1164 = vsel %vm1149, %v1131, %v1049
      %v1165 = vsel %vm1149, %v1132, %v1051
      %v1166 = vsel %vm1149, %v1133, %v1053
      %v1167 = vsel %vm1149, %v1134, %v1055
      %v1168 = vsel %vm1149, %v1135, %v1057
      %v1169 = vsel %vm1149, %v1136, %v1059
      %v1170 = vsel %vm1149, %v1137, %v1061
      %v1171 = vsel %vm1149, %v1138, %v1063
      %v1172 = vsel %vm1149, %v1139, %v1065
      %v1173 = vsel %vm1149, %v1140, %v1067
      %v1174 = vsel %vm1149, %v1141, %v1069
      %v1175 = vsel %vm1149, %v1142, %v1071
      %v1176 = vsel %vm1149, %v1143, %v1073
      %v1177 = vsel %vm1149, %v1144, %v1075
      %v1178 = vsel %vm1149, %v1145, %v1077
      %v1179 = vsel %vm1149, %v1146, %v1079
      %v1180 = vsel %vm1149, %v1147, %v1081
      %v1181 = vsel %vm1149, %v1148, %v1083
      %v1182 = vpack.c.bf16 %v1151, %v1150
      %v1183 = vpack.c.bf16 %v1153, %v1152
      %v1184 = vpack.c.bf16 %v1155, %v1154
      %v1185 = vpack.c.bf16 %v1157, %v1156
      %v1186 = vpack.c.bf16 %v1159, %v1158
      %v1187 = vpack.c.bf16 %v1161, %v1160
      %v1188 = vpack.c.bf16 %v1163, %v1162
      %v1189 = vpack.c.bf16 %v1165, %v1164
      %v1190 = vpack.c.bf16 %v1167, %v1166
      %v1191 = vpack.c.bf16 %v1169, %v1168
      %v1192 = vpack.c.bf16 %v1171, %v1170
      %v1193 = vpack.c.bf16 %v1173, %v1172
      %v1194 = vpack.c.bf16 %v1175, %v1174
      %v1195 = vpack.c.bf16 %v1177, %v1176
      %v1196 = vpack.c.bf16 %v1179, %v1178
      %v1197 = vpack.c.bf16 %v1181, %v1180
      %v1199 = vlaneseq
      %v1200 = vshrl.u32 %v1199, 7
      %v1201 = vsub.s32 0, %v1200
      %v1202 = vrot.slane %v241, %v1201
      %v1209 = vunpack.c.l.b16 %v236
      %v1210 = vunpack.c.l.b16 %v237
      %v1211 = vunpack.c.l.b16 %v238
      %v1212 = vunpack.c.l.b16 %v239
      %v1213 = vunpack.c.l.b16 %v240
      %v1214 = vpack.c.b16 %v1210, %v1209
      %v1215 = vpack.c.b16 %v1212, %v1211
      %v1216 = vpack.c.b16 %v1213, %v1213
      %vm1219 = vcmask 293888
      %v1221 = vsel %vm1219, %v1182, 0
      %v1224 = vsel %vm1219, %v1183, 0
      %v1227 = vsel %vm1219, %v1184, 0
      %v1230 = vsel %vm1219, %v1185, 0
      %v1233 = vsel %vm1219, %v1186, 0
      %v1236 = vsel %vm1219, %v1187, 0
      %v1239 = vsel %vm1219, %v1188, 0
      %v1242 = vsel %vm1219, %v1189, 0
      %v1245 = vsel %vm1219, %v1190, 0
      %v1248 = vsel %vm1219, %v1191, 0
      %v1251 = vsel %vm1219, %v1192, 0
      %v1254 = vsel %vm1219, %v1193, 0
      %v1257 = vsel %vm1219, %v1194, 0
      %v1260 = vsel %vm1219, %v1195, 0
      %v1263 = vsel %vm1219, %v1196, 0
      %v1266 = vsel %vm1219, %v1197, 0
      %vm1268 = vcmask 1041408
      %v1270 = vsel %vm1268, %v1216, 0
      %1272 = vmatprep.subr.bf16.mxu0 0
      %1273 = vmatpush1.bf16.msra.mxu0 0
      %1274 = vmatprep.subr.bf16.mxu0 0
      %1275 = vmatpush1.bf16.msra.mxu0 0
      %1276 = vmatprep.subr.bf16.mxu0 0
      %1277 = vmatpush1.bf16.msra.mxu0 0
      %1278 = vmatprep.subr.bf16.mxu0 0
      %1279 = vmatpush1.bf16.msra.mxu0 0
      %1280 = vmatprep.subr.bf16.mxu0 0
      %1281 = vmatpush1.bf16.msra.mxu0 0
      %1282 = vmatprep.subr.bf16.mxu0 0
      %1283 = vmatpush1.bf16.msra.mxu0 %v1270
      %1284 = vmatprep.subr.bf16.mxu0 0
      %1285 = vmatpush1.bf16.msra.mxu0 %v1215
      %1286 = vmatprep.subr.bf16.mxu0 0
      %1287 = vmatpush1.bf16.msra.mxu0 %v1214
      %1288 = vmatprep.subr.bf16.mxu0 0
      %1289 = vmatpush2.bf16.msra.mxu0 0
      %1290 = vmatprep.subr.bf16.mxu0 0
      %1291 = vmatpush2.bf16.msra.mxu0 0
      %1292 = vmatprep.subr.bf16.mxu0 0
      %1293 = vmatpush2.bf16.msra.mxu0 0
      %1294 = vmatprep.subr.bf16.mxu0 0
      %1295 = vmatpush2.bf16.msra.mxu0 0
      %1296 = vmatprep.subr.bf16.mxu0 0
      %1297 = vmatpush2.bf16.msra.mxu0 0
      %1298 = vmatprep.subr.bf16.mxu0 0
      %1299 = vmatpush2.bf16.msra.mxu0 0
      %1300 = vmatprep.subr.bf16.mxu0 0
      %1301 = vmatpush2.bf16.msra.mxu0 0
      %1302 = vmatprep.subr.bf16.mxu0 0
      %1303 = vmatpush2.bf16.msra.mxu0 0
      %1304 = vmatprep.mubr.bf16.mxu0 0
      %1305 = vmatmul.mubr.bf16.gmra.mxu0 %v1221
      %v1306 = vpop.f32.mrf.mxu0
      %v1307 = vadd.f32 %v1202, %v1306
      %v1308 = vpop.f32.mrf.mxu0
      %v1309 = vpop.f32.mrf.mxu0
      %v1310 = vadd.f32 %v1202, %v1309
      %v1311 = vpop.f32.mrf.mxu0
      %1312 = vmatprep.mubr.bf16.mxu0 0
      %1313 = vmatmul.mubr.bf16.gmra.mxu0 %v1224
      %v1314 = vpop.f32.mrf.mxu0
      %v1315 = vadd.f32 %v1202, %v1314
      %v1316 = vpop.f32.mrf.mxu0
      %v1317 = vpop.f32.mrf.mxu0
      %v1318 = vadd.f32 %v1202, %v1317
      %v1319 = vpop.f32.mrf.mxu0
      %1320 = vmatprep.mubr.bf16.mxu0 0
      %1321 = vmatmul.mubr.bf16.gmra.mxu0 %v1227
      %v1322 = vpop.f32.mrf.mxu0
      %v1323 = vadd.f32 %v1202, %v1322
      %v1324 = vpop.f32.mrf.mxu0
      %v1325 = vpop.f32.mrf.mxu0
      %v1326 = vadd.f32 %v1202, %v1325
      %v1327 = vpop.f32.mrf.mxu0
      %1328 = vmatprep.mubr.bf16.mxu0 0
      %1329 = vmatmul.mubr.bf16.gmra.mxu0 %v1230
      %v1330 = vpop.f32.mrf.mxu0
      %v1331 = vadd.f32 %v1202, %v1330
      %v1332 = vpop.f32.mrf.mxu0
      %v1333 = vpop.f32.mrf.mxu0
      %v1334 = vadd.f32 %v1202, %v1333
      %v1335 = vpop.f32.mrf.mxu0
      %1336 = vmatprep.mubr.bf16.mxu0 0
      %1337 = vmatmul.mubr.bf16.gmra.mxu0 %v1233
      %v1338 = vpop.f32.mrf.mxu0
      %v1339 = vadd.f32 %v1202, %v1338
      %v1340 = vpop.f32.mrf.mxu0
      %v1341 = vpop.f32.mrf.mxu0
      %v1342 = vadd.f32 %v1202, %v1341
      %v1343 = vpop.f32.mrf.mxu0
      %1344 = vmatprep.mubr.bf16.mxu0 0
      %1345 = vmatmul.mubr.bf16.gmra.mxu0 %v1236
      %v1346 = vpop.f32.mrf.mxu0
      %v1347 = vadd.f32 %v1202, %v1346
      %v1348 = vpop.f32.mrf.mxu0
      %v1349 = vpop.f32.mrf.mxu0
      %v1350 = vadd.f32 %v1202, %v1349
      %v1351 = vpop.f32.mrf.mxu0
      %1352 = vmatprep.mubr.bf16.mxu0 0
      %1353 = vmatmul.mubr.bf16.gmra.mxu0 %v1239
      %v1354 = vpop.f32.mrf.mxu0
      %v1355 = vadd.f32 %v1202, %v1354
      %v1356 = vpop.f32.mrf.mxu0
      %v1357 = vpop.f32.mrf.mxu0
      %v1358 = vadd.f32 %v1202, %v1357
      %v1359 = vpop.f32.mrf.mxu0
      %1360 = vmatprep.mubr.bf16.mxu0 0
      %1361 = vmatmul.mubr.bf16.gmra.mxu0 %v1242
      %v1362 = vpop.f32.mrf.mxu0
      %v1363 = vadd.f32 %v1202, %v1362
      %v1364 = vpop.f32.mrf.mxu0
      %v1365 = vpop.f32.mrf.mxu0
      %v1366 = vadd.f32 %v1202, %v1365
      %v1367 = vpop.f32.mrf.mxu0
      %1368 = vmatprep.mubr.bf16.mxu0 0
      %1369 = vmatmul.mubr.bf16.gmra.mxu0 %v1245
      %v1370 = vpop.f32.mrf.mxu0
      %v1371 = vadd.f32 %v1202, %v1370
      %v1372 = vpop.f32.mrf.mxu0
      %v1373 = vpop.f32.mrf.mxu0
      %v1374 = vadd.f32 %v1202, %v1373
      %v1375 = vpop.f32.mrf.mxu0
      %1376 = vmatprep.mubr.bf16.mxu0 0
      %1377 = vmatmul.mubr.bf16.gmra.mxu0 %v1248
      %v1378 = vpop.f32.mrf.mxu0
      %v1379 = vadd.f32 %v1202, %v1378
      %v1380 = vpop.f32.mrf.mxu0
      %v1381 = vpop.f32.mrf.mxu0
      %v1382 = vadd.f32 %v1202, %v1381
      %v1383 = vpop.f32.mrf.mxu0
      %1384 = vmatprep.mubr.bf16.mxu0 0
      %1385 = vmatmul.mubr.bf16.gmra.mxu0 %v1251
      %v1386 = vpop.f32.mrf.mxu0
      %v1387 = vadd.f32 %v1202, %v1386
      %v1388 = vpop.f32.mrf.mxu0
      %v1389 = vpop.f32.mrf.mxu0
      %v1390 = vadd.f32 %v1202, %v1389
      %v1391 = vpop.f32.mrf.mxu0
      %1392 = vmatprep.mubr.bf16.mxu0 0
      %1393 = vmatmul.mubr.bf16.gmra.mxu0 %v1254
      %v1394 = vpop.f32.mrf.mxu0
      %v1395 = vadd.f32 %v1202, %v1394
      %v1396 = vpop.f32.mrf.mxu0
      %v1397 = vpop.f32.mrf.mxu0
      %v1398 = vadd.f32 %v1202, %v1397
      %v1399 = vpop.f32.mrf.mxu0
      %1400 = vmatprep.mubr.bf16.mxu0 0
      %1401 = vmatmul.mubr.bf16.gmra.mxu0 %v1257
      %v1402 = vpop.f32.mrf.mxu0
      %v1403 = vadd.f32 %v1202, %v1402
      %v1404 = vpop.f32.mrf.mxu0
      %v1405 = vpop.f32.mrf.mxu0
      %v1406 = vadd.f32 %v1202, %v1405
      %v1407 = vpop.f32.mrf.mxu0
      %1408 = vmatprep.mubr.bf16.mxu0 0
      %1409 = vmatmul.mubr.bf16.gmra.mxu0 %v1260
      %v1410 = vpop.f32.mrf.mxu0
      %v1411 = vadd.f32 %v1202, %v1410
      %v1412 = vpop.f32.mrf.mxu0
      %v1413 = vpop.f32.mrf.mxu0
      %v1414 = vadd.f32 %v1202, %v1413
      %v1415 = vpop.f32.mrf.mxu0
      %1416 = vmatprep.mubr.bf16.mxu0 0
      %1417 = vmatmul.mubr.bf16.gmra.mxu0 %v1263
      %v1418 = vpop.f32.mrf.mxu0
      %v1419 = vadd.f32 %v1202, %v1418
      %v1420 = vpop.f32.mrf.mxu0
      %v1421 = vpop.f32.mrf.mxu0
      %v1422 = vadd.f32 %v1202, %v1421
      %v1423 = vpop.f32.mrf.mxu0
      %1424 = vmatprep.mubr.bf16.mxu0 0
      %1425 = vmatmul.mubr.bf16.gmra.mxu0 %v1266
      %v1426 = vpop.f32.mrf.mxu0
      %v1427 = vadd.f32 %v1202, %v1426
      %v1428 = vpop.f32.mrf.mxu0
      %v1429 = vpop.f32.mrf.mxu0
      %v1430 = vadd.f32 %v1202, %v1429
      %v1431 = vpop.f32.mrf.mxu0
      %1432 = vdwg.mxu0
      %v1433 = vpack.c.bf16 %v1310, %v1307
      %v1434 = vpack.c.bf16 %v1318, %v1315
      %v1435 = vpack.c.bf16 %v1326, %v1323
      %v1436 = vpack.c.bf16 %v1334, %v1331
      %v1437 = vpack.c.bf16 %v1342, %v1339
      %v1438 = vpack.c.bf16 %v1350, %v1347
      %v1439 = vpack.c.bf16 %v1358, %v1355
      %v1440 = vpack.c.bf16 %v1366, %v1363
      %v1441 = vpack.c.bf16 %v1374, %v1371
      %v1442 = vpack.c.bf16 %v1382, %v1379
      %v1443 = vpack.c.bf16 %v1390, %v1387
      %v1444 = vpack.c.bf16 %v1398, %v1395
      %v1445 = vpack.c.bf16 %v1406, %v1403
      %v1446 = vpack.c.bf16 %v1414, %v1411
      %v1447 = vpack.c.bf16 %v1422, %v1419
      %v1448 = vpack.c.bf16 %v1430, %v1427
      %v1465 = vunpack.c.l.b16 %v1433
      %v1466 = vunpack.c.h.b16 %v1433
      %v1467 = vunpack.c.l.b16 %v1434
      %v1468 = vunpack.c.h.b16 %v1434
      %v1469 = vunpack.c.l.b16 %v1435
      %v1470 = vunpack.c.h.b16 %v1435
      %v1471 = vunpack.c.l.b16 %v1436
      %v1472 = vunpack.c.h.b16 %v1436
      %v1473 = vunpack.c.l.b16 %v1437
      %v1474 = vunpack.c.h.b16 %v1437
      %v1475 = vunpack.c.l.b16 %v1438
      %v1476 = vunpack.c.h.b16 %v1438
      %v1477 = vunpack.c.l.b16 %v1439
      %v1478 = vunpack.c.h.b16 %v1439
      %v1479 = vunpack.c.l.b16 %v1440
      %v1480 = vunpack.c.h.b16 %v1440
      %v1481 = vunpack.c.l.b16 %v1441
      %v1482 = vunpack.c.h.b16 %v1441
      %v1483 = vunpack.c.l.b16 %v1442
      %v1484 = vunpack.c.h.b16 %v1442
      %v1485 = vunpack.c.l.b16 %v1443
      %v1486 = vunpack.c.h.b16 %v1443
      %v1487 = vunpack.c.l.b16 %v1444
      %v1488 = vunpack.c.h.b16 %v1444
      %v1489 = vunpack.c.l.b16 %v1445
      %v1490 = vunpack.c.h.b16 %v1445
      %v1491 = vunpack.c.l.b16 %v1446
      %v1492 = vunpack.c.h.b16 %v1446
      %v1493 = vunpack.c.l.b16 %v1447
      %v1494 = vunpack.c.h.b16 %v1447
      %v1495 = vunpack.c.l.b16 %v1448
      %v1496 = vunpack.c.h.b16 %v1448
      %v1497 = vpack.c.b16 %v1465, %v1465
      %v1498 = vpack.c.b16 %v1466, %v1466
      %v1499 = vpack.c.b16 %v1467, %v1467
      %v1500 = vpack.c.b16 %v1468, %v1468
      %v1501 = vpack.c.b16 %v1469, %v1469
      %v1502 = vpack.c.b16 %v1470, %v1470
      %v1503 = vpack.c.b16 %v1471, %v1471
      %v1504 = vpack.c.b16 %v1472, %v1472
      %v1505 = vpack.c.b16 %v1473, %v1473
      %v1506 = vpack.c.b16 %v1474, %v1474
      %v1507 = vpack.c.b16 %v1475, %v1475
      %v1508 = vpack.c.b16 %v1476, %v1476
      %v1509 = vpack.c.b16 %v1477, %v1477
      %v1510 = vpack.c.b16 %v1478, %v1478
      %v1511 = vpack.c.b16 %v1479, %v1479
      %v1512 = vpack.c.b16 %v1480, %v1480
      %v1513 = vpack.c.b16 %v1481, %v1481
      %v1514 = vpack.c.b16 %v1482, %v1482
      %v1515 = vpack.c.b16 %v1483, %v1483
      %v1516 = vpack.c.b16 %v1484, %v1484
      %v1517 = vpack.c.b16 %v1485, %v1485
      %v1518 = vpack.c.b16 %v1486, %v1486
      %v1519 = vpack.c.b16 %v1487, %v1487
      %v1520 = vpack.c.b16 %v1488, %v1488
      %v1521 = vpack.c.b16 %v1489, %v1489
      %v1522 = vpack.c.b16 %v1490, %v1490
      %v1523 = vpack.c.b16 %v1491, %v1491
      %v1524 = vpack.c.b16 %v1492, %v1492
      %v1525 = vpack.c.b16 %v1493, %v1493
      %v1526 = vpack.c.b16 %v1494, %v1494
      %v1527 = vpack.c.b16 %v1495, %v1495
      %v1528 = vpack.c.b16 %v1496, %v1496
      %vm1561 = vcmask 60416
      %1562 = vst.msk [vmem:[%s170] sm:$0xf] %vm1561, %v1497
      %1563 = vst.msk [vmem:[%s170 + $0x4] sm:$0xf] %vm1561, %v1498
      %1564 = vst.msk [vmem:[%s170 + $0x8] sm:$0xf] %vm1561, %v1499
      %1565 = vst.msk [vmem:[%s170 + $0xc] sm:$0xf] %vm1561, %v1500
      %1566 = vst.msk [vmem:[%s170 + $0x10] sm:$0xf] %vm1561, %v1501
      %1567 = vst.msk [vmem:[%s170 + $0x14] sm:$0xf] %vm1561, %v1502
      %1568 = vst.msk [vmem:[%s170 + $0x18] sm:$0xf] %vm1561, %v1503
      %1569 = vst.msk [vmem:[%s170 + $0x1c] sm:$0xf] %vm1561, %v1504
      %1570 = vst.msk [vmem:[%s170 + $0x20] sm:$0xf] %vm1561, %v1505
      %1571 = vst.msk [vmem:[%s170 + $0x24] sm:$0xf] %vm1561, %v1506
      %1572 = vst.msk [vmem:[%s170 + $0x28] sm:$0xf] %vm1561, %v1507
      %1573 = vst.msk [vmem:[%s170 + $0x2c] sm:$0xf] %vm1561, %v1508
      %1574 = vst.msk [vmem:[%s170 + $0x30] sm:$0xf] %vm1561, %v1509
      %1575 = vst.msk [vmem:[%s170 + $0x34] sm:$0xf] %vm1561, %v1510
      %1576 = vst.msk [vmem:[%s170 + $0x38] sm:$0xf] %vm1561, %v1511
      %1577 = vst.msk [vmem:[%s170 + $0x3c] sm:$0xf] %vm1561, %v1512
      %1578 = vst.msk [vmem:[%s170 + $0x40] sm:$0xf] %vm1561, %v1513
      %1579 = vst.msk [vmem:[%s170 + $0x44] sm:$0xf] %vm1561, %v1514
      %1580 = vst.msk [vmem:[%s170 + $0x48] sm:$0xf] %vm1561, %v1515
      %1581 = vst.msk [vmem:[%s170 + $0x4c] sm:$0xf] %vm1561, %v1516
      %1582 = vst.msk [vmem:[%s170 + $0x50] sm:$0xf] %vm1561, %v1517
      %1583 = vst.msk [vmem:[%s170 + $0x54] sm:$0xf] %vm1561, %v1518
      %1584 = vst.msk [vmem:[%s170 + $0x58] sm:$0xf] %vm1561, %v1519
      %1585 = vst.msk [vmem:[%s170 + $0x5c] sm:$0xf] %vm1561, %v1520
      %1586 = vst.msk [vmem:[%s170 + $0x60] sm:$0xf] %vm1561, %v1521
      %1587 = vst.msk [vmem:[%s170 + $0x64] sm:$0xf] %vm1561, %v1522
      %1588 = vst.msk [vmem:[%s170 + $0x68] sm:$0xf] %vm1561, %v1523
      %1589 = vst.msk [vmem:[%s170 + $0x6c] sm:$0xf] %vm1561, %v1524
      %1590 = vst.msk [vmem:[%s170 + $0x70] sm:$0xf] %vm1561, %v1525
      %1591 = vst.msk [vmem:[%s170 + $0x74] sm:$0xf] %vm1561, %v1526
      %1592 = vst.msk [vmem:[%s170 + $0x78] sm:$0xf] %vm1561, %v1527
      %1593 = vst.msk [vmem:[%s170 + $0x7c] sm:$0xf] %vm1561, %v1528
      %p1594 = scmp.lt.s32.totalorder %s14, 1
      %s1595 = scalar_select %p1594, %s14, 1
      %s1596 = smul.addr %s1595, 32
      %s1597 = smul.addr %s1596, 4
      %s1598 = scalar_lea.vmem %s3, %s1597
      // Predicated region
      $region33: #{_lambda_.7} parent=31 // pred_check
        %p1599 = pneg %p100
      $region34: #{_lambda_.7} parent=31 // pred_check_branch
        %1601 = sbr.rel (%p1599) target = $region36
      $region35: #{_lambda_.7} parent=31 // pred_region
        _
      $region36: #{_lambda_.7} parent=31 // pred_fallthru
        _
    $region32: #{_lambda_.7} parent=5 // pred_fallthru
      _
    %p1602 = scmp.le.s32.totalorder 2, %s9
    // Predicated region
    $region37: #{_lambda_.7} parent=5 // pred_check
      %p1603 = pneg %p1602
    $region38: #{_lambda_.7} parent=5 // pred_check_branch
      %1605 = sbr.rel (%p1603) target = $region40
    $region39: #{_lambda_.7} parent=5 // pred_region
      %s1606 = ssub.s32 %s9, 2
      // Predicated region
      $region41: #{_lambda_.7} parent=39 // pred_check
        %p1607 = pneg %p106
      $region42: #{_lambda_.7} parent=39 // pred_check_branch
        %1609 = sbr.rel (%p1607) target = $region44
      $region43: #{_lambda_.7} parent=39 // pred_region
        %p1610 = scmp.lt.s32.totalorder %s15, 1
        %s1611 = scalar_select %p1610, %s15, 1
        %s1612 = smul.addr %s1611, 32
        %s1613 = smul.addr %s1612, 4
        %s1614 = scalar_lea.vmem %s3, %s1613
      $region44: #{_lambda_.7} parent=39 // pred_fallthru
        _
    $region40: #{_lambda_.7} parent=5 // pred_fallthru
      _
  $region6: #{_lambda_.7} parent=0 // loop_footer
    %s13 = sadd.s32 1, %s9
  $region7: #{_lambda_.7} parent=0 // loop_footer_branch
    %8 = sbr.rel target = $region3
  $region8: #{_lambda_.7} parent=0 // loop_exit
    _

// kernel: _lambda_.8
$region0: #{_lambda_.8}
  #allocation0 [shape = 'u32[]', space=smem, size = 0x4, offset = 0x4, fixed_abs, tag = 'smem constant byte address 0x4 - core index']
  #allocation1 [shape = 'u32[144,128]{1,0:T(1,128)}', space=vmem, size = 0x12000, scoped, tag = 'internal scratch']
  %s0 = inlined_call_operand.vmem [shape: bf16[2,16,16,8], index: 0, kind: input, shape index: {}]
  %s1 = inlined_call_operand.vmem [shape: bf16[72,8], index: 1, kind: input, shape index: {}]
  %s2 = inlined_call_operand.vmem [shape: f32[1,8], index: 2, kind: input, shape index: {}]
  %s3 = inlined_call_operand.vmem [shape: bf16[72,16], index: 3, kind: input, shape index: {}]
  %s4 = inlined_call_operand.vmem [shape: f32[1,16], index: 4, kind: input, shape index: {}]
  %s5 = inlined_call_operand.vmem [shape: bf16[8,16], index: 5, kind: input, shape index: {}]
  %s6 = inlined_call_operand.vmem [shape: bf16[2,16,16,16], index: 6, kind: output, shape index: {}]
  %s7 = sld [smem:[#allocation0]]
  $region57: #{_lambda_.8} parent=0
    _
  %s9 = ssub.s32 1, %s7
  %s10 = scalar_select 0, %s9, %s7
  loop: start=0, step=1, limit=4
  $region2: #{_lambda_.8} parent=0 // loop_pre_header
    _
  $region3: #{_lambda_.8} parent=0 // loop_header
    %s12 = sphi 0, %s16
    %p13 = scmp.ge.s32.totalorder %s12, 4
    %s22 = sphi 0, %s24
    %s25 = sphi 0, %s22
    %s26 = sphi 0, %s25
    %s42 = sphi 0, %s26
    %s46 = sphi 0, %s46
    %s48 = sphi 0, %s46
    %s49 = sphi 0, %s48
    %s63 = sphi 0, %s49
    %s67 = sphi 0, %s67
    %s69 = sphi 0, %s67
    %s70 = sphi 0, %s69
    %s84 = sphi 0, %s70
    %s88 = sphi 0, %s88
    %s90 = sphi 0, %s88
    %s91 = sphi 0, %s90
    %s105 = sphi 0, %s91
    %s109 = sphi 0, %s109
    %s111 = sphi 0, %s109
    %s112 = sphi 0, %s111
    %s126 = sphi 0, %s112
    %s130 = sphi 0, %s130
    %s132 = sphi 0, %s130
    %s133 = sphi 0, %s132
    %s147 = sphi 0, %s133
    %s153 = sphi 0, %s155
    %s156 = sphi 0, %s153
    %s157 = sphi 0, %s156
    %s173 = sphi 0, %s157
  $region4: #{_lambda_.8} parent=0 // loop_header_branch
    %15 = sbr.rel (%p13) target = $region8
  $region5: #{_lambda_.8} parent=0 // loop_body
    %s17 = ssub.s32 %s12, 1
    %s18 = ssub.s32 %s12, 2
    %s19 = sadd.s32 %s12, 1
    %s20 = ssub.s32 %s12, %s19
    %p21 = scmp.eq.s32.totalorder %s20, 0
    %s23 = sadd.s32 %s22, 1
    %s24 = scalar_select %p21, %s22, %s23
    %p27 = pneg %p21
    %p28 = scmp.eq.s32.totalorder %s12, 1
    %p29 = por %p27, %p28
    %p30 = scmp.ne.s32.totalorder %s22, %s25
    %p31 = scmp.eq.s32.totalorder %s12, 0
    %p32 = por %p30, %p31
    %p33 = scmp.ne.s32.totalorder %s22, %s25
    %p34 = scmp.eq.s32.totalorder %s17, 1
    %p35 = por %p33, %p34
    %p36 = scmp.ne.s32.totalorder %s25, %s26
    %p37 = scmp.eq.s32.totalorder %s17, 0
    %p38 = por %p36, %p37
    %p39 = scmp.ne.s32.totalorder %s25, %s26
    %p40 = scmp.eq.s32.totalorder %s18, 1
    %p41 = por %p39, %p40
    %p43 = scmp.ne.s32.totalorder %s26, %s42
    %p44 = scmp.eq.s32.totalorder %s18, 0
    %p45 = por %p43, %p44
    %s47 = sadd.s32 %s46, 1
    %p50 = scmp.eq.s32.totalorder %s12, 1
    %p51 = scmp.ne.s32.totalorder %s46, %s48
    %p52 = scmp.eq.s32.totalorder %s12, 0
    %p53 = por %p51, %p52
    %p54 = scmp.ne.s32.totalorder %s46, %s48
    %p55 = scmp.eq.s32.totalorder %s17, 1
    %p56 = por %p54, %p55
    %p57 = scmp.ne.s32.totalorder %s48, %s49
    %p58 = scmp.eq.s32.totalorder %s17, 0
    %p59 = por %p57, %p58
    %p60 = scmp.ne.s32.totalorder %s48, %s49
    %p61 = scmp.eq.s32.totalorder %s18, 1
    %p62 = por %p60, %p61
    %p64 = scmp.ne.s32.totalorder %s49, %s63
    %p65 = scmp.eq.s32.totalorder %s18, 0
    %p66 = por %p64, %p65
    %s68 = sadd.s32 %s67, 1
    %p71 = scmp.eq.s32.totalorder %s12, 1
    %p72 = scmp.ne.s32.totalorder %s67, %s69
    %p73 = scmp.eq.s32.totalorder %s12, 0
    %p74 = por %p72, %p73
    %p75 = scmp.ne.s32.totalorder %s67, %s69
    %p76 = scmp.eq.s32.totalorder %s17, 1
    %p77 = por %p75, %p76
    %p78 = scmp.ne.s32.totalorder %s69, %s70
    %p79 = scmp.eq.s32.totalorder %s17, 0
    %p80 = por %p78, %p79
    %p81 = scmp.ne.s32.totalorder %s69, %s70
    %p82 = scmp.eq.s32.totalorder %s18, 1
    %p83 = por %p81, %p82
    %p85 = scmp.ne.s32.totalorder %s70, %s84
    %p86 = scmp.eq.s32.totalorder %s18, 0
    %p87 = por %p85, %p86
    %s89 = sadd.s32 %s88, 1
    %p92 = scmp.eq.s32.totalorder %s12, 1
    %p93 = scmp.ne.s32.totalorder %s88, %s90
    %p94 = scmp.eq.s32.totalorder %s12, 0
    %p95 = por %p93, %p94
    %p96 = scmp.ne.s32.totalorder %s88, %s90
    %p97 = scmp.eq.s32.totalorder %s17, 1
    %p98 = por %p96, %p97
    %p99 = scmp.ne.s32.totalorder %s90, %s91
    %p100 = scmp.eq.s32.totalorder %s17, 0
    %p101 = por %p99, %p100
    %p102 = scmp.ne.s32.totalorder %s90, %s91
    %p103 = scmp.eq.s32.totalorder %s18, 1
    %p104 = por %p102, %p103
    %p106 = scmp.ne.s32.totalorder %s91, %s105
    %p107 = scmp.eq.s32.totalorder %s18, 0
    %p108 = por %p106, %p107
    %s110 = sadd.s32 %s109, 1
    %p113 = scmp.eq.s32.totalorder %s12, 1
    %p114 = scmp.ne.s32.totalorder %s109, %s111
    %p115 = scmp.eq.s32.totalorder %s12, 0
    %p116 = por %p114, %p115
    %p117 = scmp.ne.s32.totalorder %s109, %s111
    %p118 = scmp.eq.s32.totalorder %s17, 1
    %p119 = por %p117, %p118
    %p120 = scmp.ne.s32.totalorder %s111, %s112
    %p121 = scmp.eq.s32.totalorder %s17, 0
    %p122 = por %p120, %p121
    %p123 = scmp.ne.s32.totalorder %s111, %s112
    %p124 = scmp.eq.s32.totalorder %s18, 1
    %p125 = por %p123, %p124
    %p127 = scmp.ne.s32.totalorder %s112, %s126
    %p128 = scmp.eq.s32.totalorder %s18, 0
    %p129 = por %p127, %p128
    %s131 = sadd.s32 %s130, 1
    %p134 = scmp.eq.s32.totalorder %s12, 1
    %p135 = scmp.ne.s32.totalorder %s130, %s132
    %p136 = scmp.eq.s32.totalorder %s12, 0
    %p137 = por %p135, %p136
    %p138 = scmp.ne.s32.totalorder %s130, %s132
    %p139 = scmp.eq.s32.totalorder %s17, 1
    %p140 = por %p138, %p139
    %p141 = scmp.ne.s32.totalorder %s132, %s133
    %p142 = scmp.eq.s32.totalorder %s17, 0
    %p143 = por %p141, %p142
    %p144 = scmp.ne.s32.totalorder %s132, %s133
    %p145 = scmp.eq.s32.totalorder %s18, 1
    %p146 = por %p144, %p145
    %p148 = scmp.ne.s32.totalorder %s133, %s147
    %p149 = scmp.eq.s32.totalorder %s18, 0
    %p150 = por %p148, %p149
    %s151 = ssub.s32 %s12, %s19
    %p152 = scmp.eq.s32.totalorder %s151, 0
    %s154 = sadd.s32 %s153, 1
    %s155 = scalar_select %p152, %s153, %s154
    %p158 = pneg %p152
    %p159 = scmp.eq.s32.totalorder %s12, 1
    %p160 = por %p158, %p159
    %p161 = scmp.ne.s32.totalorder %s153, %s156
    %p162 = scmp.eq.s32.totalorder %s12, 0
    %p163 = por %p161, %p162
    %p164 = scmp.ne.s32.totalorder %s153, %s156
    %p165 = scmp.eq.s32.totalorder %s17, 1
    %p166 = por %p164, %p165
    %p167 = scmp.ne.s32.totalorder %s156, %s157
    %p168 = scmp.eq.s32.totalorder %s17, 0
    %p169 = por %p167, %p168
    %p170 = scmp.ne.s32.totalorder %s156, %s157
    %p171 = scmp.eq.s32.totalorder %s18, 1
    %p172 = por %p170, %p171
    %p174 = scmp.ne.s32.totalorder %s157, %s173
    %p175 = scmp.eq.s32.totalorder %s18, 0
    %p176 = por %p174, %p175
    %p177 = scmp.le.s32.totalorder 1, %s12
    %p178 = scmp.lt.s32.totalorder %s12, 3
    %p179 = pnand %p177, %p178
    %p180 = pneg %p179
    // Predicated region
    $region9: #{_lambda_.8} parent=5 // pred_check
      _
    $region10: #{_lambda_.8} parent=5 // pred_check_branch
      %182 = sbr.rel (%p179) target = $region12
    $region11: #{_lambda_.8} parent=5 // pred_region
      %s183 = ssub.s32 %s12, 1
      // Predicated region
      $region13: #{_lambda_.8} parent=11 // pred_check
        %p184 = pneg %p59
      $region14: #{_lambda_.8} parent=11 // pred_check_branch
        %186 = sbr.rel (%p184) target = $region16
      $region15: #{_lambda_.8} parent=11 // pred_region
        _
      $region16: #{_lambda_.8} parent=11 // pred_fallthru
        _
      // Predicated region
      $region17: #{_lambda_.8} parent=11 // pred_check
        %p187 = pneg %p80
      $region18: #{_lambda_.8} parent=11 // pred_check_branch
        %189 = sbr.rel (%p187) target = $region20
      $region19: #{_lambda_.8} parent=11 // pred_region
        _
      $region20: #{_lambda_.8} parent=11 // pred_fallthru
        _
      // Predicated region
      $region21: #{_lambda_.8} parent=11 // pred_check
        %p190 = pneg %p101
      $region22: #{_lambda_.8} parent=11 // pred_check_branch
        %192 = sbr.rel (%p190) target = $region24
      $region23: #{_lambda_.8} parent=11 // pred_region
        _
      $region24: #{_lambda_.8} parent=11 // pred_fallthru
        _
      // Predicated region
      $region25: #{_lambda_.8} parent=11 // pred_check
        %p193 = pneg %p122
      $region26: #{_lambda_.8} parent=11 // pred_check_branch
        %195 = sbr.rel (%p193) target = $region28
      $region27: #{_lambda_.8} parent=11 // pred_region
        _
      $region28: #{_lambda_.8} parent=11 // pred_fallthru
        _
      // Predicated region
      $region29: #{_lambda_.8} parent=11 // pred_check
        %p196 = pneg %p143
      $region30: #{_lambda_.8} parent=11 // pred_check_branch
        %198 = sbr.rel (%p196) target = $region32
      $region31: #{_lambda_.8} parent=11 // pred_region
        _
      $region32: #{_lambda_.8} parent=11 // pred_fallthru
        _
    $region12: #{_lambda_.8} parent=5 // pred_fallthru
      _
    %p199 = scmp.lt.s32.totalorder %s12, 2
    // Predicated region
    $region33: #{_lambda_.8} parent=5 // pred_check
      %p200 = pneg %p199
    $region34: #{_lambda_.8} parent=5 // pred_check_branch
      %202 = sbr.rel (%p200) target = $region36
    $region35: #{_lambda_.8} parent=5 // pred_region
      // Predicated region
      $region37: #{_lambda_.8} parent=35 // pred_check
        %p203 = pneg %p32
      $region38: #{_lambda_.8} parent=35 // pred_check_branch
        %205 = sbr.rel (%p203) target = $region40
      $region39: #{_lambda_.8} parent=35 // pred_region
        %p206 = scmp.lt.s32.totalorder %s12, 1
        %s207 = scalar_select %p206, %s12, 1
        %s208 = smul.addr %s207, 32
        %s209 = smul.addr %s208, 4
        %s210 = scalar_lea.vmem %s0, %s209
      $region40: #{_lambda_.8} parent=35 // pred_fallthru
        _
    $region36: #{_lambda_.8} parent=5 // pred_fallthru
      _
    %p211 = scmp.le.s32.totalorder 1, %s12
    %p212 = scmp.lt.s32.totalorder %s12, 3
    %p213 = pnand %p211, %p212
    %p214 = pneg %p213
    // Predicated region
    $region41: #{_lambda_.8} parent=5 // pred_check
      _
    $region42: #{_lambda_.8} parent=5 // pred_check_branch
      %216 = sbr.rel (%p213) target = $region44
    $region43: #{_lambda_.8} parent=5 // pred_region
      %s217 = ssub.s32 %s12, 1
      %p218 = scmp.lt.s32.totalorder %s17, 1
      %s219 = scalar_select %p218, %s17, 1
      %s220 = smul.addr %s219, 32
      %s221 = smul.addr %s220, 4
      %s222 = scalar_lea.vmem %s0, %s221
      %p223 = pneg %p38
      %p224 = pneg %p35
      %p225 = pneg %p59
      %p226 = pneg %p56
      %p227 = pneg %p80
      %p228 = pneg %p77
      %p229 = pneg %p101
      %p230 = pneg %p98
      %p231 = pneg %p122
      %p232 = pneg %p119
      %p233 = pneg %p143
      %p234 = pneg %p140
      %p235 = pneg %p169
      %p236 = pneg %p166
      %p237 = scmp.lt.s32.totalorder %s17, 1
      %s238 = scalar_select %p237, %s17, 1
      %s239 = smul.addr %s238, 32
      %s240 = smul.addr %s239, 4
      %s241 = scalar_lea.vmem %s6, %s240
      %p242 = scmp.lt.s32.totalorder %s17, 1
      %s243 = scalar_select %p242, %s17, 1
      %s244 = smul.addr %s243, 32
      %s245 = smul.addr %s244, 4
      %s246 = scalar_lea.vmem %s0, %s245
      %p247 = scmp.lt.s32.totalorder %s17, 1
      %s248 = scalar_select %p247, %s17, 1
      %s249 = smul.addr %s248, 32
      %s250 = smul.addr %s249, 4
      %s251 = scalar_lea.vmem %s6, %s250
      %v253 = vld [vmem:[%s246] sm:$0xf]
      %v254 = vld [vmem:[%s246 + $0x4] sm:$0xf]
      %v255 = vld [vmem:[%s246 + $0x8] sm:$0xf]
      %v256 = vld [vmem:[%s246 + $0xc] sm:$0xf]
      %v257 = vld [vmem:[%s246 + $0x10] sm:$0xf]
      %v258 = vld [vmem:[%s246 + $0x14] sm:$0xf]
      %v259 = vld [vmem:[%s246 + $0x18] sm:$0xf]
      %v260 = vld [vmem:[%s246 + $0x1c] sm:$0xf]
      %v261 = vld [vmem:[%s246 + $0x20] sm:$0xf]
      %v262 = vld [vmem:[%s246 + $0x24] sm:$0xf]
      %v263 = vld [vmem:[%s246 + $0x28] sm:$0xf]
      %v264 = vld [vmem:[%s246 + $0x2c] sm:$0xf]
      %v265 = vld [vmem:[%s246 + $0x30] sm:$0xf]
      %v266 = vld [vmem:[%s246 + $0x34] sm:$0xf]
      %v267 = vld [vmem:[%s246 + $0x38] sm:$0xf]
      %v268 = vld [vmem:[%s246 + $0x3c] sm:$0xf]
      %v269 = vld [vmem:[%s246 + $0x40] sm:$0xf]
      %v270 = vld [vmem:[%s246 + $0x44] sm:$0xf]
      %v271 = vld [vmem:[%s246 + $0x48] sm:$0xf]
      %v272 = vld [vmem:[%s246 + $0x4c] sm:$0xf]
      %v273 = vld [vmem:[%s246 + $0x50] sm:$0xf]
      %v274 = vld [vmem:[%s246 + $0x54] sm:$0xf]
      %v275 = vld [vmem:[%s246 + $0x58] sm:$0xf]
      %v276 = vld [vmem:[%s246 + $0x5c] sm:$0xf]
      %v277 = vld [vmem:[%s246 + $0x60] sm:$0xf]
      %v278 = vld [vmem:[%s246 + $0x64] sm:$0xf]
      %v279 = vld [vmem:[%s246 + $0x68] sm:$0xf]
      %v280 = vld [vmem:[%s246 + $0x6c] sm:$0xf]
      %v281 = vld [vmem:[%s246 + $0x70] sm:$0xf]
      %v282 = vld [vmem:[%s246 + $0x74] sm:$0xf]
      %v283 = vld [vmem:[%s246 + $0x78] sm:$0xf]
      %v284 = vld [vmem:[%s246 + $0x7c] sm:$0xf]
      %v285 = vunpack.c.l.bf16 %v253
      %v286 = vunpack.c.l.bf16 %v254
      %v287 = vunpack.c.l.bf16 %v255
      %v288 = vunpack.c.l.bf16 %v256
      %v289 = vunpack.c.l.bf16 %v257
      %v290 = vunpack.c.l.bf16 %v258
      %v291 = vunpack.c.l.bf16 %v259
      %v292 = vunpack.c.l.bf16 %v260
      %v293 = vunpack.c.l.bf16 %v261
      %v294 = vunpack.c.l.bf16 %v262
      %v295 = vunpack.c.l.bf16 %v263
      %v296 = vunpack.c.l.bf16 %v264
      %v297 = vunpack.c.l.bf16 %v265
      %v298 = vunpack.c.l.bf16 %v266
      %v299 = vunpack.c.l.bf16 %v267
      %v300 = vunpack.c.l.bf16 %v268
      %v301 = vunpack.c.l.bf16 %v269
      %v302 = vunpack.c.l.bf16 %v270
      %v303 = vunpack.c.l.bf16 %v271
      %v304 = vunpack.c.l.bf16 %v272
      %v305 = vunpack.c.l.bf16 %v273
      %v306 = vunpack.c.l.bf16 %v274
      %v307 = vunpack.c.l.bf16 %v275
      %v308 = vunpack.c.l.bf16 %v276
      %v309 = vunpack.c.l.bf16 %v277
      %v310 = vunpack.c.l.bf16 %v278
      %v311 = vunpack.c.l.bf16 %v279
      %v312 = vunpack.c.l.bf16 %v280
      %v313 = vunpack.c.l.bf16 %v281
      %v314 = vunpack.c.l.bf16 %v282
      %v315 = vunpack.c.l.bf16 %v283
      %v316 = vunpack.c.l.bf16 %v284
      %v317 = vpack.c.bf16 %v286, %v285
      %v318 = vpack.c.bf16 %v288, %v287
      %v319 = vpack.c.bf16 %v290, %v289
      %v320 = vpack.c.bf16 %v292, %v291
      %v321 = vpack.c.bf16 %v294, %v293
      %v322 = vpack.c.bf16 %v296, %v295
      %v323 = vpack.c.bf16 %v298, %v297
      %v324 = vpack.c.bf16 %v300, %v299
      %v325 = vpack.c.bf16 %v302, %v301
      %v326 = vpack.c.bf16 %v304, %v303
      %v327 = vpack.c.bf16 %v306, %v305
      %v328 = vpack.c.bf16 %v308, %v307
      %v329 = vpack.c.bf16 %v310, %v309
      %v330 = vpack.c.bf16 %v312, %v311
      %v331 = vpack.c.bf16 %v314, %v313
      %v332 = vpack.c.bf16 %v316, %v315
      %v333 = vld [vmem:[%s5] sm:$0xf]
      %vm334 = vcmp.ge.f32.partialorder %v285, 0.0
      %vm335 = vcmp.ge.f32.partialorder %v286, 0.0
      %vm336 = vcmp.ge.f32.partialorder %v287, 0.0
      %vm337 = vcmp.ge.f32.partialorder %v288, 0.0
      %vm338 = vcmp.ge.f32.partialorder %v289, 0.0
      %vm339 = vcmp.ge.f32.partialorder %v290, 0.0
      %vm340 = vcmp.ge.f32.partialorder %v291, 0.0
      %vm341 = vcmp.ge.f32.partialorder %v292, 0.0
      %vm342 = vcmp.ge.f32.partialorder %v293, 0.0
      %vm343 = vcmp.ge.f32.partialorder %v294, 0.0
      %vm344 = vcmp.ge.f32.partialorder %v295, 0.0
      %vm345 = vcmp.ge.f32.partialorder %v296, 0.0
      %vm346 = vcmp.ge.f32.partialorder %v297, 0.0
      %vm347 = vcmp.ge.f32.partialorder %v298, 0.0
      %vm348 = vcmp.ge.f32.partialorder %v299, 0.0
      %vm349 = vcmp.ge.f32.partialorder %v300, 0.0
      %vm350 = vcmp.ge.f32.partialorder %v301, 0.0
      %vm351 = vcmp.ge.f32.partialorder %v302, 0.0
      %vm352 = vcmp.ge.f32.partialorder %v303, 0.0
      %vm353 = vcmp.ge.f32.partialorder %v304, 0.0
      %vm354 = vcmp.ge.f32.partialorder %v305, 0.0
      %vm355 = vcmp.ge.f32.partialorder %v306, 0.0
      %vm356 = vcmp.ge.f32.partialorder %v307, 0.0
      %vm357 = vcmp.ge.f32.partialorder %v308, 0.0
      %vm358 = vcmp.ge.f32.partialorder %v309, 0.0
      %vm359 = vcmp.ge.f32.partialorder %v310, 0.0
      %vm360 = vcmp.ge.f32.partialorder %v311, 0.0
      %vm361 = vcmp.ge.f32.partialorder %v312, 0.0
      %vm362 = vcmp.ge.f32.partialorder %v313, 0.0
      %vm363 = vcmp.ge.f32.partialorder %v314, 0.0
      %vm364 = vcmp.ge.f32.partialorder %v315, 0.0
      %vm365 = vcmp.ge.f32.partialorder %v316, 0.0
      %v366 = vmul.f32 %v285, 0.2
      %v367 = vmul.f32 %v286, 0.2
      %v368 = vmul.f32 %v287, 0.2
      %v369 = vmul.f32 %v288, 0.2
      %v370 = vmul.f32 %v289, 0.2
      %v371 = vmul.f32 %v290, 0.2
      %v372 = vmul.f32 %v291, 0.2
      %v373 = vmul.f32 %v292, 0.2
      %v374 = vmul.f32 %v293, 0.2
      %v375 = vmul.f32 %v294, 0.2
      %v376 = vmul.f32 %v295, 0.2
      %v377 = vmul.f32 %v296, 0.2
      %v378 = vmul.f32 %v297, 0.2
      %v379 = vmul.f32 %v298, 0.2
      %v380 = vmul.f32 %v299, 0.2
      %v381 = vmul.f32 %v300, 0.2
      %v382 = vmul.f32 %v301, 0.2
      %v383 = vmul.f32 %v302, 0.2
      %v384 = vmul.f32 %v303, 0.2
      %v385 = vmul.f32 %v304, 0.2
      %v386 = vmul.f32 %v305, 0.2
      %v387 = vmul.f32 %v306, 0.2
      %v388 = vmul.f32 %v307, 0.2
      %v389 = vmul.f32 %v308, 0.2
      %v390 = vmul.f32 %v309, 0.2
      %v391 = vmul.f32 %v310, 0.2
      %v392 = vmul.f32 %v311, 0.2
      %v393 = vmul.f32 %v312, 0.2
      %v394 = vmul.f32 %v313, 0.2
      %v395 = vmul.f32 %v314, 0.2
      %v396 = vmul.f32 %v315, 0.2
      %v397 = vmul.f32 %v316, 0.2
      %v398 = vsel %vm334, %v285, %v366
      %v399 = vsel %vm335, %v286, %v367
      %v400 = vsel %vm336, %v287, %v368
      %v401 = vsel %vm337, %v288, %v369
      %v402 = vsel %vm338, %v289, %v370
      %v403 = vsel %vm339, %v290, %v371
      %v404 = vsel %vm340, %v291, %v372
      %v405 = vsel %vm341, %v292, %v373
      %v406 = vsel %vm342, %v293, %v374
      %v407 = vsel %vm343, %v294, %v375
      %v408 = vsel %vm344, %v295, %v376
      %v409 = vsel %vm345, %v296, %v377
      %v410 = vsel %vm346, %v297, %v378
      %v411 = vsel %vm347, %v298, %v379
      %v412 = vsel %vm348, %v299, %v380
      %v413 = vsel %vm349, %v300, %v381
      %v414 = vsel %vm350, %v301, %v382
      %v415 = vsel %vm351, %v302, %v383
      %v416 = vsel %vm352, %v303, %v384
      %v417 = vsel %vm353, %v304, %v385
      %v418 = vsel %vm354, %v305, %v386
      %v419 = vsel %vm355, %v306, %v387
      %v420 = vsel %vm356, %v307, %v388
      %v421 = vsel %vm357, %v308, %v389
      %v422 = vsel %vm358, %v309, %v390
      %v423 = vsel %vm359, %v310, %v391
      %v424 = vsel %vm360, %v311, %v392
      %v425 = vsel %vm361, %v312, %v393
      %v426 = vsel %vm362, %v313, %v394
      %v427 = vsel %vm363, %v314, %v395
      %v428 = vsel %vm364, %v315, %v396
      %v429 = vsel %vm365, %v316, %v397
      %v430 = vld [vmem:[%s1] sm:$0xf]
      %v431 = vld [vmem:[%s1 + $0x4] sm:$0xf]
      %v432 = vld [vmem:[%s1 + $0x8] sm:$0xf]
      %v433 = vld [vmem:[%s1 + $0xc] sm:$0xf]
      %v434 = vld [vmem:[%s1 + $0x10] sm:$0xf]
      %v435 = vld [vmem:[%s1 + $0x14] sm:$0xf]
      %v436 = vld [vmem:[%s1 + $0x18] sm:$0xf]
      %v437 = vld [vmem:[%s1 + $0x1c] sm:$0xf]
      %v438 = vld [vmem:[%s1 + $0x20] sm:$0xf]
      %v439 = vld [vmem:[%s2] sm:$0x1]
      %vm473 = vcmask 1040384
      %v474 = vrot.slane 0.0, 7
      %v475 = vsel %vm473, %v474, %v474
      %v476 = vrot.slane %v398, 7
      %v477 = vrot.slane %v399, 7
      %v478 = vsel %vm473, %v476, %v477
      %v479 = vrot.slane %v400, 7
      %v480 = vrot.slane %v401, 7
      %v481 = vsel %vm473, %v479, %v480
      %v482 = vrot.slane %v402, 7
      %v483 = vrot.slane %v403, 7
      %v484 = vsel %vm473, %v482, %v483
      %v485 = vrot.slane %v404, 7
      %v486 = vrot.slane %v405, 7
      %v487 = vsel %vm473, %v485, %v486
      %v488 = vrot.slane %v406, 7
      %v489 = vrot.slane %v407, 7
      %v490 = vsel %vm473, %v488, %v489
      %v491 = vrot.slane %v408, 7
      %v492 = vrot.slane %v409, 7
      %v493 = vsel %vm473, %v491, %v492
      %v494 = vrot.slane %v410, 7
      %v495 = vrot.slane %v411, 7
      %v496 = vsel %vm473, %v494, %v495
      %v497 = vrot.slane %v412, 7
      %v498 = vrot.slane %v413, 7
      %v499 = vsel %vm473, %v497, %v498
      %v500 = vrot.slane %v414, 7
      %v501 = vrot.slane %v415, 7
      %v502 = vsel %vm473, %v500, %v501
      %v503 = vrot.slane %v416, 7
      %v504 = vrot.slane %v417, 7
      %v505 = vsel %vm473, %v503, %v504
      %v506 = vrot.slane %v418, 7
      %v507 = vrot.slane %v419, 7
      %v508 = vsel %vm473, %v506, %v507
      %v509 = vrot.slane %v420, 7
      %v510 = vrot.slane %v421, 7
      %v511 = vsel %vm473, %v509, %v510
      %v512 = vrot.slane %v422, 7
      %v513 = vrot.slane %v423, 7
      %v514 = vsel %vm473, %v512, %v513
      %v515 = vrot.slane %v424, 7
      %v516 = vrot.slane %v425, 7
      %v517 = vsel %vm473, %v515, %v516
      %v518 = vrot.slane %v426, 7
      %v519 = vrot.slane %v427, 7
      %v520 = vsel %vm473, %v518, %v519
      %v521 = vrot.slane %v428, 7
      %v522 = vrot.slane %v429, 7
      %v523 = vsel %vm473, %v521, %v522
      %v574 = vsel %vm473, 0.0, %v474
      %v575 = vsel %vm473, 0.0, %v476
      %v576 = vsel %vm473, 0.0, %v479
      %v577 = vsel %vm473, 0.0, %v482
      %v578 = vsel %vm473, 0.0, %v485
      %v579 = vsel %vm473, 0.0, %v488
      %v580 = vsel %vm473, 0.0, %v491
      %v581 = vsel %vm473, 0.0, %v494
      %v582 = vsel %vm473, 0.0, %v497
      %v583 = vsel %vm473, 0.0, %v500
      %v584 = vsel %vm473, 0.0, %v503
      %v585 = vsel %vm473, 0.0, %v506
      %v586 = vsel %vm473, 0.0, %v509
      %v587 = vsel %vm473, 0.0, %v512
      %v588 = vsel %vm473, 0.0, %v515
      %v589 = vsel %vm473, 0.0, %v518
      %v590 = vsel %vm473, 0.0, %v521
      %v591 = vsel %vm473, %v474, 0.0
      %v592 = vsel %vm473, %v477, 0.0
      %v593 = vsel %vm473, %v480, 0.0
      %v594 = vsel %vm473, %v483, 0.0
      %v595 = vsel %vm473, %v486, 0.0
      %v596 = vsel %vm473, %v489, 0.0
      %v597 = vsel %vm473, %v492, 0.0
      %v598 = vsel %vm473, %v495, 0.0
      %v599 = vsel %vm473, %v498, 0.0
      %v600 = vsel %vm473, %v501, 0.0
      %v601 = vsel %vm473, %v504, 0.0
      %v602 = vsel %vm473, %v507, 0.0
      %v603 = vsel %vm473, %v510, 0.0
      %v604 = vsel %vm473, %v513, 0.0
      %v605 = vsel %vm473, %v516, 0.0
      %v606 = vsel %vm473, %v519, 0.0
      %v607 = vsel %vm473, %v522, 0.0
      %vm640 = vcmask 1046528
      %v641 = vrot.slane %v574, 1
      %v642 = vrot.slane %v475, 1
      %v643 = vsel %vm640, %v641, %v642
      %v644 = vrot.slane %v591, 1
      %v645 = vsel %vm640, %v642, %v644
      %v646 = vrot.slane %v575, 1
      %v647 = vrot.slane %v478, 1
      %v648 = vsel %vm640, %v646, %v647
      %v649 = vrot.slane %v592, 1
      %v650 = vsel %vm640, %v647, %v649
      %v651 = vrot.slane %v576, 1
      %v652 = vrot.slane %v481, 1
      %v653 = vsel %vm640, %v651, %v652
      %v654 = vrot.slane %v593, 1
      %v655 = vsel %vm640, %v652, %v654
      %v656 = vrot.slane %v577, 1
      %v657 = vrot.slane %v484, 1
      %v658 = vsel %vm640, %v656, %v657
      %v659 = vrot.slane %v594, 1
      %v660 = vsel %vm640, %v657, %v659
      %v661 = vrot.slane %v578, 1
      %v662 = vrot.slane %v487, 1
      %v663 = vsel %vm640, %v661, %v662
      %v664 = vrot.slane %v595, 1
      %v665 = vsel %vm640, %v662, %v664
      %v666 = vrot.slane %v579, 1
      %v667 = vrot.slane %v490, 1
      %v668 = vsel %vm640, %v666, %v667
      %v669 = vrot.slane %v596, 1
      %v670 = vsel %vm640, %v667, %v669
      %v671 = vrot.slane %v580, 1
      %v672 = vrot.slane %v493, 1
      %v673 = vsel %vm640, %v671, %v672
      %v674 = vrot.slane %v597, 1
      %v675 = vsel %vm640, %v672, %v674
      %v676 = vrot.slane %v581, 1
      %v677 = vrot.slane %v496, 1
      %v678 = vsel %vm640, %v676, %v677
      %v679 = vrot.slane %v598, 1
      %v680 = vsel %vm640, %v677, %v679
      %v681 = vrot.slane %v582, 1
      %v682 = vrot.slane %v499, 1
      %v683 = vsel %vm640, %v681, %v682
      %v684 = vrot.slane %v599, 1
      %v685 = vsel %vm640, %v682, %v684
      %v686 = vrot.slane %v583, 1
      %v687 = vrot.slane %v502, 1
      %v688 = vsel %vm640, %v686, %v687
      %v689 = vrot.slane %v600, 1
      %v690 = vsel %vm640, %v687, %v689
      %v691 = vrot.slane %v584, 1
      %v692 = vrot.slane %v505, 1
      %v693 = vsel %vm640, %v691, %v692
      %v694 = vrot.slane %v601, 1
      %v695 = vsel %vm640, %v692, %v694
      %v696 = vrot.slane %v585, 1
      %v697 = vrot.slane %v508, 1
      %v698 = vsel %vm640, %v696, %v697
      %v699 = vrot.slane %v602, 1
      %v700 = vsel %vm640, %v697, %v699
      %v701 = vrot.slane %v586, 1
      %v702 = vrot.slane %v511, 1
      %v703 = vsel %vm640, %v701, %v702
      %v704 = vrot.slane %v603, 1
      %v705 = vsel %vm640, %v702, %v704
      %v706 = vrot.slane %v587, 1
      %v707 = vrot.slane %v514, 1
      %v708 = vsel %vm640, %v706, %v707
      %v709 = vrot.slane %v604, 1
      %v710 = vsel %vm640, %v707, %v709
      %v711 = vrot.slane %v588, 1
      %v712 = vrot.slane %v517, 1
      %v713 = vsel %vm640, %v711, %v712
      %v714 = vrot.slane %v605, 1
      %v715 = vsel %vm640, %v712, %v714
      %v716 = vrot.slane %v589, 1
      %v717 = vrot.slane %v520, 1
      %v718 = vsel %vm640, %v716, %v717
      %v719 = vrot.slane %v606, 1
      %v720 = vsel %vm640, %v717, %v719
      %721 = vrot.lane.b32.xlu0 %v643, 8
      %v722 = vpop.permute.xlu0 %721
      %723 = vrot.lane.b32.xlu0 %v645, 8
      %v724 = vpop.permute.xlu0 %723
      %725 = vrot.lane.b32.xlu0 %v648, 8
      %v726 = vpop.permute.xlu0 %725
      %727 = vrot.lane.b32.xlu0 %v650, 8
      %v728 = vpop.permute.xlu0 %727
      %729 = vrot.lane.b32.xlu0 %v653, 8
      %v730 = vpop.permute.xlu0 %729
      %731 = vrot.lane.b32.xlu0 %v655, 8
      %v732 = vpop.permute.xlu0 %731
      %733 = vrot.lane.b32.xlu0 %v658, 8
      %v734 = vpop.permute.xlu0 %733
      %735 = vrot.lane.b32.xlu0 %v660, 8
      %v736 = vpop.permute.xlu0 %735
      %737 = vrot.lane.b32.xlu0 %v663, 8
      %v738 = vpop.permute.xlu0 %737
      %739 = vrot.lane.b32.xlu0 %v665, 8
      %v740 = vpop.permute.xlu0 %739
      %741 = vrot.lane.b32.xlu0 %v668, 8
      %v742 = vpop.permute.xlu0 %741
      %743 = vrot.lane.b32.xlu0 %v670, 8
      %v744 = vpop.permute.xlu0 %743
      %745 = vrot.lane.b32.xlu0 %v673, 8
      %v746 = vpop.permute.xlu0 %745
      %747 = vrot.lane.b32.xlu0 %v675, 8
      %v748 = vpop.permute.xlu0 %747
      %749 = vrot.lane.b32.xlu0 %v678, 8
      %v750 = vpop.permute.xlu0 %749
      %751 = vrot.lane.b32.xlu0 %v680, 8
      %v752 = vpop.permute.xlu0 %751
      %753 = vrot.lane.b32.xlu0 %v683, 8
      %v754 = vpop.permute.xlu0 %753
      %755 = vrot.lane.b32.xlu0 %v685, 8
      %v756 = vpop.permute.xlu0 %755
      %757 = vrot.lane.b32.xlu0 %v688, 8
      %v758 = vpop.permute.xlu0 %757
      %759 = vrot.lane.b32.xlu0 %v690, 8
      %v760 = vpop.permute.xlu0 %759
      %761 = vrot.lane.b32.xlu0 %v693, 8
      %v762 = vpop.permute.xlu0 %761
      %763 = vrot.lane.b32.xlu0 %v695, 8
      %v764 = vpop.permute.xlu0 %763
      %765 = vrot.lane.b32.xlu0 %v698, 8
      %v766 = vpop.permute.xlu0 %765
      %767 = vrot.lane.b32.xlu0 %v700, 8
      %v768 = vpop.permute.xlu0 %767
      %769 = vrot.lane.b32.xlu0 %v703, 8
      %v770 = vpop.permute.xlu0 %769
      %771 = vrot.lane.b32.xlu0 %v705, 8
      %v772 = vpop.permute.xlu0 %771
      %773 = vrot.lane.b32.xlu0 %v708, 8
      %v774 = vpop.permute.xlu0 %773
      %775 = vrot.lane.b32.xlu0 %v710, 8
      %v776 = vpop.permute.xlu0 %775
      %777 = vrot.lane.b32.xlu0 %v713, 8
      %v778 = vpop.permute.xlu0 %777
      %779 = vrot.lane.b32.xlu0 %v715, 8
      %v780 = vpop.permute.xlu0 %779
      %781 = vrot.lane.b32.xlu0 %v718, 8
      %v782 = vpop.permute.xlu0 %781
      %783 = vrot.lane.b32.xlu0 %v720, 8
      %v784 = vpop.permute.xlu0 %783
      %vm817 = vcmask 1045504
      %v818 = vrot.slane %v574, 2
      %v819 = vrot.slane %v475, 2
      %v820 = vsel %vm817, %v818, %v819
      %v821 = vrot.slane %v591, 2
      %v822 = vsel %vm817, %v819, %v821
      %v823 = vrot.slane %v575, 2
      %v824 = vrot.slane %v478, 2
      %v825 = vsel %vm817, %v823, %v824
      %v826 = vrot.slane %v592, 2
      %v827 = vsel %vm817, %v824, %v826
      %v828 = vrot.slane %v576, 2
      %v829 = vrot.slane %v481, 2
      %v830 = vsel %vm817, %v828, %v829
      %v831 = vrot.slane %v593, 2
      %v832 = vsel %vm817, %v829, %v831
      %v833 = vrot.slane %v577, 2
      %v834 = vrot.slane %v484, 2
      %v835 = vsel %vm817, %v833, %v834
      %v836 = vrot.slane %v594, 2
      %v837 = vsel %vm817, %v834, %v836
      %v838 = vrot.slane %v578, 2
      %v839 = vrot.slane %v487, 2
      %v840 = vsel %vm817, %v838, %v839
      %v841 = vrot.slane %v595, 2
      %v842 = vsel %vm817, %v839, %v841
      %v843 = vrot.slane %v579, 2
      %v844 = vrot.slane %v490, 2
      %v845 = vsel %vm817, %v843, %v844
      %v846 = vrot.slane %v596, 2
      %v847 = vsel %vm817, %v844, %v846
      %v848 = vrot.slane %v580, 2
      %v849 = vrot.slane %v493, 2
      %v850 = vsel %vm817, %v848, %v849
      %v851 = vrot.slane %v597, 2
      %v852 = vsel %vm817, %v849, %v851
      %v853 = vrot.slane %v581, 2
      %v854 = vrot.slane %v496, 2
      %v855 = vsel %vm817, %v853, %v854
      %v856 = vrot.slane %v598, 2
      %v857 = vsel %vm817, %v854, %v856
      %v858 = vrot.slane %v582, 2
      %v859 = vrot.slane %v499, 2
      %v860 = vsel %vm817, %v858, %v859
      %v861 = vrot.slane %v599, 2
      %v862 = vsel %vm817, %v859, %v861
      %v863 = vrot.slane %v583, 2
      %v864 = vrot.slane %v502, 2
      %v865 = vsel %vm817, %v863, %v864
      %v866 = vrot.slane %v600, 2
      %v867 = vsel %vm817, %v864, %v866
      %v868 = vrot.slane %v584, 2
      %v869 = vrot.slane %v505, 2
      %v870 = vsel %vm817, %v868, %v869
      %v871 = vrot.slane %v601, 2
      %v872 = vsel %vm817, %v869, %v871
      %v873 = vrot.slane %v585, 2
      %v874 = vrot.slane %v508, 2
      %v875 = vsel %vm817, %v873, %v874
      %v876 = vrot.slane %v602, 2
      %v877 = vsel %vm817, %v874, %v876
      %v878 = vrot.slane %v586, 2
      %v879 = vrot.slane %v511, 2
      %v880 = vsel %vm817, %v878, %v879
      %v881 = vrot.slane %v603, 2
      %v882 = vsel %vm817, %v879, %v881
      %v883 = vrot.slane %v587, 2
      %v884 = vrot.slane %v514, 2
      %v885 = vsel %vm817, %v883, %v884
      %v886 = vrot.slane %v604, 2
      %v887 = vsel %vm817, %v884, %v886
      %v888 = vrot.slane %v588, 2
      %v889 = vrot.slane %v517, 2
      %v890 = vsel %vm817, %v888, %v889
      %v891 = vrot.slane %v605, 2
      %v892 = vsel %vm817, %v889, %v891
      %v893 = vrot.slane %v589, 2
      %v894 = vrot.slane %v520, 2
      %v895 = vsel %vm817, %v893, %v894
      %v896 = vrot.slane %v606, 2
      %v897 = vsel %vm817, %v894, %v896
      %898 = vrot.lane.b32.xlu0 %v820, 16
      %v899 = vpop.permute.xlu0 %898
      %900 = vrot.lane.b32.xlu0 %v822, 16
      %v901 = vpop.permute.xlu0 %900
      %902 = vrot.lane.b32.xlu0 %v825, 16
      %v903 = vpop.permute.xlu0 %902
      %904 = vrot.lane.b32.xlu0 %v827, 16
      %v905 = vpop.permute.xlu0 %904
      %906 = vrot.lane.b32.xlu0 %v830, 16
      %v907 = vpop.permute.xlu0 %906
      %908 = vrot.lane.b32.xlu0 %v832, 16
      %v909 = vpop.permute.xlu0 %908
      %910 = vrot.lane.b32.xlu0 %v835, 16
      %v911 = vpop.permute.xlu0 %910
      %912 = vrot.lane.b32.xlu0 %v837, 16
      %v913 = vpop.permute.xlu0 %912
      %914 = vrot.lane.b32.xlu0 %v840, 16
      %v915 = vpop.permute.xlu0 %914
      %916 = vrot.lane.b32.xlu0 %v842, 16
      %v917 = vpop.permute.xlu0 %916
      %918 = vrot.lane.b32.xlu0 %v845, 16
      %v919 = vpop.permute.xlu0 %918
      %920 = vrot.lane.b32.xlu0 %v847, 16
      %v921 = vpop.permute.xlu0 %920
      %922 = vrot.lane.b32.xlu0 %v850, 16
      %v923 = vpop.permute.xlu0 %922
      %924 = vrot.lane.b32.xlu0 %v852, 16
      %v925 = vpop.permute.xlu0 %924
      %926 = vrot.lane.b32.xlu0 %v855, 16
      %v927 = vpop.permute.xlu0 %926
      %928 = vrot.lane.b32.xlu0 %v857, 16
      %v929 = vpop.permute.xlu0 %928
      %930 = vrot.lane.b32.xlu0 %v860, 16
      %v931 = vpop.permute.xlu0 %930
      %932 = vrot.lane.b32.xlu0 %v862, 16
      %v933 = vpop.permute.xlu0 %932
      %934 = vrot.lane.b32.xlu0 %v865, 16
      %v935 = vpop.permute.xlu0 %934
      %936 = vrot.lane.b32.xlu0 %v867, 16
      %v937 = vpop.permute.xlu0 %936
      %938 = vrot.lane.b32.xlu0 %v870, 16
      %v939 = vpop.permute.xlu0 %938
      %940 = vrot.lane.b32.xlu0 %v872, 16
      %v941 = vpop.permute.xlu0 %940
      %942 = vrot.lane.b32.xlu0 %v875, 16
      %v943 = vpop.permute.xlu0 %942
      %944 = vrot.lane.b32.xlu0 %v877, 16
      %v945 = vpop.permute.xlu0 %944
      %946 = vrot.lane.b32.xlu0 %v880, 16
      %v947 = vpop.permute.xlu0 %946
      %948 = vrot.lane.b32.xlu0 %v882, 16
      %v949 = vpop.permute.xlu0 %948
      %950 = vrot.lane.b32.xlu0 %v885, 16
      %v951 = vpop.permute.xlu0 %950
      %952 = vrot.lane.b32.xlu0 %v887, 16
      %v953 = vpop.permute.xlu0 %952
      %954 = vrot.lane.b32.xlu0 %v890, 16
      %v955 = vpop.permute.xlu0 %954
      %956 = vrot.lane.b32.xlu0 %v892, 16
      %v957 = vpop.permute.xlu0 %956
      %958 = vrot.lane.b32.xlu0 %v895, 16
      %v959 = vpop.permute.xlu0 %958
      %960 = vrot.lane.b32.xlu0 %v897, 16
      %v961 = vpop.permute.xlu0 %960
      %vm994 = vcmask 64512
      %v995 = vsel %vm994, %v574, %v722
      %v996 = vsel %vm994, %v475, %v724
      %v997 = vsel %vm994, %v575, %v726
      %v998 = vsel %vm994, %v478, %v728
      %v999 = vsel %vm994, %v576, %v730
      %v1000 = vsel %vm994, %v481, %v732
      %v1001 = vsel %vm994, %v577, %v734
      %v1002 = vsel %vm994, %v484, %v736
      %v1003 = vsel %vm994, %v578, %v738
      %v1004 = vsel %vm994, %v487, %v740
      %v1005 = vsel %vm994, %v579, %v742
      %v1006 = vsel %vm994, %v490, %v744
      %v1007 = vsel %vm994, %v580, %v746
      %v1008 = vsel %vm994, %v493, %v748
      %v1009 = vsel %vm994, %v581, %v750
      %v1010 = vsel %vm994, %v496, %v752
      %v1011 = vsel %vm994, %v582, %v754
      %v1012 = vsel %vm994, %v499, %v756
      %v1013 = vsel %vm994, %v583, %v758
      %v1014 = vsel %vm994, %v502, %v760
      %v1015 = vsel %vm994, %v584, %v762
      %v1016 = vsel %vm994, %v505, %v764
      %v1017 = vsel %vm994, %v585, %v766
      %v1018 = vsel %vm994, %v508, %v768
      %v1019 = vsel %vm994, %v586, %v770
      %v1020 = vsel %vm994, %v511, %v772
      %v1021 = vsel %vm994, %v587, %v774
      %v1022 = vsel %vm994, %v514, %v776
      %v1023 = vsel %vm994, %v588, %v778
      %v1024 = vsel %vm994, %v517, %v780
      %v1025 = vsel %vm994, %v589, %v782
      %v1026 = vsel %vm994, %v520, %v784
      %vm1027 = vcmask 130048
      %v1028 = vsel %vm1027, %v995, %v899
      %v1029 = vsel %vm1027, %v996, %v901
      %v1030 = vsel %vm1027, %v997, %v903
      %v1031 = vsel %vm1027, %v998, %v905
      %v1032 = vsel %vm1027, %v999, %v907
      %v1033 = vsel %vm1027, %v1000, %v909
      %v1034 = vsel %vm1027, %v1001, %v911
      %v1035 = vsel %vm1027, %v1002, %v913
      %v1036 = vsel %vm1027, %v1003, %v915
      %v1037 = vsel %vm1027, %v1004, %v917
      %v1038 = vsel %vm1027, %v1005, %v919
      %v1039 = vsel %vm1027, %v1006, %v921
      %v1040 = vsel %vm1027, %v1007, %v923
      %v1041 = vsel %vm1027, %v1008, %v925
      %v1042 = vsel %vm1027, %v1009, %v927
      %v1043 = vsel %vm1027, %v1010, %v929
      %v1044 = vsel %vm1027, %v1011, %v931
      %v1045 = vsel %vm1027, %v1012, %v933
      %v1046 = vsel %vm1027, %v1013, %v935
      %v1047 = vsel %vm1027, %v1014, %v937
      %v1048 = vsel %vm1027, %v1015, %v939
      %v1049 = vsel %vm1027, %v1016, %v941
      %v1050 = vsel %vm1027, %v1017, %v943
      %v1051 = vsel %vm1027, %v1018, %v945
      %v1052 = vsel %vm1027, %v1019, %v947
      %v1053 = vsel %vm1027, %v1020, %v949
      %v1054 = vsel %vm1027, %v1021, %v951
      %v1055 = vsel %vm1027, %v1022, %v953
      %v1056 = vsel %vm1027, %v1023, %v955
      %v1057 = vsel %vm1027, %v1024, %v957
      %v1058 = vsel %vm1027, %v1025, %v959
      %v1059 = vsel %vm1027, %v1026, %v961
      %v1062 = vrot.slane %v590, 1
      %v1063 = vrot.slane %v523, 1
      %v1064 = vsel %vm640, %v1062, %v1063
      %v1065 = vrot.slane %v607, 1
      %v1066 = vsel %vm640, %v1063, %v1065
      %1067 = vrot.lane.b32.xlu0 %v1064, 8
      %v1068 = vpop.permute.xlu0 %1067
      %1069 = vrot.lane.b32.xlu0 %v1066, 8
      %v1070 = vpop.permute.xlu0 %1069
      %v1073 = vrot.slane %v590, 2
      %v1074 = vrot.slane %v523, 2
      %v1075 = vsel %vm817, %v1073, %v1074
      %v1076 = vrot.slane %v607, 2
      %v1077 = vsel %vm817, %v1074, %v1076
      %1078 = vrot.lane.b32.xlu0 %v1075, 16
      %v1079 = vpop.permute.xlu0 %1078
      %1080 = vrot.lane.b32.xlu0 %v1077, 16
      %v1081 = vpop.permute.xlu0 %1080
      %v1084 = vsel %vm994, %v590, %v1068
      %v1085 = vsel %vm994, %v523, %v1070
      %v1086 = vsel %vm1027, %v1084, %v1079
      %v1087 = vsel %vm1027, %v1085, %v1081
      %1120 = vrot.lane.b32.xlu0 %v1030, 24
      %v1121 = vpop.permute.xlu0 %1120
      %1122 = vrot.lane.b32.xlu0 %v1031, 24
      %v1123 = vpop.permute.xlu0 %1122
      %1124 = vrot.lane.b32.xlu0 %v1032, 24
      %v1125 = vpop.permute.xlu0 %1124
      %1126 = vrot.lane.b32.xlu0 %v1033, 24
      %v1127 = vpop.permute.xlu0 %1126
      %1128 = vrot.lane.b32.xlu0 %v1034, 24
      %v1129 = vpop.permute.xlu0 %1128
      %1130 = vrot.lane.b32.xlu0 %v1035, 24
      %v1131 = vpop.permute.xlu0 %1130
      %1132 = vrot.lane.b32.xlu0 %v1036, 24
      %v1133 = vpop.permute.xlu0 %1132
      %1134 = vrot.lane.b32.xlu0 %v1037, 24
      %v1135 = vpop.permute.xlu0 %1134
      %1136 = vrot.lane.b32.xlu0 %v1038, 24
      %v1137 = vpop.permute.xlu0 %1136
      %1138 = vrot.lane.b32.xlu0 %v1039, 24
      %v1139 = vpop.permute.xlu0 %1138
      %1140 = vrot.lane.b32.xlu0 %v1040, 24
      %v1141 = vpop.permute.xlu0 %1140
      %1142 = vrot.lane.b32.xlu0 %v1041, 24
      %v1143 = vpop.permute.xlu0 %1142
      %1144 = vrot.lane.b32.xlu0 %v1042, 24
      %v1145 = vpop.permute.xlu0 %1144
      %1146 = vrot.lane.b32.xlu0 %v1043, 24
      %v1147 = vpop.permute.xlu0 %1146
      %1148 = vrot.lane.b32.xlu0 %v1044, 24
      %v1149 = vpop.permute.xlu0 %1148
      %1150 = vrot.lane.b32.xlu0 %v1045, 24
      %v1151 = vpop.permute.xlu0 %1150
      %1152 = vrot.lane.b32.xlu0 %v1046, 24
      %v1153 = vpop.permute.xlu0 %1152
      %1154 = vrot.lane.b32.xlu0 %v1047, 24
      %v1155 = vpop.permute.xlu0 %1154
      %1156 = vrot.lane.b32.xlu0 %v1048, 24
      %v1157 = vpop.permute.xlu0 %1156
      %1158 = vrot.lane.b32.xlu0 %v1049, 24
      %v1159 = vpop.permute.xlu0 %1158
      %1160 = vrot.lane.b32.xlu0 %v1050, 24
      %v1161 = vpop.permute.xlu0 %1160
      %1162 = vrot.lane.b32.xlu0 %v1051, 24
      %v1163 = vpop.permute.xlu0 %1162
      %1164 = vrot.lane.b32.xlu0 %v1052, 24
      %v1165 = vpop.permute.xlu0 %1164
      %1166 = vrot.lane.b32.xlu0 %v1053, 24
      %v1167 = vpop.permute.xlu0 %1166
      %1168 = vrot.lane.b32.xlu0 %v1054, 24
      %v1169 = vpop.permute.xlu0 %1168
      %1170 = vrot.lane.b32.xlu0 %v1055, 24
      %v1171 = vpop.permute.xlu0 %1170
      %1172 = vrot.lane.b32.xlu0 %v1056, 24
      %v1173 = vpop.permute.xlu0 %1172
      %1174 = vrot.lane.b32.xlu0 %v1057, 24
      %v1175 = vpop.permute.xlu0 %1174
      %1176 = vrot.lane.b32.xlu0 %v1058, 24
      %v1177 = vpop.permute.xlu0 %1176
      %1178 = vrot.lane.b32.xlu0 %v1059, 24
      %v1179 = vpop.permute.xlu0 %1178
      %1180 = vrot.lane.b32.xlu0 %v1086, 24
      %v1181 = vpop.permute.xlu0 %1180
      %1182 = vrot.lane.b32.xlu0 %v1087, 24
      %v1183 = vpop.permute.xlu0 %1182
      %1218 = vrot.lane.b32.xlu0 %v1032, 48
      %v1219 = vpop.permute.xlu0 %1218
      %1220 = vrot.lane.b32.xlu0 %v1033, 48
      %v1221 = vpop.permute.xlu0 %1220
      %1222 = vrot.lane.b32.xlu0 %v1034, 48
      %v1223 = vpop.permute.xlu0 %1222
      %1224 = vrot.lane.b32.xlu0 %v1035, 48
      %v1225 = vpop.permute.xlu0 %1224
      %1226 = vrot.lane.b32.xlu0 %v1036, 48
      %v1227 = vpop.permute.xlu0 %1226
      %1228 = vrot.lane.b32.xlu0 %v1037, 48
      %v1229 = vpop.permute.xlu0 %1228
      %1230 = vrot.lane.b32.xlu0 %v1038, 48
      %v1231 = vpop.permute.xlu0 %1230
      %1232 = vrot.lane.b32.xlu0 %v1039, 48
      %v1233 = vpop.permute.xlu0 %1232
      %1234 = vrot.lane.b32.xlu0 %v1040, 48
      %v1235 = vpop.permute.xlu0 %1234
      %1236 = vrot.lane.b32.xlu0 %v1041, 48
      %v1237 = vpop.permute.xlu0 %1236
      %1238 = vrot.lane.b32.xlu0 %v1042, 48
      %v1239 = vpop.permute.xlu0 %1238
      %1240 = vrot.lane.b32.xlu0 %v1043, 48
      %v1241 = vpop.permute.xlu0 %1240
      %1242 = vrot.lane.b32.xlu0 %v1044, 48
      %v1243 = vpop.permute.xlu0 %1242
      %1244 = vrot.lane.b32.xlu0 %v1045, 48
      %v1245 = vpop.permute.xlu0 %1244
      %1246 = vrot.lane.b32.xlu0 %v1046, 48
      %v1247 = vpop.permute.xlu0 %1246
      %1248 = vrot.lane.b32.xlu0 %v1047, 48
      %v1249 = vpop.permute.xlu0 %1248
      %1250 = vrot.lane.b32.xlu0 %v1048, 48
      %v1251 = vpop.permute.xlu0 %1250
      %1252 = vrot.lane.b32.xlu0 %v1049, 48
      %v1253 = vpop.permute.xlu0 %1252
      %1254 = vrot.lane.b32.xlu0 %v1050, 48
      %v1255 = vpop.permute.xlu0 %1254
      %1256 = vrot.lane.b32.xlu0 %v1051, 48
      %v1257 = vpop.permute.xlu0 %1256
      %1258 = vrot.lane.b32.xlu0 %v1052, 48
      %v1259 = vpop.permute.xlu0 %1258
      %1260 = vrot.lane.b32.xlu0 %v1053, 48
      %v1261 = vpop.permute.xlu0 %1260
      %1262 = vrot.lane.b32.xlu0 %v1054, 48
      %v1263 = vpop.permute.xlu0 %1262
      %1264 = vrot.lane.b32.xlu0 %v1055, 48
      %v1265 = vpop.permute.xlu0 %1264
      %1266 = vrot.lane.b32.xlu0 %v1056, 48
      %v1267 = vpop.permute.xlu0 %1266
      %1268 = vrot.lane.b32.xlu0 %v1057, 48
      %v1269 = vpop.permute.xlu0 %1268
      %1270 = vrot.lane.b32.xlu0 %v1058, 48
      %v1271 = vpop.permute.xlu0 %1270
      %1272 = vrot.lane.b32.xlu0 %v1059, 48
      %v1273 = vpop.permute.xlu0 %1272
      %1274 = vrot.lane.b32.xlu0 %v1086, 48
      %v1275 = vpop.permute.xlu0 %1274
      %1276 = vrot.lane.b32.xlu0 %v1087, 48
      %v1277 = vpop.permute.xlu0 %1276
      %1278 = vrot.lane.b32.xlu0 %v1028, 48
      %v1279 = vpop.permute.xlu0 %1278
      %1280 = vrot.lane.b32.xlu0 %v1029, 48
      %v1281 = vpop.permute.xlu0 %1280
      %vm1314 = vcmask 195584
      %v1315 = vsel %vm1314, %v1028, %v1121
      %v1316 = vsel %vm1314, %v1029, %v1123
      %v1317 = vsel %vm1314, %v1030, %v1125
      %v1318 = vsel %vm1314, %v1031, %v1127
      %v1319 = vsel %vm1314, %v1032, %v1129
      %v1320 = vsel %vm1314, %v1033, %v1131
      %v1321 = vsel %vm1314, %v1034, %v1133
      %v1322 = vsel %vm1314, %v1035, %v1135
      %v1323 = vsel %vm1314, %v1036, %v1137
      %v1324 = vsel %vm1314, %v1037, %v1139
      %v1325 = vsel %vm1314, %v1038, %v1141
      %v1326 = vsel %vm1314, %v1039, %v1143
      %v1327 = vsel %vm1314, %v1040, %v1145
      %v1328 = vsel %vm1314, %v1041, %v1147
      %v1329 = vsel %vm1314, %v1042, %v1149
      %v1330 = vsel %vm1314, %v1043, %v1151
      %v1331 = vsel %vm1314, %v1044, %v1153
      %v1332 = vsel %vm1314, %v1045, %v1155
      %v1333 = vsel %vm1314, %v1046, %v1157
      %v1334 = vsel %vm1314, %v1047, %v1159
      %v1335 = vsel %vm1314, %v1048, %v1161
      %v1336 = vsel %vm1314, %v1049, %v1163
      %v1337 = vsel %vm1314, %v1050, %v1165
      %v1338 = vsel %vm1314, %v1051, %v1167
      %v1339 = vsel %vm1314, %v1052, %v1169
      %v1340 = vsel %vm1314, %v1053, %v1171
      %v1341 = vsel %vm1314, %v1054, %v1173
      %v1342 = vsel %vm1314, %v1055, %v1175
      %v1343 = vsel %vm1314, %v1056, %v1177
      %v1344 = vsel %vm1314, %v1057, %v1179
      %v1345 = vsel %vm1314, %v1058, %v1181
      %v1346 = vsel %vm1314, %v1059, %v1183
      %vm1347 = vcmask 392192
      %v1348 = vsel %vm1347, %v1315, %v1219
      %v1349 = vsel %vm1347, %v1316, %v1221
      %v1350 = vsel %vm1347, %v1317, %v1223
      %v1351 = vsel %vm1347, %v1318, %v1225
      %v1352 = vsel %vm1347, %v1319, %v1227
      %v1353 = vsel %vm1347, %v1320, %v1229
      %v1354 = vsel %vm1347, %v1321, %v1231
      %v1355 = vsel %vm1347, %v1322, %v1233
      %v1356 = vsel %vm1347, %v1323, %v1235
      %v1357 = vsel %vm1347, %v1324, %v1237
      %v1358 = vsel %vm1347, %v1325, %v1239
      %v1359 = vsel %vm1347, %v1326, %v1241
      %v1360 = vsel %vm1347, %v1327, %v1243
      %v1361 = vsel %vm1347, %v1328, %v1245
      %v1362 = vsel %vm1347, %v1329, %v1247
      %v1363 = vsel %vm1347, %v1330, %v1249
      %v1364 = vsel %vm1347, %v1331, %v1251
      %v1365 = vsel %vm1347, %v1332, %v1253
      %v1366 = vsel %vm1347, %v1333, %v1255
      %v1367 = vsel %vm1347, %v1334, %v1257
      %v1368 = vsel %vm1347, %v1335, %v1259
      %v1369 = vsel %vm1347, %v1336, %v1261
      %v1370 = vsel %vm1347, %v1337, %v1263
      %v1371 = vsel %vm1347, %v1338, %v1265
      %v1372 = vsel %vm1347, %v1339, %v1267
      %v1373 = vsel %vm1347, %v1340, %v1269
      %v1374 = vsel %vm1347, %v1341, %v1271
      %v1375 = vsel %vm1347, %v1342, %v1273
      %v1376 = vsel %vm1347, %v1343, %v1275
      %v1377 = vsel %vm1347, %v1344, %v1277
      %v1378 = vsel %vm1347, %v1345, %v1279
      %v1379 = vsel %vm1347, %v1346, %v1281
      %v1380 = vpack.c.bf16 %v1349, %v1348
      %v1381 = vpack.c.bf16 %v1351, %v1350
      %v1382 = vpack.c.bf16 %v1353, %v1352
      %v1383 = vpack.c.bf16 %v1355, %v1354
      %v1384 = vpack.c.bf16 %v1357, %v1356
      %v1385 = vpack.c.bf16 %v1359, %v1358
      %v1386 = vpack.c.bf16 %v1361, %v1360
      %v1387 = vpack.c.bf16 %v1363, %v1362
      %v1388 = vpack.c.bf16 %v1365, %v1364
      %v1389 = vpack.c.bf16 %v1367, %v1366
      %v1390 = vpack.c.bf16 %v1369, %v1368
      %v1391 = vpack.c.bf16 %v1371, %v1370
      %v1392 = vpack.c.bf16 %v1373, %v1372
      %v1393 = vpack.c.bf16 %v1375, %v1374
      %v1394 = vpack.c.bf16 %v1377, %v1376
      %v1395 = vpack.c.bf16 %v1379, %v1378
      %v1397 = vlaneseq
      %v1398 = vshrl.u32 %v1397, 7
      %v1399 = vsub.s32 0, %v1398
      %v1400 = vrot.slane %v439, %v1399
      %v1411 = vunpack.c.l.b16 %v430
      %v1412 = vunpack.c.l.b16 %v431
      %v1413 = vunpack.c.l.b16 %v432
      %v1414 = vunpack.c.l.b16 %v433
      %v1415 = vunpack.c.l.b16 %v434
      %v1416 = vunpack.c.l.b16 %v435
      %v1417 = vunpack.c.l.b16 %v436
      %v1418 = vunpack.c.l.b16 %v437
      %v1419 = vunpack.c.l.b16 %v438
      %v1420 = vpack.c.b16 %v1412, %v1411
      %v1421 = vpack.c.b16 %v1414, %v1413
      %v1422 = vpack.c.b16 %v1416, %v1415
      %v1423 = vpack.c.b16 %v1418, %v1417
      %v1424 = vpack.c.b16 %v1419, %v1419
      %vm1429 = vcmask 588800
      %v1431 = vsel %vm1429, %v1380, 0
      %v1434 = vsel %vm1429, %v1381, 0
      %v1437 = vsel %vm1429, %v1382, 0
      %v1440 = vsel %vm1429, %v1383, 0
      %v1443 = vsel %vm1429, %v1384, 0
      %v1446 = vsel %vm1429, %v1385, 0
      %v1449 = vsel %vm1429, %v1386, 0
      %v1452 = vsel %vm1429, %v1387, 0
      %v1455 = vsel %vm1429, %v1388, 0
      %v1458 = vsel %vm1429, %v1389, 0
      %v1461 = vsel %vm1429, %v1390, 0
      %v1464 = vsel %vm1429, %v1391, 0
      %v1467 = vsel %vm1429, %v1392, 0
      %v1470 = vsel %vm1429, %v1393, 0
      %v1473 = vsel %vm1429, %v1394, 0
      %v1476 = vsel %vm1429, %v1395, 0
      %vm1478 = vcmask 1043456
      %v1480 = vsel %vm1478, %v1424, 0
      %1482 = vmatprep.subr.bf16.mxu0 0
      %1483 = vmatpush1.bf16.msra.mxu0 0
      %1484 = vmatprep.subr.bf16.mxu0 0
      %1485 = vmatpush1.bf16.msra.mxu0 0
      %1486 = vmatprep.subr.bf16.mxu0 0
      %1487 = vmatpush1.bf16.msra.mxu0 0
      %1488 = vmatprep.subr.bf16.mxu0 0
      %1489 = vmatpush1.bf16.msra.mxu0 %v1480
      %1490 = vmatprep.subr.bf16.mxu0 0
      %1491 = vmatpush1.bf16.msra.mxu0 %v1423
      %1492 = vmatprep.subr.bf16.mxu0 0
      %1493 = vmatpush1.bf16.msra.mxu0 %v1422
      %1494 = vmatprep.subr.bf16.mxu0 0
      %1495 = vmatpush1.bf16.msra.mxu0 %v1421
      %1496 = vmatprep.subr.bf16.mxu0 0
      %1497 = vmatpush1.bf16.msra.mxu0 %v1420
      %1498 = vmatprep.subr.bf16.mxu0 0
      %1499 = vmatpush2.bf16.msra.mxu0 0
      %1500 = vmatprep.subr.bf16.mxu0 0
      %1501 = vmatpush2.bf16.msra.mxu0 0
      %1502 = vmatprep.subr.bf16.mxu0 0
      %1503 = vmatpush2.bf16.msra.mxu0 0
      %1504 = vmatprep.subr.bf16.mxu0 0
      %1505 = vmatpush2.bf16.msra.mxu0 0
      %1506 = vmatprep.subr.bf16.mxu0 0
      %1507 = vmatpush2.bf16.msra.mxu0 0
      %1508 = vmatprep.subr.bf16.mxu0 0
      %1509 = vmatpush2.bf16.msra.mxu0 0
      %1510 = vmatprep.subr.bf16.mxu0 0
      %1511 = vmatpush2.bf16.msra.mxu0 0
      %1512 = vmatprep.subr.bf16.mxu0 0
      %1513 = vmatpush2.bf16.msra.mxu0 0
      %1514 = vmatprep.mubr.bf16.mxu0 0
      %1515 = vmatmul.mubr.bf16.gmra.mxu0 %v1431
      %v1516 = vpop.f32.mrf.mxu0
      %v1517 = vadd.f32 %v1400, %v1516
      %v1518 = vpop.f32.mrf.mxu0
      %v1519 = vpop.f32.mrf.mxu0
      %v1520 = vadd.f32 %v1400, %v1519
      %v1521 = vpop.f32.mrf.mxu0
      %1522 = vmatprep.mubr.bf16.mxu0 0
      %1523 = vmatmul.mubr.bf16.gmra.mxu0 %v1434
      %v1524 = vpop.f32.mrf.mxu0
      %v1525 = vadd.f32 %v1400, %v1524
      %v1526 = vpop.f32.mrf.mxu0
      %v1527 = vpop.f32.mrf.mxu0
      %v1528 = vadd.f32 %v1400, %v1527
      %v1529 = vpop.f32.mrf.mxu0
      %1530 = vmatprep.mubr.bf16.mxu0 0
      %1531 = vmatmul.mubr.bf16.gmra.mxu0 %v1437
      %v1532 = vpop.f32.mrf.mxu0
      %v1533 = vadd.f32 %v1400, %v1532
      %v1534 = vpop.f32.mrf.mxu0
      %v1535 = vpop.f32.mrf.mxu0
      %v1536 = vadd.f32 %v1400, %v1535
      %v1537 = vpop.f32.mrf.mxu0
      %1538 = vmatprep.mubr.bf16.mxu0 0
      %1539 = vmatmul.mubr.bf16.gmra.mxu0 %v1440
      %v1540 = vpop.f32.mrf.mxu0
      %v1541 = vadd.f32 %v1400, %v1540
      %v1542 = vpop.f32.mrf.mxu0
      %v1543 = vpop.f32.mrf.mxu0
      %v1544 = vadd.f32 %v1400, %v1543
      %v1545 = vpop.f32.mrf.mxu0
      %1546 = vmatprep.mubr.bf16.mxu0 0
      %1547 = vmatmul.mubr.bf16.gmra.mxu0 %v1443
      %v1548 = vpop.f32.mrf.mxu0
      %v1549 = vadd.f32 %v1400, %v1548
      %v1550 = vpop.f32.mrf.mxu0
      %v1551 = vpop.f32.mrf.mxu0
      %v1552 = vadd.f32 %v1400, %v1551
      %v1553 = vpop.f32.mrf.mxu0
      %1554 = vmatprep.mubr.bf16.mxu0 0
      %1555 = vmatmul.mubr.bf16.gmra.mxu0 %v1446
      %v1556 = vpop.f32.mrf.mxu0
      %v1557 = vadd.f32 %v1400, %v1556
      %v1558 = vpop.f32.mrf.mxu0
      %v1559 = vpop.f32.mrf.mxu0
      %v1560 = vadd.f32 %v1400, %v1559
      %v1561 = vpop.f32.mrf.mxu0
      %1562 = vmatprep.mubr.bf16.mxu0 0
      %1563 = vmatmul.mubr.bf16.gmra.mxu0 %v1449
      %v1564 = vpop.f32.mrf.mxu0
      %v1565 = vadd.f32 %v1400, %v1564
      %v1566 = vpop.f32.mrf.mxu0
      %v1567 = vpop.f32.mrf.mxu0
      %v1568 = vadd.f32 %v1400, %v1567
      %v1569 = vpop.f32.mrf.mxu0
      %1570 = vmatprep.mubr.bf16.mxu0 0
      %1571 = vmatmul.mubr.bf16.gmra.mxu0 %v1452
      %v1572 = vpop.f32.mrf.mxu0
      %v1573 = vadd.f32 %v1400, %v1572
      %v1574 = vpop.f32.mrf.mxu0
      %v1575 = vpop.f32.mrf.mxu0
      %v1576 = vadd.f32 %v1400, %v1575
      %v1577 = vpop.f32.mrf.mxu0
      %1578 = vmatprep.mubr.bf16.mxu0 0
      %1579 = vmatmul.mubr.bf16.gmra.mxu0 %v1455
      %v1580 = vpop.f32.mrf.mxu0
      %v1581 = vadd.f32 %v1400, %v1580
      %v1582 = vpop.f32.mrf.mxu0
      %v1583 = vpop.f32.mrf.mxu0
      %v1584 = vadd.f32 %v1400, %v1583
      %v1585 = vpop.f32.mrf.mxu0
      %1586 = vmatprep.mubr.bf16.mxu0 0
      %1587 = vmatmul.mubr.bf16.gmra.mxu0 %v1458
      %v1588 = vpop.f32.mrf.mxu0
      %v1589 = vadd.f32 %v1400, %v1588
      %v1590 = vpop.f32.mrf.mxu0
      %v1591 = vpop.f32.mrf.mxu0
      %v1592 = vadd.f32 %v1400, %v1591
      %v1593 = vpop.f32.mrf.mxu0
      %1594 = vmatprep.mubr.bf16.mxu0 0
      %1595 = vmatmul.mubr.bf16.gmra.mxu0 %v1461
      %v1596 = vpop.f32.mrf.mxu0
      %v1597 = vadd.f32 %v1400, %v1596
      %v1598 = vpop.f32.mrf.mxu0
      %v1599 = vpop.f32.mrf.mxu0
      %v1600 = vadd.f32 %v1400, %v1599
      %v1601 = vpop.f32.mrf.mxu0
      %1602 = vmatprep.mubr.bf16.mxu0 0
      %1603 = vmatmul.mubr.bf16.gmra.mxu0 %v1464
      %v1604 = vpop.f32.mrf.mxu0
      %v1605 = vadd.f32 %v1400, %v1604
      %v1606 = vpop.f32.mrf.mxu0
      %v1607 = vpop.f32.mrf.mxu0
      %v1608 = vadd.f32 %v1400, %v1607
      %v1609 = vpop.f32.mrf.mxu0
      %1610 = vmatprep.mubr.bf16.mxu0 0
      %1611 = vmatmul.mubr.bf16.gmra.mxu0 %v1467
      %v1612 = vpop.f32.mrf.mxu0
      %v1613 = vadd.f32 %v1400, %v1612
      %v1614 = vpop.f32.mrf.mxu0
      %v1615 = vpop.f32.mrf.mxu0
      %v1616 = vadd.f32 %v1400, %v1615
      %v1617 = vpop.f32.mrf.mxu0
      %1618 = vmatprep.mubr.bf16.mxu0 0
      %1619 = vmatmul.mubr.bf16.gmra.mxu0 %v1470
      %v1620 = vpop.f32.mrf.mxu0
      %v1621 = vadd.f32 %v1400, %v1620
      %v1622 = vpop.f32.mrf.mxu0
      %v1623 = vpop.f32.mrf.mxu0
      %v1624 = vadd.f32 %v1400, %v1623
      %v1625 = vpop.f32.mrf.mxu0
      %1626 = vmatprep.mubr.bf16.mxu0 0
      %1627 = vmatmul.mubr.bf16.gmra.mxu0 %v1473
      %v1628 = vpop.f32.mrf.mxu0
      %v1629 = vadd.f32 %v1400, %v1628
      %v1630 = vpop.f32.mrf.mxu0
      %v1631 = vpop.f32.mrf.mxu0
      %v1632 = vadd.f32 %v1400, %v1631
      %v1633 = vpop.f32.mrf.mxu0
      %1634 = vmatprep.mubr.bf16.mxu0 0
      %1635 = vmatmul.mubr.bf16.gmra.mxu0 %v1476
      %v1636 = vpop.f32.mrf.mxu0
      %v1637 = vadd.f32 %v1400, %v1636
      %v1638 = vpop.f32.mrf.mxu0
      %v1639 = vpop.f32.mrf.mxu0
      %v1640 = vadd.f32 %v1400, %v1639
      %v1641 = vpop.f32.mrf.mxu0
      %1642 = vdwg.mxu0
      %vm1643 = vcmp.ge.f32.partialorder %v1517, 0.0
      %vm1644 = vcmp.ge.f32.partialorder %v1520, 0.0
      %vm1645 = vcmp.ge.f32.partialorder %v1525, 0.0
      %vm1646 = vcmp.ge.f32.partialorder %v1528, 0.0
      %vm1647 = vcmp.ge.f32.partialorder %v1533, 0.0
      %vm1648 = vcmp.ge.f32.partialorder %v1536, 0.0
      %vm1649 = vcmp.ge.f32.partialorder %v1541, 0.0
      %vm1650 = vcmp.ge.f32.partialorder %v1544, 0.0
      %vm1651 = vcmp.ge.f32.partialorder %v1549, 0.0
      %vm1652 = vcmp.ge.f32.partialorder %v1552, 0.0
      %vm1653 = vcmp.ge.f32.partialorder %v1557, 0.0
      %vm1654 = vcmp.ge.f32.partialorder %v1560, 0.0
      %vm1655 = vcmp.ge.f32.partialorder %v1565, 0.0
      %vm1656 = vcmp.ge.f32.partialorder %v1568, 0.0
      %vm1657 = vcmp.ge.f32.partialorder %v1573, 0.0
      %vm1658 = vcmp.ge.f32.partialorder %v1576, 0.0
      %vm1659 = vcmp.ge.f32.partialorder %v1581, 0.0
      %vm1660 = vcmp.ge.f32.partialorder %v1584, 0.0
      %vm1661 = vcmp.ge.f32.partialorder %v1589, 0.0
      %vm1662 = vcmp.ge.f32.partialorder %v1592, 0.0
      %vm1663 = vcmp.ge.f32.partialorder %v1597, 0.0
      %vm1664 = vcmp.ge.f32.partialorder %v1600, 0.0
      %vm1665 = vcmp.ge.f32.partialorder %v1605, 0.0
      %vm1666 = vcmp.ge.f32.partialorder %v1608, 0.0
      %vm1667 = vcmp.ge.f32.partialorder %v1613, 0.0
      %vm1668 = vcmp.ge.f32.partialorder %v1616, 0.0
      %vm1669 = vcmp.ge.f32.partialorder %v1621, 0.0
      %vm1670 = vcmp.ge.f32.partialorder %v1624, 0.0
      %vm1671 = vcmp.ge.f32.partialorder %v1629, 0.0
      %vm1672 = vcmp.ge.f32.partialorder %v1632, 0.0
      %vm1673 = vcmp.ge.f32.partialorder %v1637, 0.0
      %vm1674 = vcmp.ge.f32.partialorder %v1640, 0.0
      %v1675 = vmul.f32 %v1517, 0.2
      %v1676 = vmul.f32 %v1520, 0.2
      %v1677 = vmul.f32 %v1525, 0.2
      %v1678 = vmul.f32 %v1528, 0.2
      %v1679 = vmul.f32 %v1533, 0.2
      %v1680 = vmul.f32 %v1536, 0.2
      %v1681 = vmul.f32 %v1541, 0.2
      %v1682 = vmul.f32 %v1544, 0.2
      %v1683 = vmul.f32 %v1549, 0.2
      %v1684 = vmul.f32 %v1552, 0.2
      %v1685 = vmul.f32 %v1557, 0.2
      %v1686 = vmul.f32 %v1560, 0.2
      %v1687 = vmul.f32 %v1565, 0.2
      %v1688 = vmul.f32 %v1568, 0.2
      %v1689 = vmul.f32 %v1573, 0.2
      %v1690 = vmul.f32 %v1576, 0.2
      %v1691 = vmul.f32 %v1581, 0.2
      %v1692 = vmul.f32 %v1584, 0.2
      %v1693 = vmul.f32 %v1589, 0.2
      %v1694 = vmul.f32 %v1592, 0.2
      %v1695 = vmul.f32 %v1597, 0.2
      %v1696 = vmul.f32 %v1600, 0.2
      %v1697 = vmul.f32 %v1605, 0.2
      %v1698 = vmul.f32 %v1608, 0.2
      %v1699 = vmul.f32 %v1613, 0.2
      %v1700 = vmul.f32 %v1616, 0.2
      %v1701 = vmul.f32 %v1621, 0.2
      %v1702 = vmul.f32 %v1624, 0.2
      %v1703 = vmul.f32 %v1629, 0.2
      %v1704 = vmul.f32 %v1632, 0.2
      %v1705 = vmul.f32 %v1637, 0.2
      %v1706 = vmul.f32 %v1640, 0.2
      %v1707 = vsel %vm1643, %v1517, %v1675
      %v1708 = vsel %vm1644, %v1520, %v1676
      %v1709 = vsel %vm1645, %v1525, %v1677
      %v1710 = vsel %vm1646, %v1528, %v1678
      %v1711 = vsel %vm1647, %v1533, %v1679
      %v1712 = vsel %vm1648, %v1536, %v1680
      %v1713 = vsel %vm1649, %v1541, %v1681
      %v1714 = vsel %vm1650, %v1544, %v1682
      %v1715 = vsel %vm1651, %v1549, %v1683
      %v1716 = vsel %vm1652, %v1552, %v1684
      %v1717 = vsel %vm1653, %v1557, %v1685
      %v1718 = vsel %vm1654, %v1560, %v1686
      %v1719 = vsel %vm1655, %v1565, %v1687
      %v1720 = vsel %vm1656, %v1568, %v1688
      %v1721 = vsel %vm1657, %v1573, %v1689
      %v1722 = vsel %vm1658, %v1576, %v1690
      %v1723 = vsel %vm1659, %v1581, %v1691
      %v1724 = vsel %vm1660, %v1584, %v1692
      %v1725 = vsel %vm1661, %v1589, %v1693
      %v1726 = vsel %vm1662, %v1592, %v1694
      %v1727 = vsel %vm1663, %v1597, %v1695
      %v1728 = vsel %vm1664, %v1600, %v1696
      %v1729 = vsel %vm1665, %v1605, %v1697
      %v1730 = vsel %vm1666, %v1608, %v1698
      %v1731 = vsel %vm1667, %v1613, %v1699
      %v1732 = vsel %vm1668, %v1616, %v1700
      %v1733 = vsel %vm1669, %v1621, %v1701
      %v1734 = vsel %vm1670, %v1624, %v1702
      %v1735 = vsel %vm1671, %v1629, %v1703
      %v1736 = vsel %vm1672, %v1632, %v1704
      %v1737 = vsel %vm1673, %v1637, %v1705
      %v1738 = vsel %vm1674, %v1640, %v1706
      %v1739 = vld [vmem:[%s3] sm:$0xf]
      %v1740 = vld [vmem:[%s3 + $0x4] sm:$0xf]
      %v1741 = vld [vmem:[%s3 + $0x8] sm:$0xf]
      %v1742 = vld [vmem:[%s3 + $0xc] sm:$0xf]
      %v1743 = vld [vmem:[%s3 + $0x10] sm:$0xf]
      %v1744 = vld [vmem:[%s3 + $0x14] sm:$0xf]
      %v1745 = vld [vmem:[%s3 + $0x18] sm:$0xf]
      %v1746 = vld [vmem:[%s3 + $0x1c] sm:$0xf]
      %v1747 = vld [vmem:[%s3 + $0x20] sm:$0xf]
      %v1748 = vld [vmem:[%s4] sm:$0x1]
      %v1781 = vrot.slane %v1707, 7
      %v1782 = vrot.slane %v1708, 7
      %v1783 = vsel %vm473, %v1781, %v1782
      %v1784 = vrot.slane %v1709, 7
      %v1785 = vrot.slane %v1710, 7
      %v1786 = vsel %vm473, %v1784, %v1785
      %v1787 = vrot.slane %v1711, 7
      %v1788 = vrot.slane %v1712, 7
      %v1789 = vsel %vm473, %v1787, %v1788
      %v1790 = vrot.slane %v1713, 7
      %v1791 = vrot.slane %v1714, 7
      %v1792 = vsel %vm473, %v1790, %v1791
      %v1793 = vrot.slane %v1715, 7
      %v1794 = vrot.slane %v1716, 7
      %v1795 = vsel %vm473, %v1793, %v1794
      %v1796 = vrot.slane %v1717, 7
      %v1797 = vrot.slane %v1718, 7
      %v1798 = vsel %vm473, %v1796, %v1797
      %v1799 = vrot.slane %v1719, 7
      %v1800 = vrot.slane %v1720, 7
      %v1801 = vsel %vm473, %v1799, %v1800
      %v1802 = vrot.slane %v1721, 7
      %v1803 = vrot.slane %v1722, 7
      %v1804 = vsel %vm473, %v1802, %v1803
      %v1805 = vrot.slane %v1723, 7
      %v1806 = vrot.slane %v1724, 7
      %v1807 = vsel %vm473, %v1805, %v1806
      %v1808 = vrot.slane %v1725, 7
      %v1809 = vrot.slane %v1726, 7
      %v1810 = vsel %vm473, %v1808, %v1809
      %v1811 = vrot.slane %v1727, 7
      %v1812 = vrot.slane %v1728, 7
      %v1813 = vsel %vm473, %v1811, %v1812
      %v1814 = vrot.slane %v1729, 7
      %v1815 = vrot.slane %v1730, 7
      %v1816 = vsel %vm473, %v1814, %v1815
      %v1817 = vrot.slane %v1731, 7
      %v1818 = vrot.slane %v1732, 7
      %v1819 = vsel %vm473, %v1817, %v1818
      %v1820 = vrot.slane %v1733, 7
      %v1821 = vrot.slane %v1734, 7
      %v1822 = vsel %vm473, %v1820, %v1821
      %v1823 = vrot.slane %v1735, 7
      %v1824 = vrot.slane %v1736, 7
      %v1825 = vsel %vm473, %v1823, %v1824
      %v1826 = vrot.slane %v1737, 7
      %v1827 = vrot.slane %v1738, 7
      %v1828 = vsel %vm473, %v1826, %v1827
      %v1877 = vsel %vm473, 0.0, %v1781
      %v1878 = vsel %vm473, 0.0, %v1784
      %v1879 = vsel %vm473, 0.0, %v1787
      %v1880 = vsel %vm473, 0.0, %v1790
      %v1881 = vsel %vm473, 0.0, %v1793
      %v1882 = vsel %vm473, 0.0, %v1796
      %v1883 = vsel %vm473, 0.0, %v1799
      %v1884 = vsel %vm473, 0.0, %v1802
      %v1885 = vsel %vm473, 0.0, %v1805
      %v1886 = vsel %vm473, 0.0, %v1808
      %v1887 = vsel %vm473, 0.0, %v1811
      %v1888 = vsel %vm473, 0.0, %v1814
      %v1889 = vsel %vm473, 0.0, %v1817
      %v1890 = vsel %vm473, 0.0, %v1820
      %v1891 = vsel %vm473, 0.0, %v1823
      %v1892 = vsel %vm473, 0.0, %v1826
      %v1893 = vsel %vm473, %v1782, 0.0
      %v1894 = vsel %vm473, %v1785, 0.0
      %v1895 = vsel %vm473, %v1788, 0.0
      %v1896 = vsel %vm473, %v1791, 0.0
      %v1897 = vsel %vm473, %v1794, 0.0
      %v1898 = vsel %vm473, %v1797, 0.0
      %v1899 = vsel %vm473, %v1800, 0.0
      %v1900 = vsel %vm473, %v1803, 0.0
      %v1901 = vsel %vm473, %v1806, 0.0
      %v1902 = vsel %vm473, %v1809, 0.0
      %v1903 = vsel %vm473, %v1812, 0.0
      %v1904 = vsel %vm473, %v1815, 0.0
      %v1905 = vsel %vm473, %v1818, 0.0
      %v1906 = vsel %vm473, %v1821, 0.0
      %v1907 = vsel %vm473, %v1824, 0.0
      %v1908 = vsel %vm473, %v1827, 0.0
      %v1939 = vrot.slane %v1877, 1
      %v1940 = vrot.slane %v1783, 1
      %v1941 = vsel %vm640, %v1939, %v1940
      %v1942 = vrot.slane %v1893, 1
      %v1943 = vsel %vm640, %v1940, %v1942
      %v1944 = vrot.slane %v1878, 1
      %v1945 = vrot.slane %v1786, 1
      %v1946 = vsel %vm640, %v1944, %v1945
      %v1947 = vrot.slane %v1894, 1
      %v1948 = vsel %vm640, %v1945, %v1947
      %v1949 = vrot.slane %v1879, 1
      %v1950 = vrot.slane %v1789, 1
      %v1951 = vsel %vm640, %v1949, %v1950
      %v1952 = vrot.slane %v1895, 1
      %v1953 = vsel %vm640, %v1950, %v1952
      %v1954 = vrot.slane %v1880, 1
      %v1955 = vrot.slane %v1792, 1
      %v1956 = vsel %vm640, %v1954, %v1955
      %v1957 = vrot.slane %v1896, 1
      %v1958 = vsel %vm640, %v1955, %v1957
      %v1959 = vrot.slane %v1881, 1
      %v1960 = vrot.slane %v1795, 1
      %v1961 = vsel %vm640, %v1959, %v1960
      %v1962 = vrot.slane %v1897, 1
      %v1963 = vsel %vm640, %v1960, %v1962
      %v1964 = vrot.slane %v1882, 1
      %v1965 = vrot.slane %v1798, 1
      %v1966 = vsel %vm640, %v1964, %v1965
      %v1967 = vrot.slane %v1898, 1
      %v1968 = vsel %vm640, %v1965, %v1967
      %v1969 = vrot.slane %v1883, 1
      %v1970 = vrot.slane %v1801, 1
      %v1971 = vsel %vm640, %v1969, %v1970
      %v1972 = vrot.slane %v1899, 1
      %v1973 = vsel %vm640, %v1970, %v1972
      %v1974 = vrot.slane %v1884, 1
      %v1975 = vrot.slane %v1804, 1
      %v1976 = vsel %vm640, %v1974, %v1975
      %v1977 = vrot.slane %v1900, 1
      %v1978 = vsel %vm640, %v1975, %v1977
      %v1979 = vrot.slane %v1885, 1
      %v1980 = vrot.slane %v1807, 1
      %v1981 = vsel %vm640, %v1979, %v1980
      %v1982 = vrot.slane %v1901, 1
      %v1983 = vsel %vm640, %v1980, %v1982
      %v1984 = vrot.slane %v1886, 1
      %v1985 = vrot.slane %v1810, 1
      %v1986 = vsel %vm640, %v1984, %v1985
      %v1987 = vrot.slane %v1902, 1
      %v1988 = vsel %vm640, %v1985, %v1987
      %v1989 = vrot.slane %v1887, 1
      %v1990 = vrot.slane %v1813, 1
      %v1991 = vsel %vm640, %v1989, %v1990
      %v1992 = vrot.slane %v1903, 1
      %v1993 = vsel %vm640, %v1990, %v1992
      %v1994 = vrot.slane %v1888, 1
      %v1995 = vrot.slane %v1816, 1
      %v1996 = vsel %vm640, %v1994, %v1995
      %v1997 = vrot.slane %v1904, 1
      %v1998 = vsel %vm640, %v1995, %v1997
      %v1999 = vrot.slane %v1889, 1
      %v2000 = vrot.slane %v1819, 1
      %v2001 = vsel %vm640, %v1999, %v2000
      %v2002 = vrot.slane %v1905, 1
      %v2003 = vsel %vm640, %v2000, %v2002
      %v2004 = vrot.slane %v1890, 1
      %v2005 = vrot.slane %v1822, 1
      %v2006 = vsel %vm640, %v2004, %v2005
      %v2007 = vrot.slane %v1906, 1
      %v2008 = vsel %vm640, %v2005, %v2007
      %v2009 = vrot.slane %v1891, 1
      %v2010 = vrot.slane %v1825, 1
      %v2011 = vsel %vm640, %v2009, %v2010
      %v2012 = vrot.slane %v1907, 1
      %v2013 = vsel %vm640, %v2010, %v2012
      %2014 = vrot.lane.b32.xlu0 %v1941, 8
      %v2015 = vpop.permute.xlu0 %2014
      %2016 = vrot.lane.b32.xlu0 %v1943, 8
      %v2017 = vpop.permute.xlu0 %2016
      %2018 = vrot.lane.b32.xlu0 %v1946, 8
      %v2019 = vpop.permute.xlu0 %2018
      %2020 = vrot.lane.b32.xlu0 %v1948, 8
      %v2021 = vpop.permute.xlu0 %2020
      %2022 = vrot.lane.b32.xlu0 %v1951, 8
      %v2023 = vpop.permute.xlu0 %2022
      %2024 = vrot.lane.b32.xlu0 %v1953, 8
      %v2025 = vpop.permute.xlu0 %2024
      %2026 = vrot.lane.b32.xlu0 %v1956, 8
      %v2027 = vpop.permute.xlu0 %2026
      %2028 = vrot.lane.b32.xlu0 %v1958, 8
      %v2029 = vpop.permute.xlu0 %2028
      %2030 = vrot.lane.b32.xlu0 %v1961, 8
      %v2031 = vpop.permute.xlu0 %2030
      %2032 = vrot.lane.b32.xlu0 %v1963, 8
      %v2033 = vpop.permute.xlu0 %2032
      %2034 = vrot.lane.b32.xlu0 %v1966, 8
      %v2035 = vpop.permute.xlu0 %2034
      %2036 = vrot.lane.b32.xlu0 %v1968, 8
      %v2037 = vpop.permute.xlu0 %2036
      %2038 = vrot.lane.b32.xlu0 %v1971, 8
      %v2039 = vpop.permute.xlu0 %2038
      %2040 = vrot.lane.b32.xlu0 %v1973, 8
      %v2041 = vpop.permute.xlu0 %2040
      %2042 = vrot.lane.b32.xlu0 %v1976, 8
      %v2043 = vpop.permute.xlu0 %2042
      %2044 = vrot.lane.b32.xlu0 %v1978, 8
      %v2045 = vpop.permute.xlu0 %2044
      %2046 = vrot.lane.b32.xlu0 %v1981, 8
      %v2047 = vpop.permute.xlu0 %2046
      %2048 = vrot.lane.b32.xlu0 %v1983, 8
      %v2049 = vpop.permute.xlu0 %2048
      %2050 = vrot.lane.b32.xlu0 %v1986, 8
      %v2051 = vpop.permute.xlu0 %2050
      %2052 = vrot.lane.b32.xlu0 %v1988, 8
      %v2053 = vpop.permute.xlu0 %2052
      %2054 = vrot.lane.b32.xlu0 %v1991, 8
      %v2055 = vpop.permute.xlu0 %2054
      %2056 = vrot.lane.b32.xlu0 %v1993, 8
      %v2057 = vpop.permute.xlu0 %2056
      %2058 = vrot.lane.b32.xlu0 %v1996, 8
      %v2059 = vpop.permute.xlu0 %2058
      %2060 = vrot.lane.b32.xlu0 %v1998, 8
      %v2061 = vpop.permute.xlu0 %2060
      %2062 = vrot.lane.b32.xlu0 %v2001, 8
      %v2063 = vpop.permute.xlu0 %2062
      %2064 = vrot.lane.b32.xlu0 %v2003, 8
      %v2065 = vpop.permute.xlu0 %2064
      %2066 = vrot.lane.b32.xlu0 %v2006, 8
      %v2067 = vpop.permute.xlu0 %2066
      %2068 = vrot.lane.b32.xlu0 %v2008, 8
      %v2069 = vpop.permute.xlu0 %2068
      %2070 = vrot.lane.b32.xlu0 %v2011, 8
      %v2071 = vpop.permute.xlu0 %2070
      %2072 = vrot.lane.b32.xlu0 %v2013, 8
      %v2073 = vpop.permute.xlu0 %2072
      %v2104 = vrot.slane %v1877, 2
      %v2105 = vrot.slane %v1783, 2
      %v2106 = vsel %vm817, %v2104, %v2105
      %v2107 = vrot.slane %v1893, 2
      %v2108 = vsel %vm817, %v2105, %v2107
      %v2109 = vrot.slane %v1878, 2
      %v2110 = vrot.slane %v1786, 2
      %v2111 = vsel %vm817, %v2109, %v2110
      %v2112 = vrot.slane %v1894, 2
      %v2113 = vsel %vm817, %v2110, %v2112
      %v2114 = vrot.slane %v1879, 2
      %v2115 = vrot.slane %v1789, 2
      %v2116 = vsel %vm817, %v2114, %v2115
      %v2117 = vrot.slane %v1895, 2
      %v2118 = vsel %vm817, %v2115, %v2117
      %v2119 = vrot.slane %v1880, 2
      %v2120 = vrot.slane %v1792, 2
      %v2121 = vsel %vm817, %v2119, %v2120
      %v2122 = vrot.slane %v1896, 2
      %v2123 = vsel %vm817, %v2120, %v2122
      %v2124 = vrot.slane %v1881, 2
      %v2125 = vrot.slane %v1795, 2
      %v2126 = vsel %vm817, %v2124, %v2125
      %v2127 = vrot.slane %v1897, 2
      %v2128 = vsel %vm817, %v2125, %v2127
      %v2129 = vrot.slane %v1882, 2
      %v2130 = vrot.slane %v1798, 2
      %v2131 = vsel %vm817, %v2129, %v2130
      %v2132 = vrot.slane %v1898, 2
      %v2133 = vsel %vm817, %v2130, %v2132
      %v2134 = vrot.slane %v1883, 2
      %v2135 = vrot.slane %v1801, 2
      %v2136 = vsel %vm817, %v2134, %v2135
      %v2137 = vrot.slane %v1899, 2
      %v2138 = vsel %vm817, %v2135, %v2137
      %v2139 = vrot.slane %v1884, 2
      %v2140 = vrot.slane %v1804, 2
      %v2141 = vsel %vm817, %v2139, %v2140
      %v2142 = vrot.slane %v1900, 2
      %v2143 = vsel %vm817, %v2140, %v2142
      %v2144 = vrot.slane %v1885, 2
      %v2145 = vrot.slane %v1807, 2
      %v2146 = vsel %vm817, %v2144, %v2145
      %v2147 = vrot.slane %v1901, 2
      %v2148 = vsel %vm817, %v2145, %v2147
      %v2149 = vrot.slane %v1886, 2
      %v2150 = vrot.slane %v1810, 2
      %v2151 = vsel %vm817, %v2149, %v2150
      %v2152 = vrot.slane %v1902, 2
      %v2153 = vsel %vm817, %v2150, %v2152
      %v2154 = vrot.slane %v1887, 2
      %v2155 = vrot.slane %v1813, 2
      %v2156 = vsel %vm817, %v2154, %v2155
      %v2157 = vrot.slane %v1903, 2
      %v2158 = vsel %vm817, %v2155, %v2157
      %v2159 = vrot.slane %v1888, 2
      %v2160 = vrot.slane %v1816, 2
      %v2161 = vsel %vm817, %v2159, %v2160
      %v2162 = vrot.slane %v1904, 2
      %v2163 = vsel %vm817, %v2160, %v2162
      %v2164 = vrot.slane %v1889, 2
      %v2165 = vrot.slane %v1819, 2
      %v2166 = vsel %vm817, %v2164, %v2165
      %v2167 = vrot.slane %v1905, 2
      %v2168 = vsel %vm817, %v2165, %v2167
      %v2169 = vrot.slane %v1890, 2
      %v2170 = vrot.slane %v1822, 2
      %v2171 = vsel %vm817, %v2169, %v2170
      %v2172 = vrot.slane %v1906, 2
      %v2173 = vsel %vm817, %v2170, %v2172
      %v2174 = vrot.slane %v1891, 2
      %v2175 = vrot.slane %v1825, 2
      %v2176 = vsel %vm817, %v2174, %v2175
      %v2177 = vrot.slane %v1907, 2
      %v2178 = vsel %vm817, %v2175, %v2177
      %2179 = vrot.lane.b32.xlu0 %v2106, 16
      %v2180 = vpop.permute.xlu0 %2179
      %2181 = vrot.lane.b32.xlu0 %v2108, 16
      %v2182 = vpop.permute.xlu0 %2181
      %2183 = vrot.lane.b32.xlu0 %v2111, 16
      %v2184 = vpop.permute.xlu0 %2183
      %2185 = vrot.lane.b32.xlu0 %v2113, 16
      %v2186 = vpop.permute.xlu0 %2185
      %2187 = vrot.lane.b32.xlu0 %v2116, 16
      %v2188 = vpop.permute.xlu0 %2187
      %2189 = vrot.lane.b32.xlu0 %v2118, 16
      %v2190 = vpop.permute.xlu0 %2189
      %2191 = vrot.lane.b32.xlu0 %v2121, 16
      %v2192 = vpop.permute.xlu0 %2191
      %2193 = vrot.lane.b32.xlu0 %v2123, 16
      %v2194 = vpop.permute.xlu0 %2193
      %2195 = vrot.lane.b32.xlu0 %v2126, 16
      %v2196 = vpop.permute.xlu0 %2195
      %2197 = vrot.lane.b32.xlu0 %v2128, 16
      %v2198 = vpop.permute.xlu0 %2197
      %2199 = vrot.lane.b32.xlu0 %v2131, 16
      %v2200 = vpop.permute.xlu0 %2199
      %2201 = vrot.lane.b32.xlu0 %v2133, 16
      %v2202 = vpop.permute.xlu0 %2201
      %2203 = vrot.lane.b32.xlu0 %v2136, 16
      %v2204 = vpop.permute.xlu0 %2203
      %2205 = vrot.lane.b32.xlu0 %v2138, 16
      %v2206 = vpop.permute.xlu0 %2205
      %2207 = vrot.lane.b32.xlu0 %v2141, 16
      %v2208 = vpop.permute.xlu0 %2207
      %2209 = vrot.lane.b32.xlu0 %v2143, 16
      %v2210 = vpop.permute.xlu0 %2209
      %2211 = vrot.lane.b32.xlu0 %v2146, 16
      %v2212 = vpop.permute.xlu0 %2211
      %2213 = vrot.lane.b32.xlu0 %v2148, 16
      %v2214 = vpop.permute.xlu0 %2213
      %2215 = vrot.lane.b32.xlu0 %v2151, 16
      %v2216 = vpop.permute.xlu0 %2215
      %2217 = vrot.lane.b32.xlu0 %v2153, 16
      %v2218 = vpop.permute.xlu0 %2217
      %2219 = vrot.lane.b32.xlu0 %v2156, 16
      %v2220 = vpop.permute.xlu0 %2219
      %2221 = vrot.lane.b32.xlu0 %v2158, 16
      %v2222 = vpop.permute.xlu0 %2221
      %2223 = vrot.lane.b32.xlu0 %v2161, 16
      %v2224 = vpop.permute.xlu0 %2223
      %2225 = vrot.lane.b32.xlu0 %v2163, 16
      %v2226 = vpop.permute.xlu0 %2225
      %2227 = vrot.lane.b32.xlu0 %v2166, 16
      %v2228 = vpop.permute.xlu0 %2227
      %2229 = vrot.lane.b32.xlu0 %v2168, 16
      %v2230 = vpop.permute.xlu0 %2229
      %2231 = vrot.lane.b32.xlu0 %v2171, 16
      %v2232 = vpop.permute.xlu0 %2231
      %2233 = vrot.lane.b32.xlu0 %v2173, 16
      %v2234 = vpop.permute.xlu0 %2233
      %2235 = vrot.lane.b32.xlu0 %v2176, 16
      %v2236 = vpop.permute.xlu0 %2235
      %2237 = vrot.lane.b32.xlu0 %v2178, 16
      %v2238 = vpop.permute.xlu0 %2237
      %v2269 = vsel %vm994, %v1877, %v2015
      %v2270 = vsel %vm994, %v1783, %v2017
      %v2271 = vsel %vm994, %v1878, %v2019
      %v2272 = vsel %vm994, %v1786, %v2021
      %v2273 = vsel %vm994, %v1879, %v2023
      %v2274 = vsel %vm994, %v1789, %v2025
      %v2275 = vsel %vm994, %v1880, %v2027
      %v2276 = vsel %vm994, %v1792, %v2029
      %v2277 = vsel %vm994, %v1881, %v2031
      %v2278 = vsel %vm994, %v1795, %v2033
      %v2279 = vsel %vm994, %v1882, %v2035
      %v2280 = vsel %vm994, %v1798, %v2037
      %v2281 = vsel %vm994, %v1883, %v2039
      %v2282 = vsel %vm994, %v1801, %v2041
      %v2283 = vsel %vm994, %v1884, %v2043
      %v2284 = vsel %vm994, %v1804, %v2045
      %v2285 = vsel %vm994, %v1885, %v2047
      %v2286 = vsel %vm994, %v1807, %v2049
      %v2287 = vsel %vm994, %v1886, %v2051
      %v2288 = vsel %vm994, %v1810, %v2053
      %v2289 = vsel %vm994, %v1887, %v2055
      %v2290 = vsel %vm994, %v1813, %v2057
      %v2291 = vsel %vm994, %v1888, %v2059
      %v2292 = vsel %vm994, %v1816, %v2061
      %v2293 = vsel %vm994, %v1889, %v2063
      %v2294 = vsel %vm994, %v1819, %v2065
      %v2295 = vsel %vm994, %v1890, %v2067
      %v2296 = vsel %vm994, %v1822, %v2069
      %v2297 = vsel %vm994, %v1891, %v2071
      %v2298 = vsel %vm994, %v1825, %v2073
      %v2299 = vsel %vm1027, %v2269, %v2180
      %v2300 = vsel %vm1027, %v2270, %v2182
      %v2301 = vsel %vm1027, %v2271, %v2184
      %v2302 = vsel %vm1027, %v2272, %v2186
      %v2303 = vsel %vm1027, %v2273, %v2188
      %v2304 = vsel %vm1027, %v2274, %v2190
      %v2305 = vsel %vm1027, %v2275, %v2192
      %v2306 = vsel %vm1027, %v2276, %v2194
      %v2307 = vsel %vm1027, %v2277, %v2196
      %v2308 = vsel %vm1027, %v2278, %v2198
      %v2309 = vsel %vm1027, %v2279, %v2200
      %v2310 = vsel %vm1027, %v2280, %v2202
      %v2311 = vsel %vm1027, %v2281, %v2204
      %v2312 = vsel %vm1027, %v2282, %v2206
      %v2313 = vsel %vm1027, %v2283, %v2208
      %v2314 = vsel %vm1027, %v2284, %v2210
      %v2315 = vsel %vm1027, %v2285, %v2212
      %v2316 = vsel %vm1027, %v2286, %v2214
      %v2317 = vsel %vm1027, %v2287, %v2216
      %v2318 = vsel %vm1027, %v2288, %v2218
      %v2319 = vsel %vm1027, %v2289, %v2220
      %v2320 = vsel %vm1027, %v2290, %v2222
      %v2321 = vsel %vm1027, %v2291, %v2224
      %v2322 = vsel %vm1027, %v2292, %v2226
      %v2323 = vsel %vm1027, %v2293, %v2228
      %v2324 = vsel %vm1027, %v2294, %v2230
      %v2325 = vsel %vm1027, %v2295, %v2232
      %v2326 = vsel %vm1027, %v2296, %v2234
      %v2327 = vsel %vm1027, %v2297, %v2236
      %v2328 = vsel %vm1027, %v2298, %v2238
      %v2331 = vrot.slane %v1892, 1
      %v2332 = vrot.slane %v1828, 1
      %v2333 = vsel %vm640, %v2331, %v2332
      %v2334 = vrot.slane %v1908, 1
      %v2335 = vsel %vm640, %v2332, %v2334
      %2336 = vrot.lane.b32.xlu0 %v2333, 8
      %v2337 = vpop.permute.xlu0 %2336
      %2338 = vrot.lane.b32.xlu0 %v2335, 8
      %v2339 = vpop.permute.xlu0 %2338
      %v2342 = vrot.slane %v1892, 2
      %v2343 = vrot.slane %v1828, 2
      %v2344 = vsel %vm817, %v2342, %v2343
      %v2345 = vrot.slane %v1908, 2
      %v2346 = vsel %vm817, %v2343, %v2345
      %2347 = vrot.lane.b32.xlu0 %v2344, 16
      %v2348 = vpop.permute.xlu0 %2347
      %2349 = vrot.lane.b32.xlu0 %v2346, 16
      %v2350 = vpop.permute.xlu0 %2349
      %v2353 = vsel %vm994, %v1892, %v2337
      %v2354 = vsel %vm994, %v1828, %v2339
      %v2355 = vsel %vm1027, %v2353, %v2348
      %v2356 = vsel %vm1027, %v2354, %v2350
      %2389 = vrot.lane.b32.xlu0 %v2299, 24
      %v2390 = vpop.permute.xlu0 %2389
      %2391 = vrot.lane.b32.xlu0 %v2300, 24
      %v2392 = vpop.permute.xlu0 %2391
      %2393 = vrot.lane.b32.xlu0 %v2301, 24
      %v2394 = vpop.permute.xlu0 %2393
      %2395 = vrot.lane.b32.xlu0 %v2302, 24
      %v2396 = vpop.permute.xlu0 %2395
      %2397 = vrot.lane.b32.xlu0 %v2303, 24
      %v2398 = vpop.permute.xlu0 %2397
      %2399 = vrot.lane.b32.xlu0 %v2304, 24
      %v2400 = vpop.permute.xlu0 %2399
      %2401 = vrot.lane.b32.xlu0 %v2305, 24
      %v2402 = vpop.permute.xlu0 %2401
      %2403 = vrot.lane.b32.xlu0 %v2306, 24
      %v2404 = vpop.permute.xlu0 %2403
      %2405 = vrot.lane.b32.xlu0 %v2307, 24
      %v2406 = vpop.permute.xlu0 %2405
      %2407 = vrot.lane.b32.xlu0 %v2308, 24
      %v2408 = vpop.permute.xlu0 %2407
      %2409 = vrot.lane.b32.xlu0 %v2309, 24
      %v2410 = vpop.permute.xlu0 %2409
      %2411 = vrot.lane.b32.xlu0 %v2310, 24
      %v2412 = vpop.permute.xlu0 %2411
      %2413 = vrot.lane.b32.xlu0 %v2311, 24
      %v2414 = vpop.permute.xlu0 %2413
      %2415 = vrot.lane.b32.xlu0 %v2312, 24
      %v2416 = vpop.permute.xlu0 %2415
      %2417 = vrot.lane.b32.xlu0 %v2313, 24
      %v2418 = vpop.permute.xlu0 %2417
      %2419 = vrot.lane.b32.xlu0 %v2314, 24
      %v2420 = vpop.permute.xlu0 %2419
      %2421 = vrot.lane.b32.xlu0 %v2315, 24
      %v2422 = vpop.permute.xlu0 %2421
      %2423 = vrot.lane.b32.xlu0 %v2316, 24
      %v2424 = vpop.permute.xlu0 %2423
      %2425 = vrot.lane.b32.xlu0 %v2317, 24
      %v2426 = vpop.permute.xlu0 %2425
      %2427 = vrot.lane.b32.xlu0 %v2318, 24
      %v2428 = vpop.permute.xlu0 %2427
      %2429 = vrot.lane.b32.xlu0 %v2319, 24
      %v2430 = vpop.permute.xlu0 %2429
      %2431 = vrot.lane.b32.xlu0 %v2320, 24
      %v2432 = vpop.permute.xlu0 %2431
      %2433 = vrot.lane.b32.xlu0 %v2321, 24
      %v2434 = vpop.permute.xlu0 %2433
      %2435 = vrot.lane.b32.xlu0 %v2322, 24
      %v2436 = vpop.permute.xlu0 %2435
      %2437 = vrot.lane.b32.xlu0 %v2323, 24
      %v2438 = vpop.permute.xlu0 %2437
      %2439 = vrot.lane.b32.xlu0 %v2324, 24
      %v2440 = vpop.permute.xlu0 %2439
      %2441 = vrot.lane.b32.xlu0 %v2325, 24
      %v2442 = vpop.permute.xlu0 %2441
      %2443 = vrot.lane.b32.xlu0 %v2326, 24
      %v2444 = vpop.permute.xlu0 %2443
      %2445 = vrot.lane.b32.xlu0 %v2327, 24
      %v2446 = vpop.permute.xlu0 %2445
      %2447 = vrot.lane.b32.xlu0 %v2328, 24
      %v2448 = vpop.permute.xlu0 %2447
      %2449 = vrot.lane.b32.xlu0 %v2355, 24
      %v2450 = vpop.permute.xlu0 %2449
      %2451 = vrot.lane.b32.xlu0 %v2356, 24
      %v2452 = vpop.permute.xlu0 %2451
      %2485 = vrot.lane.b32.xlu0 %v2301, 48
      %v2486 = vpop.permute.xlu0 %2485
      %2487 = vrot.lane.b32.xlu0 %v2302, 48
      %v2488 = vpop.permute.xlu0 %2487
      %2489 = vrot.lane.b32.xlu0 %v2303, 48
      %v2490 = vpop.permute.xlu0 %2489
      %2491 = vrot.lane.b32.xlu0 %v2304, 48
      %v2492 = vpop.permute.xlu0 %2491
      %2493 = vrot.lane.b32.xlu0 %v2305, 48
      %v2494 = vpop.permute.xlu0 %2493
      %2495 = vrot.lane.b32.xlu0 %v2306, 48
      %v2496 = vpop.permute.xlu0 %2495
      %2497 = vrot.lane.b32.xlu0 %v2307, 48
      %v2498 = vpop.permute.xlu0 %2497
      %2499 = vrot.lane.b32.xlu0 %v2308, 48
      %v2500 = vpop.permute.xlu0 %2499
      %2501 = vrot.lane.b32.xlu0 %v2309, 48
      %v2502 = vpop.permute.xlu0 %2501
      %2503 = vrot.lane.b32.xlu0 %v2310, 48
      %v2504 = vpop.permute.xlu0 %2503
      %2505 = vrot.lane.b32.xlu0 %v2311, 48
      %v2506 = vpop.permute.xlu0 %2505
      %2507 = vrot.lane.b32.xlu0 %v2312, 48
      %v2508 = vpop.permute.xlu0 %2507
      %2509 = vrot.lane.b32.xlu0 %v2313, 48
      %v2510 = vpop.permute.xlu0 %2509
      %2511 = vrot.lane.b32.xlu0 %v2314, 48
      %v2512 = vpop.permute.xlu0 %2511
      %2513 = vrot.lane.b32.xlu0 %v2315, 48
      %v2514 = vpop.permute.xlu0 %2513
      %2515 = vrot.lane.b32.xlu0 %v2316, 48
      %v2516 = vpop.permute.xlu0 %2515
      %2517 = vrot.lane.b32.xlu0 %v2317, 48
      %v2518 = vpop.permute.xlu0 %2517
      %2519 = vrot.lane.b32.xlu0 %v2318, 48
      %v2520 = vpop.permute.xlu0 %2519
      %2521 = vrot.lane.b32.xlu0 %v2319, 48
      %v2522 = vpop.permute.xlu0 %2521
      %2523 = vrot.lane.b32.xlu0 %v2320, 48
      %v2524 = vpop.permute.xlu0 %2523
      %2525 = vrot.lane.b32.xlu0 %v2321, 48
      %v2526 = vpop.permute.xlu0 %2525
      %2527 = vrot.lane.b32.xlu0 %v2322, 48
      %v2528 = vpop.permute.xlu0 %2527
      %2529 = vrot.lane.b32.xlu0 %v2323, 48
      %v2530 = vpop.permute.xlu0 %2529
      %2531 = vrot.lane.b32.xlu0 %v2324, 48
      %v2532 = vpop.permute.xlu0 %2531
      %2533 = vrot.lane.b32.xlu0 %v2325, 48
      %v2534 = vpop.permute.xlu0 %2533
      %2535 = vrot.lane.b32.xlu0 %v2326, 48
      %v2536 = vpop.permute.xlu0 %2535
      %2537 = vrot.lane.b32.xlu0 %v2327, 48
      %v2538 = vpop.permute.xlu0 %2537
      %2539 = vrot.lane.b32.xlu0 %v2328, 48
      %v2540 = vpop.permute.xlu0 %2539
      %2541 = vrot.lane.b32.xlu0 %v2355, 48
      %v2542 = vpop.permute.xlu0 %2541
      %2543 = vrot.lane.b32.xlu0 %v2356, 48
      %v2544 = vpop.permute.xlu0 %2543
      %v2575 = vsel %vm1314, %v1028, %v2390
      %v2576 = vsel %vm1314, %v1029, %v2392
      %v2577 = vsel %vm1314, %v2299, %v2394
      %v2578 = vsel %vm1314, %v2300, %v2396
      %v2579 = vsel %vm1314, %v2301, %v2398
      %v2580 = vsel %vm1314, %v2302, %v2400
      %v2581 = vsel %vm1314, %v2303, %v2402
      %v2582 = vsel %vm1314, %v2304, %v2404
      %v2583 = vsel %vm1314, %v2305, %v2406
      %v2584 = vsel %vm1314, %v2306, %v2408
      %v2585 = vsel %vm1314, %v2307, %v2410
      %v2586 = vsel %vm1314, %v2308, %v2412
      %v2587 = vsel %vm1314, %v2309, %v2414
      %v2588 = vsel %vm1314, %v2310, %v2416
      %v2589 = vsel %vm1314, %v2311, %v2418
      %v2590 = vsel %vm1314, %v2312, %v2420
      %v2591 = vsel %vm1314, %v2313, %v2422
      %v2592 = vsel %vm1314, %v2314, %v2424
      %v2593 = vsel %vm1314, %v2315, %v2426
      %v2594 = vsel %vm1314, %v2316, %v2428
      %v2595 = vsel %vm1314, %v2317, %v2430
      %v2596 = vsel %vm1314, %v2318, %v2432
      %v2597 = vsel %vm1314, %v2319, %v2434
      %v2598 = vsel %vm1314, %v2320, %v2436
      %v2599 = vsel %vm1314, %v2321, %v2438
      %v2600 = vsel %vm1314, %v2322, %v2440
      %v2601 = vsel %vm1314, %v2323, %v2442
      %v2602 = vsel %vm1314, %v2324, %v2444
      %v2603 = vsel %vm1314, %v2325, %v2446
      %v2604 = vsel %vm1314, %v2326, %v2448
      %v2605 = vsel %vm1314, %v2327, %v2450
      %v2606 = vsel %vm1314, %v2328, %v2452
      %v2607 = vsel %vm1347, %v2575, %v2486
      %v2608 = vsel %vm1347, %v2576, %v2488
      %v2609 = vsel %vm1347, %v2577, %v2490
      %v2610 = vsel %vm1347, %v2578, %v2492
      %v2611 = vsel %vm1347, %v2579, %v2494
      %v2612 = vsel %vm1347, %v2580, %v2496
      %v2613 = vsel %vm1347, %v2581, %v2498
      %v2614 = vsel %vm1347, %v2582, %v2500
      %v2615 = vsel %vm1347, %v2583, %v2502
      %v2616 = vsel %vm1347, %v2584, %v2504
      %v2617 = vsel %vm1347, %v2585, %v2506
      %v2618 = vsel %vm1347, %v2586, %v2508
      %v2619 = vsel %vm1347, %v2587, %v2510
      %v2620 = vsel %vm1347, %v2588, %v2512
      %v2621 = vsel %vm1347, %v2589, %v2514
      %v2622 = vsel %vm1347, %v2590, %v2516
      %v2623 = vsel %vm1347, %v2591, %v2518
      %v2624 = vsel %vm1347, %v2592, %v2520
      %v2625 = vsel %vm1347, %v2593, %v2522
      %v2626 = vsel %vm1347, %v2594, %v2524
      %v2627 = vsel %vm1347, %v2595, %v2526
      %v2628 = vsel %vm1347, %v2596, %v2528
      %v2629 = vsel %vm1347, %v2597, %v2530
      %v2630 = vsel %vm1347, %v2598, %v2532
      %v2631 = vsel %vm1347, %v2599, %v2534
      %v2632 = vsel %vm1347, %v2600, %v2536
      %v2633 = vsel %vm1347, %v2601, %v2538
      %v2634 = vsel %vm1347, %v2602, %v2540
      %v2635 = vsel %vm1347, %v2603, %v2542
      %v2636 = vsel %vm1347, %v2604, %v2544
      %v2637 = vsel %vm1347, %v2605, %v1279
      %v2638 = vsel %vm1347, %v2606, %v1281
      %v2639 = vpack.c.bf16 %v2608, %v2607
      %v2640 = vpack.c.bf16 %v2610, %v2609
      %v2641 = vpack.c.bf16 %v2612, %v2611
      %v2642 = vpack.c.bf16 %v2614, %v2613
      %v2643 = vpack.c.bf16 %v2616, %v2615
      %v2644 = vpack.c.bf16 %v2618, %v2617
      %v2645 = vpack.c.bf16 %v2620, %v2619
      %v2646 = vpack.c.bf16 %v2622, %v2621
      %v2647 = vpack.c.bf16 %v2624, %v2623
      %v2648 = vpack.c.bf16 %v2626, %v2625
      %v2649 = vpack.c.bf16 %v2628, %v2627
      %v2650 = vpack.c.bf16 %v2630, %v2629
      %v2651 = vpack.c.bf16 %v2632, %v2631
      %v2652 = vpack.c.bf16 %v2634, %v2633
      %v2653 = vpack.c.bf16 %v2636, %v2635
      %v2654 = vpack.c.bf16 %v2638, %v2637
      %v2656 = vlaneseq
      %v2657 = vshrl.u32 %v2656, 7
      %v2658 = vsub.s32 0, %v2657
      %v2659 = vrot.slane %v1748, %v2658
      %v2670 = vunpack.c.l.b16 %v1739
      %v2671 = vunpack.c.l.b16 %v1740
      %v2672 = vunpack.c.l.b16 %v1741
      %v2673 = vunpack.c.l.b16 %v1742
      %v2674 = vunpack.c.l.b16 %v1743
      %v2675 = vunpack.c.l.b16 %v1744
      %v2676 = vunpack.c.l.b16 %v1745
      %v2677 = vunpack.c.l.b16 %v1746
      %v2678 = vunpack.c.l.b16 %v1747
      %v2679 = vpack.c.b16 %v2671, %v2670
      %v2680 = vpack.c.b16 %v2673, %v2672
      %v2681 = vpack.c.b16 %v2675, %v2674
      %v2682 = vpack.c.b16 %v2677, %v2676
      %v2683 = vpack.c.b16 %v2678, %v2678
      %v2689 = vsel %vm1429, %v2639, 0
      %v2692 = vsel %vm1429, %v2640, 0
      %v2695 = vsel %vm1429, %v2641, 0
      %v2698 = vsel %vm1429, %v2642, 0
      %v2701 = vsel %vm1429, %v2643, 0
      %v2704 = vsel %vm1429, %v2644, 0
      %v2707 = vsel %vm1429, %v2645, 0
      %v2710 = vsel %vm1429, %v2646, 0
      %v2713 = vsel %vm1429, %v2647, 0
      %v2716 = vsel %vm1429, %v2648, 0
      %v2719 = vsel %vm1429, %v2649, 0
      %v2722 = vsel %vm1429, %v2650, 0
      %v2725 = vsel %vm1429, %v2651, 0
      %v2728 = vsel %vm1429, %v2652, 0
      %v2731 = vsel %vm1429, %v2653, 0
      %v2734 = vsel %vm1429, %v2654, 0
      %v2737 = vsel %vm1478, %v2683, 0
      %2739 = vmatprep.subr.bf16.mxu0 0
      %2740 = vmatpush1.bf16.msra.mxu0 0
      %2741 = vmatprep.subr.bf16.mxu0 0
      %2742 = vmatpush1.bf16.msra.mxu0 0
      %2743 = vmatprep.subr.bf16.mxu0 0
      %2744 = vmatpush1.bf16.msra.mxu0 0
      %2745 = vmatprep.subr.bf16.mxu0 0
      %2746 = vmatpush1.bf16.msra.mxu0 %v2737
      %2747 = vmatprep.subr.bf16.mxu0 0
      %2748 = vmatpush1.bf16.msra.mxu0 %v2682
      %2749 = vmatprep.subr.bf16.mxu0 0
      %2750 = vmatpush1.bf16.msra.mxu0 %v2681
      %2751 = vmatprep.subr.bf16.mxu0 0
      %2752 = vmatpush1.bf16.msra.mxu0 %v2680
      %2753 = vmatprep.subr.bf16.mxu0 0
      %2754 = vmatpush1.bf16.msra.mxu0 %v2679
      %2755 = vmatprep.subr.bf16.mxu0 0
      %2756 = vmatpush2.bf16.msra.mxu0 0
      %2757 = vmatprep.subr.bf16.mxu0 0
      %2758 = vmatpush2.bf16.msra.mxu0 0
      %2759 = vmatprep.subr.bf16.mxu0 0
      %2760 = vmatpush2.bf16.msra.mxu0 0
      %2761 = vmatprep.subr.bf16.mxu0 0
      %2762 = vmatpush2.bf16.msra.mxu0 0
      %2763 = vmatprep.subr.bf16.mxu0 0
      %2764 = vmatpush2.bf16.msra.mxu0 0
      %2765 = vmatprep.subr.bf16.mxu0 0
      %2766 = vmatpush2.bf16.msra.mxu0 0
      %2767 = vmatprep.subr.bf16.mxu0 0
      %2768 = vmatpush2.bf16.msra.mxu0 0
      %2769 = vmatprep.subr.bf16.mxu0 0
      %2770 = vmatpush2.bf16.msra.mxu0 0
      %2771 = vmatprep.mubr.bf16.mxu0 0
      %2772 = vmatmul.mubr.bf16.gmra.mxu0 %v2689
      %v2773 = vpop.f32.mrf.mxu0
      %v2774 = vadd.f32 %v2659, %v2773
      %v2775 = vpop.f32.mrf.mxu0
      %v2776 = vpop.f32.mrf.mxu0
      %v2777 = vadd.f32 %v2659, %v2776
      %v2778 = vpop.f32.mrf.mxu0
      %2779 = vmatprep.mubr.bf16.mxu0 0
      %2780 = vmatmul.mubr.bf16.gmra.mxu0 %v2692
      %v2781 = vpop.f32.mrf.mxu0
      %v2782 = vadd.f32 %v2659, %v2781
      %v2783 = vpop.f32.mrf.mxu0
      %v2784 = vpop.f32.mrf.mxu0
      %v2785 = vadd.f32 %v2659, %v2784
      %v2786 = vpop.f32.mrf.mxu0
      %2787 = vmatprep.mubr.bf16.mxu0 0
      %2788 = vmatmul.mubr.bf16.gmra.mxu0 %v2695
      %v2789 = vpop.f32.mrf.mxu0
      %v2790 = vadd.f32 %v2659, %v2789
      %v2791 = vpop.f32.mrf.mxu0
      %v2792 = vpop.f32.mrf.mxu0
      %v2793 = vadd.f32 %v2659, %v2792
      %v2794 = vpop.f32.mrf.mxu0
      %2795 = vmatprep.mubr.bf16.mxu0 0
      %2796 = vmatmul.mubr.bf16.gmra.mxu0 %v2698
      %v2797 = vpop.f32.mrf.mxu0
      %v2798 = vadd.f32 %v2659, %v2797
      %v2799 = vpop.f32.mrf.mxu0
      %v2800 = vpop.f32.mrf.mxu0
      %v2801 = vadd.f32 %v2659, %v2800
      %v2802 = vpop.f32.mrf.mxu0
      %2803 = vmatprep.mubr.bf16.mxu0 0
      %2804 = vmatmul.mubr.bf16.gmra.mxu0 %v2701
      %v2805 = vpop.f32.mrf.mxu0
      %v2806 = vadd.f32 %v2659, %v2805
      %v2807 = vpop.f32.mrf.mxu0
      %v2808 = vpop.f32.mrf.mxu0
      %v2809 = vadd.f32 %v2659, %v2808
      %v2810 = vpop.f32.mrf.mxu0
      %2811 = vmatprep.mubr.bf16.mxu0 0
      %2812 = vmatmul.mubr.bf16.gmra.mxu0 %v2704
      %v2813 = vpop.f32.mrf.mxu0
      %v2814 = vadd.f32 %v2659, %v2813
      %v2815 = vpop.f32.mrf.mxu0
      %v2816 = vpop.f32.mrf.mxu0
      %v2817 = vadd.f32 %v2659, %v2816
      %v2818 = vpop.f32.mrf.mxu0
      %2819 = vmatprep.mubr.bf16.mxu0 0
      %2820 = vmatmul.mubr.bf16.gmra.mxu0 %v2707
      %v2821 = vpop.f32.mrf.mxu0
      %v2822 = vadd.f32 %v2659, %v2821
      %v2823 = vpop.f32.mrf.mxu0
      %v2824 = vpop.f32.mrf.mxu0
      %v2825 = vadd.f32 %v2659, %v2824
      %v2826 = vpop.f32.mrf.mxu0
      %2827 = vmatprep.mubr.bf16.mxu0 0
      %2828 = vmatmul.mubr.bf16.gmra.mxu0 %v2710
      %v2829 = vpop.f32.mrf.mxu0
      %v2830 = vadd.f32 %v2659, %v2829
      %v2831 = vpop.f32.mrf.mxu0
      %v2832 = vpop.f32.mrf.mxu0
      %v2833 = vadd.f32 %v2659, %v2832
      %v2834 = vpop.f32.mrf.mxu0
      %2835 = vmatprep.mubr.bf16.mxu0 0
      %2836 = vmatmul.mubr.bf16.gmra.mxu0 %v2713
      %v2837 = vpop.f32.mrf.mxu0
      %v2838 = vadd.f32 %v2659, %v2837
      %v2839 = vpop.f32.mrf.mxu0
      %v2840 = vpop.f32.mrf.mxu0
      %v2841 = vadd.f32 %v2659, %v2840
      %v2842 = vpop.f32.mrf.mxu0
      %2843 = vmatprep.mubr.bf16.mxu0 0
      %2844 = vmatmul.mubr.bf16.gmra.mxu0 %v2716
      %v2845 = vpop.f32.mrf.mxu0
      %v2846 = vadd.f32 %v2659, %v2845
      %v2847 = vpop.f32.mrf.mxu0
      %v2848 = vpop.f32.mrf.mxu0
      %v2849 = vadd.f32 %v2659, %v2848
      %v2850 = vpop.f32.mrf.mxu0
      %2851 = vmatprep.mubr.bf16.mxu0 0
      %2852 = vmatmul.mubr.bf16.gmra.mxu0 %v2719
      %v2853 = vpop.f32.mrf.mxu0
      %v2854 = vadd.f32 %v2659, %v2853
      %v2855 = vpop.f32.mrf.mxu0
      %v2856 = vpop.f32.mrf.mxu0
      %v2857 = vadd.f32 %v2659, %v2856
      %v2858 = vpop.f32.mrf.mxu0
      %2859 = vmatprep.mubr.bf16.mxu0 0
      %2860 = vmatmul.mubr.bf16.gmra.mxu0 %v2722
      %v2861 = vpop.f32.mrf.mxu0
      %v2862 = vadd.f32 %v2659, %v2861
      %v2863 = vpop.f32.mrf.mxu0
      %v2864 = vpop.f32.mrf.mxu0
      %v2865 = vadd.f32 %v2659, %v2864
      %v2866 = vpop.f32.mrf.mxu0
      %2867 = vmatprep.mubr.bf16.mxu0 0
      %2868 = vmatmul.mubr.bf16.gmra.mxu0 %v2725
      %v2869 = vpop.f32.mrf.mxu0
      %v2870 = vadd.f32 %v2659, %v2869
      %v2871 = vpop.f32.mrf.mxu0
      %v2872 = vpop.f32.mrf.mxu0
      %v2873 = vadd.f32 %v2659, %v2872
      %v2874 = vpop.f32.mrf.mxu0
      %2875 = vmatprep.mubr.bf16.mxu0 0
      %2876 = vmatmul.mubr.bf16.gmra.mxu0 %v2728
      %v2877 = vpop.f32.mrf.mxu0
      %v2878 = vadd.f32 %v2659, %v2877
      %v2879 = vpop.f32.mrf.mxu0
      %v2880 = vpop.f32.mrf.mxu0
      %v2881 = vadd.f32 %v2659, %v2880
      %v2882 = vpop.f32.mrf.mxu0
      %2883 = vmatprep.mubr.bf16.mxu0 0
      %2884 = vmatmul.mubr.bf16.gmra.mxu0 %v2731
      %v2885 = vpop.f32.mrf.mxu0
      %v2886 = vadd.f32 %v2659, %v2885
      %v2887 = vpop.f32.mrf.mxu0
      %v2888 = vpop.f32.mrf.mxu0
      %v2889 = vadd.f32 %v2659, %v2888
      %v2890 = vpop.f32.mrf.mxu0
      %2891 = vmatprep.mubr.bf16.mxu0 0
      %2892 = vmatmul.mubr.bf16.gmra.mxu0 %v2734
      %v2893 = vpop.f32.mrf.mxu0
      %v2894 = vadd.f32 %v2659, %v2893
      %v2895 = vpop.f32.mrf.mxu0
      %v2896 = vpop.f32.mrf.mxu0
      %v2897 = vadd.f32 %v2659, %v2896
      %v2898 = vpop.f32.mrf.mxu0
      %2899 = vdwg.mxu0
      %v2900 = vmul.f32 %v2774, 0.1
      %v2901 = vmul.f32 %v2777, 0.1
      %v2902 = vmul.f32 %v2782, 0.1
      %v2903 = vmul.f32 %v2785, 0.1
      %v2904 = vmul.f32 %v2790, 0.1
      %v2905 = vmul.f32 %v2793, 0.1
      %v2906 = vmul.f32 %v2798, 0.1
      %v2907 = vmul.f32 %v2801, 0.1
      %v2908 = vmul.f32 %v2806, 0.1
      %v2909 = vmul.f32 %v2809, 0.1
      %v2910 = vmul.f32 %v2814, 0.1
      %v2911 = vmul.f32 %v2817, 0.1
      %v2912 = vmul.f32 %v2822, 0.1
      %v2913 = vmul.f32 %v2825, 0.1
      %v2914 = vmul.f32 %v2830, 0.1
      %v2915 = vmul.f32 %v2833, 0.1
      %v2916 = vmul.f32 %v2838, 0.1
      %v2917 = vmul.f32 %v2841, 0.1
      %v2918 = vmul.f32 %v2846, 0.1
      %v2919 = vmul.f32 %v2849, 0.1
      %v2920 = vmul.f32 %v2854, 0.1
      %v2921 = vmul.f32 %v2857, 0.1
      %v2922 = vmul.f32 %v2862, 0.1
      %v2923 = vmul.f32 %v2865, 0.1
      %v2924 = vmul.f32 %v2870, 0.1
      %v2925 = vmul.f32 %v2873, 0.1
      %v2926 = vmul.f32 %v2878, 0.1
      %v2927 = vmul.f32 %v2881, 0.1
      %v2928 = vmul.f32 %v2886, 0.1
      %v2929 = vmul.f32 %v2889, 0.1
      %v2930 = vmul.f32 %v2894, 0.1
      %v2931 = vmul.f32 %v2897, 0.1
      %v2933 = vsel %vm994, %v317, 0
      %v2936 = vsel %vm994, %v318, 0
      %v2939 = vsel %vm994, %v319, 0
      %v2942 = vsel %vm994, %v320, 0
      %v2945 = vsel %vm994, %v321, 0
      %v2948 = vsel %vm994, %v322, 0
      %v2951 = vsel %vm994, %v323, 0
      %v2954 = vsel %vm994, %v324, 0
      %v2957 = vsel %vm994, %v325, 0
      %v2960 = vsel %vm994, %v326, 0
      %v2963 = vsel %vm994, %v327, 0
      %v2966 = vsel %vm994, %v328, 0
      %v2969 = vsel %vm994, %v329, 0
      %v2972 = vsel %vm994, %v330, 0
      %v2975 = vsel %vm994, %v331, 0
      %v2978 = vsel %vm994, %v332, 0
      %v2981 = vsel %vm1478, %v333, 0
      %2983 = vmatprep.subr.bf16.mxu0 0
      %2984 = vmatpush1.bf16.msra.mxu0 0
      %2985 = vmatprep.subr.bf16.mxu0 0
      %2986 = vmatpush1.bf16.msra.mxu0 0
      %2987 = vmatprep.subr.bf16.mxu0 0
      %2988 = vmatpush1.bf16.msra.mxu0 0
      %2989 = vmatprep.subr.bf16.mxu0 0
      %2990 = vmatpush1.bf16.msra.mxu0 0
      %2991 = vmatprep.subr.bf16.mxu0 0
      %2992 = vmatpush1.bf16.msra.mxu0 0
      %2993 = vmatprep.subr.bf16.mxu0 0
      %2994 = vmatpush1.bf16.msra.mxu0 0
      %2995 = vmatprep.subr.bf16.mxu0 0
      %2996 = vmatpush1.bf16.msra.mxu0 0
      %2997 = vmatprep.subr.bf16.mxu0 0
      %2998 = vmatpush1.bf16.msra.mxu0 %v2981
      %2999 = vmatprep.subr.bf16.mxu0 0
      %3000 = vmatpush2.bf16.msra.mxu0 0
      %3001 = vmatprep.subr.bf16.mxu0 0
      %3002 = vmatpush2.bf16.msra.mxu0 0
      %3003 = vmatprep.subr.bf16.mxu0 0
      %3004 = vmatpush2.bf16.msra.mxu0 0
      %3005 = vmatprep.subr.bf16.mxu0 0
      %3006 = vmatpush2.bf16.msra.mxu0 0
      %3007 = vmatprep.subr.bf16.mxu0 0
      %3008 = vmatpush2.bf16.msra.mxu0 0
      %3009 = vmatprep.subr.bf16.mxu0 0
      %3010 = vmatpush2.bf16.msra.mxu0 0
      %3011 = vmatprep.subr.bf16.mxu0 0
      %3012 = vmatpush2.bf16.msra.mxu0 0
      %3013 = vmatprep.subr.bf16.mxu0 0
      %3014 = vmatpush2.bf16.msra.mxu0 0
      %3015 = vmatprep.mubr.bf16.mxu0 0
      %3016 = vmatmul.mubr.bf16.gmra.mxu0 %v2933
      %v3017 = vpop.f32.mrf.mxu0
      %v3018 = vadd.f32 %v2900, %v3017
      %v3019 = vpop.f32.mrf.mxu0
      %v3020 = vpop.f32.mrf.mxu0
      %v3021 = vadd.f32 %v2901, %v3020
      %v3022 = vpop.f32.mrf.mxu0
      %3023 = vmatprep.mubr.bf16.mxu0 0
      %3024 = vmatmul.mubr.bf16.gmra.mxu0 %v2936
      %v3025 = vpop.f32.mrf.mxu0
      %v3026 = vadd.f32 %v2902, %v3025
      %v3027 = vpop.f32.mrf.mxu0
      %v3028 = vpop.f32.mrf.mxu0
      %v3029 = vadd.f32 %v2903, %v3028
      %v3030 = vpop.f32.mrf.mxu0
      %3031 = vmatprep.mubr.bf16.mxu0 0
      %3032 = vmatmul.mubr.bf16.gmra.mxu0 %v2939
      %v3033 = vpop.f32.mrf.mxu0
      %v3034 = vadd.f32 %v2904, %v3033
      %v3035 = vpop.f32.mrf.mxu0
      %v3036 = vpop.f32.mrf.mxu0
      %v3037 = vadd.f32 %v2905, %v3036
      %v3038 = vpop.f32.mrf.mxu0
      %3039 = vmatprep.mubr.bf16.mxu0 0
      %3040 = vmatmul.mubr.bf16.gmra.mxu0 %v2942
      %v3041 = vpop.f32.mrf.mxu0
      %v3042 = vadd.f32 %v2906, %v3041
      %v3043 = vpop.f32.mrf.mxu0
      %v3044 = vpop.f32.mrf.mxu0
      %v3045 = vadd.f32 %v2907, %v3044
      %v3046 = vpop.f32.mrf.mxu0
      %3047 = vmatprep.mubr.bf16.mxu0 0
      %3048 = vmatmul.mubr.bf16.gmra.mxu0 %v2945
      %v3049 = vpop.f32.mrf.mxu0
      %v3050 = vadd.f32 %v2908, %v3049
      %v3051 = vpop.f32.mrf.mxu0
      %v3052 = vpop.f32.mrf.mxu0
      %v3053 = vadd.f32 %v2909, %v3052
      %v3054 = vpop.f32.mrf.mxu0
      %3055 = vmatprep.mubr.bf16.mxu0 0
      %3056 = vmatmul.mubr.bf16.gmra.mxu0 %v2948
      %v3057 = vpop.f32.mrf.mxu0
      %v3058 = vadd.f32 %v2910, %v3057
      %v3059 = vpop.f32.mrf.mxu0
      %v3060 = vpop.f32.mrf.mxu0
      %v3061 = vadd.f32 %v2911, %v3060
      %v3062 = vpop.f32.mrf.mxu0
      %3063 = vmatprep.mubr.bf16.mxu0 0
      %3064 = vmatmul.mubr.bf16.gmra.mxu0 %v2951
      %v3065 = vpop.f32.mrf.mxu0
      %v3066 = vadd.f32 %v2912, %v3065
      %v3067 = vpop.f32.mrf.mxu0
      %v3068 = vpop.f32.mrf.mxu0
      %v3069 = vadd.f32 %v2913, %v3068
      %v3070 = vpop.f32.mrf.mxu0
      %3071 = vmatprep.mubr.bf16.mxu0 0
      %3072 = vmatmul.mubr.bf16.gmra.mxu0 %v2954
      %v3073 = vpop.f32.mrf.mxu0
      %v3074 = vadd.f32 %v2914, %v3073
      %v3075 = vpop.f32.mrf.mxu0
      %v3076 = vpop.f32.mrf.mxu0
      %v3077 = vadd.f32 %v2915, %v3076
      %v3078 = vpop.f32.mrf.mxu0
      %3079 = vmatprep.mubr.bf16.mxu0 0
      %3080 = vmatmul.mubr.bf16.gmra.mxu0 %v2957
      %v3081 = vpop.f32.mrf.mxu0
      %v3082 = vadd.f32 %v2916, %v3081
      %v3083 = vpop.f32.mrf.mxu0
      %v3084 = vpop.f32.mrf.mxu0
      %v3085 = vadd.f32 %v2917, %v3084
      %v3086 = vpop.f32.mrf.mxu0
      %3087 = vmatprep.mubr.bf16.mxu0 0
      %3088 = vmatmul.mubr.bf16.gmra.mxu0 %v2960
      %v3089 = vpop.f32.mrf.mxu0
      %v3090 = vadd.f32 %v2918, %v3089
      %v3091 = vpop.f32.mrf.mxu0
      %v3092 = vpop.f32.mrf.mxu0
      %v3093 = vadd.f32 %v2919, %v3092
      %v3094 = vpop.f32.mrf.mxu0
      %3095 = vmatprep.mubr.bf16.mxu0 0
      %3096 = vmatmul.mubr.bf16.gmra.mxu0 %v2963
      %v3097 = vpop.f32.mrf.mxu0
      %v3098 = vadd.f32 %v2920, %v3097
      %v3099 = vpop.f32.mrf.mxu0
      %v3100 = vpop.f32.mrf.mxu0
      %v3101 = vadd.f32 %v2921, %v3100
      %v3102 = vpop.f32.mrf.mxu0
      %3103 = vmatprep.mubr.bf16.mxu0 0
      %3104 = vmatmul.mubr.bf16.gmra.mxu0 %v2966
      %v3105 = vpop.f32.mrf.mxu0
      %v3106 = vadd.f32 %v2922, %v3105
      %v3107 = vpop.f32.mrf.mxu0
      %v3108 = vpop.f32.mrf.mxu0
      %v3109 = vadd.f32 %v2923, %v3108
      %v3110 = vpop.f32.mrf.mxu0
      %3111 = vmatprep.mubr.bf16.mxu0 0
      %3112 = vmatmul.mubr.bf16.gmra.mxu0 %v2969
      %v3113 = vpop.f32.mrf.mxu0
      %v3114 = vadd.f32 %v2924, %v3113
      %v3115 = vpop.f32.mrf.mxu0
      %v3116 = vpop.f32.mrf.mxu0
      %v3117 = vadd.f32 %v2925, %v3116
      %v3118 = vpop.f32.mrf.mxu0
      %3119 = vmatprep.mubr.bf16.mxu0 0
      %3120 = vmatmul.mubr.bf16.gmra.mxu0 %v2972
      %v3121 = vpop.f32.mrf.mxu0
      %v3122 = vadd.f32 %v2926, %v3121
      %v3123 = vpop.f32.mrf.mxu0
      %v3124 = vpop.f32.mrf.mxu0
      %v3125 = vadd.f32 %v2927, %v3124
      %v3126 = vpop.f32.mrf.mxu0
      %3127 = vmatprep.mubr.bf16.mxu0 0
      %3128 = vmatmul.mubr.bf16.gmra.mxu0 %v2975
      %v3129 = vpop.f32.mrf.mxu0
      %v3130 = vadd.f32 %v2928, %v3129
      %v3131 = vpop.f32.mrf.mxu0
      %v3132 = vpop.f32.mrf.mxu0
      %v3133 = vadd.f32 %v2929, %v3132
      %v3134 = vpop.f32.mrf.mxu0
      %3135 = vmatprep.mubr.bf16.mxu0 0
      %3136 = vmatmul.mubr.bf16.gmra.mxu0 %v2978
      %v3137 = vpop.f32.mrf.mxu0
      %v3138 = vadd.f32 %v2930, %v3137
      %v3139 = vpop.f32.mrf.mxu0
      %v3140 = vpop.f32.mrf.mxu0
      %v3141 = vadd.f32 %v2931, %v3140
      %v3142 = vpop.f32.mrf.mxu0
      %3143 = vdwg.mxu0
      %v3144 = vpack.c.bf16 %v3021, %v3018
      %v3145 = vpack.c.bf16 %v3029, %v3026
      %v3146 = vpack.c.bf16 %v3037, %v3034
      %v3147 = vpack.c.bf16 %v3045, %v3042
      %v3148 = vpack.c.bf16 %v3053, %v3050
      %v3149 = vpack.c.bf16 %v3061, %v3058
      %v3150 = vpack.c.bf16 %v3069, %v3066
      %v3151 = vpack.c.bf16 %v3077, %v3074
      %v3152 = vpack.c.bf16 %v3085, %v3082
      %v3153 = vpack.c.bf16 %v3093, %v3090
      %v3154 = vpack.c.bf16 %v3101, %v3098
      %v3155 = vpack.c.bf16 %v3109, %v3106
      %v3156 = vpack.c.bf16 %v3117, %v3114
      %v3157 = vpack.c.bf16 %v3125, %v3122
      %v3158 = vpack.c.bf16 %v3133, %v3130
      %v3159 = vpack.c.bf16 %v3141, %v3138
      %v3176 = vunpack.c.l.b16 %v3144
      %v3177 = vunpack.c.h.b16 %v3144
      %v3178 = vunpack.c.l.b16 %v3145
      %v3179 = vunpack.c.h.b16 %v3145
      %v3180 = vunpack.c.l.b16 %v3146
      %v3181 = vunpack.c.h.b16 %v3146
      %v3182 = vunpack.c.l.b16 %v3147
      %v3183 = vunpack.c.h.b16 %v3147
      %v3184 = vunpack.c.l.b16 %v3148
      %v3185 = vunpack.c.h.b16 %v3148
      %v3186 = vunpack.c.l.b16 %v3149
      %v3187 = vunpack.c.h.b16 %v3149
      %v3188 = vunpack.c.l.b16 %v3150
      %v3189 = vunpack.c.h.b16 %v3150
      %v3190 = vunpack.c.l.b16 %v3151
      %v3191 = vunpack.c.h.b16 %v3151
      %v3192 = vunpack.c.l.b16 %v3152
      %v3193 = vunpack.c.h.b16 %v3152
      %v3194 = vunpack.c.l.b16 %v3153
      %v3195 = vunpack.c.h.b16 %v3153
      %v3196 = vunpack.c.l.b16 %v3154
      %v3197 = vunpack.c.h.b16 %v3154
      %v3198 = vunpack.c.l.b16 %v3155
      %v3199 = vunpack.c.h.b16 %v3155
      %v3200 = vunpack.c.l.b16 %v3156
      %v3201 = vunpack.c.h.b16 %v3156
      %v3202 = vunpack.c.l.b16 %v3157
      %v3203 = vunpack.c.h.b16 %v3157
      %v3204 = vunpack.c.l.b16 %v3158
      %v3205 = vunpack.c.h.b16 %v3158
      %v3206 = vunpack.c.l.b16 %v3159
      %v3207 = vunpack.c.h.b16 %v3159
      %v3208 = vpack.c.b16 %v3176, %v3176
      %v3209 = vpack.c.b16 %v3177, %v3177
      %v3210 = vpack.c.b16 %v3178, %v3178
      %v3211 = vpack.c.b16 %v3179, %v3179
      %v3212 = vpack.c.b16 %v3180, %v3180
      %v3213 = vpack.c.b16 %v3181, %v3181
      %v3214 = vpack.c.b16 %v3182, %v3182
      %v3215 = vpack.c.b16 %v3183, %v3183
      %v3216 = vpack.c.b16 %v3184, %v3184
      %v3217 = vpack.c.b16 %v3185, %v3185
      %v3218 = vpack.c.b16 %v3186, %v3186
      %v3219 = vpack.c.b16 %v3187, %v3187
      %v3220 = vpack.c.b16 %v3188, %v3188
      %v3221 = vpack.c.b16 %v3189, %v3189
      %v3222 = vpack.c.b16 %v3190, %v3190
      %v3223 = vpack.c.b16 %v3191, %v3191
      %v3224 = vpack.c.b16 %v3192, %v3192
      %v3225 = vpack.c.b16 %v3193, %v3193
      %v3226 = vpack.c.b16 %v3194, %v3194
      %v3227 = vpack.c.b16 %v3195, %v3195
      %v3228 = vpack.c.b16 %v3196, %v3196
      %v3229 = vpack.c.b16 %v3197, %v3197
      %v3230 = vpack.c.b16 %v3198, %v3198
      %v3231 = vpack.c.b16 %v3199, %v3199
      %v3232 = vpack.c.b16 %v3200, %v3200
      %v3233 = vpack.c.b16 %v3201, %v3201
      %v3234 = vpack.c.b16 %v3202, %v3202
      %v3235 = vpack.c.b16 %v3203, %v3203
      %v3236 = vpack.c.b16 %v3204, %v3204
      %v3237 = vpack.c.b16 %v3205, %v3205
      %v3238 = vpack.c.b16 %v3206, %v3206
      %v3239 = vpack.c.b16 %v3207, %v3207
      %vm3272 = vcmask 125952
      %3273 = vst.msk [vmem:[%s251] sm:$0xf] %vm3272, %v3208
      %3274 = vst.msk [vmem:[%s251 + $0x4] sm:$0xf] %vm3272, %v3209
      %3275 = vst.msk [vmem:[%s251 + $0x8] sm:$0xf] %vm3272, %v3210
      %3276 = vst.msk [vmem:[%s251 + $0xc] sm:$0xf] %vm3272, %v3211
      %3277 = vst.msk [vmem:[%s251 + $0x10] sm:$0xf] %vm3272, %v3212
      %3278 = vst.msk [vmem:[%s251 + $0x14] sm:$0xf] %vm3272, %v3213
      %3279 = vst.msk [vmem:[%s251 + $0x18] sm:$0xf] %vm3272, %v3214
      %3280 = vst.msk [vmem:[%s251 + $0x1c] sm:$0xf] %vm3272, %v3215
      %3281 = vst.msk [vmem:[%s251 + $0x20] sm:$0xf] %vm3272, %v3216
      %3282 = vst.msk [vmem:[%s251 + $0x24] sm:$0xf] %vm3272, %v3217
      %3283 = vst.msk [vmem:[%s251 + $0x28] sm:$0xf] %vm3272, %v3218
      %3284 = vst.msk [vmem:[%s251 + $0x2c] sm:$0xf] %vm3272, %v3219
      %3285 = vst.msk [vmem:[%s251 + $0x30] sm:$0xf] %vm3272, %v3220
      %3286 = vst.msk [vmem:[%s251 + $0x34] sm:$0xf] %vm3272, %v3221
      %3287 = vst.msk [vmem:[%s251 + $0x38] sm:$0xf] %vm3272, %v3222
      %3288 = vst.msk [vmem:[%s251 + $0x3c] sm:$0xf] %vm3272, %v3223
      %3289 = vst.msk [vmem:[%s251 + $0x40] sm:$0xf] %vm3272, %v3224
      %3290 = vst.msk [vmem:[%s251 + $0x44] sm:$0xf] %vm3272, %v3225
      %3291 = vst.msk [vmem:[%s251 + $0x48] sm:$0xf] %vm3272, %v3226
      %3292 = vst.msk [vmem:[%s251 + $0x4c] sm:$0xf] %vm3272, %v3227
      %3293 = vst.msk [vmem:[%s251 + $0x50] sm:$0xf] %vm3272, %v3228
      %3294 = vst.msk [vmem:[%s251 + $0x54] sm:$0xf] %vm3272, %v3229
      %3295 = vst.msk [vmem:[%s251 + $0x58] sm:$0xf] %vm3272, %v3230
      %3296 = vst.msk [vmem:[%s251 + $0x5c] sm:$0xf] %vm3272, %v3231
      %3297 = vst.msk [vmem:[%s251 + $0x60] sm:$0xf] %vm3272, %v3232
      %3298 = vst.msk [vmem:[%s251 + $0x64] sm:$0xf] %vm3272, %v3233
      %3299 = vst.msk [vmem:[%s251 + $0x68] sm:$0xf] %vm3272, %v3234
      %3300 = vst.msk [vmem:[%s251 + $0x6c] sm:$0xf] %vm3272, %v3235
      %3301 = vst.msk [vmem:[%s251 + $0x70] sm:$0xf] %vm3272, %v3236
      %3302 = vst.msk [vmem:[%s251 + $0x74] sm:$0xf] %vm3272, %v3237
      %3303 = vst.msk [vmem:[%s251 + $0x78] sm:$0xf] %vm3272, %v3238
      %3304 = vst.msk [vmem:[%s251 + $0x7c] sm:$0xf] %vm3272, %v3239
      %p3305 = scmp.lt.s32.totalorder %s17, 1
      %s3306 = scalar_select %p3305, %s17, 1
      %s3307 = smul.addr %s3306, 32
      %s3308 = smul.addr %s3307, 4
      %s3309 = scalar_lea.vmem %s6, %s3308
      // Predicated region
      $region45: #{_lambda_.8} parent=43 // pred_check
        %p3310 = pneg %p166
      $region46: #{_lambda_.8} parent=43 // pred_check_branch
        %3312 = sbr.rel (%p3310) target = $region48
      $region47: #{_lambda_.8} parent=43 // pred_region
        _
      $region48: #{_lambda_.8} parent=43 // pred_fallthru
        _
    $region44: #{_lambda_.8} parent=5 // pred_fallthru
      _
    %p3313 = scmp.le.s32.totalorder 2, %s12
    // Predicated region
    $region49: #{_lambda_.8} parent=5 // pred_check
      %p3314 = pneg %p3313
    $region50: #{_lambda_.8} parent=5 // pred_check_branch
      %3316 = sbr.rel (%p3314) target = $region52
    $region51: #{_lambda_.8} parent=5 // pred_region
      %s3317 = ssub.s32 %s12, 2
      // Predicated region
      $region53: #{_lambda_.8} parent=51 // pred_check
        %p3318 = pneg %p172
      $region54: #{_lambda_.8} parent=51 // pred_check_branch
        %3320 = sbr.rel (%p3318) target = $region56
      $region55: #{_lambda_.8} parent=51 // pred_region
        %p3321 = scmp.lt.s32.totalorder %s18, 1
        %s3322 = scalar_select %p3321, %s18, 1
        %s3323 = smul.addr %s3322, 32
        %s3324 = smul.addr %s3323, 4
        %s3325 = scalar_lea.vmem %s6, %s3324
      $region56: #{_lambda_.8} parent=51 // pred_fallthru
        _
    $region52: #{_lambda_.8} parent=5 // pred_fallthru
      _
  $region6: #{_lambda_.8} parent=0 // loop_footer
    %s16 = sadd.s32 1, %s12
  $region7: #{_lambda_.8} parent=0 // loop_footer_branch
    %11 = sbr.rel target = $region3
  $region8: #{_lambda_.8} parent=0 // loop_exit
    _

// kernel: _lambda_.9
$region0: #{_lambda_.9}
  #allocation0 [shape = 'u32[]', space=smem, size = 0x4, offset = 0x4, fixed_abs, tag = 'smem constant byte address 0x4 - core index']
  #allocation1 [shape = 'u32[144,128]{1,0:T(1,128)}', space=vmem, size = 0x12000, scoped, tag = 'internal scratch']
  %s0 = inlined_call_operand.vmem [shape: bf16[2,16,16,16], index: 0, kind: input, shape index: {}]
  %s1 = inlined_call_operand.vmem [shape: bf16[144,16], index: 1, kind: input, shape index: {}]
  %s2 = inlined_call_operand.vmem [shape: f32[1,16], index: 2, kind: input, shape index: {}]
  %s3 = inlined_call_operand.vmem [shape: bf16[144,16], index: 3, kind: input, shape index: {}]
  %s4 = inlined_call_operand.vmem [shape: f32[1,16], index: 4, kind: input, shape index: {}]
  %s5 = inlined_call_operand.vmem [shape: bf16[2,16,16,16], index: 5, kind: output, shape index: {}]
  %s6 = sld [smem:[#allocation0]]
  $region53: #{_lambda_.9} parent=0
    _
  %s8 = ssub.s32 1, %s6
  %s9 = scalar_select 0, %s8, %s6
  loop: start=0, step=1, limit=4
  $region2: #{_lambda_.9} parent=0 // loop_pre_header
    _
  $region3: #{_lambda_.9} parent=0 // loop_header
    %s11 = sphi 0, %s15
    %p12 = scmp.ge.s32.totalorder %s11, 4
    %s21 = sphi 0, %s23
    %s24 = sphi 0, %s21
    %s25 = sphi 0, %s24
    %s41 = sphi 0, %s25
    %s45 = sphi 0, %s45
    %s47 = sphi 0, %s45
    %s48 = sphi 0, %s47
    %s62 = sphi 0, %s48
    %s66 = sphi 0, %s66
    %s68 = sphi 0, %s66
    %s69 = sphi 0, %s68
    %s83 = sphi 0, %s69
    %s87 = sphi 0, %s87
    %s89 = sphi 0, %s87
    %s90 = sphi 0, %s89
    %s104 = sphi 0, %s90
    %s108 = sphi 0, %s108
    %s110 = sphi 0, %s108
    %s111 = sphi 0, %s110
    %s125 = sphi 0, %s111
    %s131 = sphi 0, %s133
    %s134 = sphi 0, %s131
    %s135 = sphi 0, %s134
    %s151 = sphi 0, %s135
  $region4: #{_lambda_.9} parent=0 // loop_header_branch
    %14 = sbr.rel (%p12) target = $region8
  $region5: #{_lambda_.9} parent=0 // loop_body
    %s16 = ssub.s32 %s11, 1
    %s17 = ssub.s32 %s11, 2
    %s18 = sadd.s32 %s11, 1
    %s19 = ssub.s32 %s11, %s18
    %p20 = scmp.eq.s32.totalorder %s19, 0
    %s22 = sadd.s32 %s21, 1
    %s23 = scalar_select %p20, %s21, %s22
    %p26 = pneg %p20
    %p27 = scmp.eq.s32.totalorder %s11, 1
    %p28 = por %p26, %p27
    %p29 = scmp.ne.s32.totalorder %s21, %s24
    %p30 = scmp.eq.s32.totalorder %s11, 0
    %p31 = por %p29, %p30
    %p32 = scmp.ne.s32.totalorder %s21, %s24
    %p33 = scmp.eq.s32.totalorder %s16, 1
    %p34 = por %p32, %p33
    %p35 = scmp.ne.s32.totalorder %s24, %s25
    %p36 = scmp.eq.s32.totalorder %s16, 0
    %p37 = por %p35, %p36
    %p38 = scmp.ne.s32.totalorder %s24, %s25
    %p39 = scmp.eq.s32.totalorder %s17, 1
    %p40 = por %p38, %p39
    %p42 = scmp.ne.s32.totalorder %s25, %s41
    %p43 = scmp.eq.s32.totalorder %s17, 0
    %p44 = por %p42, %p43
    %s46 = sadd.s32 %s45, 1
    %p49 = scmp.eq.s32.totalorder %s11, 1
    %p50 = scmp.ne.s32.totalorder %s45, %s47
    %p51 = scmp.eq.s32.totalorder %s11, 0
    %p52 = por %p50, %p51
    %p53 = scmp.ne.s32.totalorder %s45, %s47
    %p54 = scmp.eq.s32.totalorder %s16, 1
    %p55 = por %p53, %p54
    %p56 = scmp.ne.s32.totalorder %s47, %s48
    %p57 = scmp.eq.s32.totalorder %s16, 0
    %p58 = por %p56, %p57
    %p59 = scmp.ne.s32.totalorder %s47, %s48
    %p60 = scmp.eq.s32.totalorder %s17, 1
    %p61 = por %p59, %p60
    %p63 = scmp.ne.s32.totalorder %s48, %s62
    %p64 = scmp.eq.s32.totalorder %s17, 0
    %p65 = por %p63, %p64
    %s67 = sadd.s32 %s66, 1
    %p70 = scmp.eq.s32.totalorder %s11, 1
    %p71 = scmp.ne.s32.totalorder %s66, %s68
    %p72 = scmp.eq.s32.totalorder %s11, 0
    %p73 = por %p71, %p72
    %p74 = scmp.ne.s32.totalorder %s66, %s68
    %p75 = scmp.eq.s32.totalorder %s16, 1
    %p76 = por %p74, %p75
    %p77 = scmp.ne.s32.totalorder %s68, %s69
    %p78 = scmp.eq.s32.totalorder %s16, 0
    %p79 = por %p77, %p78
    %p80 = scmp.ne.s32.totalorder %s68, %s69
    %p81 = scmp.eq.s32.totalorder %s17, 1
    %p82 = por %p80, %p81
    %p84 = scmp.ne.s32.totalorder %s69, %s83
    %p85 = scmp.eq.s32.totalorder %s17, 0
    %p86 = por %p84, %p85
    %s88 = sadd.s32 %s87, 1
    %p91 = scmp.eq.s32.totalorder %s11, 1
    %p92 = scmp.ne.s32.totalorder %s87, %s89
    %p93 = scmp.eq.s32.totalorder %s11, 0
    %p94 = por %p92, %p93
    %p95 = scmp.ne.s32.totalorder %s87, %s89
    %p96 = scmp.eq.s32.totalorder %s16, 1
    %p97 = por %p95, %p96
    %p98 = scmp.ne.s32.totalorder %s89, %s90
    %p99 = scmp.eq.s32.totalorder %s16, 0
    %p100 = por %p98, %p99
    %p101 = scmp.ne.s32.totalorder %s89, %s90
    %p102 = scmp.eq.s32.totalorder %s17, 1
    %p103 = por %p101, %p102
    %p105 = scmp.ne.s32.totalorder %s90, %s104
    %p106 = scmp.eq.s32.totalorder %s17, 0
    %p107 = por %p105, %p106
    %s109 = sadd.s32 %s108, 1
    %p112 = scmp.eq.s32.totalorder %s11, 1
    %p113 = scmp.ne.s32.totalorder %s108, %s110
    %p114 = scmp.eq.s32.totalorder %s11, 0
    %p115 = por %p113, %p114
    %p116 = scmp.ne.s32.totalorder %s108, %s110
    %p117 = scmp.eq.s32.totalorder %s16, 1
    %p118 = por %p116, %p117
    %p119 = scmp.ne.s32.totalorder %s110, %s111
    %p120 = scmp.eq.s32.totalorder %s16, 0
    %p121 = por %p119, %p120
    %p122 = scmp.ne.s32.totalorder %s110, %s111
    %p123 = scmp.eq.s32.totalorder %s17, 1
    %p124 = por %p122, %p123
    %p126 = scmp.ne.s32.totalorder %s111, %s125
    %p127 = scmp.eq.s32.totalorder %s17, 0
    %p128 = por %p126, %p127
    %s129 = ssub.s32 %s11, %s18
    %p130 = scmp.eq.s32.totalorder %s129, 0
    %s132 = sadd.s32 %s131, 1
    %s133 = scalar_select %p130, %s131, %s132
    %p136 = pneg %p130
    %p137 = scmp.eq.s32.totalorder %s11, 1
    %p138 = por %p136, %p137
    %p139 = scmp.ne.s32.totalorder %s131, %s134
    %p140 = scmp.eq.s32.totalorder %s11, 0
    %p141 = por %p139, %p140
    %p142 = scmp.ne.s32.totalorder %s131, %s134
    %p143 = scmp.eq.s32.totalorder %s16, 1
    %p144 = por %p142, %p143
    %p145 = scmp.ne.s32.totalorder %s134, %s135
    %p146 = scmp.eq.s32.totalorder %s16, 0
    %p147 = por %p145, %p146
    %p148 = scmp.ne.s32.totalorder %s134, %s135
    %p149 = scmp.eq.s32.totalorder %s17, 1
    %p150 = por %p148, %p149
    %p152 = scmp.ne.s32.totalorder %s135, %s151
    %p153 = scmp.eq.s32.totalorder %s17, 0
    %p154 = por %p152, %p153
    %p155 = scmp.le.s32.totalorder 1, %s11
    %p156 = scmp.lt.s32.totalorder %s11, 3
    %p157 = pnand %p155, %p156
    %p158 = pneg %p157
    // Predicated region
    $region9: #{_lambda_.9} parent=5 // pred_check
      _
    $region10: #{_lambda_.9} parent=5 // pred_check_branch
      %160 = sbr.rel (%p157) target = $region12
    $region11: #{_lambda_.9} parent=5 // pred_region
      %s161 = ssub.s32 %s11, 1
      // Predicated region
      $region13: #{_lambda_.9} parent=11 // pred_check
        %p162 = pneg %p58
      $region14: #{_lambda_.9} parent=11 // pred_check_branch
        %164 = sbr.rel (%p162) target = $region16
      $region15: #{_lambda_.9} parent=11 // pred_region
        _
      $region16: #{_lambda_.9} parent=11 // pred_fallthru
        _
      // Predicated region
      $region17: #{_lambda_.9} parent=11 // pred_check
        %p165 = pneg %p79
      $region18: #{_lambda_.9} parent=11 // pred_check_branch
        %167 = sbr.rel (%p165) target = $region20
      $region19: #{_lambda_.9} parent=11 // pred_region
        _
      $region20: #{_lambda_.9} parent=11 // pred_fallthru
        _
      // Predicated region
      $region21: #{_lambda_.9} parent=11 // pred_check
        %p168 = pneg %p100
      $region22: #{_lambda_.9} parent=11 // pred_check_branch
        %170 = sbr.rel (%p168) target = $region24
      $region23: #{_lambda_.9} parent=11 // pred_region
        _
      $region24: #{_lambda_.9} parent=11 // pred_fallthru
        _
      // Predicated region
      $region25: #{_lambda_.9} parent=11 // pred_check
        %p171 = pneg %p121
      $region26: #{_lambda_.9} parent=11 // pred_check_branch
        %173 = sbr.rel (%p171) target = $region28
      $region27: #{_lambda_.9} parent=11 // pred_region
        _
      $region28: #{_lambda_.9} parent=11 // pred_fallthru
        _
    $region12: #{_lambda_.9} parent=5 // pred_fallthru
      _
    %p174 = scmp.lt.s32.totalorder %s11, 2
    // Predicated region
    $region29: #{_lambda_.9} parent=5 // pred_check
      %p175 = pneg %p174
    $region30: #{_lambda_.9} parent=5 // pred_check_branch
      %177 = sbr.rel (%p175) target = $region32
    $region31: #{_lambda_.9} parent=5 // pred_region
      // Predicated region
      $region33: #{_lambda_.9} parent=31 // pred_check
        %p178 = pneg %p31
      $region34: #{_lambda_.9} parent=31 // pred_check_branch
        %180 = sbr.rel (%p178) target = $region36
      $region35: #{_lambda_.9} parent=31 // pred_region
        %p181 = scmp.lt.s32.totalorder %s11, 1
        %s182 = scalar_select %p181, %s11, 1
        %s183 = smul.addr %s182, 32
        %s184 = smul.addr %s183, 4
        %s185 = scalar_lea.vmem %s0, %s184
      $region36: #{_lambda_.9} parent=31 // pred_fallthru
        _
    $region32: #{_lambda_.9} parent=5 // pred_fallthru
      _
    %p186 = scmp.le.s32.totalorder 1, %s11
    %p187 = scmp.lt.s32.totalorder %s11, 3
    %p188 = pnand %p186, %p187
    %p189 = pneg %p188
    // Predicated region
    $region37: #{_lambda_.9} parent=5 // pred_check
      _
    $region38: #{_lambda_.9} parent=5 // pred_check_branch
      %191 = sbr.rel (%p188) target = $region40
    $region39: #{_lambda_.9} parent=5 // pred_region
      %s192 = ssub.s32 %s11, 1
      %p193 = scmp.lt.s32.totalorder %s16, 1
      %s194 = scalar_select %p193, %s16, 1
      %s195 = smul.addr %s194, 32
      %s196 = smul.addr %s195, 4
      %s197 = scalar_lea.vmem %s0, %s196
      %p198 = pneg %p37
      %p199 = pneg %p34
      %p200 = pneg %p58
      %p201 = pneg %p55
      %p202 = pneg %p79
      %p203 = pneg %p76
      %p204 = pneg %p100
      %p205 = pneg %p97
      %p206 = pneg %p121
      %p207 = pneg %p118
      %p208 = pneg %p147
      %p209 = pneg %p144
      %p210 = scmp.lt.s32.totalorder %s16, 1
      %s211 = scalar_select %p210, %s16, 1
      %s212 = smul.addr %s211, 32
      %s213 = smul.addr %s212, 4
      %s214 = scalar_lea.vmem %s5, %s213
      %p215 = scmp.lt.s32.totalorder %s16, 1
      %s216 = scalar_select %p215, %s16, 1
      %s217 = smul.addr %s216, 32
      %s218 = smul.addr %s217, 4
      %s219 = scalar_lea.vmem %s0, %s218
      %p220 = scmp.lt.s32.totalorder %s16, 1
      %s221 = scalar_select %p220, %s16, 1
      %s222 = smul.addr %s221, 32
      %s223 = smul.addr %s222, 4
      %s224 = scalar_lea.vmem %s5, %s223
      %v226 = vld [vmem:[%s219] sm:$0xf]
      %v227 = vld [vmem:[%s219 + $0x4] sm:$0xf]
      %v228 = vld [vmem:[%s219 + $0x8] sm:$0xf]
      %v229 = vld [vmem:[%s219 + $0xc] sm:$0xf]
      %v230 = vld [vmem:[%s219 + $0x10] sm:$0xf]
      %v231 = vld [vmem:[%s219 + $0x14] sm:$0xf]
      %v232 = vld [vmem:[%s219 + $0x18] sm:$0xf]
      %v233 = vld [vmem:[%s219 + $0x1c] sm:$0xf]
      %v234 = vld [vmem:[%s219 + $0x20] sm:$0xf]
      %v235 = vld [vmem:[%s219 + $0x24] sm:$0xf]
      %v236 = vld [vmem:[%s219 + $0x28] sm:$0xf]
      %v237 = vld [vmem:[%s219 + $0x2c] sm:$0xf]
      %v238 = vld [vmem:[%s219 + $0x30] sm:$0xf]
      %v239 = vld [vmem:[%s219 + $0x34] sm:$0xf]
      %v240 = vld [vmem:[%s219 + $0x38] sm:$0xf]
      %v241 = vld [vmem:[%s219 + $0x3c] sm:$0xf]
      %v242 = vld [vmem:[%s219 + $0x40] sm:$0xf]
      %v243 = vld [vmem:[%s219 + $0x44] sm:$0xf]
      %v244 = vld [vmem:[%s219 + $0x48] sm:$0xf]
      %v245 = vld [vmem:[%s219 + $0x4c] sm:$0xf]
      %v246 = vld [vmem:[%s219 + $0x50] sm:$0xf]
      %v247 = vld [vmem:[%s219 + $0x54] sm:$0xf]
      %v248 = vld [vmem:[%s219 + $0x58] sm:$0xf]
      %v249 = vld [vmem:[%s219 + $0x5c] sm:$0xf]
      %v250 = vld [vmem:[%s219 + $0x60] sm:$0xf]
      %v251 = vld [vmem:[%s219 + $0x64] sm:$0xf]
      %v252 = vld [vmem:[%s219 + $0x68] sm:$0xf]
      %v253 = vld [vmem:[%s219 + $0x6c] sm:$0xf]
      %v254 = vld [vmem:[%s219 + $0x70] sm:$0xf]
      %v255 = vld [vmem:[%s219 + $0x74] sm:$0xf]
      %v256 = vld [vmem:[%s219 + $0x78] sm:$0xf]
      %v257 = vld [vmem:[%s219 + $0x7c] sm:$0xf]
      %v258 = vunpack.c.l.bf16 %v226
      %v259 = vunpack.c.l.bf16 %v227
      %v260 = vunpack.c.l.bf16 %v228
      %v261 = vunpack.c.l.bf16 %v229
      %v262 = vunpack.c.l.bf16 %v230
      %v263 = vunpack.c.l.bf16 %v231
      %v264 = vunpack.c.l.bf16 %v232
      %v265 = vunpack.c.l.bf16 %v233
      %v266 = vunpack.c.l.bf16 %v234
      %v267 = vunpack.c.l.bf16 %v235
      %v268 = vunpack.c.l.bf16 %v236
      %v269 = vunpack.c.l.bf16 %v237
      %v270 = vunpack.c.l.bf16 %v238
      %v271 = vunpack.c.l.bf16 %v239
      %v272 = vunpack.c.l.bf16 %v240
      %v273 = vunpack.c.l.bf16 %v241
      %v274 = vunpack.c.l.bf16 %v242
      %v275 = vunpack.c.l.bf16 %v243
      %v276 = vunpack.c.l.bf16 %v244
      %v277 = vunpack.c.l.bf16 %v245
      %v278 = vunpack.c.l.bf16 %v246
      %v279 = vunpack.c.l.bf16 %v247
      %v280 = vunpack.c.l.bf16 %v248
      %v281 = vunpack.c.l.bf16 %v249
      %v282 = vunpack.c.l.bf16 %v250
      %v283 = vunpack.c.l.bf16 %v251
      %v284 = vunpack.c.l.bf16 %v252
      %v285 = vunpack.c.l.bf16 %v253
      %v286 = vunpack.c.l.bf16 %v254
      %v287 = vunpack.c.l.bf16 %v255
      %v288 = vunpack.c.l.bf16 %v256
      %v289 = vunpack.c.l.bf16 %v257
      %vm290 = vcmp.ge.f32.partialorder %v258, 0.0
      %vm291 = vcmp.ge.f32.partialorder %v259, 0.0
      %vm292 = vcmp.ge.f32.partialorder %v260, 0.0
      %vm293 = vcmp.ge.f32.partialorder %v261, 0.0
      %vm294 = vcmp.ge.f32.partialorder %v262, 0.0
      %vm295 = vcmp.ge.f32.partialorder %v263, 0.0
      %vm296 = vcmp.ge.f32.partialorder %v264, 0.0
      %vm297 = vcmp.ge.f32.partialorder %v265, 0.0
      %vm298 = vcmp.ge.f32.partialorder %v266, 0.0
      %vm299 = vcmp.ge.f32.partialorder %v267, 0.0
      %vm300 = vcmp.ge.f32.partialorder %v268, 0.0
      %vm301 = vcmp.ge.f32.partialorder %v269, 0.0
      %vm302 = vcmp.ge.f32.partialorder %v270, 0.0
      %vm303 = vcmp.ge.f32.partialorder %v271, 0.0
      %vm304 = vcmp.ge.f32.partialorder %v272, 0.0
      %vm305 = vcmp.ge.f32.partialorder %v273, 0.0
      %vm306 = vcmp.ge.f32.partialorder %v274, 0.0
      %vm307 = vcmp.ge.f32.partialorder %v275, 0.0
      %vm308 = vcmp.ge.f32.partialorder %v276, 0.0
      %vm309 = vcmp.ge.f32.partialorder %v277, 0.0
      %vm310 = vcmp.ge.f32.partialorder %v278, 0.0
      %vm311 = vcmp.ge.f32.partialorder %v279, 0.0
      %vm312 = vcmp.ge.f32.partialorder %v280, 0.0
      %vm313 = vcmp.ge.f32.partialorder %v281, 0.0
      %vm314 = vcmp.ge.f32.partialorder %v282, 0.0
      %vm315 = vcmp.ge.f32.partialorder %v283, 0.0
      %vm316 = vcmp.ge.f32.partialorder %v284, 0.0
      %vm317 = vcmp.ge.f32.partialorder %v285, 0.0
      %vm318 = vcmp.ge.f32.partialorder %v286, 0.0
      %vm319 = vcmp.ge.f32.partialorder %v287, 0.0
      %vm320 = vcmp.ge.f32.partialorder %v288, 0.0
      %vm321 = vcmp.ge.f32.partialorder %v289, 0.0
      %v322 = vmul.f32 %v258, 0.2
      %v323 = vmul.f32 %v259, 0.2
      %v324 = vmul.f32 %v260, 0.2
      %v325 = vmul.f32 %v261, 0.2
      %v326 = vmul.f32 %v262, 0.2
      %v327 = vmul.f32 %v263, 0.2
      %v328 = vmul.f32 %v264, 0.2
      %v329 = vmul.f32 %v265, 0.2
      %v330 = vmul.f32 %v266, 0.2
      %v331 = vmul.f32 %v267, 0.2
      %v332 = vmul.f32 %v268, 0.2
      %v333 = vmul.f32 %v269, 0.2
      %v334 = vmul.f32 %v270, 0.2
      %v335 = vmul.f32 %v271, 0.2
      %v336 = vmul.f32 %v272, 0.2
      %v337 = vmul.f32 %v273, 0.2
      %v338 = vmul.f32 %v274, 0.2
      %v339 = vmul.f32 %v275, 0.2
      %v340 = vmul.f32 %v276, 0.2
      %v341 = vmul.f32 %v277, 0.2
      %v342 = vmul.f32 %v278, 0.2
      %v343 = vmul.f32 %v279, 0.2
      %v344 = vmul.f32 %v280, 0.2
      %v345 = vmul.f32 %v281, 0.2
      %v346 = vmul.f32 %v282, 0.2
      %v347 = vmul.f32 %v283, 0.2
      %v348 = vmul.f32 %v284, 0.2
      %v349 = vmul.f32 %v285, 0.2
      %v350 = vmul.f32 %v286, 0.2
      %v351 = vmul.f32 %v287, 0.2
      %v352 = vmul.f32 %v288, 0.2
      %v353 = vmul.f32 %v289, 0.2
      %v354 = vsel %vm290, %v258, %v322
      %v355 = vsel %vm291, %v259, %v323
      %v356 = vsel %vm292, %v260, %v324
      %v357 = vsel %vm293, %v261, %v325
      %v358 = vsel %vm294, %v262, %v326
      %v359 = vsel %vm295, %v263, %v327
      %v360 = vsel %vm296, %v264, %v328
      %v361 = vsel %vm297, %v265, %v329
      %v362 = vsel %vm298, %v266, %v330
      %v363 = vsel %vm299, %v267, %v331
      %v364 = vsel %vm300, %v268, %v332
      %v365 = vsel %vm301, %v269, %v333
      %v366 = vsel %vm302, %v270, %v334
      %v367 = vsel %vm303, %v271, %v335
      %v368 = vsel %vm304, %v272, %v336
      %v369 = vsel %vm305, %v273, %v337
      %v370 = vsel %vm306, %v274, %v338
      %v371 = vsel %vm307, %v275, %v339
      %v372 = vsel %vm308, %v276, %v340
      %v373 = vsel %vm309, %v277, %v341
      %v374 = vsel %vm310, %v278, %v342
      %v375 = vsel %vm311, %v279, %v343
      %v376 = vsel %vm312, %v280, %v344
      %v377 = vsel %vm313, %v281, %v345
      %v378 = vsel %vm314, %v282, %v346
      %v379 = vsel %vm315, %v283, %v347
      %v380 = vsel %vm316, %v284, %v348
      %v381 = vsel %vm317, %v285, %v349
      %v382 = vsel %vm318, %v286, %v350
      %v383 = vsel %vm319, %v287, %v351
      %v384 = vsel %vm320, %v288, %v352
      %v385 = vsel %vm321, %v289, %v353
      %v386 = vld [vmem:[%s1] sm:$0xf]
      %v387 = vld [vmem:[%s1 + $0x4] sm:$0xf]
      %v388 = vld [vmem:[%s1 + $0x8] sm:$0xf]
      %v389 = vld [vmem:[%s1 + $0xc] sm:$0xf]
      %v390 = vld [vmem:[%s1 + $0x10] sm:$0xf]
      %v391 = vld [vmem:[%s1 + $0x14] sm:$0xf]
      %v392 = vld [vmem:[%s1 + $0x18] sm:$0xf]
      %v393 = vld [vmem:[%s1 + $0x1c] sm:$0xf]
      %v394 = vld [vmem:[%s1 + $0x20] sm:$0xf]
      %v395 = vld [vmem:[%s1 + $0x24] sm:$0xf]
      %v396 = vld [vmem:[%s1 + $0x28] sm:$0xf]
      %v397 = vld [vmem:[%s1 + $0x2c] sm:$0xf]
      %v398 = vld [vmem:[%s1 + $0x30] sm:$0xf]
      %v399 = vld [vmem:[%s1 + $0x34] sm:$0xf]
      %v400 = vld [vmem:[%s1 + $0x38] sm:$0xf]
      %v401 = vld [vmem:[%s1 + $0x3c] sm:$0xf]
      %v402 = vld [vmem:[%s1 + $0x40] sm:$0xf]
      %v403 = vld [vmem:[%s1 + $0x44] sm:$0xf]
      %v404 = vld [vmem:[%s2] sm:$0x1]
      %vm438 = vcmask 1040384
      %v439 = vrot.slane 0.0, 7
      %v440 = vsel %vm438, %v439, %v439
      %v441 = vrot.slane %v354, 7
      %v442 = vrot.slane %v355, 7
      %v443 = vsel %vm438, %v441, %v442
      %v444 = vrot.slane %v356, 7
      %v445 = vrot.slane %v357, 7
      %v446 = vsel %vm438, %v444, %v445
      %v447 = vrot.slane %v358, 7
      %v448 = vrot.slane %v359, 7
      %v449 = vsel %vm438, %v447, %v448
      %v450 = vrot.slane %v360, 7
      %v451 = vrot.slane %v361, 7
      %v452 = vsel %vm438, %v450, %v451
      %v453 = vrot.slane %v362, 7
      %v454 = vrot.slane %v363, 7
      %v455 = vsel %vm438, %v453, %v454
      %v456 = vrot.slane %v364, 7
      %v457 = vrot.slane %v365, 7
      %v458 = vsel %vm438, %v456, %v457
      %v459 = vrot.slane %v366, 7
      %v460 = vrot.slane %v367, 7
      %v461 = vsel %vm438, %v459, %v460
      %v462 = vrot.slane %v368, 7
      %v463 = vrot.slane %v369, 7
      %v464 = vsel %vm438, %v462, %v463
      %v465 = vrot.slane %v370, 7
      %v466 = vrot.slane %v371, 7
      %v467 = vsel %vm438, %v465, %v466
      %v468 = vrot.slane %v372, 7
      %v469 = vrot.slane %v373, 7
      %v470 = vsel %vm438, %v468, %v469
      %v471 = vrot.slane %v374, 7
      %v472 = vrot.slane %v375, 7
      %v473 = vsel %vm438, %v471, %v472
      %v474 = vrot.slane %v376, 7
      %v475 = vrot.slane %v377, 7
      %v476 = vsel %vm438, %v474, %v475
      %v477 = vrot.slane %v378, 7
      %v478 = vrot.slane %v379, 7
      %v479 = vsel %vm438, %v477, %v478
      %v480 = vrot.slane %v380, 7
      %v481 = vrot.slane %v381, 7
      %v482 = vsel %vm438, %v480, %v481
      %v483 = vrot.slane %v382, 7
      %v484 = vrot.slane %v383, 7
      %v485 = vsel %vm438, %v483, %v484
      %v486 = vrot.slane %v384, 7
      %v487 = vrot.slane %v385, 7
      %v488 = vsel %vm438, %v486, %v487
      %v539 = vsel %vm438, 0.0, %v439
      %v540 = vsel %vm438, 0.0, %v441
      %v541 = vsel %vm438, 0.0, %v444
      %v542 = vsel %vm438, 0.0, %v447
      %v543 = vsel %vm438, 0.0, %v450
      %v544 = vsel %vm438, 0.0, %v453
      %v545 = vsel %vm438, 0.0, %v456
      %v546 = vsel %vm438, 0.0, %v459
      %v547 = vsel %vm438, 0.0, %v462
      %v548 = vsel %vm438, 0.0, %v465
      %v549 = vsel %vm438, 0.0, %v468
      %v550 = vsel %vm438, 0.0, %v471
      %v551 = vsel %vm438, 0.0, %v474
      %v552 = vsel %vm438, 0.0, %v477
      %v553 = vsel %vm438, 0.0, %v480
      %v554 = vsel %vm438, 0.0, %v483
      %v555 = vsel %vm438, 0.0, %v486
      %v556 = vsel %vm438, %v439, 0.0
      %v557 = vsel %vm438, %v442, 0.0
      %v558 = vsel %vm438, %v445, 0.0
      %v559 = vsel %vm438, %v448, 0.0
      %v560 = vsel %vm438, %v451, 0.0
      %v561 = vsel %vm438, %v454, 0.0
      %v562 = vsel %vm438, %v457, 0.0
      %v563 = vsel %vm438, %v460, 0.0
      %v564 = vsel %vm438, %v463, 0.0
      %v565 = vsel %vm438, %v466, 0.0
      %v566 = vsel %vm438, %v469, 0.0
      %v567 = vsel %vm438, %v472, 0.0
      %v568 = vsel %vm438, %v475, 0.0
      %v569 = vsel %vm438, %v478, 0.0
      %v570 = vsel %vm438, %v481, 0.0
      %v571 = vsel %vm438, %v484, 0.0
      %v572 = vsel %vm438, %v487, 0.0
      %vm605 = vcmask 1046528
      %v606 = vrot.slane %v539, 1
      %v607 = vrot.slane %v440, 1
      %v608 = vsel %vm605, %v606, %v607
      %v609 = vrot.slane %v556, 1
      %v610 = vsel %vm605, %v607, %v609
      %v611 = vrot.slane %v540, 1
      %v612 = vrot.slane %v443, 1
      %v613 = vsel %vm605, %v611, %v612
      %v614 = vrot.slane %v557, 1
      %v615 = vsel %vm605, %v612, %v614
      %v616 = vrot.slane %v541, 1
      %v617 = vrot.slane %v446, 1
      %v618 = vsel %vm605, %v616, %v617
      %v619 = vrot.slane %v558, 1
      %v620 = vsel %vm605, %v617, %v619
      %v621 = vrot.slane %v542, 1
      %v622 = vrot.slane %v449, 1
      %v623 = vsel %vm605, %v621, %v622
      %v624 = vrot.slane %v559, 1
      %v625 = vsel %vm605, %v622, %v624
      %v626 = vrot.slane %v543, 1
      %v627 = vrot.slane %v452, 1
      %v628 = vsel %vm605, %v626, %v627
      %v629 = vrot.slane %v560, 1
      %v630 = vsel %vm605, %v627, %v629
      %v631 = vrot.slane %v544, 1
      %v632 = vrot.slane %v455, 1
      %v633 = vsel %vm605, %v631, %v632
      %v634 = vrot.slane %v561, 1
      %v635 = vsel %vm605, %v632, %v634
      %v636 = vrot.slane %v545, 1
      %v637 = vrot.slane %v458, 1
      %v638 = vsel %vm605, %v636, %v637
      %v639 = vrot.slane %v562, 1
      %v640 = vsel %vm605, %v637, %v639
      %v641 = vrot.slane %v546, 1
      %v642 = vrot.slane %v461, 1
      %v643 = vsel %vm605, %v641, %v642
      %v644 = vrot.slane %v563, 1
      %v645 = vsel %vm605, %v642, %v644
      %v646 = vrot.slane %v547, 1
      %v647 = vrot.slane %v464, 1
      %v648 = vsel %vm605, %v646, %v647
      %v649 = vrot.slane %v564, 1
      %v650 = vsel %vm605, %v647, %v649
      %v651 = vrot.slane %v548, 1
      %v652 = vrot.slane %v467, 1
      %v653 = vsel %vm605, %v651, %v652
      %v654 = vrot.slane %v565, 1
      %v655 = vsel %vm605, %v652, %v654
      %v656 = vrot.slane %v549, 1
      %v657 = vrot.slane %v470, 1
      %v658 = vsel %vm605, %v656, %v657
      %v659 = vrot.slane %v566, 1
      %v660 = vsel %vm605, %v657, %v659
      %v661 = vrot.slane %v550, 1
      %v662 = vrot.slane %v473, 1
      %v663 = vsel %vm605, %v661, %v662
      %v664 = vrot.slane %v567, 1
      %v665 = vsel %vm605, %v662, %v664
      %v666 = vrot.slane %v551, 1
      %v667 = vrot.slane %v476, 1
      %v668 = vsel %vm605, %v666, %v667
      %v669 = vrot.slane %v568, 1
      %v670 = vsel %vm605, %v667, %v669
      %v671 = vrot.slane %v552, 1
      %v672 = vrot.slane %v479, 1
      %v673 = vsel %vm605, %v671, %v672
      %v674 = vrot.slane %v569, 1
      %v675 = vsel %vm605, %v672, %v674
      %v676 = vrot.slane %v553, 1
      %v677 = vrot.slane %v482, 1
      %v678 = vsel %vm605, %v676, %v677
      %v679 = vrot.slane %v570, 1
      %v680 = vsel %vm605, %v677, %v679
      %v681 = vrot.slane %v554, 1
      %v682 = vrot.slane %v485, 1
      %v683 = vsel %vm605, %v681, %v682
      %v684 = vrot.slane %v571, 1
      %v685 = vsel %vm605, %v682, %v684
      %686 = vrot.lane.b32.xlu0 %v608, 16
      %v687 = vpop.permute.xlu0 %686
      %688 = vrot.lane.b32.xlu0 %v610, 16
      %v689 = vpop.permute.xlu0 %688
      %690 = vrot.lane.b32.xlu0 %v613, 16
      %v691 = vpop.permute.xlu0 %690
      %692 = vrot.lane.b32.xlu0 %v615, 16
      %v693 = vpop.permute.xlu0 %692
      %694 = vrot.lane.b32.xlu0 %v618, 16
      %v695 = vpop.permute.xlu0 %694
      %696 = vrot.lane.b32.xlu0 %v620, 16
      %v697 = vpop.permute.xlu0 %696
      %698 = vrot.lane.b32.xlu0 %v623, 16
      %v699 = vpop.permute.xlu0 %698
      %700 = vrot.lane.b32.xlu0 %v625, 16
      %v701 = vpop.permute.xlu0 %700
      %702 = vrot.lane.b32.xlu0 %v628, 16
      %v703 = vpop.permute.xlu0 %702
      %704 = vrot.lane.b32.xlu0 %v630, 16
      %v705 = vpop.permute.xlu0 %704
      %706 = vrot.lane.b32.xlu0 %v633, 16
      %v707 = vpop.permute.xlu0 %706
      %708 = vrot.lane.b32.xlu0 %v635, 16
      %v709 = vpop.permute.xlu0 %708
      %710 = vrot.lane.b32.xlu0 %v638, 16
      %v711 = vpop.permute.xlu0 %710
      %712 = vrot.lane.b32.xlu0 %v640, 16
      %v713 = vpop.permute.xlu0 %712
      %714 = vrot.lane.b32.xlu0 %v643, 16
      %v715 = vpop.permute.xlu0 %714
      %716 = vrot.lane.b32.xlu0 %v645, 16
      %v717 = vpop.permute.xlu0 %716
      %718 = vrot.lane.b32.xlu0 %v648, 16
      %v719 = vpop.permute.xlu0 %718
      %720 = vrot.lane.b32.xlu0 %v650, 16
      %v721 = vpop.permute.xlu0 %720
      %722 = vrot.lane.b32.xlu0 %v653, 16
      %v723 = vpop.permute.xlu0 %722
      %724 = vrot.lane.b32.xlu0 %v655, 16
      %v725 = vpop.permute.xlu0 %724
      %726 = vrot.lane.b32.xlu0 %v658, 16
      %v727 = vpop.permute.xlu0 %726
      %728 = vrot.lane.b32.xlu0 %v660, 16
      %v729 = vpop.permute.xlu0 %728
      %730 = vrot.lane.b32.xlu0 %v663, 16
      %v731 = vpop.permute.xlu0 %730
      %732 = vrot.lane.b32.xlu0 %v665, 16
      %v733 = vpop.permute.xlu0 %732
      %734 = vrot.lane.b32.xlu0 %v668, 16
      %v735 = vpop.permute.xlu0 %734
      %736 = vrot.lane.b32.xlu0 %v670, 16
      %v737 = vpop.permute.xlu0 %736
      %738 = vrot.lane.b32.xlu0 %v673, 16
      %v739 = vpop.permute.xlu0 %738
      %740 = vrot.lane.b32.xlu0 %v675, 16
      %v741 = vpop.permute.xlu0 %740
      %742 = vrot.lane.b32.xlu0 %v678, 16
      %v743 = vpop.permute.xlu0 %742
      %744 = vrot.lane.b32.xlu0 %v680, 16
      %v745 = vpop.permute.xlu0 %744
      %746 = vrot.lane.b32.xlu0 %v683, 16
      %v747 = vpop.permute.xlu0 %746
      %748 = vrot.lane.b32.xlu0 %v685, 16
      %v749 = vpop.permute.xlu0 %748
      %vm782 = vcmask 1045504
      %v783 = vrot.slane %v539, 2
      %v784 = vrot.slane %v440, 2
      %v785 = vsel %vm782, %v783, %v784
      %v786 = vrot.slane %v556, 2
      %v787 = vsel %vm782, %v784, %v786
      %v788 = vrot.slane %v540, 2
      %v789 = vrot.slane %v443, 2
      %v790 = vsel %vm782, %v788, %v789
      %v791 = vrot.slane %v557, 2
      %v792 = vsel %vm782, %v789, %v791
      %v793 = vrot.slane %v541, 2
      %v794 = vrot.slane %v446, 2
      %v795 = vsel %vm782, %v793, %v794
      %v796 = vrot.slane %v558, 2
      %v797 = vsel %vm782, %v794, %v796
      %v798 = vrot.slane %v542, 2
      %v799 = vrot.slane %v449, 2
      %v800 = vsel %vm782, %v798, %v799
      %v801 = vrot.slane %v559, 2
      %v802 = vsel %vm782, %v799, %v801
      %v803 = vrot.slane %v543, 2
      %v804 = vrot.slane %v452, 2
      %v805 = vsel %vm782, %v803, %v804
      %v806 = vrot.slane %v560, 2
      %v807 = vsel %vm782, %v804, %v806
      %v808 = vrot.slane %v544, 2
      %v809 = vrot.slane %v455, 2
      %v810 = vsel %vm782, %v808, %v809
      %v811 = vrot.slane %v561, 2
      %v812 = vsel %vm782, %v809, %v811
      %v813 = vrot.slane %v545, 2
      %v814 = vrot.slane %v458, 2
      %v815 = vsel %vm782, %v813, %v814
      %v816 = vrot.slane %v562, 2
      %v817 = vsel %vm782, %v814, %v816
      %v818 = vrot.slane %v546, 2
      %v819 = vrot.slane %v461, 2
      %v820 = vsel %vm782, %v818, %v819
      %v821 = vrot.slane %v563, 2
      %v822 = vsel %vm782, %v819, %v821
      %v823 = vrot.slane %v547, 2
      %v824 = vrot.slane %v464, 2
      %v825 = vsel %vm782, %v823, %v824
      %v826 = vrot.slane %v564, 2
      %v827 = vsel %vm782, %v824, %v826
      %v828 = vrot.slane %v548, 2
      %v829 = vrot.slane %v467, 2
      %v830 = vsel %vm782, %v828, %v829
      %v831 = vrot.slane %v565, 2
      %v832 = vsel %vm782, %v829, %v831
      %v833 = vrot.slane %v549, 2
      %v834 = vrot.slane %v470, 2
      %v835 = vsel %vm782, %v833, %v834
      %v836 = vrot.slane %v566, 2
      %v837 = vsel %vm782, %v834, %v836
      %v838 = vrot.slane %v550, 2
      %v839 = vrot.slane %v473, 2
      %v840 = vsel %vm782, %v838, %v839
      %v841 = vrot.slane %v567, 2
      %v842 = vsel %vm782, %v839, %v841
      %v843 = vrot.slane %v551, 2
      %v844 = vrot.slane %v476, 2
      %v845 = vsel %vm782, %v843, %v844
      %v846 = vrot.slane %v568, 2
      %v847 = vsel %vm782, %v844, %v846
      %v848 = vrot.slane %v552, 2
      %v849 = vrot.slane %v479, 2
      %v850 = vsel %vm782, %v848, %v849
      %v851 = vrot.slane %v569, 2
      %v852 = vsel %vm782, %v849, %v851
      %v853 = vrot.slane %v553, 2
      %v854 = vrot.slane %v482, 2
      %v855 = vsel %vm782, %v853, %v854
      %v856 = vrot.slane %v570, 2
      %v857 = vsel %vm782, %v854, %v856
      %v858 = vrot.slane %v554, 2
      %v859 = vrot.slane %v485, 2
      %v860 = vsel %vm782, %v858, %v859
      %v861 = vrot.slane %v571, 2
      %v862 = vsel %vm782, %v859, %v861
      %863 = vrot.lane.b32.xlu0 %v785, 32
      %v864 = vpop.permute.xlu0 %863
      %865 = vrot.lane.b32.xlu0 %v787, 32
      %v866 = vpop.permute.xlu0 %865
      %867 = vrot.lane.b32.xlu0 %v790, 32
      %v868 = vpop.permute.xlu0 %867
      %869 = vrot.lane.b32.xlu0 %v792, 32
      %v870 = vpop.permute.xlu0 %869
      %871 = vrot.lane.b32.xlu0 %v795, 32
      %v872 = vpop.permute.xlu0 %871
      %873 = vrot.lane.b32.xlu0 %v797, 32
      %v874 = vpop.permute.xlu0 %873
      %875 = vrot.lane.b32.xlu0 %v800, 32
      %v876 = vpop.permute.xlu0 %875
      %877 = vrot.lane.b32.xlu0 %v802, 32
      %v878 = vpop.permute.xlu0 %877
      %879 = vrot.lane.b32.xlu0 %v805, 32
      %v880 = vpop.permute.xlu0 %879
      %881 = vrot.lane.b32.xlu0 %v807, 32
      %v882 = vpop.permute.xlu0 %881
      %883 = vrot.lane.b32.xlu0 %v810, 32
      %v884 = vpop.permute.xlu0 %883
      %885 = vrot.lane.b32.xlu0 %v812, 32
      %v886 = vpop.permute.xlu0 %885
      %887 = vrot.lane.b32.xlu0 %v815, 32
      %v888 = vpop.permute.xlu0 %887
      %889 = vrot.lane.b32.xlu0 %v817, 32
      %v890 = vpop.permute.xlu0 %889
      %891 = vrot.lane.b32.xlu0 %v820, 32
      %v892 = vpop.permute.xlu0 %891
      %893 = vrot.lane.b32.xlu0 %v822, 32
      %v894 = vpop.permute.xlu0 %893
      %895 = vrot.lane.b32.xlu0 %v825, 32
      %v896 = vpop.permute.xlu0 %895
      %897 = vrot.lane.b32.xlu0 %v827, 32
      %v898 = vpop.permute.xlu0 %897
      %899 = vrot.lane.b32.xlu0 %v830, 32
      %v900 = vpop.permute.xlu0 %899
      %901 = vrot.lane.b32.xlu0 %v832, 32
      %v902 = vpop.permute.xlu0 %901
      %903 = vrot.lane.b32.xlu0 %v835, 32
      %v904 = vpop.permute.xlu0 %903
      %905 = vrot.lane.b32.xlu0 %v837, 32
      %v906 = vpop.permute.xlu0 %905
      %907 = vrot.lane.b32.xlu0 %v840, 32
      %v908 = vpop.permute.xlu0 %907
      %909 = vrot.lane.b32.xlu0 %v842, 32
      %v910 = vpop.permute.xlu0 %909
      %911 = vrot.lane.b32.xlu0 %v845, 32
      %v912 = vpop.permute.xlu0 %911
      %913 = vrot.lane.b32.xlu0 %v847, 32
      %v914 = vpop.permute.xlu0 %913
      %915 = vrot.lane.b32.xlu0 %v850, 32
      %v916 = vpop.permute.xlu0 %915
      %917 = vrot.lane.b32.xlu0 %v852, 32
      %v918 = vpop.permute.xlu0 %917
      %919 = vrot.lane.b32.xlu0 %v855, 32
      %v920 = vpop.permute.xlu0 %919
      %921 = vrot.lane.b32.xlu0 %v857, 32
      %v922 = vpop.permute.xlu0 %921
      %923 = vrot.lane.b32.xlu0 %v860, 32
      %v924 = vpop.permute.xlu0 %923
      %925 = vrot.lane.b32.xlu0 %v862, 32
      %v926 = vpop.permute.xlu0 %925
      %vm959 = vcmask 130048
      %v960 = vsel %vm959, %v539, %v687
      %v961 = vsel %vm959, %v440, %v689
      %v962 = vsel %vm959, %v540, %v691
      %v963 = vsel %vm959, %v443, %v693
      %v964 = vsel %vm959, %v541, %v695
      %v965 = vsel %vm959, %v446, %v697
      %v966 = vsel %vm959, %v542, %v699
      %v967 = vsel %vm959, %v449, %v701
      %v968 = vsel %vm959, %v543, %v703
      %v969 = vsel %vm959, %v452, %v705
      %v970 = vsel %vm959, %v544, %v707
      %v971 = vsel %vm959, %v455, %v709
      %v972 = vsel %vm959, %v545, %v711
      %v973 = vsel %vm959, %v458, %v713
      %v974 = vsel %vm959, %v546, %v715
      %v975 = vsel %vm959, %v461, %v717
      %v976 = vsel %vm959, %v547, %v719
      %v977 = vsel %vm959, %v464, %v721
      %v978 = vsel %vm959, %v548, %v723
      %v979 = vsel %vm959, %v467, %v725
      %v980 = vsel %vm959, %v549, %v727
      %v981 = vsel %vm959, %v470, %v729
      %v982 = vsel %vm959, %v550, %v731
      %v983 = vsel %vm959, %v473, %v733
      %v984 = vsel %vm959, %v551, %v735
      %v985 = vsel %vm959, %v476, %v737
      %v986 = vsel %vm959, %v552, %v739
      %v987 = vsel %vm959, %v479, %v741
      %v988 = vsel %vm959, %v553, %v743
      %v989 = vsel %vm959, %v482, %v745
      %v990 = vsel %vm959, %v554, %v747
      %v991 = vsel %vm959, %v485, %v749
      %vm992 = vcmask 261120
      %v993 = vsel %vm992, %v960, %v864
      %v994 = vsel %vm992, %v961, %v866
      %v995 = vsel %vm992, %v962, %v868
      %v996 = vsel %vm992, %v963, %v870
      %v997 = vsel %vm992, %v964, %v872
      %v998 = vsel %vm992, %v965, %v874
      %v999 = vsel %vm992, %v966, %v876
      %v1000 = vsel %vm992, %v967, %v878
      %v1001 = vsel %vm992, %v968, %v880
      %v1002 = vsel %vm992, %v969, %v882
      %v1003 = vsel %vm992, %v970, %v884
      %v1004 = vsel %vm992, %v971, %v886
      %v1005 = vsel %vm992, %v972, %v888
      %v1006 = vsel %vm992, %v973, %v890
      %v1007 = vsel %vm992, %v974, %v892
      %v1008 = vsel %vm992, %v975, %v894
      %v1009 = vsel %vm992, %v976, %v896
      %v1010 = vsel %vm992, %v977, %v898
      %v1011 = vsel %vm992, %v978, %v900
      %v1012 = vsel %vm992, %v979, %v902
      %v1013 = vsel %vm992, %v980, %v904
      %v1014 = vsel %vm992, %v981, %v906
      %v1015 = vsel %vm992, %v982, %v908
      %v1016 = vsel %vm992, %v983, %v910
      %v1017 = vsel %vm992, %v984, %v912
      %v1018 = vsel %vm992, %v985, %v914
      %v1019 = vsel %vm992, %v986, %v916
      %v1020 = vsel %vm992, %v987, %v918
      %v1021 = vsel %vm992, %v988, %v920
      %v1022 = vsel %vm992, %v989, %v922
      %v1023 = vsel %vm992, %v990, %v924
      %v1024 = vsel %vm992, %v991, %v926
      %v1027 = vrot.slane %v555, 1
      %v1028 = vrot.slane %v488, 1
      %v1029 = vsel %vm605, %v1027, %v1028
      %v1030 = vrot.slane %v572, 1
      %v1031 = vsel %vm605, %v1028, %v1030
      %1032 = vrot.lane.b32.xlu0 %v1029, 16
      %v1033 = vpop.permute.xlu0 %1032
      %1034 = vrot.lane.b32.xlu0 %v1031, 16
      %v1035 = vpop.permute.xlu0 %1034
      %v1038 = vrot.slane %v555, 2
      %v1039 = vrot.slane %v488, 2
      %v1040 = vsel %vm782, %v1038, %v1039
      %v1041 = vrot.slane %v572, 2
      %v1042 = vsel %vm782, %v1039, %v1041
      %1043 = vrot.lane.b32.xlu0 %v1040, 32
      %v1044 = vpop.permute.xlu0 %1043
      %1045 = vrot.lane.b32.xlu0 %v1042, 32
      %v1046 = vpop.permute.xlu0 %1045
      %v1049 = vsel %vm959, %v555, %v1033
      %v1050 = vsel %vm959, %v488, %v1035
      %v1051 = vsel %vm992, %v1049, %v1044
      %v1052 = vsel %vm992, %v1050, %v1046
      %1085 = vrot.lane.b32.xlu0 %v995, 48
      %v1086 = vpop.permute.xlu0 %1085
      %1087 = vrot.lane.b32.xlu0 %v996, 48
      %v1088 = vpop.permute.xlu0 %1087
      %1089 = vrot.lane.b32.xlu0 %v997, 48
      %v1090 = vpop.permute.xlu0 %1089
      %1091 = vrot.lane.b32.xlu0 %v998, 48
      %v1092 = vpop.permute.xlu0 %1091
      %1093 = vrot.lane.b32.xlu0 %v999, 48
      %v1094 = vpop.permute.xlu0 %1093
      %1095 = vrot.lane.b32.xlu0 %v1000, 48
      %v1096 = vpop.permute.xlu0 %1095
      %1097 = vrot.lane.b32.xlu0 %v1001, 48
      %v1098 = vpop.permute.xlu0 %1097
      %1099 = vrot.lane.b32.xlu0 %v1002, 48
      %v1100 = vpop.permute.xlu0 %1099
      %1101 = vrot.lane.b32.xlu0 %v1003, 48
      %v1102 = vpop.permute.xlu0 %1101
      %1103 = vrot.lane.b32.xlu0 %v1004, 48
      %v1104 = vpop.permute.xlu0 %1103
      %1105 = vrot.lane.b32.xlu0 %v1005, 48
      %v1106 = vpop.permute.xlu0 %1105
      %1107 = vrot.lane.b32.xlu0 %v1006, 48
      %v1108 = vpop.permute.xlu0 %1107
      %1109 = vrot.lane.b32.xlu0 %v1007, 48
      %v1110 = vpop.permute.xlu0 %1109
      %1111 = vrot.lane.b32.xlu0 %v1008, 48
      %v1112 = vpop.permute.xlu0 %1111
      %1113 = vrot.lane.b32.xlu0 %v1009, 48
      %v1114 = vpop.permute.xlu0 %1113
      %1115 = vrot.lane.b32.xlu0 %v1010, 48
      %v1116 = vpop.permute.xlu0 %1115
      %1117 = vrot.lane.b32.xlu0 %v1011, 48
      %v1118 = vpop.permute.xlu0 %1117
      %1119 = vrot.lane.b32.xlu0 %v1012, 48
      %v1120 = vpop.permute.xlu0 %1119
      %1121 = vrot.lane.b32.xlu0 %v1013, 48
      %v1122 = vpop.permute.xlu0 %1121
      %1123 = vrot.lane.b32.xlu0 %v1014, 48
      %v1124 = vpop.permute.xlu0 %1123
      %1125 = vrot.lane.b32.xlu0 %v1015, 48
      %v1126 = vpop.permute.xlu0 %1125
      %1127 = vrot.lane.b32.xlu0 %v1016, 48
      %v1128 = vpop.permute.xlu0 %1127
      %1129 = vrot.lane.b32.xlu0 %v1017, 48
      %v1130 = vpop.permute.xlu0 %1129
      %1131 = vrot.lane.b32.xlu0 %v1018, 48
      %v1132 = vpop.permute.xlu0 %1131
      %1133 = vrot.lane.b32.xlu0 %v1019, 48
      %v1134 = vpop.permute.xlu0 %1133
      %1135 = vrot.lane.b32.xlu0 %v1020, 48
      %v1136 = vpop.permute.xlu0 %1135
      %1137 = vrot.lane.b32.xlu0 %v1021, 48
      %v1138 = vpop.permute.xlu0 %1137
      %1139 = vrot.lane.b32.xlu0 %v1022, 48
      %v1140 = vpop.permute.xlu0 %1139
      %1141 = vrot.lane.b32.xlu0 %v1023, 48
      %v1142 = vpop.permute.xlu0 %1141
      %1143 = vrot.lane.b32.xlu0 %v1024, 48
      %v1144 = vpop.permute.xlu0 %1143
      %1145 = vrot.lane.b32.xlu0 %v1051, 48
      %v1146 = vpop.permute.xlu0 %1145
      %1147 = vrot.lane.b32.xlu0 %v1052, 48
      %v1148 = vpop.permute.xlu0 %1147
      %1183 = vrot.lane.b32.xlu0 %v997, 96
      %v1184 = vpop.permute.xlu0 %1183
      %1185 = vrot.lane.b32.xlu0 %v998, 96
      %v1186 = vpop.permute.xlu0 %1185
      %1187 = vrot.lane.b32.xlu0 %v999, 96
      %v1188 = vpop.permute.xlu0 %1187
      %1189 = vrot.lane.b32.xlu0 %v1000, 96
      %v1190 = vpop.permute.xlu0 %1189
      %1191 = vrot.lane.b32.xlu0 %v1001, 96
      %v1192 = vpop.permute.xlu0 %1191
      %1193 = vrot.lane.b32.xlu0 %v1002, 96
      %v1194 = vpop.permute.xlu0 %1193
      %1195 = vrot.lane.b32.xlu0 %v1003, 96
      %v1196 = vpop.permute.xlu0 %1195
      %1197 = vrot.lane.b32.xlu0 %v1004, 96
      %v1198 = vpop.permute.xlu0 %1197
      %1199 = vrot.lane.b32.xlu0 %v1005, 96
      %v1200 = vpop.permute.xlu0 %1199
      %1201 = vrot.lane.b32.xlu0 %v1006, 96
      %v1202 = vpop.permute.xlu0 %1201
      %1203 = vrot.lane.b32.xlu0 %v1007, 96
      %v1204 = vpop.permute.xlu0 %1203
      %1205 = vrot.lane.b32.xlu0 %v1008, 96
      %v1206 = vpop.permute.xlu0 %1205
      %1207 = vrot.lane.b32.xlu0 %v1009, 96
      %v1208 = vpop.permute.xlu0 %1207
      %1209 = vrot.lane.b32.xlu0 %v1010, 96
      %v1210 = vpop.permute.xlu0 %1209
      %1211 = vrot.lane.b32.xlu0 %v1011, 96
      %v1212 = vpop.permute.xlu0 %1211
      %1213 = vrot.lane.b32.xlu0 %v1012, 96
      %v1214 = vpop.permute.xlu0 %1213
      %1215 = vrot.lane.b32.xlu0 %v1013, 96
      %v1216 = vpop.permute.xlu0 %1215
      %1217 = vrot.lane.b32.xlu0 %v1014, 96
      %v1218 = vpop.permute.xlu0 %1217
      %1219 = vrot.lane.b32.xlu0 %v1015, 96
      %v1220 = vpop.permute.xlu0 %1219
      %1221 = vrot.lane.b32.xlu0 %v1016, 96
      %v1222 = vpop.permute.xlu0 %1221
      %1223 = vrot.lane.b32.xlu0 %v1017, 96
      %v1224 = vpop.permute.xlu0 %1223
      %1225 = vrot.lane.b32.xlu0 %v1018, 96
      %v1226 = vpop.permute.xlu0 %1225
      %1227 = vrot.lane.b32.xlu0 %v1019, 96
      %v1228 = vpop.permute.xlu0 %1227
      %1229 = vrot.lane.b32.xlu0 %v1020, 96
      %v1230 = vpop.permute.xlu0 %1229
      %1231 = vrot.lane.b32.xlu0 %v1021, 96
      %v1232 = vpop.permute.xlu0 %1231
      %1233 = vrot.lane.b32.xlu0 %v1022, 96
      %v1234 = vpop.permute.xlu0 %1233
      %1235 = vrot.lane.b32.xlu0 %v1023, 96
      %v1236 = vpop.permute.xlu0 %1235
      %1237 = vrot.lane.b32.xlu0 %v1024, 96
      %v1238 = vpop.permute.xlu0 %1237
      %1239 = vrot.lane.b32.xlu0 %v1051, 96
      %v1240 = vpop.permute.xlu0 %1239
      %1241 = vrot.lane.b32.xlu0 %v1052, 96
      %v1242 = vpop.permute.xlu0 %1241
      %1243 = vrot.lane.b32.xlu0 %v993, 96
      %v1244 = vpop.permute.xlu0 %1243
      %1245 = vrot.lane.b32.xlu0 %v994, 96
      %v1246 = vpop.permute.xlu0 %1245
      %vm1279 = vcmask 392192
      %v1280 = vsel %vm1279, %v993, %v1086
      %v1281 = vsel %vm1279, %v994, %v1088
      %v1282 = vsel %vm1279, %v995, %v1090
      %v1283 = vsel %vm1279, %v996, %v1092
      %v1284 = vsel %vm1279, %v997, %v1094
      %v1285 = vsel %vm1279, %v998, %v1096
      %v1286 = vsel %vm1279, %v999, %v1098
      %v1287 = vsel %vm1279, %v1000, %v1100
      %v1288 = vsel %vm1279, %v1001, %v1102
      %v1289 = vsel %vm1279, %v1002, %v1104
      %v1290 = vsel %vm1279, %v1003, %v1106
      %v1291 = vsel %vm1279, %v1004, %v1108
      %v1292 = vsel %vm1279, %v1005, %v1110
      %v1293 = vsel %vm1279, %v1006, %v1112
      %v1294 = vsel %vm1279, %v1007, %v1114
      %v1295 = vsel %vm1279, %v1008, %v1116
      %v1296 = vsel %vm1279, %v1009, %v1118
      %v1297 = vsel %vm1279, %v1010, %v1120
      %v1298 = vsel %vm1279, %v1011, %v1122
      %v1299 = vsel %vm1279, %v1012, %v1124
      %v1300 = vsel %vm1279, %v1013, %v1126
      %v1301 = vsel %vm1279, %v1014, %v1128
      %v1302 = vsel %vm1279, %v1015, %v1130
      %v1303 = vsel %vm1279, %v1016, %v1132
      %v1304 = vsel %vm1279, %v1017, %v1134
      %v1305 = vsel %vm1279, %v1018, %v1136
      %v1306 = vsel %vm1279, %v1019, %v1138
      %v1307 = vsel %vm1279, %v1020, %v1140
      %v1308 = vsel %vm1279, %v1021, %v1142
      %v1309 = vsel %vm1279, %v1022, %v1144
      %v1310 = vsel %vm1279, %v1023, %v1146
      %v1311 = vsel %vm1279, %v1024, %v1148
      %vm1312 = vcmask 785408
      %v1313 = vsel %vm1312, %v1280, %v1184
      %v1314 = vsel %vm1312, %v1281, %v1186
      %v1315 = vsel %vm1312, %v1282, %v1188
      %v1316 = vsel %vm1312, %v1283, %v1190
      %v1317 = vsel %vm1312, %v1284, %v1192
      %v1318 = vsel %vm1312, %v1285, %v1194
      %v1319 = vsel %vm1312, %v1286, %v1196
      %v1320 = vsel %vm1312, %v1287, %v1198
      %v1321 = vsel %vm1312, %v1288, %v1200
      %v1322 = vsel %vm1312, %v1289, %v1202
      %v1323 = vsel %vm1312, %v1290, %v1204
      %v1324 = vsel %vm1312, %v1291, %v1206
      %v1325 = vsel %vm1312, %v1292, %v1208
      %v1326 = vsel %vm1312, %v1293, %v1210
      %v1327 = vsel %vm1312, %v1294, %v1212
      %v1328 = vsel %vm1312, %v1295, %v1214
      %v1329 = vsel %vm1312, %v1296, %v1216
      %v1330 = vsel %vm1312, %v1297, %v1218
      %v1331 = vsel %vm1312, %v1298, %v1220
      %v1332 = vsel %vm1312, %v1299, %v1222
      %v1333 = vsel %vm1312, %v1300, %v1224
      %v1334 = vsel %vm1312, %v1301, %v1226
      %v1335 = vsel %vm1312, %v1302, %v1228
      %v1336 = vsel %vm1312, %v1303, %v1230
      %v1337 = vsel %vm1312, %v1304, %v1232
      %v1338 = vsel %vm1312, %v1305, %v1234
      %v1339 = vsel %vm1312, %v1306, %v1236
      %v1340 = vsel %vm1312, %v1307, %v1238
      %v1341 = vsel %vm1312, %v1308, %v1240
      %v1342 = vsel %vm1312, %v1309, %v1242
      %v1343 = vsel %vm1312, %v1310, %v1244
      %v1344 = vsel %vm1312, %v1311, %v1246
      %v1345 = vpack.c.bf16 %v1314, %v1313
      %v1346 = vpack.c.bf16 %v1186, %v1184
      %v1347 = vpack.c.bf16 %v1316, %v1315
      %v1348 = vpack.c.bf16 %v1190, %v1188
      %v1349 = vpack.c.bf16 %v1318, %v1317
      %v1350 = vpack.c.bf16 %v1194, %v1192
      %v1351 = vpack.c.bf16 %v1320, %v1319
      %v1352 = vpack.c.bf16 %v1198, %v1196
      %v1353 = vpack.c.bf16 %v1322, %v1321
      %v1354 = vpack.c.bf16 %v1202, %v1200
      %v1355 = vpack.c.bf16 %v1324, %v1323
      %v1356 = vpack.c.bf16 %v1206, %v1204
      %v1357 = vpack.c.bf16 %v1326, %v1325
      %v1358 = vpack.c.bf16 %v1210, %v1208
      %v1359 = vpack.c.bf16 %v1328, %v1327
      %v1360 = vpack.c.bf16 %v1214, %v1212
      %v1361 = vpack.c.bf16 %v1330, %v1329
      %v1362 = vpack.c.bf16 %v1218, %v1216
      %v1363 = vpack.c.bf16 %v1332, %v1331
      %v1364 = vpack.c.bf16 %v1222, %v1220
      %v1365 = vpack.c.bf16 %v1334, %v1333
      %v1366 = vpack.c.bf16 %v1226, %v1224
      %v1367 = vpack.c.bf16 %v1336, %v1335
      %v1368 = vpack.c.bf16 %v1230, %v1228
      %v1369 = vpack.c.bf16 %v1338, %v1337
      %v1370 = vpack.c.bf16 %v1234, %v1232
      %v1371 = vpack.c.bf16 %v1340, %v1339
      %v1372 = vpack.c.bf16 %v1238, %v1236
      %v1373 = vpack.c.bf16 %v1342, %v1341
      %v1374 = vpack.c.bf16 %v1242, %v1240
      %v1375 = vpack.c.bf16 %v1344, %v1343
      %v1376 = vpack.c.bf16 %v1246, %v1244
      %v1378 = vlaneseq
      %v1379 = vshrl.u32 %v1378, 7
      %v1380 = vsub.s32 0, %v1379
      %v1381 = vrot.slane %v404, %v1380
      %v1401 = vunpack.c.l.b16 %v386
      %v1402 = vunpack.c.l.b16 %v387
      %v1403 = vunpack.c.l.b16 %v388
      %v1404 = vunpack.c.l.b16 %v389
      %v1405 = vunpack.c.l.b16 %v390
      %v1406 = vunpack.c.l.b16 %v391
      %v1407 = vunpack.c.l.b16 %v392
      %v1408 = vunpack.c.l.b16 %v393
      %v1409 = vunpack.c.l.b16 %v394
      %v1410 = vunpack.c.l.b16 %v395
      %v1411 = vunpack.c.l.b16 %v396
      %v1412 = vunpack.c.l.b16 %v397
      %v1413 = vunpack.c.l.b16 %v398
      %v1414 = vunpack.c.l.b16 %v399
      %v1415 = vunpack.c.l.b16 %v400
      %v1416 = vunpack.c.l.b16 %v401
      %v1417 = vunpack.c.l.b16 %v402
      %v1418 = vunpack.c.l.b16 %v403
      %v1419 = vpack.c.b16 %v1402, %v1401
      %v1420 = vpack.c.b16 %v1404, %v1403
      %v1421 = vpack.c.b16 %v1406, %v1405
      %v1422 = vpack.c.b16 %v1408, %v1407
      %v1423 = vpack.c.b16 %v1410, %v1409
      %v1424 = vpack.c.b16 %v1412, %v1411
      %v1425 = vpack.c.b16 %v1414, %v1413
      %v1426 = vpack.c.b16 %v1416, %v1415
      %v1427 = vpack.c.b16 %v1418, %v1417
      %v1438 = vsel %vm959, %v1346, 0
      %v1441 = vsel %vm959, %v1348, 0
      %v1444 = vsel %vm959, %v1350, 0
      %v1447 = vsel %vm959, %v1352, 0
      %v1450 = vsel %vm959, %v1354, 0
      %v1453 = vsel %vm959, %v1356, 0
      %v1456 = vsel %vm959, %v1358, 0
      %v1459 = vsel %vm959, %v1360, 0
      %v1462 = vsel %vm959, %v1362, 0
      %v1465 = vsel %vm959, %v1364, 0
      %v1468 = vsel %vm959, %v1366, 0
      %v1471 = vsel %vm959, %v1368, 0
      %v1474 = vsel %vm959, %v1370, 0
      %v1477 = vsel %vm959, %v1372, 0
      %v1480 = vsel %vm959, %v1374, 0
      %v1483 = vsel %vm959, %v1376, 0
      %1485 = vmatprep.subr.bf16.mxu0 0
      %1486 = vmatpush1.bf16.msra.mxu0 %v1426
      %1487 = vmatprep.subr.bf16.mxu0 0
      %1488 = vmatpush1.bf16.msra.mxu0 %v1425
      %1489 = vmatprep.subr.bf16.mxu0 0
      %1490 = vmatpush1.bf16.msra.mxu0 %v1424
      %1491 = vmatprep.subr.bf16.mxu0 0
      %1492 = vmatpush1.bf16.msra.mxu0 %v1423
      %1493 = vmatprep.subr.bf16.mxu0 0
      %1494 = vmatpush1.bf16.msra.mxu0 %v1422
      %1495 = vmatprep.subr.bf16.mxu0 0
      %1496 = vmatpush1.bf16.msra.mxu0 %v1421
      %1497 = vmatprep.subr.bf16.mxu0 0
      %1498 = vmatpush1.bf16.msra.mxu0 %v1420
      %1499 = vmatprep.subr.bf16.mxu0 0
      %1500 = vmatpush1.bf16.msra.mxu0 %v1419
      %1501 = vmatprep.subr.bf16.mxu0 0
      %1502 = vmatpush2.bf16.msra.mxu0 0
      %1503 = vmatprep.subr.bf16.mxu0 0
      %1504 = vmatpush2.bf16.msra.mxu0 0
      %1505 = vmatprep.subr.bf16.mxu0 0
      %1506 = vmatpush2.bf16.msra.mxu0 0
      %1507 = vmatprep.subr.bf16.mxu0 0
      %1508 = vmatpush2.bf16.msra.mxu0 0
      %1509 = vmatprep.subr.bf16.mxu0 0
      %1510 = vmatpush2.bf16.msra.mxu0 0
      %1511 = vmatprep.subr.bf16.mxu0 0
      %1512 = vmatpush2.bf16.msra.mxu0 0
      %1513 = vmatprep.subr.bf16.mxu0 0
      %1514 = vmatpush2.bf16.msra.mxu0 0
      %1515 = vmatprep.subr.bf16.mxu0 0
      %1516 = vmatpush2.bf16.msra.mxu0 %v1427
      %1517 = vmatprep.mubr.bf16.mxu0 %v1438
      %1518 = vmatmul.mubr.bf16.gmra.mxu0 %v1345
      %v1519 = vpop.f32.mrf.mxu0
      %v1520 = vadd.f32 %v1381, %v1519
      %v1521 = vpop.f32.mrf.mxu0
      %v1522 = vpop.f32.mrf.mxu0
      %v1523 = vadd.f32 %v1381, %v1522
      %v1524 = vpop.f32.mrf.mxu0
      %1525 = vmatprep.mubr.bf16.mxu0 %v1441
      %1526 = vmatmul.mubr.bf16.gmra.mxu0 %v1347
      %v1527 = vpop.f32.mrf.mxu0
      %v1528 = vadd.f32 %v1381, %v1527
      %v1529 = vpop.f32.mrf.mxu0
      %v1530 = vpop.f32.mrf.mxu0
      %v1531 = vadd.f32 %v1381, %v1530
      %v1532 = vpop.f32.mrf.mxu0
      %1533 = vmatprep.mubr.bf16.mxu0 %v1444
      %1534 = vmatmul.mubr.bf16.gmra.mxu0 %v1349
      %v1535 = vpop.f32.mrf.mxu0
      %v1536 = vadd.f32 %v1381, %v1535
      %v1537 = vpop.f32.mrf.mxu0
      %v1538 = vpop.f32.mrf.mxu0
      %v1539 = vadd.f32 %v1381, %v1538
      %v1540 = vpop.f32.mrf.mxu0
      %1541 = vmatprep.mubr.bf16.mxu0 %v1447
      %1542 = vmatmul.mubr.bf16.gmra.mxu0 %v1351
      %v1543 = vpop.f32.mrf.mxu0
      %v1544 = vadd.f32 %v1381, %v1543
      %v1545 = vpop.f32.mrf.mxu0
      %v1546 = vpop.f32.mrf.mxu0
      %v1547 = vadd.f32 %v1381, %v1546
      %v1548 = vpop.f32.mrf.mxu0
      %1549 = vmatprep.mubr.bf16.mxu0 %v1450
      %1550 = vmatmul.mubr.bf16.gmra.mxu0 %v1353
      %v1551 = vpop.f32.mrf.mxu0
      %v1552 = vadd.f32 %v1381, %v1551
      %v1553 = vpop.f32.mrf.mxu0
      %v1554 = vpop.f32.mrf.mxu0
      %v1555 = vadd.f32 %v1381, %v1554
      %v1556 = vpop.f32.mrf.mxu0
      %1557 = vmatprep.mubr.bf16.mxu0 %v1453
      %1558 = vmatmul.mubr.bf16.gmra.mxu0 %v1355
      %v1559 = vpop.f32.mrf.mxu0
      %v1560 = vadd.f32 %v1381, %v1559
      %v1561 = vpop.f32.mrf.mxu0
      %v1562 = vpop.f32.mrf.mxu0
      %v1563 = vadd.f32 %v1381, %v1562
      %v1564 = vpop.f32.mrf.mxu0
      %1565 = vmatprep.mubr.bf16.mxu0 %v1456
      %1566 = vmatmul.mubr.bf16.gmra.mxu0 %v1357
      %v1567 = vpop.f32.mrf.mxu0
      %v1568 = vadd.f32 %v1381, %v1567
      %v1569 = vpop.f32.mrf.mxu0
      %v1570 = vpop.f32.mrf.mxu0
      %v1571 = vadd.f32 %v1381, %v1570
      %v1572 = vpop.f32.mrf.mxu0
      %1573 = vmatprep.mubr.bf16.mxu0 %v1459
      %1574 = vmatmul.mubr.bf16.gmra.mxu0 %v1359
      %v1575 = vpop.f32.mrf.mxu0
      %v1576 = vadd.f32 %v1381, %v1575
      %v1577 = vpop.f32.mrf.mxu0
      %v1578 = vpop.f32.mrf.mxu0
      %v1579 = vadd.f32 %v1381, %v1578
      %v1580 = vpop.f32.mrf.mxu0
      %1581 = vmatprep.mubr.bf16.mxu0 %v1462
      %1582 = vmatmul.mubr.bf16.gmra.mxu0 %v1361
      %v1583 = vpop.f32.mrf.mxu0
      %v1584 = vadd.f32 %v1381, %v1583
      %v1585 = vpop.f32.mrf.mxu0
      %v1586 = vpop.f32.mrf.mxu0
      %v1587 = vadd.f32 %v1381, %v1586
      %v1588 = vpop.f32.mrf.mxu0
      %1589 = vmatprep.mubr.bf16.mxu0 %v1465
      %1590 = vmatmul.mubr.bf16.gmra.mxu0 %v1363
      %v1591 = vpop.f32.mrf.mxu0
      %v1592 = vadd.f32 %v1381, %v1591
      %v1593 = vpop.f32.mrf.mxu0
      %v1594 = vpop.f32.mrf.mxu0
      %v1595 = vadd.f32 %v1381, %v1594
      %v1596 = vpop.f32.mrf.mxu0
      %1597 = vmatprep.mubr.bf16.mxu0 %v1468
      %1598 = vmatmul.mubr.bf16.gmra.mxu0 %v1365
      %v1599 = vpop.f32.mrf.mxu0
      %v1600 = vadd.f32 %v1381, %v1599
      %v1601 = vpop.f32.mrf.mxu0
      %v1602 = vpop.f32.mrf.mxu0
      %v1603 = vadd.f32 %v1381, %v1602
      %v1604 = vpop.f32.mrf.mxu0
      %1605 = vmatprep.mubr.bf16.mxu0 %v1471
      %1606 = vmatmul.mubr.bf16.gmra.mxu0 %v1367
      %v1607 = vpop.f32.mrf.mxu0
      %v1608 = vadd.f32 %v1381, %v1607
      %v1609 = vpop.f32.mrf.mxu0
      %v1610 = vpop.f32.mrf.mxu0
      %v1611 = vadd.f32 %v1381, %v1610
      %v1612 = vpop.f32.mrf.mxu0
      %1613 = vmatprep.mubr.bf16.mxu0 %v1474
      %1614 = vmatmul.mubr.bf16.gmra.mxu0 %v1369
      %v1615 = vpop.f32.mrf.mxu0
      %v1616 = vadd.f32 %v1381, %v1615
      %v1617 = vpop.f32.mrf.mxu0
      %v1618 = vpop.f32.mrf.mxu0
      %v1619 = vadd.f32 %v1381, %v1618
      %v1620 = vpop.f32.mrf.mxu0
      %1621 = vmatprep.mubr.bf16.mxu0 %v1477
      %1622 = vmatmul.mubr.bf16.gmra.mxu0 %v1371
      %v1623 = vpop.f32.mrf.mxu0
      %v1624 = vadd.f32 %v1381, %v1623
      %v1625 = vpop.f32.mrf.mxu0
      %v1626 = vpop.f32.mrf.mxu0
      %v1627 = vadd.f32 %v1381, %v1626
      %v1628 = vpop.f32.mrf.mxu0
      %1629 = vmatprep.mubr.bf16.mxu0 %v1480
      %1630 = vmatmul.mubr.bf16.gmra.mxu0 %v1373
      %v1631 = vpop.f32.mrf.mxu0
      %v1632 = vadd.f32 %v1381, %v1631
      %v1633 = vpop.f32.mrf.mxu0
      %v1634 = vpop.f32.mrf.mxu0
      %v1635 = vadd.f32 %v1381, %v1634
      %v1636 = vpop.f32.mrf.mxu0
      %1637 = vmatprep.mubr.bf16.mxu0 %v1483
      %1638 = vmatmul.mubr.bf16.gmra.mxu0 %v1375
      %v1639 = vpop.f32.mrf.mxu0
      %v1640 = vadd.f32 %v1381, %v1639
      %v1641 = vpop.f32.mrf.mxu0
      %v1642 = vpop.f32.mrf.mxu0
      %v1643 = vadd.f32 %v1381, %v1642
      %v1644 = vpop.f32.mrf.mxu0
      %1645 = vdwg.mxu0
      %vm1646 = vcmp.ge.f32.partialorder %v1520, 0.0
      %vm1647 = vcmp.ge.f32.partialorder %v1523, 0.0
      %vm1648 = vcmp.ge.f32.partialorder %v1528, 0.0
      %vm1649 = vcmp.ge.f32.partialorder %v1531, 0.0
      %vm1650 = vcmp.ge.f32.partialorder %v1536, 0.0
      %vm1651 = vcmp.ge.f32.partialorder %v1539, 0.0
      %vm1652 = vcmp.ge.f32.partialorder %v1544, 0.0
      %vm1653 = vcmp.ge.f32.partialorder %v1547, 0.0
      %vm1654 = vcmp.ge.f32.partialorder %v1552, 0.0
      %vm1655 = vcmp.ge.f32.partialorder %v1555, 0.0
      %vm1656 = vcmp.ge.f32.partialorder %v1560, 0.0
      %vm1657 = vcmp.ge.f32.partialorder %v1563, 0.0
      %vm1658 = vcmp.ge.f32.partialorder %v1568, 0.0
      %vm1659 = vcmp.ge.f32.partialorder %v1571, 0.0
      %vm1660 = vcmp.ge.f32.partialorder %v1576, 0.0
      %vm1661 = vcmp.ge.f32.partialorder %v1579, 0.0
      %vm1662 = vcmp.ge.f32.partialorder %v1584, 0.0
      %vm1663 = vcmp.ge.f32.partialorder %v1587, 0.0
      %vm1664 = vcmp.ge.f32.partialorder %v1592, 0.0
      %vm1665 = vcmp.ge.f32.partialorder %v1595, 0.0
      %vm1666 = vcmp.ge.f32.partialorder %v1600, 0.0
      %vm1667 = vcmp.ge.f32.partialorder %v1603, 0.0
      %vm1668 = vcmp.ge.f32.partialorder %v1608, 0.0
      %vm1669 = vcmp.ge.f32.partialorder %v1611, 0.0
      %vm1670 = vcmp.ge.f32.partialorder %v1616, 0.0
      %vm1671 = vcmp.ge.f32.partialorder %v1619, 0.0
      %vm1672 = vcmp.ge.f32.partialorder %v1624, 0.0
      %vm1673 = vcmp.ge.f32.partialorder %v1627, 0.0
      %vm1674 = vcmp.ge.f32.partialorder %v1632, 0.0
      %vm1675 = vcmp.ge.f32.partialorder %v1635, 0.0
      %vm1676 = vcmp.ge.f32.partialorder %v1640, 0.0
      %vm1677 = vcmp.ge.f32.partialorder %v1643, 0.0
      %v1678 = vmul.f32 %v1520, 0.2
      %v1679 = vmul.f32 %v1523, 0.2
      %v1680 = vmul.f32 %v1528, 0.2
      %v1681 = vmul.f32 %v1531, 0.2
      %v1682 = vmul.f32 %v1536, 0.2
      %v1683 = vmul.f32 %v1539, 0.2
      %v1684 = vmul.f32 %v1544, 0.2
      %v1685 = vmul.f32 %v1547, 0.2
      %v1686 = vmul.f32 %v1552, 0.2
      %v1687 = vmul.f32 %v1555, 0.2
      %v1688 = vmul.f32 %v1560, 0.2
      %v1689 = vmul.f32 %v1563, 0.2
      %v1690 = vmul.f32 %v1568, 0.2
      %v1691 = vmul.f32 %v1571, 0.2
      %v1692 = vmul.f32 %v1576, 0.2
      %v1693 = vmul.f32 %v1579, 0.2
      %v1694 = vmul.f32 %v1584, 0.2
      %v1695 = vmul.f32 %v1587, 0.2
      %v1696 = vmul.f32 %v1592, 0.2
      %v1697 = vmul.f32 %v1595, 0.2
      %v1698 = vmul.f32 %v1600, 0.2
      %v1699 = vmul.f32 %v1603, 0.2
      %v1700 = vmul.f32 %v1608, 0.2
      %v1701 = vmul.f32 %v1611, 0.2
      %v1702 = vmul.f32 %v1616, 0.2
      %v1703 = vmul.f32 %v1619, 0.2
      %v1704 = vmul.f32 %v1624, 0.2
      %v1705 = vmul.f32 %v1627, 0.2
      %v1706 = vmul.f32 %v1632, 0.2
      %v1707 = vmul.f32 %v1635, 0.2
      %v1708 = vmul.f32 %v1640, 0.2
      %v1709 = vmul.f32 %v1643, 0.2
      %v1710 = vsel %vm1646, %v1520, %v1678
      %v1711 = vsel %vm1647, %v1523, %v1679
      %v1712 = vsel %vm1648, %v1528, %v1680
      %v1713 = vsel %vm1649, %v1531, %v1681
      %v1714 = vsel %vm1650, %v1536, %v1682
      %v1715 = vsel %vm1651, %v1539, %v1683
      %v1716 = vsel %vm1652, %v1544, %v1684
      %v1717 = vsel %vm1653, %v1547, %v1685
      %v1718 = vsel %vm1654, %v1552, %v1686
      %v1719 = vsel %vm1655, %v1555, %v1687
      %v1720 = vsel %vm1656, %v1560, %v1688
      %v1721 = vsel %vm1657, %v1563, %v1689
      %v1722 = vsel %vm1658, %v1568, %v1690
      %v1723 = vsel %vm1659, %v1571, %v1691
      %v1724 = vsel %vm1660, %v1576, %v1692
      %v1725 = vsel %vm1661, %v1579, %v1693
      %v1726 = vsel %vm1662, %v1584, %v1694
      %v1727 = vsel %vm1663, %v1587, %v1695
      %v1728 = vsel %vm1664, %v1592, %v1696
      %v1729 = vsel %vm1665, %v1595, %v1697
      %v1730 = vsel %vm1666, %v1600, %v1698
      %v1731 = vsel %vm1667, %v1603, %v1699
      %v1732 = vsel %vm1668, %v1608, %v1700
      %v1733 = vsel %vm1669, %v1611, %v1701
      %v1734 = vsel %vm1670, %v1616, %v1702
      %v1735 = vsel %vm1671, %v1619, %v1703
      %v1736 = vsel %vm1672, %v1624, %v1704
      %v1737 = vsel %vm1673, %v1627, %v1705
      %v1738 = vsel %vm1674, %v1632, %v1706
      %v1739 = vsel %vm1675, %v1635, %v1707
      %v1740 = vsel %vm1676, %v1640, %v1708
      %v1741 = vsel %vm1677, %v1643, %v1709
      %v1742 = vld [vmem:[%s3] sm:$0xf]
      %v1743 = vld [vmem:[%s3 + $0x4] sm:$0xf]
      %v1744 = vld [vmem:[%s3 + $0x8] sm:$0xf]
      %v1745 = vld [vmem:[%s3 + $0xc] sm:$0xf]
      %v1746 = vld [vmem:[%s3 + $0x10] sm:$0xf]
      %v1747 = vld [vmem:[%s3 + $0x14] sm:$0xf]
      %v1748 = vld [vmem:[%s3 + $0x18] sm:$0xf]
      %v1749 = vld [vmem:[%s3 + $0x1c] sm:$0xf]
      %v1750 = vld [vmem:[%s3 + $0x20] sm:$0xf]
      %v1751 = vld [vmem:[%s3 + $0x24] sm:$0xf]
      %v1752 = vld [vmem:[%s3 + $0x28] sm:$0xf]
      %v1753 = vld [vmem:[%s3 + $0x2c] sm:$0xf]
      %v1754 = vld [vmem:[%s3 + $0x30] sm:$0xf]
      %v1755 = vld [vmem:[%s3 + $0x34] sm:$0xf]
      %v1756 = vld [vmem:[%s3 + $0x38] sm:$0xf]
      %v1757 = vld [vmem:[%s3 + $0x3c] sm:$0xf]
      %v1758 = vld [vmem:[%s3 + $0x40] sm:$0xf]
      %v1759 = vld [vmem:[%s3 + $0x44] sm:$0xf]
      %v1760 = vld [vmem:[%s4] sm:$0x1]
      %v1793 = vrot.slane %v1710, 7
      %v1794 = vrot.slane %v1711, 7
      %v1795 = vsel %vm438, %v1793, %v1794
      %v1796 = vrot.slane %v1712, 7
      %v1797 = vrot.slane %v1713, 7
      %v1798 = vsel %vm438, %v1796, %v1797
      %v1799 = vrot.slane %v1714, 7
      %v1800 = vrot.slane %v1715, 7
      %v1801 = vsel %vm438, %v1799, %v1800
      %v1802 = vrot.slane %v1716, 7
      %v1803 = vrot.slane %v1717, 7
      %v1804 = vsel %vm438, %v1802, %v1803
      %v1805 = vrot.slane %v1718, 7
      %v1806 = vrot.slane %v1719, 7
      %v1807 = vsel %vm438, %v1805, %v1806
      %v1808 = vrot.slane %v1720, 7
      %v1809 = vrot.slane %v1721, 7
      %v1810 = vsel %vm438, %v1808, %v1809
      %v1811 = vrot.slane %v1722, 7
      %v1812 = vrot.slane %v1723, 7
      %v1813 = vsel %vm438, %v1811, %v1812
      %v1814 = vrot.slane %v1724, 7
      %v1815 = vrot.slane %v1725, 7
      %v1816 = vsel %vm438, %v1814, %v1815
      %v1817 = vrot.slane %v1726, 7
      %v1818 = vrot.slane %v1727, 7
      %v1819 = vsel %vm438, %v1817, %v1818
      %v1820 = vrot.slane %v1728, 7
      %v1821 = vrot.slane %v1729, 7
      %v1822 = vsel %vm438, %v1820, %v1821
      %v1823 = vrot.slane %v1730, 7
      %v1824 = vrot.slane %v1731, 7
      %v1825 = vsel %vm438, %v1823, %v1824
      %v1826 = vrot.slane %v1732, 7
      %v1827 = vrot.slane %v1733, 7
      %v1828 = vsel %vm438, %v1826, %v1827
      %v1829 = vrot.slane %v1734, 7
      %v1830 = vrot.slane %v1735, 7
      %v1831 = vsel %vm438, %v1829, %v1830
      %v1832 = vrot.slane %v1736, 7
      %v1833 = vrot.slane %v1737, 7
      %v1834 = vsel %vm438, %v1832, %v1833
      %v1835 = vrot.slane %v1738, 7
      %v1836 = vrot.slane %v1739, 7
      %v1837 = vsel %vm438, %v1835, %v1836
      %v1838 = vrot.slane %v1740, 7
      %v1839 = vrot.slane %v1741, 7
      %v1840 = vsel %vm438, %v1838, %v1839
      %v1889 = vsel %vm438, 0.0, %v1793
      %v1890 = vsel %vm438, 0.0, %v1796
      %v1891 = vsel %vm438, 0.0, %v1799
      %v1892 = vsel %vm438, 0.0, %v1802
      %v1893 = vsel %vm438, 0.0, %v1805
      %v1894 = vsel %vm438, 0.0, %v1808
      %v1895 = vsel %vm438, 0.0, %v1811
      %v1896 = vsel %vm438, 0.0, %v1814
      %v1897 = vsel %vm438, 0.0, %v1817
      %v1898 = vsel %vm438, 0.0, %v1820
      %v1899 = vsel %vm438, 0.0, %v1823
      %v1900 = vsel %vm438, 0.0, %v1826
      %v1901 = vsel %vm438, 0.0, %v1829
      %v1902 = vsel %vm438, 0.0, %v1832
      %v1903 = vsel %vm438, 0.0, %v1835
      %v1904 = vsel %vm438, 0.0, %v1838
      %v1905 = vsel %vm438, %v1794, 0.0
      %v1906 = vsel %vm438, %v1797, 0.0
      %v1907 = vsel %vm438, %v1800, 0.0
      %v1908 = vsel %vm438, %v1803, 0.0
      %v1909 = vsel %vm438, %v1806, 0.0
      %v1910 = vsel %vm438, %v1809, 0.0
      %v1911 = vsel %vm438, %v1812, 0.0
      %v1912 = vsel %vm438, %v1815, 0.0
      %v1913 = vsel %vm438, %v1818, 0.0
      %v1914 = vsel %vm438, %v1821, 0.0
      %v1915 = vsel %vm438, %v1824, 0.0
      %v1916 = vsel %vm438, %v1827, 0.0
      %v1917 = vsel %vm438, %v1830, 0.0
      %v1918 = vsel %vm438, %v1833, 0.0
      %v1919 = vsel %vm438, %v1836, 0.0
      %v1920 = vsel %vm438, %v1839, 0.0
      %v1951 = vrot.slane %v1889, 1
      %v1952 = vrot.slane %v1795, 1
      %v1953 = vsel %vm605, %v1951, %v1952
      %v1954 = vrot.slane %v1905, 1
      %v1955 = vsel %vm605, %v1952, %v1954
      %v1956 = vrot.slane %v1890, 1
      %v1957 = vrot.slane %v1798, 1
      %v1958 = vsel %vm605, %v1956, %v1957
      %v1959 = vrot.slane %v1906, 1
      %v1960 = vsel %vm605, %v1957, %v1959
      %v1961 = vrot.slane %v1891, 1
      %v1962 = vrot.slane %v1801, 1
      %v1963 = vsel %vm605, %v1961, %v1962
      %v1964 = vrot.slane %v1907, 1
      %v1965 = vsel %vm605, %v1962, %v1964
      %v1966 = vrot.slane %v1892, 1
      %v1967 = vrot.slane %v1804, 1
      %v1968 = vsel %vm605, %v1966, %v1967
      %v1969 = vrot.slane %v1908, 1
      %v1970 = vsel %vm605, %v1967, %v1969
      %v1971 = vrot.slane %v1893, 1
      %v1972 = vrot.slane %v1807, 1
      %v1973 = vsel %vm605, %v1971, %v1972
      %v1974 = vrot.slane %v1909, 1
      %v1975 = vsel %vm605, %v1972, %v1974
      %v1976 = vrot.slane %v1894, 1
      %v1977 = vrot.slane %v1810, 1
      %v1978 = vsel %vm605, %v1976, %v1977
      %v1979 = vrot.slane %v1910, 1
      %v1980 = vsel %vm605, %v1977, %v1979
      %v1981 = vrot.slane %v1895, 1
      %v1982 = vrot.slane %v1813, 1
      %v1983 = vsel %vm605, %v1981, %v1982
      %v1984 = vrot.slane %v1911, 1
      %v1985 = vsel %vm605, %v1982, %v1984
      %v1986 = vrot.slane %v1896, 1
      %v1987 = vrot.slane %v1816, 1
      %v1988 = vsel %vm605, %v1986, %v1987
      %v1989 = vrot.slane %v1912, 1
      %v1990 = vsel %vm605, %v1987, %v1989
      %v1991 = vrot.slane %v1897, 1
      %v1992 = vrot.slane %v1819, 1
      %v1993 = vsel %vm605, %v1991, %v1992
      %v1994 = vrot.slane %v1913, 1
      %v1995 = vsel %vm605, %v1992, %v1994
      %v1996 = vrot.slane %v1898, 1
      %v1997 = vrot.slane %v1822, 1
      %v1998 = vsel %vm605, %v1996, %v1997
      %v1999 = vrot.slane %v1914, 1
      %v2000 = vsel %vm605, %v1997, %v1999
      %v2001 = vrot.slane %v1899, 1
      %v2002 = vrot.slane %v1825, 1
      %v2003 = vsel %vm605, %v2001, %v2002
      %v2004 = vrot.slane %v1915, 1
      %v2005 = vsel %vm605, %v2002, %v2004
      %v2006 = vrot.slane %v1900, 1
      %v2007 = vrot.slane %v1828, 1
      %v2008 = vsel %vm605, %v2006, %v2007
      %v2009 = vrot.slane %v1916, 1
      %v2010 = vsel %vm605, %v2007, %v2009
      %v2011 = vrot.slane %v1901, 1
      %v2012 = vrot.slane %v1831, 1
      %v2013 = vsel %vm605, %v2011, %v2012
      %v2014 = vrot.slane %v1917, 1
      %v2015 = vsel %vm605, %v2012, %v2014
      %v2016 = vrot.slane %v1902, 1
      %v2017 = vrot.slane %v1834, 1
      %v2018 = vsel %vm605, %v2016, %v2017
      %v2019 = vrot.slane %v1918, 1
      %v2020 = vsel %vm605, %v2017, %v2019
      %v2021 = vrot.slane %v1903, 1
      %v2022 = vrot.slane %v1837, 1
      %v2023 = vsel %vm605, %v2021, %v2022
      %v2024 = vrot.slane %v1919, 1
      %v2025 = vsel %vm605, %v2022, %v2024
      %2026 = vrot.lane.b32.xlu0 %v1953, 16
      %v2027 = vpop.permute.xlu0 %2026
      %2028 = vrot.lane.b32.xlu0 %v1955, 16
      %v2029 = vpop.permute.xlu0 %2028
      %2030 = vrot.lane.b32.xlu0 %v1958, 16
      %v2031 = vpop.permute.xlu0 %2030
      %2032 = vrot.lane.b32.xlu0 %v1960, 16
      %v2033 = vpop.permute.xlu0 %2032
      %2034 = vrot.lane.b32.xlu0 %v1963, 16
      %v2035 = vpop.permute.xlu0 %2034
      %2036 = vrot.lane.b32.xlu0 %v1965, 16
      %v2037 = vpop.permute.xlu0 %2036
      %2038 = vrot.lane.b32.xlu0 %v1968, 16
      %v2039 = vpop.permute.xlu0 %2038
      %2040 = vrot.lane.b32.xlu0 %v1970, 16
      %v2041 = vpop.permute.xlu0 %2040
      %2042 = vrot.lane.b32.xlu0 %v1973, 16
      %v2043 = vpop.permute.xlu0 %2042
      %2044 = vrot.lane.b32.xlu0 %v1975, 16
      %v2045 = vpop.permute.xlu0 %2044
      %2046 = vrot.lane.b32.xlu0 %v1978, 16
      %v2047 = vpop.permute.xlu0 %2046
      %2048 = vrot.lane.b32.xlu0 %v1980, 16
      %v2049 = vpop.permute.xlu0 %2048
      %2050 = vrot.lane.b32.xlu0 %v1983, 16
      %v2051 = vpop.permute.xlu0 %2050
      %2052 = vrot.lane.b32.xlu0 %v1985, 16
      %v2053 = vpop.permute.xlu0 %2052
      %2054 = vrot.lane.b32.xlu0 %v1988, 16
      %v2055 = vpop.permute.xlu0 %2054
      %2056 = vrot.lane.b32.xlu0 %v1990, 16
      %v2057 = vpop.permute.xlu0 %2056
      %2058 = vrot.lane.b32.xlu0 %v1993, 16
      %v2059 = vpop.permute.xlu0 %2058
      %2060 = vrot.lane.b32.xlu0 %v1995, 16
      %v2061 = vpop.permute.xlu0 %2060
      %2062 = vrot.lane.b32.xlu0 %v1998, 16
      %v2063 = vpop.permute.xlu0 %2062
      %2064 = vrot.lane.b32.xlu0 %v2000, 16
      %v2065 = vpop.permute.xlu0 %2064
      %2066 = vrot.lane.b32.xlu0 %v2003, 16
      %v2067 = vpop.permute.xlu0 %2066
      %2068 = vrot.lane.b32.xlu0 %v2005, 16
      %v2069 = vpop.permute.xlu0 %2068
      %2070 = vrot.lane.b32.xlu0 %v2008, 16
      %v2071 = vpop.permute.xlu0 %2070
      %2072 = vrot.lane.b32.xlu0 %v2010, 16
      %v2073 = vpop.permute.xlu0 %2072
      %2074 = vrot.lane.b32.xlu0 %v2013, 16
      %v2075 = vpop.permute.xlu0 %2074
      %2076 = vrot.lane.b32.xlu0 %v2015, 16
      %v2077 = vpop.permute.xlu0 %2076
      %2078 = vrot.lane.b32.xlu0 %v2018, 16
      %v2079 = vpop.permute.xlu0 %2078
      %2080 = vrot.lane.b32.xlu0 %v2020, 16
      %v2081 = vpop.permute.xlu0 %2080
      %2082 = vrot.lane.b32.xlu0 %v2023, 16
      %v2083 = vpop.permute.xlu0 %2082
      %2084 = vrot.lane.b32.xlu0 %v2025, 16
      %v2085 = vpop.permute.xlu0 %2084
      %v2116 = vrot.slane %v1889, 2
      %v2117 = vrot.slane %v1795, 2
      %v2118 = vsel %vm782, %v2116, %v2117
      %v2119 = vrot.slane %v1905, 2
      %v2120 = vsel %vm782, %v2117, %v2119
      %v2121 = vrot.slane %v1890, 2
      %v2122 = vrot.slane %v1798, 2
      %v2123 = vsel %vm782, %v2121, %v2122
      %v2124 = vrot.slane %v1906, 2
      %v2125 = vsel %vm782, %v2122, %v2124
      %v2126 = vrot.slane %v1891, 2
      %v2127 = vrot.slane %v1801, 2
      %v2128 = vsel %vm782, %v2126, %v2127
      %v2129 = vrot.slane %v1907, 2
      %v2130 = vsel %vm782, %v2127, %v2129
      %v2131 = vrot.slane %v1892, 2
      %v2132 = vrot.slane %v1804, 2
      %v2133 = vsel %vm782, %v2131, %v2132
      %v2134 = vrot.slane %v1908, 2
      %v2135 = vsel %vm782, %v2132, %v2134
      %v2136 = vrot.slane %v1893, 2
      %v2137 = vrot.slane %v1807, 2
      %v2138 = vsel %vm782, %v2136, %v2137
      %v2139 = vrot.slane %v1909, 2
      %v2140 = vsel %vm782, %v2137, %v2139
      %v2141 = vrot.slane %v1894, 2
      %v2142 = vrot.slane %v1810, 2
      %v2143 = vsel %vm782, %v2141, %v2142
      %v2144 = vrot.slane %v1910, 2
      %v2145 = vsel %vm782, %v2142, %v2144
      %v2146 = vrot.slane %v1895, 2
      %v2147 = vrot.slane %v1813, 2
      %v2148 = vsel %vm782, %v2146, %v2147
      %v2149 = vrot.slane %v1911, 2
      %v2150 = vsel %vm782, %v2147, %v2149
      %v2151 = vrot.slane %v1896, 2
      %v2152 = vrot.slane %v1816, 2
      %v2153 = vsel %vm782, %v2151, %v2152
      %v2154 = vrot.slane %v1912, 2
      %v2155 = vsel %vm782, %v2152, %v2154
      %v2156 = vrot.slane %v1897, 2
      %v2157 = vrot.slane %v1819, 2
      %v2158 = vsel %vm782, %v2156, %v2157
      %v2159 = vrot.slane %v1913, 2
      %v2160 = vsel %vm782, %v2157, %v2159
      %v2161 = vrot.slane %v1898, 2
      %v2162 = vrot.slane %v1822, 2
      %v2163 = vsel %vm782, %v2161, %v2162
      %v2164 = vrot.slane %v1914, 2
      %v2165 = vsel %vm782, %v2162, %v2164
      %v2166 = vrot.slane %v1899, 2
      %v2167 = vrot.slane %v1825, 2
      %v2168 = vsel %vm782, %v2166, %v2167
      %v2169 = vrot.slane %v1915, 2
      %v2170 = vsel %vm782, %v2167, %v2169
      %v2171 = vrot.slane %v1900, 2
      %v2172 = vrot.slane %v1828, 2
      %v2173 = vsel %vm782, %v2171, %v2172
      %v2174 = vrot.slane %v1916, 2
      %v2175 = vsel %vm782, %v2172, %v2174
      %v2176 = vrot.slane %v1901, 2
      %v2177 = vrot.slane %v1831, 2
      %v2178 = vsel %vm782, %v2176, %v2177
      %v2179 = vrot.slane %v1917, 2
      %v2180 = vsel %vm782, %v2177, %v2179
      %v2181 = vrot.slane %v1902, 2
      %v2182 = vrot.slane %v1834, 2
      %v2183 = vsel %vm782, %v2181, %v2182
      %v2184 = vrot.slane %v1918, 2
      %v2185 = vsel %vm782, %v2182, %v2184
      %v2186 = vrot.slane %v1903, 2
      %v2187 = vrot.slane %v1837, 2
      %v2188 = vsel %vm782, %v2186, %v2187
      %v2189 = vrot.slane %v1919, 2
      %v2190 = vsel %vm782, %v2187, %v2189
      %2191 = vrot.lane.b32.xlu0 %v2118, 32
      %v2192 = vpop.permute.xlu0 %2191
      %2193 = vrot.lane.b32.xlu0 %v2120, 32
      %v2194 = vpop.permute.xlu0 %2193
      %2195 = vrot.lane.b32.xlu0 %v2123, 32
      %v2196 = vpop.permute.xlu0 %2195
      %2197 = vrot.lane.b32.xlu0 %v2125, 32
      %v2198 = vpop.permute.xlu0 %2197
      %2199 = vrot.lane.b32.xlu0 %v2128, 32
      %v2200 = vpop.permute.xlu0 %2199
      %2201 = vrot.lane.b32.xlu0 %v2130, 32
      %v2202 = vpop.permute.xlu0 %2201
      %2203 = vrot.lane.b32.xlu0 %v2133, 32
      %v2204 = vpop.permute.xlu0 %2203
      %2205 = vrot.lane.b32.xlu0 %v2135, 32
      %v2206 = vpop.permute.xlu0 %2205
      %2207 = vrot.lane.b32.xlu0 %v2138, 32
      %v2208 = vpop.permute.xlu0 %2207
      %2209 = vrot.lane.b32.xlu0 %v2140, 32
      %v2210 = vpop.permute.xlu0 %2209
      %2211 = vrot.lane.b32.xlu0 %v2143, 32
      %v2212 = vpop.permute.xlu0 %2211
      %2213 = vrot.lane.b32.xlu0 %v2145, 32
      %v2214 = vpop.permute.xlu0 %2213
      %2215 = vrot.lane.b32.xlu0 %v2148, 32
      %v2216 = vpop.permute.xlu0 %2215
      %2217 = vrot.lane.b32.xlu0 %v2150, 32
      %v2218 = vpop.permute.xlu0 %2217
      %2219 = vrot.lane.b32.xlu0 %v2153, 32
      %v2220 = vpop.permute.xlu0 %2219
      %2221 = vrot.lane.b32.xlu0 %v2155, 32
      %v2222 = vpop.permute.xlu0 %2221
      %2223 = vrot.lane.b32.xlu0 %v2158, 32
      %v2224 = vpop.permute.xlu0 %2223
      %2225 = vrot.lane.b32.xlu0 %v2160, 32
      %v2226 = vpop.permute.xlu0 %2225
      %2227 = vrot.lane.b32.xlu0 %v2163, 32
      %v2228 = vpop.permute.xlu0 %2227
      %2229 = vrot.lane.b32.xlu0 %v2165, 32
      %v2230 = vpop.permute.xlu0 %2229
      %2231 = vrot.lane.b32.xlu0 %v2168, 32
      %v2232 = vpop.permute.xlu0 %2231
      %2233 = vrot.lane.b32.xlu0 %v2170, 32
      %v2234 = vpop.permute.xlu0 %2233
      %2235 = vrot.lane.b32.xlu0 %v2173, 32
      %v2236 = vpop.permute.xlu0 %2235
      %2237 = vrot.lane.b32.xlu0 %v2175, 32
      %v2238 = vpop.permute.xlu0 %2237
      %2239 = vrot.lane.b32.xlu0 %v2178, 32
      %v2240 = vpop.permute.xlu0 %2239
      %2241 = vrot.lane.b32.xlu0 %v2180, 32
      %v2242 = vpop.permute.xlu0 %2241
      %2243 = vrot.lane.b32.xlu0 %v2183, 32
      %v2244 = vpop.permute.xlu0 %2243
      %2245 = vrot.lane.b32.xlu0 %v2185, 32
      %v2246 = vpop.permute.xlu0 %2245
      %2247 = vrot.lane.b32.xlu0 %v2188, 32
      %v2248 = vpop.permute.xlu0 %2247
      %2249 = vrot.lane.b32.xlu0 %v2190, 32
      %v2250 = vpop.permute.xlu0 %2249
      %v2281 = vsel %vm959, %v1889, %v2027
      %v2282 = vsel %vm959, %v1795, %v2029
      %v2283 = vsel %vm959, %v1890, %v2031
      %v2284 = vsel %vm959, %v1798, %v2033
      %v2285 = vsel %vm959, %v1891, %v2035
      %v2286 = vsel %vm959, %v1801, %v2037
      %v2287 = vsel %vm959, %v1892, %v2039
      %v2288 = vsel %vm959, %v1804, %v2041
      %v2289 = vsel %vm959, %v1893, %v2043
      %v2290 = vsel %vm959, %v1807, %v2045
      %v2291 = vsel %vm959, %v1894, %v2047
      %v2292 = vsel %vm959, %v1810, %v2049
      %v2293 = vsel %vm959, %v1895, %v2051
      %v2294 = vsel %vm959, %v1813, %v2053
      %v2295 = vsel %vm959, %v1896, %v2055
      %v2296 = vsel %vm959, %v1816, %v2057
      %v2297 = vsel %vm959, %v1897, %v2059
      %v2298 = vsel %vm959, %v1819, %v2061
      %v2299 = vsel %vm959, %v1898, %v2063
      %v2300 = vsel %vm959, %v1822, %v2065
      %v2301 = vsel %vm959, %v1899, %v2067
      %v2302 = vsel %vm959, %v1825, %v2069
      %v2303 = vsel %vm959, %v1900, %v2071
      %v2304 = vsel %vm959, %v1828, %v2073
      %v2305 = vsel %vm959, %v1901, %v2075
      %v2306 = vsel %vm959, %v1831, %v2077
      %v2307 = vsel %vm959, %v1902, %v2079
      %v2308 = vsel %vm959, %v1834, %v2081
      %v2309 = vsel %vm959, %v1903, %v2083
      %v2310 = vsel %vm959, %v1837, %v2085
      %v2311 = vsel %vm992, %v2281, %v2192
      %v2312 = vsel %vm992, %v2282, %v2194
      %v2313 = vsel %vm992, %v2283, %v2196
      %v2314 = vsel %vm992, %v2284, %v2198
      %v2315 = vsel %vm992, %v2285, %v2200
      %v2316 = vsel %vm992, %v2286, %v2202
      %v2317 = vsel %vm992, %v2287, %v2204
      %v2318 = vsel %vm992, %v2288, %v2206
      %v2319 = vsel %vm992, %v2289, %v2208
      %v2320 = vsel %vm992, %v2290, %v2210
      %v2321 = vsel %vm992, %v2291, %v2212
      %v2322 = vsel %vm992, %v2292, %v2214
      %v2323 = vsel %vm992, %v2293, %v2216
      %v2324 = vsel %vm992, %v2294, %v2218
      %v2325 = vsel %vm992, %v2295, %v2220
      %v2326 = vsel %vm992, %v2296, %v2222
      %v2327 = vsel %vm992, %v2297, %v2224
      %v2328 = vsel %vm992, %v2298, %v2226
      %v2329 = vsel %vm992, %v2299, %v2228
      %v2330 = vsel %vm992, %v2300, %v2230
      %v2331 = vsel %vm992, %v2301, %v2232
      %v2332 = vsel %vm992, %v2302, %v2234
      %v2333 = vsel %vm992, %v2303, %v2236
      %v2334 = vsel %vm992, %v2304, %v2238
      %v2335 = vsel %vm992, %v2305, %v2240
      %v2336 = vsel %vm992, %v2306, %v2242
      %v2337 = vsel %vm992, %v2307, %v2244
      %v2338 = vsel %vm992, %v2308, %v2246
      %v2339 = vsel %vm992, %v2309, %v2248
      %v2340 = vsel %vm992, %v2310, %v2250
      %v2343 = vrot.slane %v1904, 1
      %v2344 = vrot.slane %v1840, 1
      %v2345 = vsel %vm605, %v2343, %v2344
      %v2346 = vrot.slane %v1920, 1
      %v2347 = vsel %vm605, %v2344, %v2346
      %2348 = vrot.lane.b32.xlu0 %v2345, 16
      %v2349 = vpop.permute.xlu0 %2348
      %2350 = vrot.lane.b32.xlu0 %v2347, 16
      %v2351 = vpop.permute.xlu0 %2350
      %v2354 = vrot.slane %v1904, 2
      %v2355 = vrot.slane %v1840, 2
      %v2356 = vsel %vm782, %v2354, %v2355
      %v2357 = vrot.slane %v1920, 2
      %v2358 = vsel %vm782, %v2355, %v2357
      %2359 = vrot.lane.b32.xlu0 %v2356, 32
      %v2360 = vpop.permute.xlu0 %2359
      %2361 = vrot.lane.b32.xlu0 %v2358, 32
      %v2362 = vpop.permute.xlu0 %2361
      %v2365 = vsel %vm959, %v1904, %v2349
      %v2366 = vsel %vm959, %v1840, %v2351
      %v2367 = vsel %vm992, %v2365, %v2360
      %v2368 = vsel %vm992, %v2366, %v2362
      %2401 = vrot.lane.b32.xlu0 %v2311, 48
      %v2402 = vpop.permute.xlu0 %2401
      %2403 = vrot.lane.b32.xlu0 %v2312, 48
      %v2404 = vpop.permute.xlu0 %2403
      %2405 = vrot.lane.b32.xlu0 %v2313, 48
      %v2406 = vpop.permute.xlu0 %2405
      %2407 = vrot.lane.b32.xlu0 %v2314, 48
      %v2408 = vpop.permute.xlu0 %2407
      %2409 = vrot.lane.b32.xlu0 %v2315, 48
      %v2410 = vpop.permute.xlu0 %2409
      %2411 = vrot.lane.b32.xlu0 %v2316, 48
      %v2412 = vpop.permute.xlu0 %2411
      %2413 = vrot.lane.b32.xlu0 %v2317, 48
      %v2414 = vpop.permute.xlu0 %2413
      %2415 = vrot.lane.b32.xlu0 %v2318, 48
      %v2416 = vpop.permute.xlu0 %2415
      %2417 = vrot.lane.b32.xlu0 %v2319, 48
      %v2418 = vpop.permute.xlu0 %2417
      %2419 = vrot.lane.b32.xlu0 %v2320, 48
      %v2420 = vpop.permute.xlu0 %2419
      %2421 = vrot.lane.b32.xlu0 %v2321, 48
      %v2422 = vpop.permute.xlu0 %2421
      %2423 = vrot.lane.b32.xlu0 %v2322, 48
      %v2424 = vpop.permute.xlu0 %2423
      %2425 = vrot.lane.b32.xlu0 %v2323, 48
      %v2426 = vpop.permute.xlu0 %2425
      %2427 = vrot.lane.b32.xlu0 %v2324, 48
      %v2428 = vpop.permute.xlu0 %2427
      %2429 = vrot.lane.b32.xlu0 %v2325, 48
      %v2430 = vpop.permute.xlu0 %2429
      %2431 = vrot.lane.b32.xlu0 %v2326, 48
      %v2432 = vpop.permute.xlu0 %2431
      %2433 = vrot.lane.b32.xlu0 %v2327, 48
      %v2434 = vpop.permute.xlu0 %2433
      %2435 = vrot.lane.b32.xlu0 %v2328, 48
      %v2436 = vpop.permute.xlu0 %2435
      %2437 = vrot.lane.b32.xlu0 %v2329, 48
      %v2438 = vpop.permute.xlu0 %2437
      %2439 = vrot.lane.b32.xlu0 %v2330, 48
      %v2440 = vpop.permute.xlu0 %2439
      %2441 = vrot.lane.b32.xlu0 %v2331, 48
      %v2442 = vpop.permute.xlu0 %2441
      %2443 = vrot.lane.b32.xlu0 %v2332, 48
      %v2444 = vpop.permute.xlu0 %2443
      %2445 = vrot.lane.b32.xlu0 %v2333, 48
      %v2446 = vpop.permute.xlu0 %2445
      %2447 = vrot.lane.b32.xlu0 %v2334, 48
      %v2448 = vpop.permute.xlu0 %2447
      %2449 = vrot.lane.b32.xlu0 %v2335, 48
      %v2450 = vpop.permute.xlu0 %2449
      %2451 = vrot.lane.b32.xlu0 %v2336, 48
      %v2452 = vpop.permute.xlu0 %2451
      %2453 = vrot.lane.b32.xlu0 %v2337, 48
      %v2454 = vpop.permute.xlu0 %2453
      %2455 = vrot.lane.b32.xlu0 %v2338, 48
      %v2456 = vpop.permute.xlu0 %2455
      %2457 = vrot.lane.b32.xlu0 %v2339, 48
      %v2458 = vpop.permute.xlu0 %2457
      %2459 = vrot.lane.b32.xlu0 %v2340, 48
      %v2460 = vpop.permute.xlu0 %2459
      %2461 = vrot.lane.b32.xlu0 %v2367, 48
      %v2462 = vpop.permute.xlu0 %2461
      %2463 = vrot.lane.b32.xlu0 %v2368, 48
      %v2464 = vpop.permute.xlu0 %2463
      %2497 = vrot.lane.b32.xlu0 %v2313, 96
      %v2498 = vpop.permute.xlu0 %2497
      %2499 = vrot.lane.b32.xlu0 %v2314, 96
      %v2500 = vpop.permute.xlu0 %2499
      %2501 = vrot.lane.b32.xlu0 %v2315, 96
      %v2502 = vpop.permute.xlu0 %2501
      %2503 = vrot.lane.b32.xlu0 %v2316, 96
      %v2504 = vpop.permute.xlu0 %2503
      %2505 = vrot.lane.b32.xlu0 %v2317, 96
      %v2506 = vpop.permute.xlu0 %2505
      %2507 = vrot.lane.b32.xlu0 %v2318, 96
      %v2508 = vpop.permute.xlu0 %2507
      %2509 = vrot.lane.b32.xlu0 %v2319, 96
      %v2510 = vpop.permute.xlu0 %2509
      %2511 = vrot.lane.b32.xlu0 %v2320, 96
      %v2512 = vpop.permute.xlu0 %2511
      %2513 = vrot.lane.b32.xlu0 %v2321, 96
      %v2514 = vpop.permute.xlu0 %2513
      %2515 = vrot.lane.b32.xlu0 %v2322, 96
      %v2516 = vpop.permute.xlu0 %2515
      %2517 = vrot.lane.b32.xlu0 %v2323, 96
      %v2518 = vpop.permute.xlu0 %2517
      %2519 = vrot.lane.b32.xlu0 %v2324, 96
      %v2520 = vpop.permute.xlu0 %2519
      %2521 = vrot.lane.b32.xlu0 %v2325, 96
      %v2522 = vpop.permute.xlu0 %2521
      %2523 = vrot.lane.b32.xlu0 %v2326, 96
      %v2524 = vpop.permute.xlu0 %2523
      %2525 = vrot.lane.b32.xlu0 %v2327, 96
      %v2526 = vpop.permute.xlu0 %2525
      %2527 = vrot.lane.b32.xlu0 %v2328, 96
      %v2528 = vpop.permute.xlu0 %2527
      %2529 = vrot.lane.b32.xlu0 %v2329, 96
      %v2530 = vpop.permute.xlu0 %2529
      %2531 = vrot.lane.b32.xlu0 %v2330, 96
      %v2532 = vpop.permute.xlu0 %2531
      %2533 = vrot.lane.b32.xlu0 %v2331, 96
      %v2534 = vpop.permute.xlu0 %2533
      %2535 = vrot.lane.b32.xlu0 %v2332, 96
      %v2536 = vpop.permute.xlu0 %2535
      %2537 = vrot.lane.b32.xlu0 %v2333, 96
      %v2538 = vpop.permute.xlu0 %2537
      %2539 = vrot.lane.b32.xlu0 %v2334, 96
      %v2540 = vpop.permute.xlu0 %2539
      %2541 = vrot.lane.b32.xlu0 %v2335, 96
      %v2542 = vpop.permute.xlu0 %2541
      %2543 = vrot.lane.b32.xlu0 %v2336, 96
      %v2544 = vpop.permute.xlu0 %2543
      %2545 = vrot.lane.b32.xlu0 %v2337, 96
      %v2546 = vpop.permute.xlu0 %2545
      %2547 = vrot.lane.b32.xlu0 %v2338, 96
      %v2548 = vpop.permute.xlu0 %2547
      %2549 = vrot.lane.b32.xlu0 %v2339, 96
      %v2550 = vpop.permute.xlu0 %2549
      %2551 = vrot.lane.b32.xlu0 %v2340, 96
      %v2552 = vpop.permute.xlu0 %2551
      %2553 = vrot.lane.b32.xlu0 %v2367, 96
      %v2554 = vpop.permute.xlu0 %2553
      %2555 = vrot.lane.b32.xlu0 %v2368, 96
      %v2556 = vpop.permute.xlu0 %2555
      %v2587 = vsel %vm1279, %v993, %v2402
      %v2588 = vsel %vm1279, %v994, %v2404
      %v2589 = vsel %vm1279, %v2311, %v2406
      %v2590 = vsel %vm1279, %v2312, %v2408
      %v2591 = vsel %vm1279, %v2313, %v2410
      %v2592 = vsel %vm1279, %v2314, %v2412
      %v2593 = vsel %vm1279, %v2315, %v2414
      %v2594 = vsel %vm1279, %v2316, %v2416
      %v2595 = vsel %vm1279, %v2317, %v2418
      %v2596 = vsel %vm1279, %v2318, %v2420
      %v2597 = vsel %vm1279, %v2319, %v2422
      %v2598 = vsel %vm1279, %v2320, %v2424
      %v2599 = vsel %vm1279, %v2321, %v2426
      %v2600 = vsel %vm1279, %v2322, %v2428
      %v2601 = vsel %vm1279, %v2323, %v2430
      %v2602 = vsel %vm1279, %v2324, %v2432
      %v2603 = vsel %vm1279, %v2325, %v2434
      %v2604 = vsel %vm1279, %v2326, %v2436
      %v2605 = vsel %vm1279, %v2327, %v2438
      %v2606 = vsel %vm1279, %v2328, %v2440
      %v2607 = vsel %vm1279, %v2329, %v2442
      %v2608 = vsel %vm1279, %v2330, %v2444
      %v2609 = vsel %vm1279, %v2331, %v2446
      %v2610 = vsel %vm1279, %v2332, %v2448
      %v2611 = vsel %vm1279, %v2333, %v2450
      %v2612 = vsel %vm1279, %v2334, %v2452
      %v2613 = vsel %vm1279, %v2335, %v2454
      %v2614 = vsel %vm1279, %v2336, %v2456
      %v2615 = vsel %vm1279, %v2337, %v2458
      %v2616 = vsel %vm1279, %v2338, %v2460
      %v2617 = vsel %vm1279, %v2339, %v2462
      %v2618 = vsel %vm1279, %v2340, %v2464
      %v2619 = vsel %vm1312, %v2587, %v2498
      %v2620 = vsel %vm1312, %v2588, %v2500
      %v2621 = vsel %vm1312, %v2589, %v2502
      %v2622 = vsel %vm1312, %v2590, %v2504
      %v2623 = vsel %vm1312, %v2591, %v2506
      %v2624 = vsel %vm1312, %v2592, %v2508
      %v2625 = vsel %vm1312, %v2593, %v2510
      %v2626 = vsel %vm1312, %v2594, %v2512
      %v2627 = vsel %vm1312, %v2595, %v2514
      %v2628 = vsel %vm1312, %v2596, %v2516
      %v2629 = vsel %vm1312, %v2597, %v2518
      %v2630 = vsel %vm1312, %v2598, %v2520
      %v2631 = vsel %vm1312, %v2599, %v2522
      %v2632 = vsel %vm1312, %v2600, %v2524
      %v2633 = vsel %vm1312, %v2601, %v2526
      %v2634 = vsel %vm1312, %v2602, %v2528
      %v2635 = vsel %vm1312, %v2603, %v2530
      %v2636 = vsel %vm1312, %v2604, %v2532
      %v2637 = vsel %vm1312, %v2605, %v2534
      %v2638 = vsel %vm1312, %v2606, %v2536
      %v2639 = vsel %vm1312, %v2607, %v2538
      %v2640 = vsel %vm1312, %v2608, %v2540
      %v2641 = vsel %vm1312, %v2609, %v2542
      %v2642 = vsel %vm1312, %v2610, %v2544
      %v2643 = vsel %vm1312, %v2611, %v2546
      %v2644 = vsel %vm1312, %v2612, %v2548
      %v2645 = vsel %vm1312, %v2613, %v2550
      %v2646 = vsel %vm1312, %v2614, %v2552
      %v2647 = vsel %vm1312, %v2615, %v2554
      %v2648 = vsel %vm1312, %v2616, %v2556
      %v2649 = vsel %vm1312, %v2617, %v1244
      %v2650 = vsel %vm1312, %v2618, %v1246
      %v2651 = vpack.c.bf16 %v2620, %v2619
      %v2652 = vpack.c.bf16 %v2500, %v2498
      %v2653 = vpack.c.bf16 %v2622, %v2621
      %v2654 = vpack.c.bf16 %v2504, %v2502
      %v2655 = vpack.c.bf16 %v2624, %v2623
      %v2656 = vpack.c.bf16 %v2508, %v2506
      %v2657 = vpack.c.bf16 %v2626, %v2625
      %v2658 = vpack.c.bf16 %v2512, %v2510
      %v2659 = vpack.c.bf16 %v2628, %v2627
      %v2660 = vpack.c.bf16 %v2516, %v2514
      %v2661 = vpack.c.bf16 %v2630, %v2629
      %v2662 = vpack.c.bf16 %v2520, %v2518
      %v2663 = vpack.c.bf16 %v2632, %v2631
      %v2664 = vpack.c.bf16 %v2524, %v2522
      %v2665 = vpack.c.bf16 %v2634, %v2633
      %v2666 = vpack.c.bf16 %v2528, %v2526
      %v2667 = vpack.c.bf16 %v2636, %v2635
      %v2668 = vpack.c.bf16 %v2532, %v2530
      %v2669 = vpack.c.bf16 %v2638, %v2637
      %v2670 = vpack.c.bf16 %v2536, %v2534
      %v2671 = vpack.c.bf16 %v2640, %v2639
      %v2672 = vpack.c.bf16 %v2540, %v2538
      %v2673 = vpack.c.bf16 %v2642, %v2641
      %v2674 = vpack.c.bf16 %v2544, %v2542
      %v2675 = vpack.c.bf16 %v2644, %v2643
      %v2676 = vpack.c.bf16 %v2548, %v2546
      %v2677 = vpack.c.bf16 %v2646, %v2645
      %v2678 = vpack.c.bf16 %v2552, %v2550
      %v2679 = vpack.c.bf16 %v2648, %v2647
      %v2680 = vpack.c.bf16 %v2556, %v2554
      %v2681 = vpack.c.bf16 %v2650, %v2649
      %v2683 = vlaneseq
      %v2684 = vshrl.u32 %v2683, 7
      %v2685 = vsub.s32 0, %v2684
      %v2686 = vrot.slane %v1760, %v2685
      %v2706 = vunpack.c.l.b16 %v1742
      %v2707 = vunpack.c.l.b16 %v1743
      %v2708 = vunpack.c.l.b16 %v1744
      %v2709 = vunpack.c.l.b16 %v1745
      %v2710 = vunpack.c.l.b16 %v1746
      %v2711 = vunpack.c.l.b16 %v1747
      %v2712 = vunpack.c.l.b16 %v1748
      %v2713 = vunpack.c.l.b16 %v1749
      %v2714 = vunpack.c.l.b16 %v1750
      %v2715 = vunpack.c.l.b16 %v1751
      %v2716 = vunpack.c.l.b16 %v1752
      %v2717 = vunpack.c.l.b16 %v1753
      %v2718 = vunpack.c.l.b16 %v1754
      %v2719 = vunpack.c.l.b16 %v1755
      %v2720 = vunpack.c.l.b16 %v1756
      %v2721 = vunpack.c.l.b16 %v1757
      %v2722 = vunpack.c.l.b16 %v1758
      %v2723 = vunpack.c.l.b16 %v1759
      %v2724 = vpack.c.b16 %v2707, %v2706
      %v2725 = vpack.c.b16 %v2709, %v2708
      %v2726 = vpack.c.b16 %v2711, %v2710
      %v2727 = vpack.c.b16 %v2713, %v2712
      %v2728 = vpack.c.b16 %v2715, %v2714
      %v2729 = vpack.c.b16 %v2717, %v2716
      %v2730 = vpack.c.b16 %v2719, %v2718
      %v2731 = vpack.c.b16 %v2721, %v2720
      %v2732 = vpack.c.b16 %v2723, %v2722
      %v2743 = vsel %vm959, %v2652, 0
      %v2746 = vsel %vm959, %v2654, 0
      %v2749 = vsel %vm959, %v2656, 0
      %v2752 = vsel %vm959, %v2658, 0
      %v2755 = vsel %vm959, %v2660, 0
      %v2758 = vsel %vm959, %v2662, 0
      %v2761 = vsel %vm959, %v2664, 0
      %v2764 = vsel %vm959, %v2666, 0
      %v2767 = vsel %vm959, %v2668, 0
      %v2770 = vsel %vm959, %v2670, 0
      %v2773 = vsel %vm959, %v2672, 0
      %v2776 = vsel %vm959, %v2674, 0
      %v2779 = vsel %vm959, %v2676, 0
      %v2782 = vsel %vm959, %v2678, 0
      %v2785 = vsel %vm959, %v2680, 0
      %2787 = vmatprep.subr.bf16.mxu0 0
      %2788 = vmatpush1.bf16.msra.mxu0 %v2731
      %2789 = vmatprep.subr.bf16.mxu0 0
      %2790 = vmatpush1.bf16.msra.mxu0 %v2730
      %2791 = vmatprep.subr.bf16.mxu0 0
      %2792 = vmatpush1.bf16.msra.mxu0 %v2729
      %2793 = vmatprep.subr.bf16.mxu0 0
      %2794 = vmatpush1.bf16.msra.mxu0 %v2728
      %2795 = vmatprep.subr.bf16.mxu0 0
      %2796 = vmatpush1.bf16.msra.mxu0 %v2727
      %2797 = vmatprep.subr.bf16.mxu0 0
      %2798 = vmatpush1.bf16.msra.mxu0 %v2726
      %2799 = vmatprep.subr.bf16.mxu0 0
      %2800 = vmatpush1.bf16.msra.mxu0 %v2725
      %2801 = vmatprep.subr.bf16.mxu0 0
      %2802 = vmatpush1.bf16.msra.mxu0 %v2724
      %2803 = vmatprep.subr.bf16.mxu0 0
      %2804 = vmatpush2.bf16.msra.mxu0 0
      %2805 = vmatprep.subr.bf16.mxu0 0
      %2806 = vmatpush2.bf16.msra.mxu0 0
      %2807 = vmatprep.subr.bf16.mxu0 0
      %2808 = vmatpush2.bf16.msra.mxu0 0
      %2809 = vmatprep.subr.bf16.mxu0 0
      %2810 = vmatpush2.bf16.msra.mxu0 0
      %2811 = vmatprep.subr.bf16.mxu0 0
      %2812 = vmatpush2.bf16.msra.mxu0 0
      %2813 = vmatprep.subr.bf16.mxu0 0
      %2814 = vmatpush2.bf16.msra.mxu0 0
      %2815 = vmatprep.subr.bf16.mxu0 0
      %2816 = vmatpush2.bf16.msra.mxu0 0
      %2817 = vmatprep.subr.bf16.mxu0 0
      %2818 = vmatpush2.bf16.msra.mxu0 %v2732
      %2819 = vmatprep.mubr.bf16.mxu0 %v2743
      %2820 = vmatmul.mubr.bf16.gmra.mxu0 %v2651
      %v2821 = vpop.f32.mrf.mxu0
      %v2822 = vadd.f32 %v2686, %v2821
      %v2823 = vpop.f32.mrf.mxu0
      %v2824 = vpop.f32.mrf.mxu0
      %v2825 = vadd.f32 %v2686, %v2824
      %v2826 = vpop.f32.mrf.mxu0
      %2827 = vmatprep.mubr.bf16.mxu0 %v2746
      %2828 = vmatmul.mubr.bf16.gmra.mxu0 %v2653
      %v2829 = vpop.f32.mrf.mxu0
      %v2830 = vadd.f32 %v2686, %v2829
      %v2831 = vpop.f32.mrf.mxu0
      %v2832 = vpop.f32.mrf.mxu0
      %v2833 = vadd.f32 %v2686, %v2832
      %v2834 = vpop.f32.mrf.mxu0
      %2835 = vmatprep.mubr.bf16.mxu0 %v2749
      %2836 = vmatmul.mubr.bf16.gmra.mxu0 %v2655
      %v2837 = vpop.f32.mrf.mxu0
      %v2838 = vadd.f32 %v2686, %v2837
      %v2839 = vpop.f32.mrf.mxu0
      %v2840 = vpop.f32.mrf.mxu0
      %v2841 = vadd.f32 %v2686, %v2840
      %v2842 = vpop.f32.mrf.mxu0
      %2843 = vmatprep.mubr.bf16.mxu0 %v2752
      %2844 = vmatmul.mubr.bf16.gmra.mxu0 %v2657
      %v2845 = vpop.f32.mrf.mxu0
      %v2846 = vadd.f32 %v2686, %v2845
      %v2847 = vpop.f32.mrf.mxu0
      %v2848 = vpop.f32.mrf.mxu0
      %v2849 = vadd.f32 %v2686, %v2848
      %v2850 = vpop.f32.mrf.mxu0
      %2851 = vmatprep.mubr.bf16.mxu0 %v2755
      %2852 = vmatmul.mubr.bf16.gmra.mxu0 %v2659
      %v2853 = vpop.f32.mrf.mxu0
      %v2854 = vadd.f32 %v2686, %v2853
      %v2855 = vpop.f32.mrf.mxu0
      %v2856 = vpop.f32.mrf.mxu0
      %v2857 = vadd.f32 %v2686, %v2856
      %v2858 = vpop.f32.mrf.mxu0
      %2859 = vmatprep.mubr.bf16.mxu0 %v2758
      %2860 = vmatmul.mubr.bf16.gmra.mxu0 %v2661
      %v2861 = vpop.f32.mrf.mxu0
      %v2862 = vadd.f32 %v2686, %v2861
      %v2863 = vpop.f32.mrf.mxu0
      %v2864 = vpop.f32.mrf.mxu0
      %v2865 = vadd.f32 %v2686, %v2864
      %v2866 = vpop.f32.mrf.mxu0
      %2867 = vmatprep.mubr.bf16.mxu0 %v2761
      %2868 = vmatmul.mubr.bf16.gmra.mxu0 %v2663
      %v2869 = vpop.f32.mrf.mxu0
      %v2870 = vadd.f32 %v2686, %v2869
      %v2871 = vpop.f32.mrf.mxu0
      %v2872 = vpop.f32.mrf.mxu0
      %v2873 = vadd.f32 %v2686, %v2872
      %v2874 = vpop.f32.mrf.mxu0
      %2875 = vmatprep.mubr.bf16.mxu0 %v2764
      %2876 = vmatmul.mubr.bf16.gmra.mxu0 %v2665
      %v2877 = vpop.f32.mrf.mxu0
      %v2878 = vadd.f32 %v2686, %v2877
      %v2879 = vpop.f32.mrf.mxu0
      %v2880 = vpop.f32.mrf.mxu0
      %v2881 = vadd.f32 %v2686, %v2880
      %v2882 = vpop.f32.mrf.mxu0
      %2883 = vmatprep.mubr.bf16.mxu0 %v2767
      %2884 = vmatmul.mubr.bf16.gmra.mxu0 %v2667
      %v2885 = vpop.f32.mrf.mxu0
      %v2886 = vadd.f32 %v2686, %v2885
      %v2887 = vpop.f32.mrf.mxu0
      %v2888 = vpop.f32.mrf.mxu0
      %v2889 = vadd.f32 %v2686, %v2888
      %v2890 = vpop.f32.mrf.mxu0
      %2891 = vmatprep.mubr.bf16.mxu0 %v2770
      %2892 = vmatmul.mubr.bf16.gmra.mxu0 %v2669
      %v2893 = vpop.f32.mrf.mxu0
      %v2894 = vadd.f32 %v2686, %v2893
      %v2895 = vpop.f32.mrf.mxu0
      %v2896 = vpop.f32.mrf.mxu0
      %v2897 = vadd.f32 %v2686, %v2896
      %v2898 = vpop.f32.mrf.mxu0
      %2899 = vmatprep.mubr.bf16.mxu0 %v2773
      %2900 = vmatmul.mubr.bf16.gmra.mxu0 %v2671
      %v2901 = vpop.f32.mrf.mxu0
      %v2902 = vadd.f32 %v2686, %v2901
      %v2903 = vpop.f32.mrf.mxu0
      %v2904 = vpop.f32.mrf.mxu0
      %v2905 = vadd.f32 %v2686, %v2904
      %v2906 = vpop.f32.mrf.mxu0
      %2907 = vmatprep.mubr.bf16.mxu0 %v2776
      %2908 = vmatmul.mubr.bf16.gmra.mxu0 %v2673
      %v2909 = vpop.f32.mrf.mxu0
      %v2910 = vadd.f32 %v2686, %v2909
      %v2911 = vpop.f32.mrf.mxu0
      %v2912 = vpop.f32.mrf.mxu0
      %v2913 = vadd.f32 %v2686, %v2912
      %v2914 = vpop.f32.mrf.mxu0
      %2915 = vmatprep.mubr.bf16.mxu0 %v2779
      %2916 = vmatmul.mubr.bf16.gmra.mxu0 %v2675
      %v2917 = vpop.f32.mrf.mxu0
      %v2918 = vadd.f32 %v2686, %v2917
      %v2919 = vpop.f32.mrf.mxu0
      %v2920 = vpop.f32.mrf.mxu0
      %v2921 = vadd.f32 %v2686, %v2920
      %v2922 = vpop.f32.mrf.mxu0
      %2923 = vmatprep.mubr.bf16.mxu0 %v2782
      %2924 = vmatmul.mubr.bf16.gmra.mxu0 %v2677
      %v2925 = vpop.f32.mrf.mxu0
      %v2926 = vadd.f32 %v2686, %v2925
      %v2927 = vpop.f32.mrf.mxu0
      %v2928 = vpop.f32.mrf.mxu0
      %v2929 = vadd.f32 %v2686, %v2928
      %v2930 = vpop.f32.mrf.mxu0
      %2931 = vmatprep.mubr.bf16.mxu0 %v2785
      %2932 = vmatmul.mubr.bf16.gmra.mxu0 %v2679
      %v2933 = vpop.f32.mrf.mxu0
      %v2934 = vadd.f32 %v2686, %v2933
      %v2935 = vpop.f32.mrf.mxu0
      %v2936 = vpop.f32.mrf.mxu0
      %v2937 = vadd.f32 %v2686, %v2936
      %v2938 = vpop.f32.mrf.mxu0
      %2939 = vmatprep.mubr.bf16.mxu0 %v1483
      %2940 = vmatmul.mubr.bf16.gmra.mxu0 %v2681
      %v2941 = vpop.f32.mrf.mxu0
      %v2942 = vadd.f32 %v2686, %v2941
      %v2943 = vpop.f32.mrf.mxu0
      %v2944 = vpop.f32.mrf.mxu0
      %v2945 = vadd.f32 %v2686, %v2944
      %v2946 = vpop.f32.mrf.mxu0
      %2947 = vdwg.mxu0
      %v2948 = vmul.f32 %v2822, 0.1
      %v2949 = vmul.f32 %v2825, 0.1
      %v2950 = vmul.f32 %v2830, 0.1
      %v2951 = vmul.f32 %v2833, 0.1
      %v2952 = vmul.f32 %v2838, 0.1
      %v2953 = vmul.f32 %v2841, 0.1
      %v2954 = vmul.f32 %v2846, 0.1
      %v2955 = vmul.f32 %v2849, 0.1
      %v2956 = vmul.f32 %v2854, 0.1
      %v2957 = vmul.f32 %v2857, 0.1
      %v2958 = vmul.f32 %v2862, 0.1
      %v2959 = vmul.f32 %v2865, 0.1
      %v2960 = vmul.f32 %v2870, 0.1
      %v2961 = vmul.f32 %v2873, 0.1
      %v2962 = vmul.f32 %v2878, 0.1
      %v2963 = vmul.f32 %v2881, 0.1
      %v2964 = vmul.f32 %v2886, 0.1
      %v2965 = vmul.f32 %v2889, 0.1
      %v2966 = vmul.f32 %v2894, 0.1
      %v2967 = vmul.f32 %v2897, 0.1
      %v2968 = vmul.f32 %v2902, 0.1
      %v2969 = vmul.f32 %v2905, 0.1
      %v2970 = vmul.f32 %v2910, 0.1
      %v2971 = vmul.f32 %v2913, 0.1
      %v2972 = vmul.f32 %v2918, 0.1
      %v2973 = vmul.f32 %v2921, 0.1
      %v2974 = vmul.f32 %v2926, 0.1
      %v2975 = vmul.f32 %v2929, 0.1
      %v2976 = vmul.f32 %v2934, 0.1
      %v2977 = vmul.f32 %v2937, 0.1
      %v2978 = vmul.f32 %v2942, 0.1
      %v2979 = vmul.f32 %v2945, 0.1
      %v2980 = vadd.f32 %v258, %v2948
      %v2981 = vadd.f32 %v259, %v2949
      %v2982 = vadd.f32 %v260, %v2950
      %v2983 = vadd.f32 %v261, %v2951
      %v2984 = vadd.f32 %v262, %v2952
      %v2985 = vadd.f32 %v263, %v2953
      %v2986 = vadd.f32 %v264, %v2954
      %v2987 = vadd.f32 %v265, %v2955
      %v2988 = vadd.f32 %v266, %v2956
      %v2989 = vadd.f32 %v267, %v2957
      %v2990 = vadd.f32 %v268, %v2958
      %v2991 = vadd.f32 %v269, %v2959
      %v2992 = vadd.f32 %v270, %v2960
      %v2993 = vadd.f32 %v271, %v2961
      %v2994 = vadd.f32 %v272, %v2962
      %v2995 = vadd.f32 %v273, %v2963
      %v2996 = vadd.f32 %v274, %v2964
      %v2997 = vadd.f32 %v275, %v2965
      %v2998 = vadd.f32 %v276, %v2966
      %v2999 = vadd.f32 %v277, %v2967
      %v3000 = vadd.f32 %v278, %v2968
      %v3001 = vadd.f32 %v279, %v2969
      %v3002 = vadd.f32 %v280, %v2970
      %v3003 = vadd.f32 %v281, %v2971
      %v3004 = vadd.f32 %v282, %v2972
      %v3005 = vadd.f32 %v283, %v2973
      %v3006 = vadd.f32 %v284, %v2974
      %v3007 = vadd.f32 %v285, %v2975
      %v3008 = vadd.f32 %v286, %v2976
      %v3009 = vadd.f32 %v287, %v2977
      %v3010 = vadd.f32 %v288, %v2978
      %v3011 = vadd.f32 %v289, %v2979
      %v3012 = vpack.c.bf16 %v2981, %v2980
      %v3013 = vpack.c.bf16 %v2983, %v2982
      %v3014 = vpack.c.bf16 %v2985, %v2984
      %v3015 = vpack.c.bf16 %v2987, %v2986
      %v3016 = vpack.c.bf16 %v2989, %v2988
      %v3017 = vpack.c.bf16 %v2991, %v2990
      %v3018 = vpack.c.bf16 %v2993, %v2992
      %v3019 = vpack.c.bf16 %v2995, %v2994
      %v3020 = vpack.c.bf16 %v2997, %v2996
      %v3021 = vpack.c.bf16 %v2999, %v2998
      %v3022 = vpack.c.bf16 %v3001, %v3000
      %v3023 = vpack.c.bf16 %v3003, %v3002
      %v3024 = vpack.c.bf16 %v3005, %v3004
      %v3025 = vpack.c.bf16 %v3007, %v3006
      %v3026 = vpack.c.bf16 %v3009, %v3008
      %v3027 = vpack.c.bf16 %v3011, %v3010
      %v3044 = vunpack.c.l.b16 %v3012
      %v3045 = vunpack.c.h.b16 %v3012
      %v3046 = vunpack.c.l.b16 %v3013
      %v3047 = vunpack.c.h.b16 %v3013
      %v3048 = vunpack.c.l.b16 %v3014
      %v3049 = vunpack.c.h.b16 %v3014
      %v3050 = vunpack.c.l.b16 %v3015
      %v3051 = vunpack.c.h.b16 %v3015
      %v3052 = vunpack.c.l.b16 %v3016
      %v3053 = vunpack.c.h.b16 %v3016
      %v3054 = vunpack.c.l.b16 %v3017
      %v3055 = vunpack.c.h.b16 %v3017
      %v3056 = vunpack.c.l.b16 %v3018
      %v3057 = vunpack.c.h.b16 %v3018
      %v3058 = vunpack.c.l.b16 %v3019
      %v3059 = vunpack.c.h.b16 %v3019
      %v3060 = vunpack.c.l.b16 %v3020
      %v3061 = vunpack.c.h.b16 %v3020
      %v3062 = vunpack.c.l.b16 %v3021
      %v3063 = vunpack.c.h.b16 %v3021
      %v3064 = vunpack.c.l.b16 %v3022
      %v3065 = vunpack.c.h.b16 %v3022
      %v3066 = vunpack.c.l.b16 %v3023
      %v3067 = vunpack.c.h.b16 %v3023
      %v3068 = vunpack.c.l.b16 %v3024
      %v3069 = vunpack.c.h.b16 %v3024
      %v3070 = vunpack.c.l.b16 %v3025
      %v3071 = vunpack.c.h.b16 %v3025
      %v3072 = vunpack.c.l.b16 %v3026
      %v3073 = vunpack.c.h.b16 %v3026
      %v3074 = vunpack.c.l.b16 %v3027
      %v3075 = vunpack.c.h.b16 %v3027
      %v3076 = vpack.c.b16 %v3044, %v3044
      %v3077 = vpack.c.b16 %v3045, %v3045
      %v3078 = vpack.c.b16 %v3046, %v3046
      %v3079 = vpack.c.b16 %v3047, %v3047
      %v3080 = vpack.c.b16 %v3048, %v3048
      %v3081 = vpack.c.b16 %v3049, %v3049
      %v3082 = vpack.c.b16 %v3050, %v3050
      %v3083 = vpack.c.b16 %v3051, %v3051
      %v3084 = vpack.c.b16 %v3052, %v3052
      %v3085 = vpack.c.b16 %v3053, %v3053
      %v3086 = vpack.c.b16 %v3054, %v3054
      %v3087 = vpack.c.b16 %v3055, %v3055
      %v3088 = vpack.c.b16 %v3056, %v3056
      %v3089 = vpack.c.b16 %v3057, %v3057
      %v3090 = vpack.c.b16 %v3058, %v3058
      %v3091 = vpack.c.b16 %v3059, %v3059
      %v3092 = vpack.c.b16 %v3060, %v3060
      %v3093 = vpack.c.b16 %v3061, %v3061
      %v3094 = vpack.c.b16 %v3062, %v3062
      %v3095 = vpack.c.b16 %v3063, %v3063
      %v3096 = vpack.c.b16 %v3064, %v3064
      %v3097 = vpack.c.b16 %v3065, %v3065
      %v3098 = vpack.c.b16 %v3066, %v3066
      %v3099 = vpack.c.b16 %v3067, %v3067
      %v3100 = vpack.c.b16 %v3068, %v3068
      %v3101 = vpack.c.b16 %v3069, %v3069
      %v3102 = vpack.c.b16 %v3070, %v3070
      %v3103 = vpack.c.b16 %v3071, %v3071
      %v3104 = vpack.c.b16 %v3072, %v3072
      %v3105 = vpack.c.b16 %v3073, %v3073
      %v3106 = vpack.c.b16 %v3074, %v3074
      %v3107 = vpack.c.b16 %v3075, %v3075
      %vm3140 = vcmask 125952
      %3141 = vst.msk [vmem:[%s224] sm:$0xf] %vm3140, %v3076
      %3142 = vst.msk [vmem:[%s224 + $0x4] sm:$0xf] %vm3140, %v3077
      %3143 = vst.msk [vmem:[%s224 + $0x8] sm:$0xf] %vm3140, %v3078
      %3144 = vst.msk [vmem:[%s224 + $0xc] sm:$0xf] %vm3140, %v3079
      %3145 = vst.msk [vmem:[%s224 + $0x10] sm:$0xf] %vm3140, %v3080
      %3146 = vst.msk [vmem:[%s224 + $0x14] sm:$0xf] %vm3140, %v3081
      %3147 = vst.msk [vmem:[%s224 + $0x18] sm:$0xf] %vm3140, %v3082
      %3148 = vst.msk [vmem:[%s224 + $0x1c] sm:$0xf] %vm3140, %v3083
      %3149 = vst.msk [vmem:[%s224 + $0x20] sm:$0xf] %vm3140, %v3084
      %3150 = vst.msk [vmem:[%s224 + $0x24] sm:$0xf] %vm3140, %v3085
      %3151 = vst.msk [vmem:[%s224 + $0x28] sm:$0xf] %vm3140, %v3086
      %3152 = vst.msk [vmem:[%s224 + $0x2c] sm:$0xf] %vm3140, %v3087
      %3153 = vst.msk [vmem:[%s224 + $0x30] sm:$0xf] %vm3140, %v3088
      %3154 = vst.msk [vmem:[%s224 + $0x34] sm:$0xf] %vm3140, %v3089
      %3155 = vst.msk [vmem:[%s224 + $0x38] sm:$0xf] %vm3140, %v3090
      %3156 = vst.msk [vmem:[%s224 + $0x3c] sm:$0xf] %vm3140, %v3091
      %3157 = vst.msk [vmem:[%s224 + $0x40] sm:$0xf] %vm3140, %v3092
      %3158 = vst.msk [vmem:[%s224 + $0x44] sm:$0xf] %vm3140, %v3093
      %3159 = vst.msk [vmem:[%s224 + $0x48] sm:$0xf] %vm3140, %v3094
      %3160 = vst.msk [vmem:[%s224 + $0x4c] sm:$0xf] %vm3140, %v3095
      %3161 = vst.msk [vmem:[%s224 + $0x50] sm:$0xf] %vm3140, %v3096
      %3162 = vst.msk [vmem:[%s224 + $0x54] sm:$0xf] %vm3140, %v3097
      %3163 = vst.msk [vmem:[%s224 + $0x58] sm:$0xf] %vm3140, %v3098
      %3164 = vst.msk [vmem:[%s224 + $0x5c] sm:$0xf] %vm3140, %v3099
      %3165 = vst.msk [vmem:[%s224 + $0x60] sm:$0xf] %vm3140, %v3100
      %3166 = vst.msk [vmem:[%s224 + $0x64] sm:$0xf] %vm3140, %v3101
      %3167 = vst.msk [vmem:[%s224 + $0x68] sm:$0xf] %vm3140, %v3102
      %3168 = vst.msk [vmem:[%s224 + $0x6c] sm:$0xf] %vm3140, %v3103
      %3169 = vst.msk [vmem:[%s224 + $0x70] sm:$0xf] %vm3140, %v3104
      %3170 = vst.msk [vmem:[%s224 + $0x74] sm:$0xf] %vm3140, %v3105
      %3171 = vst.msk [vmem:[%s224 + $0x78] sm:$0xf] %vm3140, %v3106
      %3172 = vst.msk [vmem:[%s224 + $0x7c] sm:$0xf] %vm3140, %v3107
      %p3173 = scmp.lt.s32.totalorder %s16, 1
      %s3174 = scalar_select %p3173, %s16, 1
      %s3175 = smul.addr %s3174, 32
      %s3176 = smul.addr %s3175, 4
      %s3177 = scalar_lea.vmem %s5, %s3176
      // Predicated region
      $region41: #{_lambda_.9} parent=39 // pred_check
        %p3178 = pneg %p144
      $region42: #{_lambda_.9} parent=39 // pred_check_branch
        %3180 = sbr.rel (%p3178) target = $region44
      $region43: #{_lambda_.9} parent=39 // pred_region
        _
      $region44: #{_lambda_.9} parent=39 // pred_fallthru
        _
    $region40: #{_lambda_.9} parent=5 // pred_fallthru
      _
    %p3181 = scmp.le.s32.totalorder 2, %s11
    // Predicated region
    $region45: #{_lambda_.9} parent=5 // pred_check
      %p3182 = pneg %p3181
    $region46: #{_lambda_.9} parent=5 // pred_check_branch
      %3184 = sbr.rel (%p3182) target = $region48
    $region47: #{_lambda_.9} parent=5 // pred_region
      %s3185 = ssub.s32 %s11, 2
      // Predicated region
      $region49: #{_lambda_.9} parent=47 // pred_check
        %p3186 = pneg %p150
      $region50: #{_lambda_.9} parent=47 // pred_check_branch
        %3188 = sbr.rel (%p3186) target = $region52
      $region51: #{_lambda_.9} parent=47 // pred_region
        %p3189 = scmp.lt.s32.totalorder %s17, 1
        %s3190 = scalar_select %p3189, %s17, 1
        %s3191 = smul.addr %s3190, 32
        %s3192 = smul.addr %s3191, 4
        %s3193 = scalar_lea.vmem %s5, %s3192
      $region52: #{_lambda_.9} parent=47 // pred_fallthru
        _
    $region48: #{_lambda_.9} parent=5 // pred_fallthru
      _
  $region6: #{_lambda_.9} parent=0 // loop_footer
    %s15 = sadd.s32 1, %s11
  $region7: #{_lambda_.9} parent=0 // loop_footer_branch
    %10 = sbr.rel target = $region3
  $region8: #{_lambda_.9} parent=0 // loop_exit
    _

// kernel: _lambda_.11
$region0: #{_lambda_.11}
  #allocation0 [shape = 'u32[]', space=smem, size = 0x4, offset = 0x4, fixed_abs, tag = 'smem constant byte address 0x4 - core index']
  #allocation1 [shape = 'u32[144,128]{1,0:T(1,128)}', space=vmem, size = 0x12000, scoped, tag = 'internal scratch']
  %s0 = inlined_call_operand.vmem [shape: bf16[2,8,8,16], index: 0, kind: input, shape index: {}]
  %s1 = inlined_call_operand.vmem [shape: bf16[144,16], index: 1, kind: input, shape index: {}]
  %s2 = inlined_call_operand.vmem [shape: f32[1,16], index: 2, kind: input, shape index: {}]
  %s3 = inlined_call_operand.vmem [shape: bf16[144,32], index: 3, kind: input, shape index: {}]
  %s4 = inlined_call_operand.vmem [shape: f32[1,32], index: 4, kind: input, shape index: {}]
  %s5 = inlined_call_operand.vmem [shape: bf16[16,32], index: 5, kind: input, shape index: {}]
  %s6 = inlined_call_operand.vmem [shape: bf16[2,8,8,32], index: 6, kind: output, shape index: {}]
  %s7 = sld [smem:[#allocation0]]
  $region57: #{_lambda_.11} parent=0
    _
  %s9 = ssub.s32 1, %s7
  %s10 = scalar_select 0, %s9, %s7
  loop: start=0, step=1, limit=4
  $region2: #{_lambda_.11} parent=0 // loop_pre_header
    _
  $region3: #{_lambda_.11} parent=0 // loop_header
    %s12 = sphi 0, %s16
    %p13 = scmp.ge.s32.totalorder %s12, 4
    %s22 = sphi 0, %s24
    %s25 = sphi 0, %s22
    %s26 = sphi 0, %s25
    %s42 = sphi 0, %s26
    %s46 = sphi 0, %s46
    %s48 = sphi 0, %s46
    %s49 = sphi 0, %s48
    %s63 = sphi 0, %s49
    %s67 = sphi 0, %s67
    %s69 = sphi 0, %s67
    %s70 = sphi 0, %s69
    %s84 = sphi 0, %s70
    %s88 = sphi 0, %s88
    %s90 = sphi 0, %s88
    %s91 = sphi 0, %s90
    %s105 = sphi 0, %s91
    %s109 = sphi 0, %s109
    %s111 = sphi 0, %s109
    %s112 = sphi 0, %s111
    %s126 = sphi 0, %s112
    %s130 = sphi 0, %s130
    %s132 = sphi 0, %s130
    %s133 = sphi 0, %s132
    %s147 = sphi 0, %s133
    %s153 = sphi 0, %s155
    %s156 = sphi 0, %s153
    %s157 = sphi 0, %s156
    %s173 = sphi 0, %s157
  $region4: #{_lambda_.11} parent=0 // loop_header_branch
    %15 = sbr.rel (%p13) target = $region8
  $region5: #{_lambda_.11} parent=0 // loop_body
    %s17 = ssub.s32 %s12, 1
    %s18 = ssub.s32 %s12, 2
    %s19 = sadd.s32 %s12, 1
    %s20 = ssub.s32 %s12, %s19
    %p21 = scmp.eq.s32.totalorder %s20, 0
    %s23 = sadd.s32 %s22, 1
    %s24 = scalar_select %p21, %s22, %s23
    %p27 = pneg %p21
    %p28 = scmp.eq.s32.totalorder %s12, 1
    %p29 = por %p27, %p28
    %p30 = scmp.ne.s32.totalorder %s22, %s25
    %p31 = scmp.eq.s32.totalorder %s12, 0
    %p32 = por %p30, %p31
    %p33 = scmp.ne.s32.totalorder %s22, %s25
    %p34 = scmp.eq.s32.totalorder %s17, 1
    %p35 = por %p33, %p34
    %p36 = scmp.ne.s32.totalorder %s25, %s26
    %p37 = scmp.eq.s32.totalorder %s17, 0
    %p38 = por %p36, %p37
    %p39 = scmp.ne.s32.totalorder %s25, %s26
    %p40 = scmp.eq.s32.totalorder %s18, 1
    %p41 = por %p39, %p40
    %p43 = scmp.ne.s32.totalorder %s26, %s42
    %p44 = scmp.eq.s32.totalorder %s18, 0
    %p45 = por %p43, %p44
    %s47 = sadd.s32 %s46, 1
    %p50 = scmp.eq.s32.totalorder %s12, 1
    %p51 = scmp.ne.s32.totalorder %s46, %s48
    %p52 = scmp.eq.s32.totalorder %s12, 0
    %p53 = por %p51, %p52
    %p54 = scmp.ne.s32.totalorder %s46, %s48
    %p55 = scmp.eq.s32.totalorder %s17, 1
    %p56 = por %p54, %p55
    %p57 = scmp.ne.s32.totalorder %s48, %s49
    %p58 = scmp.eq.s32.totalorder %s17, 0
    %p59 = por %p57, %p58
    %p60 = scmp.ne.s32.totalorder %s48, %s49
    %p61 = scmp.eq.s32.totalorder %s18, 1
    %p62 = por %p60, %p61
    %p64 = scmp.ne.s32.totalorder %s49, %s63
    %p65 = scmp.eq.s32.totalorder %s18, 0
    %p66 = por %p64, %p65
    %s68 = sadd.s32 %s67, 1
    %p71 = scmp.eq.s32.totalorder %s12, 1
    %p72 = scmp.ne.s32.totalorder %s67, %s69
    %p73 = scmp.eq.s32.totalorder %s12, 0
    %p74 = por %p72, %p73
    %p75 = scmp.ne.s32.totalorder %s67, %s69
    %p76 = scmp.eq.s32.totalorder %s17, 1
    %p77 = por %p75, %p76
    %p78 = scmp.ne.s32.totalorder %s69, %s70
    %p79 = scmp.eq.s32.totalorder %s17, 0
    %p80 = por %p78, %p79
    %p81 = scmp.ne.s32.totalorder %s69, %s70
    %p82 = scmp.eq.s32.totalorder %s18, 1
    %p83 = por %p81, %p82
    %p85 = scmp.ne.s32.totalorder %s70, %s84
    %p86 = scmp.eq.s32.totalorder %s18, 0
    %p87 = por %p85, %p86
    %s89 = sadd.s32 %s88, 1
    %p92 = scmp.eq.s32.totalorder %s12, 1
    %p93 = scmp.ne.s32.totalorder %s88, %s90
    %p94 = scmp.eq.s32.totalorder %s12, 0
    %p95 = por %p93, %p94
    %p96 = scmp.ne.s32.totalorder %s88, %s90
    %p97 = scmp.eq.s32.totalorder %s17, 1
    %p98 = por %p96, %p97
    %p99 = scmp.ne.s32.totalorder %s90, %s91
    %p100 = scmp.eq.s32.totalorder %s17, 0
    %p101 = por %p99, %p100
    %p102 = scmp.ne.s32.totalorder %s90, %s91
    %p103 = scmp.eq.s32.totalorder %s18, 1
    %p104 = por %p102, %p103
    %p106 = scmp.ne.s32.totalorder %s91, %s105
    %p107 = scmp.eq.s32.totalorder %s18, 0
    %p108 = por %p106, %p107
    %s110 = sadd.s32 %s109, 1
    %p113 = scmp.eq.s32.totalorder %s12, 1
    %p114 = scmp.ne.s32.totalorder %s109, %s111
    %p115 = scmp.eq.s32.totalorder %s12, 0
    %p116 = por %p114, %p115
    %p117 = scmp.ne.s32.totalorder %s109, %s111
    %p118 = scmp.eq.s32.totalorder %s17, 1
    %p119 = por %p117, %p118
    %p120 = scmp.ne.s32.totalorder %s111, %s112
    %p121 = scmp.eq.s32.totalorder %s17, 0
    %p122 = por %p120, %p121
    %p123 = scmp.ne.s32.totalorder %s111, %s112
    %p124 = scmp.eq.s32.totalorder %s18, 1
    %p125 = por %p123, %p124
    %p127 = scmp.ne.s32.totalorder %s112, %s126
    %p128 = scmp.eq.s32.totalorder %s18, 0
    %p129 = por %p127, %p128
    %s131 = sadd.s32 %s130, 1
    %p134 = scmp.eq.s32.totalorder %s12, 1
    %p135 = scmp.ne.s32.totalorder %s130, %s132
    %p136 = scmp.eq.s32.totalorder %s12, 0
    %p137 = por %p135, %p136
    %p138 = scmp.ne.s32.totalorder %s130, %s132
    %p139 = scmp.eq.s32.totalorder %s17, 1
    %p140 = por %p138, %p139
    %p141 = scmp.ne.s32.totalorder %s132, %s133
    %p142 = scmp.eq.s32.totalorder %s17, 0
    %p143 = por %p141, %p142
    %p144 = scmp.ne.s32.totalorder %s132, %s133
    %p145 = scmp.eq.s32.totalorder %s18, 1
    %p146 = por %p144, %p145
    %p148 = scmp.ne.s32.totalorder %s133, %s147
    %p149 = scmp.eq.s32.totalorder %s18, 0
    %p150 = por %p148, %p149
    %s151 = ssub.s32 %s12, %s19
    %p152 = scmp.eq.s32.totalorder %s151, 0
    %s154 = sadd.s32 %s153, 1
    %s155 = scalar_select %p152, %s153, %s154
    %p158 = pneg %p152
    %p159 = scmp.eq.s32.totalorder %s12, 1
    %p160 = por %p158, %p159
    %p161 = scmp.ne.s32.totalorder %s153, %s156
    %p162 = scmp.eq.s32.totalorder %s12, 0
    %p163 = por %p161, %p162
    %p164 = scmp.ne.s32.totalorder %s153, %s156
    %p165 = scmp.eq.s32.totalorder %s17, 1
    %p166 = por %p164, %p165
    %p167 = scmp.ne.s32.totalorder %s156, %s157
    %p168 = scmp.eq.s32.totalorder %s17, 0
    %p169 = por %p167, %p168
    %p170 = scmp.ne.s32.totalorder %s156, %s157
    %p171 = scmp.eq.s32.totalorder %s18, 1
    %p172 = por %p170, %p171
    %p174 = scmp.ne.s32.totalorder %s157, %s173
    %p175 = scmp.eq.s32.totalorder %s18, 0
    %p176 = por %p174, %p175
    %p177 = scmp.le.s32.totalorder 1, %s12
    %p178 = scmp.lt.s32.totalorder %s12, 3
    %p179 = pnand %p177, %p178
    %p180 = pneg %p179
    // Predicated region
    $region9: #{_lambda_.11} parent=5 // pred_check
      _
    $region10: #{_lambda_.11} parent=5 // pred_check_branch
      %182 = sbr.rel (%p179) target = $region12
    $region11: #{_lambda_.11} parent=5 // pred_region
      %s183 = ssub.s32 %s12, 1
      // Predicated region
      $region13: #{_lambda_.11} parent=11 // pred_check
        %p184 = pneg %p59
      $region14: #{_lambda_.11} parent=11 // pred_check_branch
        %186 = sbr.rel (%p184) target = $region16
      $region15: #{_lambda_.11} parent=11 // pred_region
        _
      $region16: #{_lambda_.11} parent=11 // pred_fallthru
        _
      // Predicated region
      $region17: #{_lambda_.11} parent=11 // pred_check
        %p187 = pneg %p80
      $region18: #{_lambda_.11} parent=11 // pred_check_branch
        %189 = sbr.rel (%p187) target = $region20
      $region19: #{_lambda_.11} parent=11 // pred_region
        _
      $region20: #{_lambda_.11} parent=11 // pred_fallthru
        _
      // Predicated region
      $region21: #{_lambda_.11} parent=11 // pred_check
        %p190 = pneg %p101
      $region22: #{_lambda_.11} parent=11 // pred_check_branch
        %192 = sbr.rel (%p190) target = $region24
      $region23: #{_lambda_.11} parent=11 // pred_region
        _
      $region24: #{_lambda_.11} parent=11 // pred_fallthru
        _
      // Predicated region
      $region25: #{_lambda_.11} parent=11 // pred_check
        %p193 = pneg %p122
      $region26: #{_lambda_.11} parent=11 // pred_check_branch
        %195 = sbr.rel (%p193) target = $region28
      $region27: #{_lambda_.11} parent=11 // pred_region
        _
      $region28: #{_lambda_.11} parent=11 // pred_fallthru
        _
      // Predicated region
      $region29: #{_lambda_.11} parent=11 // pred_check
        %p196 = pneg %p143
      $region30: #{_lambda_.11} parent=11 // pred_check_branch
        %198 = sbr.rel (%p196) target = $region32
      $region31: #{_lambda_.11} parent=11 // pred_region
        _
      $region32: #{_lambda_.11} parent=11 // pred_fallthru
        _
    $region12: #{_lambda_.11} parent=5 // pred_fallthru
      _
    %p199 = scmp.lt.s32.totalorder %s12, 2
    // Predicated region
    $region33: #{_lambda_.11} parent=5 // pred_check
      %p200 = pneg %p199
    $region34: #{_lambda_.11} parent=5 // pred_check_branch
      %202 = sbr.rel (%p200) target = $region36
    $region35: #{_lambda_.11} parent=5 // pred_region
      // Predicated region
      $region37: #{_lambda_.11} parent=35 // pred_check
        %p203 = pneg %p32
      $region38: #{_lambda_.11} parent=35 // pred_check_branch
        %205 = sbr.rel (%p203) target = $region40
      $region39: #{_lambda_.11} parent=35 // pred_region
        %p206 = scmp.lt.s32.totalorder %s12, 1
        %s207 = scalar_select %p206, %s12, 1
        %s208 = smul.addr %s207, 8
        %s209 = smul.addr %s208, 4
        %s210 = scalar_lea.vmem %s0, %s209
      $region40: #{_lambda_.11} parent=35 // pred_fallthru
        _
    $region36: #{_lambda_.11} parent=5 // pred_fallthru
      _
    %p211 = scmp.le.s32.totalorder 1, %s12
    %p212 = scmp.lt.s32.totalorder %s12, 3
    %p213 = pnand %p211, %p212
    %p214 = pneg %p213
    // Predicated region
    $region41: #{_lambda_.11} parent=5 // pred_check
      _
    $region42: #{_lambda_.11} parent=5 // pred_check_branch
      %216 = sbr.rel (%p213) target = $region44
    $region43: #{_lambda_.11} parent=5 // pred_region
      %s217 = ssub.s32 %s12, 1
      %p218 = scmp.lt.s32.totalorder %s17, 1
      %s219 = scalar_select %p218, %s17, 1
      %s220 = smul.addr %s219, 8
      %s221 = smul.addr %s220, 4
      %s222 = scalar_lea.vmem %s0, %s221
      %p223 = pneg %p38
      %p224 = pneg %p35
      %p225 = pneg %p59
      %p226 = pneg %p56
      %p227 = pneg %p80
      %p228 = pneg %p77
      %p229 = pneg %p101
      %p230 = pneg %p98
      %p231 = pneg %p122
      %p232 = pneg %p119
      %p233 = pneg %p143
      %p234 = pneg %p140
      %p235 = pneg %p169
      %p236 = pneg %p166
      %p237 = scmp.lt.s32.totalorder %s17, 1
      %s238 = scalar_select %p237, %s17, 1
      %s239 = smul.addr %s238, 8
      %s240 = smul.addr %s239, 4
      %s241 = scalar_lea.vmem %s6, %s240
      %p242 = scmp.lt.s32.totalorder %s17, 1
      %s243 = scalar_select %p242, %s17, 1
      %s244 = smul.addr %s243, 8
      %s245 = smul.addr %s244, 4
      %s246 = scalar_lea.vmem %s0, %s245
      %p247 = scmp.lt.s32.totalorder %s17, 1
      %s248 = scalar_select %p247, %s17, 1
      %s249 = smul.addr %s248, 8
      %s250 = smul.addr %s249, 4
      %s251 = scalar_lea.vmem %s6, %s250
      %v253 = vld [vmem:[%s246] sm:$0xf]
      %v254 = vld [vmem:[%s246 + $0x4] sm:$0xf]
      %v255 = vld [vmem:[%s246 + $0x8] sm:$0xf]
      %v256 = vld [vmem:[%s246 + $0xc] sm:$0xf]
      %v257 = vld [vmem:[%s246 + $0x10] sm:$0xf]
      %v258 = vld [vmem:[%s246 + $0x14] sm:$0xf]
      %v259 = vld [vmem:[%s246 + $0x18] sm:$0xf]
      %v260 = vld [vmem:[%s246 + $0x1c] sm:$0xf]
      %v261 = vunpack.c.l.bf16 %v253
      %v262 = vunpack.c.l.bf16 %v254
      %v263 = vunpack.c.l.bf16 %v255
      %v264 = vunpack.c.l.bf16 %v256
      %v265 = vunpack.c.l.bf16 %v257
      %v266 = vunpack.c.l.bf16 %v258
      %v267 = vunpack.c.l.bf16 %v259
      %v268 = vunpack.c.l.bf16 %v260
      %v269 = vpack.c.bf16 %v262, %v261
      %v270 = vpack.c.bf16 %v264, %v263
      %v271 = vpack.c.bf16 %v266, %v265
      %v272 = vpack.c.bf16 %v268, %v267
      %v273 = vld [vmem:[%s5] sm:$0xf]
      %v274 = vld [vmem:[%s5 + $0x4] sm:$0xf]
      %vm275 = vcmp.ge.f32.partialorder %v261, 0.0
      %vm276 = vcmp.ge.f32.partialorder %v262, 0.0
      %vm277 = vcmp.ge.f32.partialorder %v263, 0.0
      %vm278 = vcmp.ge.f32.partialorder %v264, 0.0
      %vm279 = vcmp.ge.f32.partialorder %v265, 0.0
      %vm280 = vcmp.ge.f32.partialorder %v266, 0.0
      %vm281 = vcmp.ge.f32.partialorder %v267, 0.0
      %vm282 = vcmp.ge.f32.partialorder %v268, 0.0
      %v283 = vmul.f32 %v261, 0.2
      %v284 = vmul.f32 %v262, 0.2
      %v285 = vmul.f32 %v263, 0.2
      %v286 = vmul.f32 %v264, 0.2
      %v287 = vmul.f32 %v265, 0.2
      %v288 = vmul.f32 %v266, 0.2
      %v289 = vmul.f32 %v267, 0.2
      %v290 = vmul.f32 %v268, 0.2
      %v291 = vsel %vm275, %v261, %v283
      %v292 = vsel %vm276, %v262, %v284
      %v293 = vsel %vm277, %v263, %v285
      %v294 = vsel %vm278, %v264, %v286
      %v295 = vsel %vm279, %v265, %v287
      %v296 = vsel %vm280, %v266, %v288
      %v297 = vsel %vm281, %v267, %v289
      %v298 = vsel %vm282, %v268, %v290
      %v299 = vld [vmem:[%s1] sm:$0xf]
      %v300 = vld [vmem:[%s1 + $0x4] sm:$0xf]
      %v301 = vld [vmem:[%s1 + $0x8] sm:$0xf]
      %v302 = vld [vmem:[%s1 + $0xc] sm:$0xf]
      %v303 = vld [vmem:[%s1 + $0x10] sm:$0xf]
      %v304 = vld [vmem:[%s1 + $0x14] sm:$0xf]
      %v305 = vld [vmem:[%s1 + $0x18] sm:$0xf]
      %v306 = vld [vmem:[%s1 + $0x1c] sm:$0xf]
      %v307 = vld [vmem:[%s1 + $0x20] sm:$0xf]
      %v308 = vld [vmem:[%s1 + $0x24] sm:$0xf]
      %v309 = vld [vmem:[%s1 + $0x28] sm:$0xf]
      %v310 = vld [vmem:[%s1 + $0x2c] sm:$0xf]
      %v311 = vld [vmem:[%s1 + $0x30] sm:$0xf]
      %v312 = vld [vmem:[%s1 + $0x34] sm:$0xf]
      %v313 = vld [vmem:[%s1 + $0x38] sm:$0xf]
      %v314 = vld [vmem:[%s1 + $0x3c] sm:$0xf]
      %v315 = vld [vmem:[%s1 + $0x40] sm:$0xf]
      %v316 = vld [vmem:[%s1 + $0x44] sm:$0xf]
      %v317 = vld [vmem:[%s2] sm:$0x1]
      %v327 = vrot.slane 0.0, 7
      %v328 = vrot.slane %v291, 7
      %v329 = vrot.slane %v292, 7
      %v330 = vrot.slane %v293, 7
      %v331 = vrot.slane %v294, 7
      %v332 = vrot.slane %v295, 7
      %v333 = vrot.slane %v296, 7
      %v334 = vrot.slane %v297, 7
      %v335 = vrot.slane %v298, 7
      %vm345 = vcmask 1040384
      %v346 = vsel %vm345, 0.0, %v327
      %v347 = vsel %vm345, 0.0, %v328
      %v348 = vsel %vm345, 0.0, %v329
      %v349 = vsel %vm345, 0.0, %v330
      %v350 = vsel %vm345, 0.0, %v331
      %v351 = vsel %vm345, 0.0, %v332
      %v352 = vsel %vm345, 0.0, %v333
      %v353 = vsel %vm345, 0.0, %v334
      %v354 = vsel %vm345, 0.0, %v335
      %v355 = vsel %vm345, %v327, 0.0
      %v356 = vsel %vm345, %v328, 0.0
      %v357 = vsel %vm345, %v329, 0.0
      %v358 = vsel %vm345, %v330, 0.0
      %v359 = vsel %vm345, %v331, 0.0
      %v360 = vsel %vm345, %v332, 0.0
      %v361 = vsel %vm345, %v333, 0.0
      %v362 = vsel %vm345, %v334, 0.0
      %v363 = vsel %vm345, %v335, 0.0
      %vm380 = vcmask 1046528
      %v381 = vrot.slane %v346, 1
      %v382 = vrot.slane %v355, 1
      %v383 = vsel %vm380, %v381, %v382
      %v384 = vrot.slane %v347, 1
      %v385 = vrot.slane %v356, 1
      %v386 = vsel %vm380, %v384, %v385
      %v387 = vrot.slane %v348, 1
      %v388 = vrot.slane %v357, 1
      %v389 = vsel %vm380, %v387, %v388
      %v390 = vrot.slane %v349, 1
      %v391 = vrot.slane %v358, 1
      %v392 = vsel %vm380, %v390, %v391
      %v393 = vrot.slane %v350, 1
      %v394 = vrot.slane %v359, 1
      %v395 = vsel %vm380, %v393, %v394
      %v396 = vrot.slane %v351, 1
      %v397 = vrot.slane %v360, 1
      %v398 = vsel %vm380, %v396, %v397
      %v399 = vrot.slane %v352, 1
      %v400 = vrot.slane %v361, 1
      %v401 = vsel %vm380, %v399, %v400
      %v402 = vrot.slane %v353, 1
      %v403 = vrot.slane %v362, 1
      %v404 = vsel %vm380, %v402, %v403
      %405 = vrot.lane.b32.xlu0 %v383, 16
      %v406 = vpop.permute.xlu0 %405
      %407 = vrot.lane.b32.xlu0 %v386, 16
      %v408 = vpop.permute.xlu0 %407
      %409 = vrot.lane.b32.xlu0 %v389, 16
      %v410 = vpop.permute.xlu0 %409
      %411 = vrot.lane.b32.xlu0 %v392, 16
      %v412 = vpop.permute.xlu0 %411
      %413 = vrot.lane.b32.xlu0 %v395, 16
      %v414 = vpop.permute.xlu0 %413
      %415 = vrot.lane.b32.xlu0 %v398, 16
      %v416 = vpop.permute.xlu0 %415
      %417 = vrot.lane.b32.xlu0 %v401, 16
      %v418 = vpop.permute.xlu0 %417
      %419 = vrot.lane.b32.xlu0 %v404, 16
      %v420 = vpop.permute.xlu0 %419
      %vm429 = vcmask 1045504
      %v430 = vrot.slane %v346, 2
      %v431 = vrot.slane %v355, 2
      %v432 = vsel %vm429, %v430, %v431
      %v433 = vrot.slane %v347, 2
      %v434 = vrot.slane %v356, 2
      %v435 = vsel %vm429, %v433, %v434
      %v436 = vrot.slane %v348, 2
      %v437 = vrot.slane %v357, 2
      %v438 = vsel %vm429, %v436, %v437
      %v439 = vrot.slane %v349, 2
      %v440 = vrot.slane %v358, 2
      %v441 = vsel %vm429, %v439, %v440
      %v442 = vrot.slane %v350, 2
      %v443 = vrot.slane %v359, 2
      %v444 = vsel %vm429, %v442, %v443
      %v445 = vrot.slane %v351, 2
      %v446 = vrot.slane %v360, 2
      %v447 = vsel %vm429, %v445, %v446
      %v448 = vrot.slane %v352, 2
      %v449 = vrot.slane %v361, 2
      %v450 = vsel %vm429, %v448, %v449
      %v451 = vrot.slane %v353, 2
      %v452 = vrot.slane %v362, 2
      %v453 = vsel %vm429, %v451, %v452
      %454 = vrot.lane.b32.xlu0 %v432, 32
      %v455 = vpop.permute.xlu0 %454
      %456 = vrot.lane.b32.xlu0 %v435, 32
      %v457 = vpop.permute.xlu0 %456
      %458 = vrot.lane.b32.xlu0 %v438, 32
      %v459 = vpop.permute.xlu0 %458
      %460 = vrot.lane.b32.xlu0 %v441, 32
      %v461 = vpop.permute.xlu0 %460
      %462 = vrot.lane.b32.xlu0 %v444, 32
      %v463 = vpop.permute.xlu0 %462
      %464 = vrot.lane.b32.xlu0 %v447, 32
      %v465 = vpop.permute.xlu0 %464
      %466 = vrot.lane.b32.xlu0 %v450, 32
      %v467 = vpop.permute.xlu0 %466
      %468 = vrot.lane.b32.xlu0 %v453, 32
      %v469 = vpop.permute.xlu0 %468
      %vm478 = vcmask 130048
      %v479 = vsel %vm478, %v346, %v406
      %v480 = vsel %vm478, %v347, %v408
      %v481 = vsel %vm478, %v348, %v410
      %v482 = vsel %vm478, %v349, %v412
      %v483 = vsel %vm478, %v350, %v414
      %v484 = vsel %vm478, %v351, %v416
      %v485 = vsel %vm478, %v352, %v418
      %v486 = vsel %vm478, %v353, %v420
      %vm487 = vcmask 261120
      %v488 = vsel %vm487, %v479, %v455
      %v489 = vsel %vm487, %v480, %v457
      %v490 = vsel %vm487, %v481, %v459
      %v491 = vsel %vm487, %v482, %v461
      %v492 = vsel %vm487, %v483, %v463
      %v493 = vsel %vm487, %v484, %v465
      %v494 = vsel %vm487, %v485, %v467
      %v495 = vsel %vm487, %v486, %v469
      %v498 = vrot.slane %v354, 1
      %v499 = vrot.slane %v363, 1
      %v500 = vsel %vm380, %v498, %v499
      %501 = vrot.lane.b32.xlu0 %v500, 16
      %v502 = vpop.permute.xlu0 %501
      %v504 = vrot.slane %v354, 2
      %v505 = vrot.slane %v363, 2
      %v506 = vsel %vm429, %v504, %v505
      %507 = vrot.lane.b32.xlu0 %v506, 32
      %v508 = vpop.permute.xlu0 %507
      %v510 = vsel %vm478, %v354, %v502
      %v511 = vsel %vm487, %v510, %v508
      %520 = vrot.lane.b32.xlu0 %v489, 48
      %v521 = vpop.permute.xlu0 %520
      %522 = vrot.lane.b32.xlu0 %v490, 48
      %v523 = vpop.permute.xlu0 %522
      %524 = vrot.lane.b32.xlu0 %v491, 48
      %v525 = vpop.permute.xlu0 %524
      %526 = vrot.lane.b32.xlu0 %v492, 48
      %v527 = vpop.permute.xlu0 %526
      %528 = vrot.lane.b32.xlu0 %v493, 48
      %v529 = vpop.permute.xlu0 %528
      %530 = vrot.lane.b32.xlu0 %v494, 48
      %v531 = vpop.permute.xlu0 %530
      %532 = vrot.lane.b32.xlu0 %v495, 48
      %v533 = vpop.permute.xlu0 %532
      %534 = vrot.lane.b32.xlu0 %v511, 48
      %v535 = vpop.permute.xlu0 %534
      %545 = vrot.lane.b32.xlu0 %v490, 96
      %v546 = vpop.permute.xlu0 %545
      %547 = vrot.lane.b32.xlu0 %v491, 96
      %v548 = vpop.permute.xlu0 %547
      %549 = vrot.lane.b32.xlu0 %v492, 96
      %v550 = vpop.permute.xlu0 %549
      %551 = vrot.lane.b32.xlu0 %v493, 96
      %v552 = vpop.permute.xlu0 %551
      %553 = vrot.lane.b32.xlu0 %v494, 96
      %v554 = vpop.permute.xlu0 %553
      %555 = vrot.lane.b32.xlu0 %v495, 96
      %v556 = vpop.permute.xlu0 %555
      %557 = vrot.lane.b32.xlu0 %v511, 96
      %v558 = vpop.permute.xlu0 %557
      %559 = vrot.lane.b32.xlu0 %v488, 96
      %v560 = vpop.permute.xlu0 %559
      %vm569 = vcmask 392192
      %v570 = vsel %vm569, %v488, %v521
      %v571 = vsel %vm569, %v489, %v523
      %v572 = vsel %vm569, %v490, %v525
      %v573 = vsel %vm569, %v491, %v527
      %v574 = vsel %vm569, %v492, %v529
      %v575 = vsel %vm569, %v493, %v531
      %v576 = vsel %vm569, %v494, %v533
      %v577 = vsel %vm569, %v495, %v535
      %vm578 = vcmask 785408
      %v579 = vsel %vm578, %v570, %v546
      %v580 = vsel %vm578, %v571, %v548
      %v581 = vsel %vm578, %v572, %v550
      %v582 = vsel %vm578, %v573, %v552
      %v583 = vsel %vm578, %v574, %v554
      %v584 = vsel %vm578, %v575, %v556
      %v585 = vsel %vm578, %v576, %v558
      %v586 = vsel %vm578, %v577, %v560
      %v587 = vpack.c.bf16 %v580, %v579
      %v588 = vpack.c.bf16 %v548, %v546
      %v589 = vpack.c.bf16 %v582, %v581
      %v590 = vpack.c.bf16 %v552, %v550
      %v591 = vpack.c.bf16 %v584, %v583
      %v592 = vpack.c.bf16 %v556, %v554
      %v593 = vpack.c.bf16 %v586, %v585
      %v594 = vpack.c.bf16 %v560, %v558
      %v596 = vlaneseq
      %v597 = vshrl.u32 %v596, 7
      %v598 = vsub.s32 0, %v597
      %v599 = vrot.slane %v317, %v598
      %v619 = vunpack.c.l.b16 %v299
      %v620 = vunpack.c.l.b16 %v300
      %v621 = vunpack.c.l.b16 %v301
      %v622 = vunpack.c.l.b16 %v302
      %v623 = vunpack.c.l.b16 %v303
      %v624 = vunpack.c.l.b16 %v304
      %v625 = vunpack.c.l.b16 %v305
      %v626 = vunpack.c.l.b16 %v306
      %v627 = vunpack.c.l.b16 %v307
      %v628 = vunpack.c.l.b16 %v308
      %v629 = vunpack.c.l.b16 %v309
      %v630 = vunpack.c.l.b16 %v310
      %v631 = vunpack.c.l.b16 %v311
      %v632 = vunpack.c.l.b16 %v312
      %v633 = vunpack.c.l.b16 %v313
      %v634 = vunpack.c.l.b16 %v314
      %v635 = vunpack.c.l.b16 %v315
      %v636 = vunpack.c.l.b16 %v316
      %v637 = vpack.c.b16 %v620, %v619
      %v638 = vpack.c.b16 %v622, %v621
      %v639 = vpack.c.b16 %v624, %v623
      %v640 = vpack.c.b16 %v626, %v625
      %v641 = vpack.c.b16 %v628, %v627
      %v642 = vpack.c.b16 %v630, %v629
      %v643 = vpack.c.b16 %v632, %v631
      %v644 = vpack.c.b16 %v634, %v633
      %v645 = vpack.c.b16 %v636, %v635
      %v656 = vsel %vm478, %v588, 0
      %v659 = vsel %vm478, %v590, 0
      %v662 = vsel %vm478, %v592, 0
      %v665 = vsel %vm478, %v594, 0
      %667 = vmatprep.subr.bf16.mxu0 0
      %668 = vmatpush1.bf16.msra.mxu0 %v644
      %669 = vmatprep.subr.bf16.mxu0 0
      %670 = vmatpush1.bf16.msra.mxu0 %v643
      %671 = vmatprep.subr.bf16.mxu0 0
      %672 = vmatpush1.bf16.msra.mxu0 %v642
      %673 = vmatprep.subr.bf16.mxu0 0
      %674 = vmatpush1.bf16.msra.mxu0 %v641
      %675 = vmatprep.subr.bf16.mxu0 0
      %676 = vmatpush1.bf16.msra.mxu0 %v640
      %677 = vmatprep.subr.bf16.mxu0 0
      %678 = vmatpush1.bf16.msra.mxu0 %v639
      %679 = vmatprep.subr.bf16.mxu0 0
      %680 = vmatpush1.bf16.msra.mxu0 %v638
      %681 = vmatprep.subr.bf16.mxu0 0
      %682 = vmatpush1.bf16.msra.mxu0 %v637
      %683 = vmatprep.subr.bf16.mxu0 0
      %684 = vmatpush2.bf16.msra.mxu0 0
      %685 = vmatprep.subr.bf16.mxu0 0
      %686 = vmatpush2.bf16.msra.mxu0 0
      %687 = vmatprep.subr.bf16.mxu0 0
      %688 = vmatpush2.bf16.msra.mxu0 0
      %689 = vmatprep.subr.bf16.mxu0 0
      %690 = vmatpush2.bf16.msra.mxu0 0
      %691 = vmatprep.subr.bf16.mxu0 0
      %692 = vmatpush2.bf16.msra.mxu0 0
      %693 = vmatprep.subr.bf16.mxu0 0
      %694 = vmatpush2.bf16.msra.mxu0 0
      %695 = vmatprep.subr.bf16.mxu0 0
      %696 = vmatpush2.bf16.msra.mxu0 0
      %697 = vmatprep.subr.bf16.mxu0 0
      %698 = vmatpush2.bf16.msra.mxu0 %v645
      %699 = vmatprep.mubr.bf16.mxu0 %v656
      %700 = vmatmul.mubr.bf16.gmra.mxu0 %v587
      %v701 = vpop.f32.mrf.mxu0
      %v702 = vadd.f32 %v599, %v701
      %v703 = vpop.f32.mrf.mxu0
      %v704 = vpop.f32.mrf.mxu0
      %v705 = vadd.f32 %v599, %v704
      %v706 = vpop.f32.mrf.mxu0
      %707 = vmatprep.mubr.bf16.mxu0 %v659
      %708 = vmatmul.mubr.bf16.gmra.mxu0 %v589
      %v709 = vpop.f32.mrf.mxu0
      %v710 = vadd.f32 %v599, %v709
      %v711 = vpop.f32.mrf.mxu0
      %v712 = vpop.f32.mrf.mxu0
      %v713 = vadd.f32 %v599, %v712
      %v714 = vpop.f32.mrf.mxu0
      %715 = vmatprep.mubr.bf16.mxu0 %v662
      %716 = vmatmul.mubr.bf16.gmra.mxu0 %v591
      %v717 = vpop.f32.mrf.mxu0
      %v718 = vadd.f32 %v599, %v717
      %v719 = vpop.f32.mrf.mxu0
      %v720 = vpop.f32.mrf.mxu0
      %v721 = vadd.f32 %v599, %v720
      %v722 = vpop.f32.mrf.mxu0
      %723 = vmatprep.mubr.bf16.mxu0 %v665
      %724 = vmatmul.mubr.bf16.gmra.mxu0 %v593
      %v725 = vpop.f32.mrf.mxu0
      %v726 = vadd.f32 %v599, %v725
      %v727 = vpop.f32.mrf.mxu0
      %v728 = vpop.f32.mrf.mxu0
      %v729 = vadd.f32 %v599, %v728
      %v730 = vpop.f32.mrf.mxu0
      %731 = vdwg.mxu0
      %vm732 = vcmp.ge.f32.partialorder %v702, 0.0
      %vm733 = vcmp.ge.f32.partialorder %v705, 0.0
      %vm734 = vcmp.ge.f32.partialorder %v710, 0.0
      %vm735 = vcmp.ge.f32.partialorder %v713, 0.0
      %vm736 = vcmp.ge.f32.partialorder %v718, 0.0
      %vm737 = vcmp.ge.f32.partialorder %v721, 0.0
      %vm738 = vcmp.ge.f32.partialorder %v726, 0.0
      %vm739 = vcmp.ge.f32.partialorder %v729, 0.0
      %v740 = vmul.f32 %v702, 0.2
      %v741 = vmul.f32 %v705, 0.2
      %v742 = vmul.f32 %v710, 0.2
      %v743 = vmul.f32 %v713, 0.2
      %v744 = vmul.f32 %v718, 0.2
      %v745 = vmul.f32 %v721, 0.2
      %v746 = vmul.f32 %v726, 0.2
      %v747 = vmul.f32 %v729, 0.2
      %v748 = vsel %vm732, %v702, %v740
      %v749 = vsel %vm733, %v705, %v741
      %v750 = vsel %vm734, %v710, %v742
      %v751 = vsel %vm735, %v713, %v743
      %v752 = vsel %vm736, %v718, %v744
      %v753 = vsel %vm737, %v721, %v745
      %v754 = vsel %vm738, %v726, %v746
      %v755 = vsel %vm739, %v729, %v747
      %v756 = vld [vmem:[%s3] sm:$0xf]
      %v757 = vld [vmem:[%s3 + $0x4] sm:$0xf]
      %v758 = vld [vmem:[%s3 + $0x8] sm:$0xf]
      %v759 = vld [vmem:[%s3 + $0xc] sm:$0xf]
      %v760 = vld [vmem:[%s3 + $0x10] sm:$0xf]
      %v761 = vld [vmem:[%s3 + $0x14] sm:$0xf]
      %v762 = vld [vmem:[%s3 + $0x18] sm:$0xf]
      %v763 = vld [vmem:[%s3 + $0x1c] sm:$0xf]
      %v764 = vld [vmem:[%s3 + $0x20] sm:$0xf]
      %v765 = vld [vmem:[%s3 + $0x24] sm:$0xf]
      %v766 = vld [vmem:[%s3 + $0x28] sm:$0xf]
      %v767 = vld [vmem:[%s3 + $0x2c] sm:$0xf]
      %v768 = vld [vmem:[%s3 + $0x30] sm:$0xf]
      %v769 = vld [vmem:[%s3 + $0x34] sm:$0xf]
      %v770 = vld [vmem:[%s3 + $0x38] sm:$0xf]
      %v771 = vld [vmem:[%s3 + $0x3c] sm:$0xf]
      %v772 = vld [vmem:[%s3 + $0x40] sm:$0xf]
      %v773 = vld [vmem:[%s3 + $0x44] sm:$0xf]
      %v774 = vld [vmem:[%s4] sm:$0x1]
      %v783 = vrot.slane %v748, 7
      %v784 = vrot.slane %v749, 7
      %v785 = vrot.slane %v750, 7
      %v786 = vrot.slane %v751, 7
      %v787 = vrot.slane %v752, 7
      %v788 = vrot.slane %v753, 7
      %v789 = vrot.slane %v754, 7
      %v790 = vrot.slane %v755, 7
      %v799 = vsel %vm345, 0.0, %v783
      %v800 = vsel %vm345, 0.0, %v784
      %v801 = vsel %vm345, 0.0, %v785
      %v802 = vsel %vm345, 0.0, %v786
      %v803 = vsel %vm345, 0.0, %v787
      %v804 = vsel %vm345, 0.0, %v788
      %v805 = vsel %vm345, 0.0, %v789
      %v806 = vsel %vm345, 0.0, %v790
      %v807 = vsel %vm345, %v783, 0.0
      %v808 = vsel %vm345, %v784, 0.0
      %v809 = vsel %vm345, %v785, 0.0
      %v810 = vsel %vm345, %v786, 0.0
      %v811 = vsel %vm345, %v787, 0.0
      %v812 = vsel %vm345, %v788, 0.0
      %v813 = vsel %vm345, %v789, 0.0
      %v814 = vsel %vm345, %v790, 0.0
      %v829 = vrot.slane %v799, 1
      %v830 = vrot.slane %v807, 1
      %v831 = vsel %vm380, %v829, %v830
      %v832 = vrot.slane %v800, 1
      %v833 = vrot.slane %v808, 1
      %v834 = vsel %vm380, %v832, %v833
      %v835 = vrot.slane %v801, 1
      %v836 = vrot.slane %v809, 1
      %v837 = vsel %vm380, %v835, %v836
      %v838 = vrot.slane %v802, 1
      %v839 = vrot.slane %v810, 1
      %v840 = vsel %vm380, %v838, %v839
      %v841 = vrot.slane %v803, 1
      %v842 = vrot.slane %v811, 1
      %v843 = vsel %vm380, %v841, %v842
      %v844 = vrot.slane %v804, 1
      %v845 = vrot.slane %v812, 1
      %v846 = vsel %vm380, %v844, %v845
      %v847 = vrot.slane %v805, 1
      %v848 = vrot.slane %v813, 1
      %v849 = vsel %vm380, %v847, %v848
      %850 = vrot.lane.b32.xlu0 %v831, 16
      %v851 = vpop.permute.xlu0 %850
      %852 = vrot.lane.b32.xlu0 %v834, 16
      %v853 = vpop.permute.xlu0 %852
      %854 = vrot.lane.b32.xlu0 %v837, 16
      %v855 = vpop.permute.xlu0 %854
      %856 = vrot.lane.b32.xlu0 %v840, 16
      %v857 = vpop.permute.xlu0 %856
      %858 = vrot.lane.b32.xlu0 %v843, 16
      %v859 = vpop.permute.xlu0 %858
      %860 = vrot.lane.b32.xlu0 %v846, 16
      %v861 = vpop.permute.xlu0 %860
      %862 = vrot.lane.b32.xlu0 %v849, 16
      %v863 = vpop.permute.xlu0 %862
      %v871 = vrot.slane %v799, 2
      %v872 = vrot.slane %v807, 2
      %v873 = vsel %vm429, %v871, %v872
      %v874 = vrot.slane %v800, 2
      %v875 = vrot.slane %v808, 2
      %v876 = vsel %vm429, %v874, %v875
      %v877 = vrot.slane %v801, 2
      %v878 = vrot.slane %v809, 2
      %v879 = vsel %vm429, %v877, %v878
      %v880 = vrot.slane %v802, 2
      %v881 = vrot.slane %v810, 2
      %v882 = vsel %vm429, %v880, %v881
      %v883 = vrot.slane %v803, 2
      %v884 = vrot.slane %v811, 2
      %v885 = vsel %vm429, %v883, %v884
      %v886 = vrot.slane %v804, 2
      %v887 = vrot.slane %v812, 2
      %v888 = vsel %vm429, %v886, %v887
      %v889 = vrot.slane %v805, 2
      %v890 = vrot.slane %v813, 2
      %v891 = vsel %vm429, %v889, %v890
      %892 = vrot.lane.b32.xlu0 %v873, 32
      %v893 = vpop.permute.xlu0 %892
      %894 = vrot.lane.b32.xlu0 %v876, 32
      %v895 = vpop.permute.xlu0 %894
      %896 = vrot.lane.b32.xlu0 %v879, 32
      %v897 = vpop.permute.xlu0 %896
      %898 = vrot.lane.b32.xlu0 %v882, 32
      %v899 = vpop.permute.xlu0 %898
      %900 = vrot.lane.b32.xlu0 %v885, 32
      %v901 = vpop.permute.xlu0 %900
      %902 = vrot.lane.b32.xlu0 %v888, 32
      %v903 = vpop.permute.xlu0 %902
      %904 = vrot.lane.b32.xlu0 %v891, 32
      %v905 = vpop.permute.xlu0 %904
      %v913 = vsel %vm478, %v799, %v851
      %v914 = vsel %vm478, %v800, %v853
      %v915 = vsel %vm478, %v801, %v855
      %v916 = vsel %vm478, %v802, %v857
      %v917 = vsel %vm478, %v803, %v859
      %v918 = vsel %vm478, %v804, %v861
      %v919 = vsel %vm478, %v805, %v863
      %v920 = vsel %vm487, %v913, %v893
      %v921 = vsel %vm487, %v914, %v895
      %v922 = vsel %vm487, %v915, %v897
      %v923 = vsel %vm487, %v916, %v899
      %v924 = vsel %vm487, %v917, %v901
      %v925 = vsel %vm487, %v918, %v903
      %v926 = vsel %vm487, %v919, %v905
      %v929 = vrot.slane %v806, 1
      %v930 = vrot.slane %v814, 1
      %v931 = vsel %vm380, %v929, %v930
      %932 = vrot.lane.b32.xlu0 %v931, 16
      %v933 = vpop.permute.xlu0 %932
      %v935 = vrot.slane %v806, 2
      %v936 = vrot.slane %v814, 2
      %v937 = vsel %vm429, %v935, %v936
      %938 = vrot.lane.b32.xlu0 %v937, 32
      %v939 = vpop.permute.xlu0 %938
      %v941 = vsel %vm478, %v806, %v933
      %v942 = vsel %vm487, %v941, %v939
      %951 = vrot.lane.b32.xlu0 %v920, 48
      %v952 = vpop.permute.xlu0 %951
      %953 = vrot.lane.b32.xlu0 %v921, 48
      %v954 = vpop.permute.xlu0 %953
      %955 = vrot.lane.b32.xlu0 %v922, 48
      %v956 = vpop.permute.xlu0 %955
      %957 = vrot.lane.b32.xlu0 %v923, 48
      %v958 = vpop.permute.xlu0 %957
      %959 = vrot.lane.b32.xlu0 %v924, 48
      %v960 = vpop.permute.xlu0 %959
      %961 = vrot.lane.b32.xlu0 %v925, 48
      %v962 = vpop.permute.xlu0 %961
      %963 = vrot.lane.b32.xlu0 %v926, 48
      %v964 = vpop.permute.xlu0 %963
      %965 = vrot.lane.b32.xlu0 %v942, 48
      %v966 = vpop.permute.xlu0 %965
      %975 = vrot.lane.b32.xlu0 %v921, 96
      %v976 = vpop.permute.xlu0 %975
      %977 = vrot.lane.b32.xlu0 %v922, 96
      %v978 = vpop.permute.xlu0 %977
      %979 = vrot.lane.b32.xlu0 %v923, 96
      %v980 = vpop.permute.xlu0 %979
      %981 = vrot.lane.b32.xlu0 %v924, 96
      %v982 = vpop.permute.xlu0 %981
      %983 = vrot.lane.b32.xlu0 %v925, 96
      %v984 = vpop.permute.xlu0 %983
      %985 = vrot.lane.b32.xlu0 %v926, 96
      %v986 = vpop.permute.xlu0 %985
      %987 = vrot.lane.b32.xlu0 %v942, 96
      %v988 = vpop.permute.xlu0 %987
      %v996 = vsel %vm569, %v488, %v952
      %v997 = vsel %vm569, %v920, %v954
      %v998 = vsel %vm569, %v921, %v956
      %v999 = vsel %vm569, %v922, %v958
      %v1000 = vsel %vm569, %v923, %v960
      %v1001 = vsel %vm569, %v924, %v962
      %v1002 = vsel %vm569, %v925, %v964
      %v1003 = vsel %vm569, %v926, %v966
      %v1004 = vsel %vm578, %v996, %v976
      %v1005 = vsel %vm578, %v997, %v978
      %v1006 = vsel %vm578, %v998, %v980
      %v1007 = vsel %vm578, %v999, %v982
      %v1008 = vsel %vm578, %v1000, %v984
      %v1009 = vsel %vm578, %v1001, %v986
      %v1010 = vsel %vm578, %v1002, %v988
      %v1011 = vsel %vm578, %v1003, %v560
      %v1012 = vpack.c.bf16 %v1005, %v1004
      %v1013 = vpack.c.bf16 %v978, %v976
      %v1014 = vpack.c.bf16 %v1007, %v1006
      %v1015 = vpack.c.bf16 %v982, %v980
      %v1016 = vpack.c.bf16 %v1009, %v1008
      %v1017 = vpack.c.bf16 %v986, %v984
      %v1018 = vpack.c.bf16 %v1011, %v1010
      %v1019 = vpack.c.bf16 %v560, %v988
      %v1021 = vlaneseq
      %v1022 = vshrl.u32 %v1021, 7
      %v1023 = vsub.s32 0, %v1022
      %v1024 = vrot.slane %v774, %v1023
      %v1044 = vunpack.c.l.b16 %v756
      %v1045 = vunpack.c.l.b16 %v757
      %v1046 = vunpack.c.l.b16 %v758
      %v1047 = vunpack.c.l.b16 %v759
      %v1048 = vunpack.c.l.b16 %v760
      %v1049 = vunpack.c.l.b16 %v761
      %v1050 = vunpack.c.l.b16 %v762
      %v1051 = vunpack.c.l.b16 %v763
      %v1052 = vunpack.c.l.b16 %v764
      %v1053 = vunpack.c.l.b16 %v765
      %v1054 = vunpack.c.l.b16 %v766
      %v1055 = vunpack.c.l.b16 %v767
      %v1056 = vunpack.c.l.b16 %v768
      %v1057 = vunpack.c.l.b16 %v769
      %v1058 = vunpack.c.l.b16 %v770
      %v1059 = vunpack.c.l.b16 %v771
      %v1060 = vunpack.c.l.b16 %v772
      %v1061 = vunpack.c.l.b16 %v773
      %v1062 = vpack.c.b16 %v1045, %v1044
      %v1063 = vpack.c.b16 %v1047, %v1046
      %v1064 = vpack.c.b16 %v1049, %v1048
      %v1065 = vpack.c.b16 %v1051, %v1050
      %v1066 = vpack.c.b16 %v1053, %v1052
      %v1067 = vpack.c.b16 %v1055, %v1054
      %v1068 = vpack.c.b16 %v1057, %v1056
      %v1069 = vpack.c.b16 %v1059, %v1058
      %v1070 = vpack.c.b16 %v1061, %v1060
      %v1081 = vsel %vm478, %v1013, 0
      %v1084 = vsel %vm478, %v1015, 0
      %v1087 = vsel %vm478, %v1017, 0
      %v1090 = vsel %vm478, %v1019, 0
      %1092 = vmatprep.subr.bf16.mxu0 0
      %1093 = vmatpush1.bf16.msra.mxu0 %v1069
      %1094 = vmatprep.subr.bf16.mxu0 0
      %1095 = vmatpush1.bf16.msra.mxu0 %v1068
      %1096 = vmatprep.subr.bf16.mxu0 0
      %1097 = vmatpush1.bf16.msra.mxu0 %v1067
      %1098 = vmatprep.subr.bf16.mxu0 0
      %1099 = vmatpush1.bf16.msra.mxu0 %v1066
      %1100 = vmatprep.subr.bf16.mxu0 0
      %1101 = vmatpush1.bf16.msra.mxu0 %v1065
      %1102 = vmatprep.subr.bf16.mxu0 0
      %1103 = vmatpush1.bf16.msra.mxu0 %v1064
      %1104 = vmatprep.subr.bf16.mxu0 0
      %1105 = vmatpush1.bf16.msra.mxu0 %v1063
      %1106 = vmatprep.subr.bf16.mxu0 0
      %1107 = vmatpush1.bf16.msra.mxu0 %v1062
      %1108 = vmatprep.subr.bf16.mxu0 0
      %1109 = vmatpush2.bf16.msra.mxu0 0
      %1110 = vmatprep.subr.bf16.mxu0 0
      %1111 = vmatpush2.bf16.msra.mxu0 0
      %1112 = vmatprep.subr.bf16.mxu0 0
      %1113 = vmatpush2.bf16.msra.mxu0 0
      %1114 = vmatprep.subr.bf16.mxu0 0
      %1115 = vmatpush2.bf16.msra.mxu0 0
      %1116 = vmatprep.subr.bf16.mxu0 0
      %1117 = vmatpush2.bf16.msra.mxu0 0
      %1118 = vmatprep.subr.bf16.mxu0 0
      %1119 = vmatpush2.bf16.msra.mxu0 0
      %1120 = vmatprep.subr.bf16.mxu0 0
      %1121 = vmatpush2.bf16.msra.mxu0 0
      %1122 = vmatprep.subr.bf16.mxu0 0
      %1123 = vmatpush2.bf16.msra.mxu0 %v1070
      %1124 = vmatprep.mubr.bf16.mxu0 %v1081
      %1125 = vmatmul.mubr.bf16.gmra.mxu0 %v1012
      %v1126 = vpop.f32.mrf.mxu0
      %v1127 = vadd.f32 %v1024, %v1126
      %v1128 = vpop.f32.mrf.mxu0
      %v1129 = vpop.f32.mrf.mxu0
      %v1130 = vadd.f32 %v1024, %v1129
      %v1131 = vpop.f32.mrf.mxu0
      %1132 = vmatprep.mubr.bf16.mxu0 %v1084
      %1133 = vmatmul.mubr.bf16.gmra.mxu0 %v1014
      %v1134 = vpop.f32.mrf.mxu0
      %v1135 = vadd.f32 %v1024, %v1134
      %v1136 = vpop.f32.mrf.mxu0
      %v1137 = vpop.f32.mrf.mxu0
      %v1138 = vadd.f32 %v1024, %v1137
      %v1139 = vpop.f32.mrf.mxu0
      %1140 = vmatprep.mubr.bf16.mxu0 %v1087
      %1141 = vmatmul.mubr.bf16.gmra.mxu0 %v1016
      %v1142 = vpop.f32.mrf.mxu0
      %v1143 = vadd.f32 %v1024, %v1142
      %v1144 = vpop.f32.mrf.mxu0
      %v1145 = vpop.f32.mrf.mxu0
      %v1146 = vadd.f32 %v1024, %v1145
      %v1147 = vpop.f32.mrf.mxu0
      %1148 = vmatprep.mubr.bf16.mxu0 %v1090
      %1149 = vmatmul.mubr.bf16.gmra.mxu0 %v1018
      %v1150 = vpop.f32.mrf.mxu0
      %v1151 = vadd.f32 %v1024, %v1150
      %v1152 = vpop.f32.mrf.mxu0
      %v1153 = vpop.f32.mrf.mxu0
      %v1154 = vadd.f32 %v1024, %v1153
      %v1155 = vpop.f32.mrf.mxu0
      %1156 = vdwg.mxu0
      %v1157 = vmul.f32 %v1127, 0.1
      %v1158 = vmul.f32 %v1130, 0.1
      %v1159 = vmul.f32 %v1135, 0.1
      %v1160 = vmul.f32 %v1138, 0.1
      %v1161 = vmul.f32 %v1143, 0.1
      %v1162 = vmul.f32 %v1146, 0.1
      %v1163 = vmul.f32 %v1151, 0.1
      %v1164 = vmul.f32 %v1154, 0.1
      %v1167 = vunpack.c.l.b16 %v273
      %v1168 = vunpack.c.l.b16 %v274
      %v1169 = vpack.c.b16 %v1168, %v1167
      %v1172 = vsel %vm478, %v269, 0
      %v1175 = vsel %vm478, %v270, 0
      %v1178 = vsel %vm478, %v271, 0
      %v1181 = vsel %vm478, %v272, 0
      %1183 = vmatprep.subr.bf16.mxu0 0
      %1184 = vmatpush1.bf16.msra.mxu0 0
      %1185 = vmatprep.subr.bf16.mxu0 0
      %1186 = vmatpush1.bf16.msra.mxu0 0
      %1187 = vmatprep.subr.bf16.mxu0 0
      %1188 = vmatpush1.bf16.msra.mxu0 0
      %1189 = vmatprep.subr.bf16.mxu0 0
      %1190 = vmatpush1.bf16.msra.mxu0 0
      %1191 = vmatprep.subr.bf16.mxu0 0
      %1192 = vmatpush1.bf16.msra.mxu0 0
      %1193 = vmatprep.subr.bf16.mxu0 0
      %1194 = vmatpush1.bf16.msra.mxu0 0
      %1195 = vmatprep.subr.bf16.mxu0 0
      %1196 = vmatpush1.bf16.msra.mxu0 0
      %1197 = vmatprep.subr.bf16.mxu0 0
      %1198 = vmatpush1.bf16.msra.mxu0 %v1169
      %1199 = vmatprep.subr.bf16.mxu0 0
      %1200 = vmatpush2.bf16.msra.mxu0 0
      %1201 = vmatprep.subr.bf16.mxu0 0
      %1202 = vmatpush2.bf16.msra.mxu0 0
      %1203 = vmatprep.subr.bf16.mxu0 0
      %1204 = vmatpush2.bf16.msra.mxu0 0
      %1205 = vmatprep.subr.bf16.mxu0 0
      %1206 = vmatpush2.bf16.msra.mxu0 0
      %1207 = vmatprep.subr.bf16.mxu0 0
      %1208 = vmatpush2.bf16.msra.mxu0 0
      %1209 = vmatprep.subr.bf16.mxu0 0
      %1210 = vmatpush2.bf16.msra.mxu0 0
      %1211 = vmatprep.subr.bf16.mxu0 0
      %1212 = vmatpush2.bf16.msra.mxu0 0
      %1213 = vmatprep.subr.bf16.mxu0 0
      %1214 = vmatpush2.bf16.msra.mxu0 0
      %1215 = vmatprep.mubr.bf16.mxu0 0
      %1216 = vmatmul.mubr.bf16.gmra.mxu0 %v1172
      %v1217 = vpop.f32.mrf.mxu0
      %v1218 = vadd.f32 %v1157, %v1217
      %v1219 = vpop.f32.mrf.mxu0
      %v1220 = vpop.f32.mrf.mxu0
      %v1221 = vadd.f32 %v1158, %v1220
      %v1222 = vpop.f32.mrf.mxu0
      %1223 = vmatprep.mubr.bf16.mxu0 0
      %1224 = vmatmul.mubr.bf16.gmra.mxu0 %v1175
      %v1225 = vpop.f32.mrf.mxu0
      %v1226 = vadd.f32 %v1159, %v1225
      %v1227 = vpop.f32.mrf.mxu0
      %v1228 = vpop.f32.mrf.mxu0
      %v1229 = vadd.f32 %v1160, %v1228
      %v1230 = vpop.f32.mrf.mxu0
      %1231 = vmatprep.mubr.bf16.mxu0 0
      %1232 = vmatmul.mubr.bf16.gmra.mxu0 %v1178
      %v1233 = vpop.f32.mrf.mxu0
      %v1234 = vadd.f32 %v1161, %v1233
      %v1235 = vpop.f32.mrf.mxu0
      %v1236 = vpop.f32.mrf.mxu0
      %v1237 = vadd.f32 %v1162, %v1236
      %v1238 = vpop.f32.mrf.mxu0
      %1239 = vmatprep.mubr.bf16.mxu0 0
      %1240 = vmatmul.mubr.bf16.gmra.mxu0 %v1181
      %v1241 = vpop.f32.mrf.mxu0
      %v1242 = vadd.f32 %v1163, %v1241
      %v1243 = vpop.f32.mrf.mxu0
      %v1244 = vpop.f32.mrf.mxu0
      %v1245 = vadd.f32 %v1164, %v1244
      %v1246 = vpop.f32.mrf.mxu0
      %1247 = vdwg.mxu0
      %v1248 = vpack.c.bf16 %v1218, %v1218
      %v1249 = vpack.c.bf16 %v1221, %v1221
      %v1250 = vpack.c.bf16 %v1226, %v1226
      %v1251 = vpack.c.bf16 %v1229, %v1229
      %v1252 = vpack.c.bf16 %v1234, %v1234
      %v1253 = vpack.c.bf16 %v1237, %v1237
      %v1254 = vpack.c.bf16 %v1242, %v1242
      %v1255 = vpack.c.bf16 %v1245, %v1245
      %vm1256 = vcmask 257024
      %1257 = vst.msk [vmem:[%s251] sm:$0xf] %vm1256, %v1248
      %1258 = vst.msk [vmem:[%s251 + $0x4] sm:$0xf] %vm1256, %v1249
      %1259 = vst.msk [vmem:[%s251 + $0x8] sm:$0xf] %vm1256, %v1250
      %1260 = vst.msk [vmem:[%s251 + $0xc] sm:$0xf] %vm1256, %v1251
      %1261 = vst.msk [vmem:[%s251 + $0x10] sm:$0xf] %vm1256, %v1252
      %1262 = vst.msk [vmem:[%s251 + $0x14] sm:$0xf] %vm1256, %v1253
      %1263 = vst.msk [vmem:[%s251 + $0x18] sm:$0xf] %vm1256, %v1254
      %1264 = vst.msk [vmem:[%s251 + $0x1c] sm:$0xf] %vm1256, %v1255
      %p1265 = scmp.lt.s32.totalorder %s17, 1
      %s1266 = scalar_select %p1265, %s17, 1
      %s1267 = smul.addr %s1266, 8
      %s1268 = smul.addr %s1267, 4
      %s1269 = scalar_lea.vmem %s6, %s1268
      // Predicated region
      $region45: #{_lambda_.11} parent=43 // pred_check
        %p1270 = pneg %p166
      $region46: #{_lambda_.11} parent=43 // pred_check_branch
        %1272 = sbr.rel (%p1270) target = $region48
      $region47: #{_lambda_.11} parent=43 // pred_region
        _
      $region48: #{_lambda_.11} parent=43 // pred_fallthru
        _
    $region44: #{_lambda_.11} parent=5 // pred_fallthru
      _
    %p1273 = scmp.le.s32.totalorder 2, %s12
    // Predicated region
    $region49: #{_lambda_.11} parent=5 // pred_check
      %p1274 = pneg %p1273
    $region50: #{_lambda_.11} parent=5 // pred_check_branch
      %1276 = sbr.rel (%p1274) target = $region52
    $region51: #{_lambda_.11} parent=5 // pred_region
      %s1277 = ssub.s32 %s12, 2
      // Predicated region
      $region53: #{_lambda_.11} parent=51 // pred_check
        %p1278 = pneg %p172
      $region54: #{_lambda_.11} parent=51 // pred_check_branch
        %1280 = sbr.rel (%p1278) target = $region56
      $region55: #{_lambda_.11} parent=51 // pred_region
        %p1281 = scmp.lt.s32.totalorder %s18, 1
        %s1282 = scalar_select %p1281, %s18, 1
        %s1283 = smul.addr %s1282, 8
        %s1284 = smul.addr %s1283, 4
        %s1285 = scalar_lea.vmem %s6, %s1284
      $region56: #{_lambda_.11} parent=51 // pred_fallthru
        _
    $region52: #{_lambda_.11} parent=5 // pred_fallthru
      _
  $region6: #{_lambda_.11} parent=0 // loop_footer
    %s16 = sadd.s32 1, %s12
  $region7: #{_lambda_.11} parent=0 // loop_footer_branch
    %11 = sbr.rel target = $region3
  $region8: #{_lambda_.11} parent=0 // loop_exit
    _

// kernel: _lambda_.12
$region0: #{_lambda_.12}
  #allocation0 [shape = 'u32[]', space=smem, size = 0x4, offset = 0x4, fixed_abs, tag = 'smem constant byte address 0x4 - core index']
  #allocation1 [shape = 'u32[144,128]{1,0:T(1,128)}', space=vmem, size = 0x12000, scoped, tag = 'internal scratch']
  %s0 = inlined_call_operand.vmem [shape: bf16[2,8,8,32], index: 0, kind: input, shape index: {}]
  %s1 = inlined_call_operand.vmem [shape: bf16[288,32], index: 1, kind: input, shape index: {}]
  %s2 = inlined_call_operand.vmem [shape: f32[1,32], index: 2, kind: input, shape index: {}]
  %s3 = inlined_call_operand.vmem [shape: bf16[288,32], index: 3, kind: input, shape index: {}]
  %s4 = inlined_call_operand.vmem [shape: f32[1,32], index: 4, kind: input, shape index: {}]
  %s5 = inlined_call_operand.vmem [shape: bf16[2,8,8,32], index: 5, kind: output, shape index: {}]
  %s6 = sld [smem:[#allocation0]]
  $region53: #{_lambda_.12} parent=0
    _
  %s8 = ssub.s32 1, %s6
  %s9 = scalar_select 0, %s8, %s6
  loop: start=0, step=1, limit=4
  $region2: #{_lambda_.12} parent=0 // loop_pre_header
    _
  $region3: #{_lambda_.12} parent=0 // loop_header
    %s11 = sphi 0, %s15
    %p12 = scmp.ge.s32.totalorder %s11, 4
    %s21 = sphi 0, %s23
    %s24 = sphi 0, %s21
    %s25 = sphi 0, %s24
    %s41 = sphi 0, %s25
    %s45 = sphi 0, %s45
    %s47 = sphi 0, %s45
    %s48 = sphi 0, %s47
    %s62 = sphi 0, %s48
    %s66 = sphi 0, %s66
    %s68 = sphi 0, %s66
    %s69 = sphi 0, %s68
    %s83 = sphi 0, %s69
    %s87 = sphi 0, %s87
    %s89 = sphi 0, %s87
    %s90 = sphi 0, %s89
    %s104 = sphi 0, %s90
    %s108 = sphi 0, %s108
    %s110 = sphi 0, %s108
    %s111 = sphi 0, %s110
    %s125 = sphi 0, %s111
    %s131 = sphi 0, %s133
    %s134 = sphi 0, %s131
    %s135 = sphi 0, %s134
    %s151 = sphi 0, %s135
  $region4: #{_lambda_.12} parent=0 // loop_header_branch
    %14 = sbr.rel (%p12) target = $region8
  $region5: #{_lambda_.12} parent=0 // loop_body
    %s16 = ssub.s32 %s11, 1
    %s17 = ssub.s32 %s11, 2
    %s18 = sadd.s32 %s11, 1
    %s19 = ssub.s32 %s11, %s18
    %p20 = scmp.eq.s32.totalorder %s19, 0
    %s22 = sadd.s32 %s21, 1
    %s23 = scalar_select %p20, %s21, %s22
    %p26 = pneg %p20
    %p27 = scmp.eq.s32.totalorder %s11, 1
    %p28 = por %p26, %p27
    %p29 = scmp.ne.s32.totalorder %s21, %s24
    %p30 = scmp.eq.s32.totalorder %s11, 0
    %p31 = por %p29, %p30
    %p32 = scmp.ne.s32.totalorder %s21, %s24
    %p33 = scmp.eq.s32.totalorder %s16, 1
    %p34 = por %p32, %p33
    %p35 = scmp.ne.s32.totalorder %s24, %s25
    %p36 = scmp.eq.s32.totalorder %s16, 0
    %p37 = por %p35, %p36
    %p38 = scmp.ne.s32.totalorder %s24, %s25
    %p39 = scmp.eq.s32.totalorder %s17, 1
    %p40 = por %p38, %p39
    %p42 = scmp.ne.s32.totalorder %s25, %s41
    %p43 = scmp.eq.s32.totalorder %s17, 0
    %p44 = por %p42, %p43
    %s46 = sadd.s32 %s45, 1
    %p49 = scmp.eq.s32.totalorder %s11, 1
    %p50 = scmp.ne.s32.totalorder %s45, %s47
    %p51 = scmp.eq.s32.totalorder %s11, 0
    %p52 = por %p50, %p51
    %p53 = scmp.ne.s32.totalorder %s45, %s47
    %p54 = scmp.eq.s32.totalorder %s16, 1
    %p55 = por %p53, %p54
    %p56 = scmp.ne.s32.totalorder %s47, %s48
    %p57 = scmp.eq.s32.totalorder %s16, 0
    %p58 = por %p56, %p57
    %p59 = scmp.ne.s32.totalorder %s47, %s48
    %p60 = scmp.eq.s32.totalorder %s17, 1
    %p61 = por %p59, %p60
    %p63 = scmp.ne.s32.totalorder %s48, %s62
    %p64 = scmp.eq.s32.totalorder %s17, 0
    %p65 = por %p63, %p64
    %s67 = sadd.s32 %s66, 1
    %p70 = scmp.eq.s32.totalorder %s11, 1
    %p71 = scmp.ne.s32.totalorder %s66, %s68
    %p72 = scmp.eq.s32.totalorder %s11, 0
    %p73 = por %p71, %p72
    %p74 = scmp.ne.s32.totalorder %s66, %s68
    %p75 = scmp.eq.s32.totalorder %s16, 1
    %p76 = por %p74, %p75
    %p77 = scmp.ne.s32.totalorder %s68, %s69
    %p78 = scmp.eq.s32.totalorder %s16, 0
    %p79 = por %p77, %p78
    %p80 = scmp.ne.s32.totalorder %s68, %s69
    %p81 = scmp.eq.s32.totalorder %s17, 1
    %p82 = por %p80, %p81
    %p84 = scmp.ne.s32.totalorder %s69, %s83
    %p85 = scmp.eq.s32.totalorder %s17, 0
    %p86 = por %p84, %p85
    %s88 = sadd.s32 %s87, 1
    %p91 = scmp.eq.s32.totalorder %s11, 1
    %p92 = scmp.ne.s32.totalorder %s87, %s89
    %p93 = scmp.eq.s32.totalorder %s11, 0
    %p94 = por %p92, %p93
    %p95 = scmp.ne.s32.totalorder %s87, %s89
    %p96 = scmp.eq.s32.totalorder %s16, 1
    %p97 = por %p95, %p96
    %p98 = scmp.ne.s32.totalorder %s89, %s90
    %p99 = scmp.eq.s32.totalorder %s16, 0
    %p100 = por %p98, %p99
    %p101 = scmp.ne.s32.totalorder %s89, %s90
    %p102 = scmp.eq.s32.totalorder %s17, 1
    %p103 = por %p101, %p102
    %p105 = scmp.ne.s32.totalorder %s90, %s104
    %p106 = scmp.eq.s32.totalorder %s17, 0
    %p107 = por %p105, %p106
    %s109 = sadd.s32 %s108, 1
    %p112 = scmp.eq.s32.totalorder %s11, 1
    %p113 = scmp.ne.s32.totalorder %s108, %s110
    %p114 = scmp.eq.s32.totalorder %s11, 0
    %p115 = por %p113, %p114
    %p116 = scmp.ne.s32.totalorder %s108, %s110
    %p117 = scmp.eq.s32.totalorder %s16, 1
    %p118 = por %p116, %p117
    %p119 = scmp.ne.s32.totalorder %s110, %s111
    %p120 = scmp.eq.s32.totalorder %s16, 0
    %p121 = por %p119, %p120
    %p122 = scmp.ne.s32.totalorder %s110, %s111
    %p123 = scmp.eq.s32.totalorder %s17, 1
    %p124 = por %p122, %p123
    %p126 = scmp.ne.s32.totalorder %s111, %s125
    %p127 = scmp.eq.s32.totalorder %s17, 0
    %p128 = por %p126, %p127
    %s129 = ssub.s32 %s11, %s18
    %p130 = scmp.eq.s32.totalorder %s129, 0
    %s132 = sadd.s32 %s131, 1
    %s133 = scalar_select %p130, %s131, %s132
    %p136 = pneg %p130
    %p137 = scmp.eq.s32.totalorder %s11, 1
    %p138 = por %p136, %p137
    %p139 = scmp.ne.s32.totalorder %s131, %s134
    %p140 = scmp.eq.s32.totalorder %s11, 0
    %p141 = por %p139, %p140
    %p142 = scmp.ne.s32.totalorder %s131, %s134
    %p143 = scmp.eq.s32.totalorder %s16, 1
    %p144 = por %p142, %p143
    %p145 = scmp.ne.s32.totalorder %s134, %s135
    %p146 = scmp.eq.s32.totalorder %s16, 0
    %p147 = por %p145, %p146
    %p148 = scmp.ne.s32.totalorder %s134, %s135
    %p149 = scmp.eq.s32.totalorder %s17, 1
    %p150 = por %p148, %p149
    %p152 = scmp.ne.s32.totalorder %s135, %s151
    %p153 = scmp.eq.s32.totalorder %s17, 0
    %p154 = por %p152, %p153
    %p155 = scmp.le.s32.totalorder 1, %s11
    %p156 = scmp.lt.s32.totalorder %s11, 3
    %p157 = pnand %p155, %p156
    %p158 = pneg %p157
    // Predicated region
    $region9: #{_lambda_.12} parent=5 // pred_check
      _
    $region10: #{_lambda_.12} parent=5 // pred_check_branch
      %160 = sbr.rel (%p157) target = $region12
    $region11: #{_lambda_.12} parent=5 // pred_region
      %s161 = ssub.s32 %s11, 1
      // Predicated region
      $region13: #{_lambda_.12} parent=11 // pred_check
        %p162 = pneg %p58
      $region14: #{_lambda_.12} parent=11 // pred_check_branch
        %164 = sbr.rel (%p162) target = $region16
      $region15: #{_lambda_.12} parent=11 // pred_region
        _
      $region16: #{_lambda_.12} parent=11 // pred_fallthru
        _
      // Predicated region
      $region17: #{_lambda_.12} parent=11 // pred_check
        %p165 = pneg %p79
      $region18: #{_lambda_.12} parent=11 // pred_check_branch
        %167 = sbr.rel (%p165) target = $region20
      $region19: #{_lambda_.12} parent=11 // pred_region
        _
      $region20: #{_lambda_.12} parent=11 // pred_fallthru
        _
      // Predicated region
      $region21: #{_lambda_.12} parent=11 // pred_check
        %p168 = pneg %p100
      $region22: #{_lambda_.12} parent=11 // pred_check_branch
        %170 = sbr.rel (%p168) target = $region24
      $region23: #{_lambda_.12} parent=11 // pred_region
        _
      $region24: #{_lambda_.12} parent=11 // pred_fallthru
        _
      // Predicated region
      $region25: #{_lambda_.12} parent=11 // pred_check
        %p171 = pneg %p121
      $region26: #{_lambda_.12} parent=11 // pred_check_branch
        %173 = sbr.rel (%p171) target = $region28
      $region27: #{_lambda_.12} parent=11 // pred_region
        _
      $region28: #{_lambda_.12} parent=11 // pred_fallthru
        _
    $region12: #{_lambda_.12} parent=5 // pred_fallthru
      _
    %p174 = scmp.lt.s32.totalorder %s11, 2
    // Predicated region
    $region29: #{_lambda_.12} parent=5 // pred_check
      %p175 = pneg %p174
    $region30: #{_lambda_.12} parent=5 // pred_check_branch
      %177 = sbr.rel (%p175) target = $region32
    $region31: #{_lambda_.12} parent=5 // pred_region
      // Predicated region
      $region33: #{_lambda_.12} parent=31 // pred_check
        %p178 = pneg %p31
      $region34: #{_lambda_.12} parent=31 // pred_check_branch
        %180 = sbr.rel (%p178) target = $region36
      $region35: #{_lambda_.12} parent=31 // pred_region
        %p181 = scmp.lt.s32.totalorder %s11, 1
        %s182 = scalar_select %p181, %s11, 1
        %s183 = smul.addr %s182, 8
        %s184 = smul.addr %s183, 4
        %s185 = scalar_lea.vmem %s0, %s184
      $region36: #{_lambda_.12} parent=31 // pred_fallthru
        _
    $region32: #{_lambda_.12} parent=5 // pred_fallthru
      _
    %p186 = scmp.le.s32.totalorder 1, %s11
    %p187 = scmp.lt.s32.totalorder %s11, 3
    %p188 = pnand %p186, %p187
    %p189 = pneg %p188
    // Predicated region
    $region37: #{_lambda_.12} parent=5 // pred_check
      _
    $region38: #{_lambda_.12} parent=5 // pred_check_branch
      %191 = sbr.rel (%p188) target = $region40
    $region39: #{_lambda_.12} parent=5 // pred_region
      %s192 = ssub.s32 %s11, 1
      %p193 = scmp.lt.s32.totalorder %s16, 1
      %s194 = scalar_select %p193, %s16, 1
      %s195 = smul.addr %s194, 8
      %s196 = smul.addr %s195, 4
      %s197 = scalar_lea.vmem %s0, %s196
      %p198 = pneg %p37
      %p199 = pneg %p34
      %p200 = pneg %p58
      %p201 = pneg %p55
      %p202 = pneg %p79
      %p203 = pneg %p76
      %p204 = pneg %p100
      %p205 = pneg %p97
      %p206 = pneg %p121
      %p207 = pneg %p118
      %p208 = pneg %p147
      %p209 = pneg %p144
      %p210 = scmp.lt.s32.totalorder %s16, 1
      %s211 = scalar_select %p210, %s16, 1
      %s212 = smul.addr %s211, 8
      %s213 = smul.addr %s212, 4
      %s214 = scalar_lea.vmem %s5, %s213
      %p215 = scmp.lt.s32.totalorder %s16, 1
      %s216 = scalar_select %p215, %s16, 1
      %s217 = smul.addr %s216, 8
      %s218 = smul.addr %s217, 4
      %s219 = scalar_lea.vmem %s0, %s218
      %p220 = scmp.lt.s32.totalorder %s16, 1
      %s221 = scalar_select %p220, %s16, 1
      %s222 = smul.addr %s221, 8
      %s223 = smul.addr %s222, 4
      %s224 = scalar_lea.vmem %s5, %s223
      %v226 = vld [vmem:[%s219] sm:$0xf]
      %v227 = vld [vmem:[%s219 + $0x4] sm:$0xf]
      %v228 = vld [vmem:[%s219 + $0x8] sm:$0xf]
      %v229 = vld [vmem:[%s219 + $0xc] sm:$0xf]
      %v230 = vld [vmem:[%s219 + $0x10] sm:$0xf]
      %v231 = vld [vmem:[%s219 + $0x14] sm:$0xf]
      %v232 = vld [vmem:[%s219 + $0x18] sm:$0xf]
      %v233 = vld [vmem:[%s219 + $0x1c] sm:$0xf]
      %v234 = vunpack.c.l.bf16 %v226
      %v235 = vunpack.c.l.bf16 %v227
      %v236 = vunpack.c.l.bf16 %v228
      %v237 = vunpack.c.l.bf16 %v229
      %v238 = vunpack.c.l.bf16 %v230
      %v239 = vunpack.c.l.bf16 %v231
      %v240 = vunpack.c.l.bf16 %v232
      %v241 = vunpack.c.l.bf16 %v233
      %vm242 = vcmp.ge.f32.partialorder %v234, 0.0
      %vm243 = vcmp.ge.f32.partialorder %v235, 0.0
      %vm244 = vcmp.ge.f32.partialorder %v236, 0.0
      %vm245 = vcmp.ge.f32.partialorder %v237, 0.0
      %vm246 = vcmp.ge.f32.partialorder %v238, 0.0
      %vm247 = vcmp.ge.f32.partialorder %v239, 0.0
      %vm248 = vcmp.ge.f32.partialorder %v240, 0.0
      %vm249 = vcmp.ge.f32.partialorder %v241, 0.0
      %v250 = vmul.f32 %v234, 0.2
      %v251 = vmul.f32 %v235, 0.2
      %v252 = vmul.f32 %v236, 0.2
      %v253 = vmul.f32 %v237, 0.2
      %v254 = vmul.f32 %v238, 0.2
      %v255 = vmul.f32 %v239, 0.2
      %v256 = vmul.f32 %v240, 0.2
      %v257 = vmul.f32 %v241, 0.2
      %v258 = vsel %vm242, %v234, %v250
      %v259 = vsel %vm243, %v235, %v251
      %v260 = vsel %vm244, %v236, %v252
      %v261 = vsel %vm245, %v237, %v253
      %v262 = vsel %vm246, %v238, %v254
      %v263 = vsel %vm247, %v239, %v255
      %v264 = vsel %vm248, %v240, %v256
      %v265 = vsel %vm249, %v241, %v257
      %v266 = vld [vmem:[%s1] sm:$0xf]
      %v267 = vld [vmem:[%s1 + $0x4] sm:$0xf]
      %v268 = vld [vmem:[%s1 + $0x8] sm:$0xf]
      %v269 = vld [vmem:[%s1 + $0xc] sm:$0xf]
      %v270 = vld [vmem:[%s1 + $0x10] sm:$0xf]
      %v271 = vld [vmem:[%s1 + $0x14] sm:$0xf]
      %v272 = vld [vmem:[%s1 + $0x18] sm:$0xf]
      %v273 = vld [vmem:[%s1 + $0x1c] sm:$0xf]
      %v274 = vld [vmem:[%s1 + $0x20] sm:$0xf]
      %v275 = vld [vmem:[%s1 + $0x24] sm:$0xf]
      %v276 = vld [vmem:[%s1 + $0x28] sm:$0xf]
      %v277 = vld [vmem:[%s1 + $0x2c] sm:$0xf]
      %v278 = vld [vmem:[%s1 + $0x30] sm:$0xf]
      %v279 = vld [vmem:[%s1 + $0x34] sm:$0xf]
      %v280 = vld [vmem:[%s1 + $0x38] sm:$0xf]
      %v281 = vld [vmem:[%s1 + $0x3c] sm:$0xf]
      %v282 = vld [vmem:[%s1 + $0x40] sm:$0xf]
      %v283 = vld [vmem:[%s1 + $0x44] sm:$0xf]
      %v284 = vld [vmem:[%s1 + $0x48] sm:$0xf]
      %v285 = vld [vmem:[%s1 + $0x4c] sm:$0xf]
      %v286 = vld [vmem:[%s1 + $0x50] sm:$0xf]
      %v287 = vld [vmem:[%s1 + $0x54] sm:$0xf]
      %v288 = vld [vmem:[%s1 + $0x58] sm:$0xf]
      %v289 = vld [vmem:[%s1 + $0x5c] sm:$0xf]
      %v290 = vld [vmem:[%s1 + $0x60] sm:$0xf]
      %v291 = vld [vmem:[%s1 + $0x64] sm:$0xf]
      %v292 = vld [vmem:[%s1 + $0x68] sm:$0xf]
      %v293 = vld [vmem:[%s1 + $0x6c] sm:$0xf]
      %v294 = vld [vmem:[%s1 + $0x70] sm:$0xf]
      %v295 = vld [vmem:[%s1 + $0x74] sm:$0xf]
      %v296 = vld [vmem:[%s1 + $0x78] sm:$0xf]
      %v297 = vld [vmem:[%s1 + $0x7c] sm:$0xf]
      %v298 = vld [vmem:[%s1 + $0x80] sm:$0xf]
      %v299 = vld [vmem:[%s1 + $0x84] sm:$0xf]
      %v300 = vld [vmem:[%s1 + $0x88] sm:$0xf]
      %v301 = vld [vmem:[%s1 + $0x8c] sm:$0xf]
      %v302 = vld [vmem:[%s2] sm:$0x1]
      %v312 = vrot.slane 0.0, 7
      %v313 = vrot.slane %v258, 7
      %v314 = vrot.slane %v259, 7
      %v315 = vrot.slane %v260, 7
      %v316 = vrot.slane %v261, 7
      %v317 = vrot.slane %v262, 7
      %v318 = vrot.slane %v263, 7
      %v319 = vrot.slane %v264, 7
      %v320 = vrot.slane %v265, 7
      %vm330 = vcmask 1040384
      %v331 = vsel %vm330, 0.0, %v312
      %v332 = vsel %vm330, 0.0, %v313
      %v333 = vsel %vm330, 0.0, %v314
      %v334 = vsel %vm330, 0.0, %v315
      %v335 = vsel %vm330, 0.0, %v316
      %v336 = vsel %vm330, 0.0, %v317
      %v337 = vsel %vm330, 0.0, %v318
      %v338 = vsel %vm330, 0.0, %v319
      %v339 = vsel %vm330, 0.0, %v320
      %v340 = vsel %vm330, %v312, 0.0
      %v341 = vsel %vm330, %v313, 0.0
      %v342 = vsel %vm330, %v314, 0.0
      %v343 = vsel %vm330, %v315, 0.0
      %v344 = vsel %vm330, %v316, 0.0
      %v345 = vsel %vm330, %v317, 0.0
      %v346 = vsel %vm330, %v318, 0.0
      %v347 = vsel %vm330, %v319, 0.0
      %v348 = vsel %vm330, %v320, 0.0
      %vm365 = vcmask 1046528
      %v366 = vrot.slane %v331, 1
      %v367 = vrot.slane %v340, 1
      %v368 = vsel %vm365, %v366, %v367
      %v369 = vrot.slane %v332, 1
      %v370 = vrot.slane %v341, 1
      %v371 = vsel %vm365, %v369, %v370
      %v372 = vrot.slane %v333, 1
      %v373 = vrot.slane %v342, 1
      %v374 = vsel %vm365, %v372, %v373
      %v375 = vrot.slane %v334, 1
      %v376 = vrot.slane %v343, 1
      %v377 = vsel %vm365, %v375, %v376
      %v378 = vrot.slane %v335, 1
      %v379 = vrot.slane %v344, 1
      %v380 = vsel %vm365, %v378, %v379
      %v381 = vrot.slane %v336, 1
      %v382 = vrot.slane %v345, 1
      %v383 = vsel %vm365, %v381, %v382
      %v384 = vrot.slane %v337, 1
      %v385 = vrot.slane %v346, 1
      %v386 = vsel %vm365, %v384, %v385
      %v387 = vrot.slane %v338, 1
      %v388 = vrot.slane %v347, 1
      %v389 = vsel %vm365, %v387, %v388
      %390 = vrot.lane.b32.xlu0 %v368, 32
      %v391 = vpop.permute.xlu0 %390
      %392 = vrot.lane.b32.xlu0 %v371, 32
      %v393 = vpop.permute.xlu0 %392
      %394 = vrot.lane.b32.xlu0 %v374, 32
      %v395 = vpop.permute.xlu0 %394
      %396 = vrot.lane.b32.xlu0 %v377, 32
      %v397 = vpop.permute.xlu0 %396
      %398 = vrot.lane.b32.xlu0 %v380, 32
      %v399 = vpop.permute.xlu0 %398
      %400 = vrot.lane.b32.xlu0 %v383, 32
      %v401 = vpop.permute.xlu0 %400
      %402 = vrot.lane.b32.xlu0 %v386, 32
      %v403 = vpop.permute.xlu0 %402
      %404 = vrot.lane.b32.xlu0 %v389, 32
      %v405 = vpop.permute.xlu0 %404
      %vm414 = vcmask 1045504
      %v415 = vrot.slane %v331, 2
      %v416 = vrot.slane %v340, 2
      %v417 = vsel %vm414, %v415, %v416
      %v418 = vrot.slane %v332, 2
      %v419 = vrot.slane %v341, 2
      %v420 = vsel %vm414, %v418, %v419
      %v421 = vrot.slane %v333, 2
      %v422 = vrot.slane %v342, 2
      %v423 = vsel %vm414, %v421, %v422
      %v424 = vrot.slane %v334, 2
      %v425 = vrot.slane %v343, 2
      %v426 = vsel %vm414, %v424, %v425
      %v427 = vrot.slane %v335, 2
      %v428 = vrot.slane %v344, 2
      %v429 = vsel %vm414, %v427, %v428
      %v430 = vrot.slane %v336, 2
      %v431 = vrot.slane %v345, 2
      %v432 = vsel %vm414, %v430, %v431
      %v433 = vrot.slane %v337, 2
      %v434 = vrot.slane %v346, 2
      %v435 = vsel %vm414, %v433, %v434
      %v436 = vrot.slane %v338, 2
      %v437 = vrot.slane %v347, 2
      %v438 = vsel %vm414, %v436, %v437
      %439 = vrot.lane.b32.xlu0 %v417, 64
      %v440 = vpop.permute.xlu0 %439
      %441 = vrot.lane.b32.xlu0 %v420, 64
      %v442 = vpop.permute.xlu0 %441
      %443 = vrot.lane.b32.xlu0 %v423, 64
      %v444 = vpop.permute.xlu0 %443
      %445 = vrot.lane.b32.xlu0 %v426, 64
      %v446 = vpop.permute.xlu0 %445
      %447 = vrot.lane.b32.xlu0 %v429, 64
      %v448 = vpop.permute.xlu0 %447
      %449 = vrot.lane.b32.xlu0 %v432, 64
      %v450 = vpop.permute.xlu0 %449
      %451 = vrot.lane.b32.xlu0 %v435, 64
      %v452 = vpop.permute.xlu0 %451
      %453 = vrot.lane.b32.xlu0 %v438, 64
      %v454 = vpop.permute.xlu0 %453
      %vm463 = vcmask 261120
      %v464 = vsel %vm463, %v331, %v391
      %v465 = vsel %vm463, %v332, %v393
      %v466 = vsel %vm463, %v333, %v395
      %v467 = vsel %vm463, %v334, %v397
      %v468 = vsel %vm463, %v335, %v399
      %v469 = vsel %vm463, %v336, %v401
      %v470 = vsel %vm463, %v337, %v403
      %v471 = vsel %vm463, %v338, %v405
      %vm472 = vcmask 523264
      %v473 = vsel %vm472, %v464, %v440
      %v474 = vsel %vm472, %v465, %v442
      %v475 = vsel %vm472, %v466, %v444
      %v476 = vsel %vm472, %v467, %v446
      %v477 = vsel %vm472, %v468, %v448
      %v478 = vsel %vm472, %v469, %v450
      %v479 = vsel %vm472, %v470, %v452
      %v480 = vsel %vm472, %v471, %v454
      %v483 = vrot.slane %v339, 1
      %v484 = vrot.slane %v348, 1
      %v485 = vsel %vm365, %v483, %v484
      %486 = vrot.lane.b32.xlu0 %v485, 32
      %v487 = vpop.permute.xlu0 %486
      %v489 = vrot.slane %v339, 2
      %v490 = vrot.slane %v348, 2
      %v491 = vsel %vm414, %v489, %v490
      %492 = vrot.lane.b32.xlu0 %v491, 64
      %v493 = vpop.permute.xlu0 %492
      %v495 = vsel %vm463, %v339, %v487
      %v496 = vsel %vm472, %v495, %v493
      %505 = vrot.lane.b32.xlu0 %v474, 96
      %v506 = vpop.permute.xlu0 %505
      %507 = vrot.lane.b32.xlu0 %v475, 96
      %v508 = vpop.permute.xlu0 %507
      %509 = vrot.lane.b32.xlu0 %v476, 96
      %v510 = vpop.permute.xlu0 %509
      %511 = vrot.lane.b32.xlu0 %v477, 96
      %v512 = vpop.permute.xlu0 %511
      %513 = vrot.lane.b32.xlu0 %v478, 96
      %v514 = vpop.permute.xlu0 %513
      %515 = vrot.lane.b32.xlu0 %v479, 96
      %v516 = vpop.permute.xlu0 %515
      %517 = vrot.lane.b32.xlu0 %v480, 96
      %v518 = vpop.permute.xlu0 %517
      %519 = vrot.lane.b32.xlu0 %v496, 96
      %v520 = vpop.permute.xlu0 %519
      %530 = vrot.lane.b32.xlu0 %v475, 64
      %v531 = vpop.permute.xlu0 %530
      %532 = vrot.lane.b32.xlu0 %v476, 64
      %v533 = vpop.permute.xlu0 %532
      %534 = vrot.lane.b32.xlu0 %v477, 64
      %v535 = vpop.permute.xlu0 %534
      %536 = vrot.lane.b32.xlu0 %v478, 64
      %v537 = vpop.permute.xlu0 %536
      %538 = vrot.lane.b32.xlu0 %v479, 64
      %v539 = vpop.permute.xlu0 %538
      %540 = vrot.lane.b32.xlu0 %v480, 64
      %v541 = vpop.permute.xlu0 %540
      %542 = vrot.lane.b32.xlu0 %v496, 64
      %v543 = vpop.permute.xlu0 %542
      %544 = vrot.lane.b32.xlu0 %v473, 64
      %v545 = vpop.permute.xlu0 %544
      %vm554 = vcmask 785408
      %v555 = vsel %vm554, %v473, %v506
      %v556 = vsel %vm554, %v474, %v508
      %v557 = vsel %vm554, %v475, %v510
      %v558 = vsel %vm554, %v476, %v512
      %v559 = vsel %vm554, %v477, %v514
      %v560 = vsel %vm554, %v478, %v516
      %v561 = vsel %vm554, %v479, %v518
      %v562 = vsel %vm554, %v480, %v520
      %v563 = vsel %vm472, %v506, %v531
      %v564 = vsel %vm472, %v508, %v533
      %v565 = vsel %vm472, %v510, %v535
      %v566 = vsel %vm472, %v512, %v537
      %v567 = vsel %vm472, %v514, %v539
      %v568 = vsel %vm472, %v516, %v541
      %v569 = vsel %vm472, %v518, %v543
      %v570 = vsel %vm472, %v520, %v545
      %v571 = vpack.c.bf16 %v556, %v555
      %v572 = vpack.c.bf16 %v564, %v563
      %v573 = vpack.c.bf16 %v533, %v531
      %v574 = vpack.c.bf16 %v558, %v557
      %v575 = vpack.c.bf16 %v566, %v565
      %v576 = vpack.c.bf16 %v537, %v535
      %v577 = vpack.c.bf16 %v560, %v559
      %v578 = vpack.c.bf16 %v568, %v567
      %v579 = vpack.c.bf16 %v541, %v539
      %v580 = vpack.c.bf16 %v562, %v561
      %v581 = vpack.c.bf16 %v570, %v569
      %v582 = vpack.c.bf16 %v545, %v543
      %v584 = vlaneseq
      %v585 = vshrl.u32 %v584, 7
      %v586 = vsub.s32 0, %v585
      %v587 = vrot.slane %v302, %v586
      %v625 = vunpack.c.l.b16 %v266
      %v626 = vunpack.c.l.b16 %v267
      %v627 = vunpack.c.l.b16 %v268
      %v628 = vunpack.c.l.b16 %v269
      %v629 = vunpack.c.l.b16 %v270
      %v630 = vunpack.c.l.b16 %v271
      %v631 = vunpack.c.l.b16 %v272
      %v632 = vunpack.c.l.b16 %v273
      %v633 = vunpack.c.l.b16 %v274
      %v634 = vunpack.c.l.b16 %v275
      %v635 = vunpack.c.l.b16 %v276
      %v636 = vunpack.c.l.b16 %v277
      %v637 = vunpack.c.l.b16 %v278
      %v638 = vunpack.c.l.b16 %v279
      %v639 = vunpack.c.l.b16 %v280
      %v640 = vunpack.c.l.b16 %v281
      %v641 = vunpack.c.l.b16 %v282
      %v642 = vunpack.c.l.b16 %v283
      %v643 = vunpack.c.l.b16 %v284
      %v644 = vunpack.c.l.b16 %v285
      %v645 = vunpack.c.l.b16 %v286
      %v646 = vunpack.c.l.b16 %v287
      %v647 = vunpack.c.l.b16 %v288
      %v648 = vunpack.c.l.b16 %v289
      %v649 = vunpack.c.l.b16 %v290
      %v650 = vunpack.c.l.b16 %v291
      %v651 = vunpack.c.l.b16 %v292
      %v652 = vunpack.c.l.b16 %v293
      %v653 = vunpack.c.l.b16 %v294
      %v654 = vunpack.c.l.b16 %v295
      %v655 = vunpack.c.l.b16 %v296
      %v656 = vunpack.c.l.b16 %v297
      %v657 = vunpack.c.l.b16 %v298
      %v658 = vunpack.c.l.b16 %v299
      %v659 = vunpack.c.l.b16 %v300
      %v660 = vunpack.c.l.b16 %v301
      %v661 = vpack.c.b16 %v626, %v625
      %v662 = vpack.c.b16 %v628, %v627
      %v663 = vpack.c.b16 %v630, %v629
      %v664 = vpack.c.b16 %v632, %v631
      %v665 = vpack.c.b16 %v634, %v633
      %v666 = vpack.c.b16 %v636, %v635
      %v667 = vpack.c.b16 %v638, %v637
      %v668 = vpack.c.b16 %v640, %v639
      %v669 = vpack.c.b16 %v642, %v641
      %v670 = vpack.c.b16 %v644, %v643
      %v671 = vpack.c.b16 %v646, %v645
      %v672 = vpack.c.b16 %v648, %v647
      %v673 = vpack.c.b16 %v650, %v649
      %v674 = vpack.c.b16 %v652, %v651
      %v675 = vpack.c.b16 %v654, %v653
      %v676 = vpack.c.b16 %v656, %v655
      %v677 = vpack.c.b16 %v658, %v657
      %v678 = vpack.c.b16 %v660, %v659
      %v698 = vsel %vm463, %v573, 0
      %v701 = vsel %vm463, %v576, 0
      %v704 = vsel %vm463, %v579, 0
      %v707 = vsel %vm463, %v582, 0
      %709 = vmatprep.subr.bf16.mxu0 0
      %710 = vmatpush1.bf16.msra.mxu0 %v668
      %711 = vmatprep.subr.bf16.mxu0 0
      %712 = vmatpush1.bf16.msra.mxu0 %v667
      %713 = vmatprep.subr.bf16.mxu0 0
      %714 = vmatpush1.bf16.msra.mxu0 %v666
      %715 = vmatprep.subr.bf16.mxu0 0
      %716 = vmatpush1.bf16.msra.mxu0 %v665
      %717 = vmatprep.subr.bf16.mxu0 0
      %718 = vmatpush1.bf16.msra.mxu0 %v664
      %719 = vmatprep.subr.bf16.mxu0 0
      %720 = vmatpush1.bf16.msra.mxu0 %v663
      %721 = vmatprep.subr.bf16.mxu0 0
      %722 = vmatpush1.bf16.msra.mxu0 %v662
      %723 = vmatprep.subr.bf16.mxu0 0
      %724 = vmatpush1.bf16.msra.mxu0 %v661
      %725 = vmatprep.subr.bf16.mxu0 0
      %726 = vmatpush2.bf16.msra.mxu0 %v676
      %727 = vmatprep.subr.bf16.mxu0 0
      %728 = vmatpush2.bf16.msra.mxu0 %v675
      %729 = vmatprep.subr.bf16.mxu0 0
      %730 = vmatpush2.bf16.msra.mxu0 %v674
      %731 = vmatprep.subr.bf16.mxu0 0
      %732 = vmatpush2.bf16.msra.mxu0 %v673
      %733 = vmatprep.subr.bf16.mxu0 0
      %734 = vmatpush2.bf16.msra.mxu0 %v672
      %735 = vmatprep.subr.bf16.mxu0 0
      %736 = vmatpush2.bf16.msra.mxu0 %v671
      %737 = vmatprep.subr.bf16.mxu0 0
      %738 = vmatpush2.bf16.msra.mxu0 %v670
      %739 = vmatprep.subr.bf16.mxu0 0
      %740 = vmatpush2.bf16.msra.mxu0 %v669
      %741 = vmatprep.mubr.bf16.mxu0 %v572
      %742 = vmatmul.mubr.bf16.gmra.mxu0 %v571
      %v743 = vpop.f32.mrf.mxu0
      %v744 = vadd.f32 %v587, %v743
      %v745 = vpop.f32.mrf.mxu0
      %v746 = vpop.f32.mrf.mxu0
      %v747 = vadd.f32 %v587, %v746
      %v748 = vpop.f32.mrf.mxu0
      %749 = vmatprep.mubr.bf16.mxu0 %v575
      %750 = vmatmul.mubr.bf16.gmra.mxu0 %v574
      %v751 = vpop.f32.mrf.mxu0
      %v752 = vadd.f32 %v587, %v751
      %v753 = vpop.f32.mrf.mxu0
      %v754 = vpop.f32.mrf.mxu0
      %v755 = vadd.f32 %v587, %v754
      %v756 = vpop.f32.mrf.mxu0
      %757 = vmatprep.mubr.bf16.mxu0 %v578
      %758 = vmatmul.mubr.bf16.gmra.mxu0 %v577
      %v759 = vpop.f32.mrf.mxu0
      %v760 = vadd.f32 %v587, %v759
      %v761 = vpop.f32.mrf.mxu0
      %v762 = vpop.f32.mrf.mxu0
      %v763 = vadd.f32 %v587, %v762
      %v764 = vpop.f32.mrf.mxu0
      %765 = vmatprep.mubr.bf16.mxu0 %v581
      %766 = vmatmul.mubr.bf16.gmra.mxu0 %v580
      %v767 = vpop.f32.mrf.mxu0
      %v768 = vadd.f32 %v587, %v767
      %v769 = vpop.f32.mrf.mxu0
      %v770 = vpop.f32.mrf.mxu0
      %v771 = vadd.f32 %v587, %v770
      %v772 = vpop.f32.mrf.mxu0
      %773 = vdwg.mxu0
      %774 = vmatprep.subr.bf16.mxu0 0
      %775 = vmatpush1.bf16.msra.mxu0 0
      %776 = vmatprep.subr.bf16.mxu0 0
      %777 = vmatpush1.bf16.msra.mxu0 0
      %778 = vmatprep.subr.bf16.mxu0 0
      %779 = vmatpush1.bf16.msra.mxu0 0
      %780 = vmatprep.subr.bf16.mxu0 0
      %781 = vmatpush1.bf16.msra.mxu0 0
      %782 = vmatprep.subr.bf16.mxu0 0
      %783 = vmatpush1.bf16.msra.mxu0 0
      %784 = vmatprep.subr.bf16.mxu0 0
      %785 = vmatpush1.bf16.msra.mxu0 0
      %786 = vmatprep.subr.bf16.mxu0 0
      %787 = vmatpush1.bf16.msra.mxu0 %v678
      %788 = vmatprep.subr.bf16.mxu0 0
      %789 = vmatpush1.bf16.msra.mxu0 %v677
      %790 = vmatprep.subr.bf16.mxu0 0
      %791 = vmatpush2.bf16.msra.mxu0 0
      %792 = vmatprep.subr.bf16.mxu0 0
      %793 = vmatpush2.bf16.msra.mxu0 0
      %794 = vmatprep.subr.bf16.mxu0 0
      %795 = vmatpush2.bf16.msra.mxu0 0
      %796 = vmatprep.subr.bf16.mxu0 0
      %797 = vmatpush2.bf16.msra.mxu0 0
      %798 = vmatprep.subr.bf16.mxu0 0
      %799 = vmatpush2.bf16.msra.mxu0 0
      %800 = vmatprep.subr.bf16.mxu0 0
      %801 = vmatpush2.bf16.msra.mxu0 0
      %802 = vmatprep.subr.bf16.mxu0 0
      %803 = vmatpush2.bf16.msra.mxu0 0
      %804 = vmatprep.subr.bf16.mxu0 0
      %805 = vmatpush2.bf16.msra.mxu0 0
      %806 = vmatprep.mubr.bf16.mxu0 0
      %807 = vmatmul.mubr.bf16.gmra.mxu0 %v698
      %v808 = vpop.f32.mrf.mxu0
      %v809 = vadd.f32 %v744, %v808
      %v810 = vpop.f32.mrf.mxu0
      %v811 = vpop.f32.mrf.mxu0
      %v812 = vadd.f32 %v747, %v811
      %v813 = vpop.f32.mrf.mxu0
      %814 = vmatprep.mubr.bf16.mxu0 0
      %815 = vmatmul.mubr.bf16.gmra.mxu0 %v701
      %v816 = vpop.f32.mrf.mxu0
      %v817 = vadd.f32 %v752, %v816
      %v818 = vpop.f32.mrf.mxu0
      %v819 = vpop.f32.mrf.mxu0
      %v820 = vadd.f32 %v755, %v819
      %v821 = vpop.f32.mrf.mxu0
      %822 = vmatprep.mubr.bf16.mxu0 0
      %823 = vmatmul.mubr.bf16.gmra.mxu0 %v704
      %v824 = vpop.f32.mrf.mxu0
      %v825 = vadd.f32 %v760, %v824
      %v826 = vpop.f32.mrf.mxu0
      %v827 = vpop.f32.mrf.mxu0
      %v828 = vadd.f32 %v763, %v827
      %v829 = vpop.f32.mrf.mxu0
      %830 = vmatprep.mubr.bf16.mxu0 0
      %831 = vmatmul.mubr.bf16.gmra.mxu0 %v707
      %v832 = vpop.f32.mrf.mxu0
      %v833 = vadd.f32 %v768, %v832
      %v834 = vpop.f32.mrf.mxu0
      %v835 = vpop.f32.mrf.mxu0
      %v836 = vadd.f32 %v771, %v835
      %v837 = vpop.f32.mrf.mxu0
      %838 = vdwg.mxu0
      %vm839 = vcmp.ge.f32.partialorder %v809, 0.0
      %vm840 = vcmp.ge.f32.partialorder %v812, 0.0
      %vm841 = vcmp.ge.f32.partialorder %v817, 0.0
      %vm842 = vcmp.ge.f32.partialorder %v820, 0.0
      %vm843 = vcmp.ge.f32.partialorder %v825, 0.0
      %vm844 = vcmp.ge.f32.partialorder %v828, 0.0
      %vm845 = vcmp.ge.f32.partialorder %v833, 0.0
      %vm846 = vcmp.ge.f32.partialorder %v836, 0.0
      %v847 = vmul.f32 %v809, 0.2
      %v848 = vmul.f32 %v812, 0.2
      %v849 = vmul.f32 %v817, 0.2
      %v850 = vmul.f32 %v820, 0.2
      %v851 = vmul.f32 %v825, 0.2
      %v852 = vmul.f32 %v828, 0.2
      %v853 = vmul.f32 %v833, 0.2
      %v854 = vmul.f32 %v836, 0.2
      %v855 = vsel %vm839, %v809, %v847
      %v856 = vsel %vm840, %v812, %v848
      %v857 = vsel %vm841, %v817, %v849
      %v858 = vsel %vm842, %v820, %v850
      %v859 = vsel %vm843, %v825, %v851
      %v860 = vsel %vm844, %v828, %v852
      %v861 = vsel %vm845, %v833, %v853
      %v862 = vsel %vm846, %v836, %v854
      %v863 = vld [vmem:[%s3] sm:$0xf]
      %v864 = vld [vmem:[%s3 + $0x4] sm:$0xf]
      %v865 = vld [vmem:[%s3 + $0x8] sm:$0xf]
      %v866 = vld [vmem:[%s3 + $0xc] sm:$0xf]
      %v867 = vld [vmem:[%s3 + $0x10] sm:$0xf]
      %v868 = vld [vmem:[%s3 + $0x14] sm:$0xf]
      %v869 = vld [vmem:[%s3 + $0x18] sm:$0xf]
      %v870 = vld [vmem:[%s3 + $0x1c] sm:$0xf]
      %v871 = vld [vmem:[%s3 + $0x20] sm:$0xf]
      %v872 = vld [vmem:[%s3 + $0x24] sm:$0xf]
      %v873 = vld [vmem:[%s3 + $0x28] sm:$0xf]
      %v874 = vld [vmem:[%s3 + $0x2c] sm:$0xf]
      %v875 = vld [vmem:[%s3 + $0x30] sm:$0xf]
      %v876 = vld [vmem:[%s3 + $0x34] sm:$0xf]
      %v877 = vld [vmem:[%s3 + $0x38] sm:$0xf]
      %v878 = vld [vmem:[%s3 + $0x3c] sm:$0xf]
      %v879 = vld [vmem:[%s3 + $0x40] sm:$0xf]
      %v880 = vld [vmem:[%s3 + $0x44] sm:$0xf]
      %v881 = vld [vmem:[%s3 + $0x48] sm:$0xf]
      %v882 = vld [vmem:[%s3 + $0x4c] sm:$0xf]
      %v883 = vld [vmem:[%s3 + $0x50] sm:$0xf]
      %v884 = vld [vmem:[%s3 + $0x54] sm:$0xf]
      %v885 = vld [vmem:[%s3 + $0x58] sm:$0xf]
      %v886 = vld [vmem:[%s3 + $0x5c] sm:$0xf]
      %v887 = vld [vmem:[%s3 + $0x60] sm:$0xf]
      %v888 = vld [vmem:[%s3 + $0x64] sm:$0xf]
      %v889 = vld [vmem:[%s3 + $0x68] sm:$0xf]
      %v890 = vld [vmem:[%s3 + $0x6c] sm:$0xf]
      %v891 = vld [vmem:[%s3 + $0x70] sm:$0xf]
      %v892 = vld [vmem:[%s3 + $0x74] sm:$0xf]
      %v893 = vld [vmem:[%s3 + $0x78] sm:$0xf]
      %v894 = vld [vmem:[%s3 + $0x7c] sm:$0xf]
      %v895 = vld [vmem:[%s3 + $0x80] sm:$0xf]
      %v896 = vld [vmem:[%s3 + $0x84] sm:$0xf]
      %v897 = vld [vmem:[%s3 + $0x88] sm:$0xf]
      %v898 = vld [vmem:[%s3 + $0x8c] sm:$0xf]
      %v899 = vld [vmem:[%s4] sm:$0x1]
      %v908 = vrot.slane %v855, 7
      %v909 = vrot.slane %v856, 7
      %v910 = vrot.slane %v857, 7
      %v911 = vrot.slane %v858, 7
      %v912 = vrot.slane %v859, 7
      %v913 = vrot.slane %v860, 7
      %v914 = vrot.slane %v861, 7
      %v915 = vrot.slane %v862, 7
      %v924 = vsel %vm330, 0.0, %v908
      %v925 = vsel %vm330, 0.0, %v909
      %v926 = vsel %vm330, 0.0, %v910
      %v927 = vsel %vm330, 0.0, %v911
      %v928 = vsel %vm330, 0.0, %v912
      %v929 = vsel %vm330, 0.0, %v913
      %v930 = vsel %vm330, 0.0, %v914
      %v931 = vsel %vm330, 0.0, %v915
      %v932 = vsel %vm330, %v908, 0.0
      %v933 = vsel %vm330, %v909, 0.0
      %v934 = vsel %vm330, %v910, 0.0
      %v935 = vsel %vm330, %v911, 0.0
      %v936 = vsel %vm330, %v912, 0.0
      %v937 = vsel %vm330, %v913, 0.0
      %v938 = vsel %vm330, %v914, 0.0
      %v939 = vsel %vm330, %v915, 0.0
      %v954 = vrot.slane %v924, 1
      %v955 = vrot.slane %v932, 1
      %v956 = vsel %vm365, %v954, %v955
      %v957 = vrot.slane %v925, 1
      %v958 = vrot.slane %v933, 1
      %v959 = vsel %vm365, %v957, %v958
      %v960 = vrot.slane %v926, 1
      %v961 = vrot.slane %v934, 1
      %v962 = vsel %vm365, %v960, %v961
      %v963 = vrot.slane %v927, 1
      %v964 = vrot.slane %v935, 1
      %v965 = vsel %vm365, %v963, %v964
      %v966 = vrot.slane %v928, 1
      %v967 = vrot.slane %v936, 1
      %v968 = vsel %vm365, %v966, %v967
      %v969 = vrot.slane %v929, 1
      %v970 = vrot.slane %v937, 1
      %v971 = vsel %vm365, %v969, %v970
      %v972 = vrot.slane %v930, 1
      %v973 = vrot.slane %v938, 1
      %v974 = vsel %vm365, %v972, %v973
      %975 = vrot.lane.b32.xlu0 %v956, 32
      %v976 = vpop.permute.xlu0 %975
      %977 = vrot.lane.b32.xlu0 %v959, 32
      %v978 = vpop.permute.xlu0 %977
      %979 = vrot.lane.b32.xlu0 %v962, 32
      %v980 = vpop.permute.xlu0 %979
      %981 = vrot.lane.b32.xlu0 %v965, 32
      %v982 = vpop.permute.xlu0 %981
      %983 = vrot.lane.b32.xlu0 %v968, 32
      %v984 = vpop.permute.xlu0 %983
      %985 = vrot.lane.b32.xlu0 %v971, 32
      %v986 = vpop.permute.xlu0 %985
      %987 = vrot.lane.b32.xlu0 %v974, 32
      %v988 = vpop.permute.xlu0 %987
      %v996 = vrot.slane %v924, 2
      %v997 = vrot.slane %v932, 2
      %v998 = vsel %vm414, %v996, %v997
      %v999 = vrot.slane %v925, 2
      %v1000 = vrot.slane %v933, 2
      %v1001 = vsel %vm414, %v999, %v1000
      %v1002 = vrot.slane %v926, 2
      %v1003 = vrot.slane %v934, 2
      %v1004 = vsel %vm414, %v1002, %v1003
      %v1005 = vrot.slane %v927, 2
      %v1006 = vrot.slane %v935, 2
      %v1007 = vsel %vm414, %v1005, %v1006
      %v1008 = vrot.slane %v928, 2
      %v1009 = vrot.slane %v936, 2
      %v1010 = vsel %vm414, %v1008, %v1009
      %v1011 = vrot.slane %v929, 2
      %v1012 = vrot.slane %v937, 2
      %v1013 = vsel %vm414, %v1011, %v1012
      %v1014 = vrot.slane %v930, 2
      %v1015 = vrot.slane %v938, 2
      %v1016 = vsel %vm414, %v1014, %v1015
      %1017 = vrot.lane.b32.xlu0 %v998, 64
      %v1018 = vpop.permute.xlu0 %1017
      %1019 = vrot.lane.b32.xlu0 %v1001, 64
      %v1020 = vpop.permute.xlu0 %1019
      %1021 = vrot.lane.b32.xlu0 %v1004, 64
      %v1022 = vpop.permute.xlu0 %1021
      %1023 = vrot.lane.b32.xlu0 %v1007, 64
      %v1024 = vpop.permute.xlu0 %1023
      %1025 = vrot.lane.b32.xlu0 %v1010, 64
      %v1026 = vpop.permute.xlu0 %1025
      %1027 = vrot.lane.b32.xlu0 %v1013, 64
      %v1028 = vpop.permute.xlu0 %1027
      %1029 = vrot.lane.b32.xlu0 %v1016, 64
      %v1030 = vpop.permute.xlu0 %1029
      %v1038 = vsel %vm463, %v924, %v976
      %v1039 = vsel %vm463, %v925, %v978
      %v1040 = vsel %vm463, %v926, %v980
      %v1041 = vsel %vm463, %v927, %v982
      %v1042 = vsel %vm463, %v928, %v984
      %v1043 = vsel %vm463, %v929, %v986
      %v1044 = vsel %vm463, %v930, %v988
      %v1045 = vsel %vm472, %v1038, %v1018
      %v1046 = vsel %vm472, %v1039, %v1020
      %v1047 = vsel %vm472, %v1040, %v1022
      %v1048 = vsel %vm472, %v1041, %v1024
      %v1049 = vsel %vm472, %v1042, %v1026
      %v1050 = vsel %vm472, %v1043, %v1028
      %v1051 = vsel %vm472, %v1044, %v1030
      %v1054 = vrot.slane %v931, 1
      %v1055 = vrot.slane %v939, 1
      %v1056 = vsel %vm365, %v1054, %v1055
      %1057 = vrot.lane.b32.xlu0 %v1056, 32
      %v1058 = vpop.permute.xlu0 %1057
      %v1060 = vrot.slane %v931, 2
      %v1061 = vrot.slane %v939, 2
      %v1062 = vsel %vm414, %v1060, %v1061
      %1063 = vrot.lane.b32.xlu0 %v1062, 64
      %v1064 = vpop.permute.xlu0 %1063
      %v1066 = vsel %vm463, %v931, %v1058
      %v1067 = vsel %vm472, %v1066, %v1064
      %1076 = vrot.lane.b32.xlu0 %v1045, 96
      %v1077 = vpop.permute.xlu0 %1076
      %1078 = vrot.lane.b32.xlu0 %v1046, 96
      %v1079 = vpop.permute.xlu0 %1078
      %1080 = vrot.lane.b32.xlu0 %v1047, 96
      %v1081 = vpop.permute.xlu0 %1080
      %1082 = vrot.lane.b32.xlu0 %v1048, 96
      %v1083 = vpop.permute.xlu0 %1082
      %1084 = vrot.lane.b32.xlu0 %v1049, 96
      %v1085 = vpop.permute.xlu0 %1084
      %1086 = vrot.lane.b32.xlu0 %v1050, 96
      %v1087 = vpop.permute.xlu0 %1086
      %1088 = vrot.lane.b32.xlu0 %v1051, 96
      %v1089 = vpop.permute.xlu0 %1088
      %1090 = vrot.lane.b32.xlu0 %v1067, 96
      %v1091 = vpop.permute.xlu0 %1090
      %1100 = vrot.lane.b32.xlu0 %v1046, 64
      %v1101 = vpop.permute.xlu0 %1100
      %1102 = vrot.lane.b32.xlu0 %v1047, 64
      %v1103 = vpop.permute.xlu0 %1102
      %1104 = vrot.lane.b32.xlu0 %v1048, 64
      %v1105 = vpop.permute.xlu0 %1104
      %1106 = vrot.lane.b32.xlu0 %v1049, 64
      %v1107 = vpop.permute.xlu0 %1106
      %1108 = vrot.lane.b32.xlu0 %v1050, 64
      %v1109 = vpop.permute.xlu0 %1108
      %1110 = vrot.lane.b32.xlu0 %v1051, 64
      %v1111 = vpop.permute.xlu0 %1110
      %1112 = vrot.lane.b32.xlu0 %v1067, 64
      %v1113 = vpop.permute.xlu0 %1112
      %v1121 = vsel %vm554, %v473, %v1077
      %v1122 = vsel %vm554, %v1045, %v1079
      %v1123 = vsel %vm554, %v1046, %v1081
      %v1124 = vsel %vm554, %v1047, %v1083
      %v1125 = vsel %vm554, %v1048, %v1085
      %v1126 = vsel %vm554, %v1049, %v1087
      %v1127 = vsel %vm554, %v1050, %v1089
      %v1128 = vsel %vm554, %v1051, %v1091
      %v1129 = vsel %vm472, %v1077, %v1101
      %v1130 = vsel %vm472, %v1079, %v1103
      %v1131 = vsel %vm472, %v1081, %v1105
      %v1132 = vsel %vm472, %v1083, %v1107
      %v1133 = vsel %vm472, %v1085, %v1109
      %v1134 = vsel %vm472, %v1087, %v1111
      %v1135 = vsel %vm472, %v1089, %v1113
      %v1136 = vsel %vm472, %v1091, %v545
      %v1137 = vpack.c.bf16 %v1122, %v1121
      %v1138 = vpack.c.bf16 %v1130, %v1129
      %v1139 = vpack.c.bf16 %v1103, %v1101
      %v1140 = vpack.c.bf16 %v1124, %v1123
      %v1141 = vpack.c.bf16 %v1132, %v1131
      %v1142 = vpack.c.bf16 %v1107, %v1105
      %v1143 = vpack.c.bf16 %v1126, %v1125
      %v1144 = vpack.c.bf16 %v1134, %v1133
      %v1145 = vpack.c.bf16 %v1111, %v1109
      %v1146 = vpack.c.bf16 %v1128, %v1127
      %v1147 = vpack.c.bf16 %v1136, %v1135
      %v1148 = vpack.c.bf16 %v545, %v1113
      %v1150 = vlaneseq
      %v1151 = vshrl.u32 %v1150, 7
      %v1152 = vsub.s32 0, %v1151
      %v1153 = vrot.slane %v899, %v1152
      %v1191 = vunpack.c.l.b16 %v863
      %v1192 = vunpack.c.l.b16 %v864
      %v1193 = vunpack.c.l.b16 %v865
      %v1194 = vunpack.c.l.b16 %v866
      %v1195 = vunpack.c.l.b16 %v867
      %v1196 = vunpack.c.l.b16 %v868
      %v1197 = vunpack.c.l.b16 %v869
      %v1198 = vunpack.c.l.b16 %v870
      %v1199 = vunpack.c.l.b16 %v871
      %v1200 = vunpack.c.l.b16 %v872
      %v1201 = vunpack.c.l.b16 %v873
      %v1202 = vunpack.c.l.b16 %v874
      %v1203 = vunpack.c.l.b16 %v875
      %v1204 = vunpack.c.l.b16 %v876
      %v1205 = vunpack.c.l.b16 %v877
      %v1206 = vunpack.c.l.b16 %v878
      %v1207 = vunpack.c.l.b16 %v879
      %v1208 = vunpack.c.l.b16 %v880
      %v1209 = vunpack.c.l.b16 %v881
      %v1210 = vunpack.c.l.b16 %v882
      %v1211 = vunpack.c.l.b16 %v883
      %v1212 = vunpack.c.l.b16 %v884
      %v1213 = vunpack.c.l.b16 %v885
      %v1214 = vunpack.c.l.b16 %v886
      %v1215 = vunpack.c.l.b16 %v887
      %v1216 = vunpack.c.l.b16 %v888
      %v1217 = vunpack.c.l.b16 %v889
      %v1218 = vunpack.c.l.b16 %v890
      %v1219 = vunpack.c.l.b16 %v891
      %v1220 = vunpack.c.l.b16 %v892
      %v1221 = vunpack.c.l.b16 %v893
      %v1222 = vunpack.c.l.b16 %v894
      %v1223 = vunpack.c.l.b16 %v895
      %v1224 = vunpack.c.l.b16 %v896
      %v1225 = vunpack.c.l.b16 %v897
      %v1226 = vunpack.c.l.b16 %v898
      %v1227 = vpack.c.b16 %v1192, %v1191
      %v1228 = vpack.c.b16 %v1194, %v1193
      %v1229 = vpack.c.b16 %v1196, %v1195
      %v1230 = vpack.c.b16 %v1198, %v1197
      %v1231 = vpack.c.b16 %v1200, %v1199
      %v1232 = vpack.c.b16 %v1202, %v1201
      %v1233 = vpack.c.b16 %v1204, %v1203
      %v1234 = vpack.c.b16 %v1206, %v1205
      %v1235 = vpack.c.b16 %v1208, %v1207
      %v1236 = vpack.c.b16 %v1210, %v1209
      %v1237 = vpack.c.b16 %v1212, %v1211
      %v1238 = vpack.c.b16 %v1214, %v1213
      %v1239 = vpack.c.b16 %v1216, %v1215
      %v1240 = vpack.c.b16 %v1218, %v1217
      %v1241 = vpack.c.b16 %v1220, %v1219
      %v1242 = vpack.c.b16 %v1222, %v1221
      %v1243 = vpack.c.b16 %v1224, %v1223
      %v1244 = vpack.c.b16 %v1226, %v1225
      %v1264 = vsel %vm463, %v1139, 0
      %v1267 = vsel %vm463, %v1142, 0
      %v1270 = vsel %vm463, %v1145, 0
      %v1273 = vsel %vm463, %v1148, 0
      %1275 = vmatprep.subr.bf16.mxu0 0
      %1276 = vmatpush1.bf16.msra.mxu0 %v1234
      %1277 = vmatprep.subr.bf16.mxu0 0
      %1278 = vmatpush1.bf16.msra.mxu0 %v1233
      %1279 = vmatprep.subr.bf16.mxu0 0
      %1280 = vmatpush1.bf16.msra.mxu0 %v1232
      %1281 = vmatprep.subr.bf16.mxu0 0
      %1282 = vmatpush1.bf16.msra.mxu0 %v1231
      %1283 = vmatprep.subr.bf16.mxu0 0
      %1284 = vmatpush1.bf16.msra.mxu0 %v1230
      %1285 = vmatprep.subr.bf16.mxu0 0
      %1286 = vmatpush1.bf16.msra.mxu0 %v1229
      %1287 = vmatprep.subr.bf16.mxu0 0
      %1288 = vmatpush1.bf16.msra.mxu0 %v1228
      %1289 = vmatprep.subr.bf16.mxu0 0
      %1290 = vmatpush1.bf16.msra.mxu0 %v1227
      %1291 = vmatprep.subr.bf16.mxu0 0
      %1292 = vmatpush2.bf16.msra.mxu0 %v1242
      %1293 = vmatprep.subr.bf16.mxu0 0
      %1294 = vmatpush2.bf16.msra.mxu0 %v1241
      %1295 = vmatprep.subr.bf16.mxu0 0
      %1296 = vmatpush2.bf16.msra.mxu0 %v1240
      %1297 = vmatprep.subr.bf16.mxu0 0
      %1298 = vmatpush2.bf16.msra.mxu0 %v1239
      %1299 = vmatprep.subr.bf16.mxu0 0
      %1300 = vmatpush2.bf16.msra.mxu0 %v1238
      %1301 = vmatprep.subr.bf16.mxu0 0
      %1302 = vmatpush2.bf16.msra.mxu0 %v1237
      %1303 = vmatprep.subr.bf16.mxu0 0
      %1304 = vmatpush2.bf16.msra.mxu0 %v1236
      %1305 = vmatprep.subr.bf16.mxu0 0
      %1306 = vmatpush2.bf16.msra.mxu0 %v1235
      %1307 = vmatprep.mubr.bf16.mxu0 %v1138
      %1308 = vmatmul.mubr.bf16.gmra.mxu0 %v1137
      %v1309 = vpop.f32.mrf.mxu0
      %v1310 = vadd.f32 %v1153, %v1309
      %v1311 = vpop.f32.mrf.mxu0
      %v1312 = vpop.f32.mrf.mxu0
      %v1313 = vadd.f32 %v1153, %v1312
      %v1314 = vpop.f32.mrf.mxu0
      %1315 = vmatprep.mubr.bf16.mxu0 %v1141
      %1316 = vmatmul.mubr.bf16.gmra.mxu0 %v1140
      %v1317 = vpop.f32.mrf.mxu0
      %v1318 = vadd.f32 %v1153, %v1317
      %v1319 = vpop.f32.mrf.mxu0
      %v1320 = vpop.f32.mrf.mxu0
      %v1321 = vadd.f32 %v1153, %v1320
      %v1322 = vpop.f32.mrf.mxu0
      %1323 = vmatprep.mubr.bf16.mxu0 %v1144
      %1324 = vmatmul.mubr.bf16.gmra.mxu0 %v1143
      %v1325 = vpop.f32.mrf.mxu0
      %v1326 = vadd.f32 %v1153, %v1325
      %v1327 = vpop.f32.mrf.mxu0
      %v1328 = vpop.f32.mrf.mxu0
      %v1329 = vadd.f32 %v1153, %v1328
      %v1330 = vpop.f32.mrf.mxu0
      %1331 = vmatprep.mubr.bf16.mxu0 %v1147
      %1332 = vmatmul.mubr.bf16.gmra.mxu0 %v1146
      %v1333 = vpop.f32.mrf.mxu0
      %v1334 = vadd.f32 %v1153, %v1333
      %v1335 = vpop.f32.mrf.mxu0
      %v1336 = vpop.f32.mrf.mxu0
      %v1337 = vadd.f32 %v1153, %v1336
      %v1338 = vpop.f32.mrf.mxu0
      %1339 = vdwg.mxu0
      %1340 = vmatprep.subr.bf16.mxu0 0
      %1341 = vmatpush1.bf16.msra.mxu0 0
      %1342 = vmatprep.subr.bf16.mxu0 0
      %1343 = vmatpush1.bf16.msra.mxu0 0
      %1344 = vmatprep.subr.bf16.mxu0 0
      %1345 = vmatpush1.bf16.msra.mxu0 0
      %1346 = vmatprep.subr.bf16.mxu0 0
      %1347 = vmatpush1.bf16.msra.mxu0 0
      %1348 = vmatprep.subr.bf16.mxu0 0
      %1349 = vmatpush1.bf16.msra.mxu0 0
      %1350 = vmatprep.subr.bf16.mxu0 0
      %1351 = vmatpush1.bf16.msra.mxu0 0
      %1352 = vmatprep.subr.bf16.mxu0 0
      %1353 = vmatpush1.bf16.msra.mxu0 %v1244
      %1354 = vmatprep.subr.bf16.mxu0 0
      %1355 = vmatpush1.bf16.msra.mxu0 %v1243
      %1356 = vmatprep.subr.bf16.mxu0 0
      %1357 = vmatpush2.bf16.msra.mxu0 0
      %1358 = vmatprep.subr.bf16.mxu0 0
      %1359 = vmatpush2.bf16.msra.mxu0 0
      %1360 = vmatprep.subr.bf16.mxu0 0
      %1361 = vmatpush2.bf16.msra.mxu0 0
      %1362 = vmatprep.subr.bf16.mxu0 0
      %1363 = vmatpush2.bf16.msra.mxu0 0
      %1364 = vmatprep.subr.bf16.mxu0 0
      %1365 = vmatpush2.bf16.msra.mxu0 0
      %1366 = vmatprep.subr.bf16.mxu0 0
      %1367 = vmatpush2.bf16.msra.mxu0 0
      %1368 = vmatprep.subr.bf16.mxu0 0
      %1369 = vmatpush2.bf16.msra.mxu0 0
      %1370 = vmatprep.subr.bf16.mxu0 0
      %1371 = vmatpush2.bf16.msra.mxu0 0
      %1372 = vmatprep.mubr.bf16.mxu0 0
      %1373 = vmatmul.mubr.bf16.gmra.mxu0 %v1264
      %v1374 = vpop.f32.mrf.mxu0
      %v1375 = vadd.f32 %v1310, %v1374
      %v1376 = vpop.f32.mrf.mxu0
      %v1377 = vpop.f32.mrf.mxu0
      %v1378 = vadd.f32 %v1313, %v1377
      %v1379 = vpop.f32.mrf.mxu0
      %1380 = vmatprep.mubr.bf16.mxu0 0
      %1381 = vmatmul.mubr.bf16.gmra.mxu0 %v1267
      %v1382 = vpop.f32.mrf.mxu0
      %v1383 = vadd.f32 %v1318, %v1382
      %v1384 = vpop.f32.mrf.mxu0
      %v1385 = vpop.f32.mrf.mxu0
      %v1386 = vadd.f32 %v1321, %v1385
      %v1387 = vpop.f32.mrf.mxu0
      %1388 = vmatprep.mubr.bf16.mxu0 0
      %1389 = vmatmul.mubr.bf16.gmra.mxu0 %v1270
      %v1390 = vpop.f32.mrf.mxu0
      %v1391 = vadd.f32 %v1326, %v1390
      %v1392 = vpop.f32.mrf.mxu0
      %v1393 = vpop.f32.mrf.mxu0
      %v1394 = vadd.f32 %v1329, %v1393
      %v1395 = vpop.f32.mrf.mxu0
      %1396 = vmatprep.mubr.bf16.mxu0 0
      %1397 = vmatmul.mubr.bf16.gmra.mxu0 %v1273
      %v1398 = vpop.f32.mrf.mxu0
      %v1399 = vadd.f32 %v1334, %v1398
      %v1400 = vpop.f32.mrf.mxu0
      %v1401 = vpop.f32.mrf.mxu0
      %v1402 = vadd.f32 %v1337, %v1401
      %v1403 = vpop.f32.mrf.mxu0
      %1404 = vdwg.mxu0
      %v1405 = vmul.f32 %v1375, 0.1
      %v1406 = vmul.f32 %v1378, 0.1
      %v1407 = vmul.f32 %v1383, 0.1
      %v1408 = vmul.f32 %v1386, 0.1
      %v1409 = vmul.f32 %v1391, 0.1
      %v1410 = vmul.f32 %v1394, 0.1
      %v1411 = vmul.f32 %v1399, 0.1
      %v1412 = vmul.f32 %v1402, 0.1
      %v1413 = vadd.f32 %v234, %v1405
      %v1414 = vadd.f32 %v235, %v1406
      %v1415 = vadd.f32 %v236, %v1407
      %v1416 = vadd.f32 %v237, %v1408
      %v1417 = vadd.f32 %v238, %v1409
      %v1418 = vadd.f32 %v239, %v1410
      %v1419 = vadd.f32 %v240, %v1411
      %v1420 = vadd.f32 %v241, %v1412
      %v1421 = vpack.c.bf16 %v1413, %v1413
      %v1422 = vpack.c.bf16 %v1414, %v1414
      %v1423 = vpack.c.bf16 %v1415, %v1415
      %v1424 = vpack.c.bf16 %v1416, %v1416
      %v1425 = vpack.c.bf16 %v1417, %v1417
      %v1426 = vpack.c.bf16 %v1418, %v1418
      %v1427 = vpack.c.bf16 %v1419, %v1419
      %v1428 = vpack.c.bf16 %v1420, %v1420
      %vm1429 = vcmask 257024
      %1430 = vst.msk [vmem:[%s224] sm:$0xf] %vm1429, %v1421
      %1431 = vst.msk [vmem:[%s224 + $0x4] sm:$0xf] %vm1429, %v1422
      %1432 = vst.msk [vmem:[%s224 + $0x8] sm:$0xf] %vm1429, %v1423
      %1433 = vst.msk [vmem:[%s224 + $0xc] sm:$0xf] %vm1429, %v1424
      %1434 = vst.msk [vmem:[%s224 + $0x10] sm:$0xf] %vm1429, %v1425
      %1435 = vst.msk [vmem:[%s224 + $0x14] sm:$0xf] %vm1429, %v1426
      %1436 = vst.msk [vmem:[%s224 + $0x18] sm:$0xf] %vm1429, %v1427
      %1437 = vst.msk [vmem:[%s224 + $0x1c] sm:$0xf] %vm1429, %v1428
      %p1438 = scmp.lt.s32.totalorder %s16, 1
      %s1439 = scalar_select %p1438, %s16, 1
      %s1440 = smul.addr %s1439, 8
      %s1441 = smul.addr %s1440, 4
      %s1442 = scalar_lea.vmem %s5, %s1441
      // Predicated region
      $region41: #{_lambda_.12} parent=39 // pred_check
        %p1443 = pneg %p144
      $region42: #{_lambda_.12} parent=39 // pred_check_branch
        %1445 = sbr.rel (%p1443) target = $region44
      $region43: #{_lambda_.12} parent=39 // pred_region
        _
      $region44: #{_lambda_.12} parent=39 // pred_fallthru
        _
    $region40: #{_lambda_.12} parent=5 // pred_fallthru
      _
    %p1446 = scmp.le.s32.totalorder 2, %s11
    // Predicated region
    $region45: #{_lambda_.12} parent=5 // pred_check
      %p1447 = pneg %p1446
    $region46: #{_lambda_.12} parent=5 // pred_check_branch
      %1449 = sbr.rel (%p1447) target = $region48
    $region47: #{_lambda_.12} parent=5 // pred_region
      %s1450 = ssub.s32 %s11, 2
      // Predicated region
      $region49: #{_lambda_.12} parent=47 // pred_check
        %p1451 = pneg %p150
      $region50: #{_lambda_.12} parent=47 // pred_check_branch
        %1453 = sbr.rel (%p1451) target = $region52
      $region51: #{_lambda_.12} parent=47 // pred_region
        %p1454 = scmp.lt.s32.totalorder %s17, 1
        %s1455 = scalar_select %p1454, %s17, 1
        %s1456 = smul.addr %s1455, 8
        %s1457 = smul.addr %s1456, 4
        %s1458 = scalar_lea.vmem %s5, %s1457
      $region52: #{_lambda_.12} parent=47 // pred_fallthru
        _
    $region48: #{_lambda_.12} parent=5 // pred_fallthru
      _
  $region6: #{_lambda_.12} parent=0 // loop_footer
    %s15 = sadd.s32 1, %s11
  $region7: #{_lambda_.12} parent=0 // loop_footer_branch
    %10 = sbr.rel target = $region3
  $region8: #{_lambda_.12} parent=0 // loop_exit
    _

// kernel: _lambda_.13
$region0: #{_lambda_.13}
  #allocation0 [shape = 'u32[]', space=smem, size = 0x4, offset = 0x4, fixed_abs, tag = 'smem constant byte address 0x4 - core index']
  #allocation1 [shape = 'u32[144,128]{1,0:T(1,128)}', space=vmem, size = 0x12000, scoped, tag = 'internal scratch']
  %s0 = inlined_call_operand.vmem [shape: bf16[2,8,8,32], index: 0, kind: input, shape index: {}]
  %s1 = inlined_call_operand.vmem [shape: bf16[32,3], index: 1, kind: input, shape index: {}]
  %s2 = inlined_call_operand.vmem [shape: f32[1,3], index: 2, kind: input, shape index: {}]
  %s3 = inlined_call_operand.vmem [shape: f32[2,8,8,3], index: 3, kind: output, shape index: {}]
  %s4 = sld [smem:[#allocation0]]
  $region45: #{_lambda_.13} parent=0
    _
  %s6 = ssub.s32 1, %s4
  %s7 = scalar_select 0, %s6, %s4
  loop: start=0, step=1, limit=4
  $region2: #{_lambda_.13} parent=0 // loop_pre_header
    _
  $region3: #{_lambda_.13} parent=0 // loop_header
    %s9 = sphi 0, %s13
    %p10 = scmp.ge.s32.totalorder %s9, 4
    %s19 = sphi 0, %s21
    %s22 = sphi 0, %s19
    %s23 = sphi 0, %s22
    %s39 = sphi 0, %s23
    %s43 = sphi 0, %s43
    %s45 = sphi 0, %s43
    %s46 = sphi 0, %s45
    %s60 = sphi 0, %s46
    %s64 = sphi 0, %s64
    %s66 = sphi 0, %s64
    %s67 = sphi 0, %s66
    %s81 = sphi 0, %s67
    %s87 = sphi 0, %s89
    %s90 = sphi 0, %s87
    %s91 = sphi 0, %s90
    %s107 = sphi 0, %s91
  $region4: #{_lambda_.13} parent=0 // loop_header_branch
    %12 = sbr.rel (%p10) target = $region8
  $region5: #{_lambda_.13} parent=0 // loop_body
    %s14 = ssub.s32 %s9, 1
    %s15 = ssub.s32 %s9, 2
    %s16 = sadd.s32 %s9, 1
    %s17 = ssub.s32 %s9, %s16
    %p18 = scmp.eq.s32.totalorder %s17, 0
    %s20 = sadd.s32 %s19, 1
    %s21 = scalar_select %p18, %s19, %s20
    %p24 = pneg %p18
    %p25 = scmp.eq.s32.totalorder %s9, 1
    %p26 = por %p24, %p25
    %p27 = scmp.ne.s32.totalorder %s19, %s22
    %p28 = scmp.eq.s32.totalorder %s9, 0
    %p29 = por %p27, %p28
    %p30 = scmp.ne.s32.totalorder %s19, %s22
    %p31 = scmp.eq.s32.totalorder %s14, 1
    %p32 = por %p30, %p31
    %p33 = scmp.ne.s32.totalorder %s22, %s23
    %p34 = scmp.eq.s32.totalorder %s14, 0
    %p35 = por %p33, %p34
    %p36 = scmp.ne.s32.totalorder %s22, %s23
    %p37 = scmp.eq.s32.totalorder %s15, 1
    %p38 = por %p36, %p37
    %p40 = scmp.ne.s32.totalorder %s23, %s39
    %p41 = scmp.eq.s32.totalorder %s15, 0
    %p42 = por %p40, %p41
    %s44 = sadd.s32 %s43, 1
    %p47 = scmp.eq.s32.totalorder %s9, 1
    %p48 = scmp.ne.s32.totalorder %s43, %s45
    %p49 = scmp.eq.s32.totalorder %s9, 0
    %p50 = por %p48, %p49
    %p51 = scmp.ne.s32.totalorder %s43, %s45
    %p52 = scmp.eq.s32.totalorder %s14, 1
    %p53 = por %p51, %p52
    %p54 = scmp.ne.s32.totalorder %s45, %s46
    %p55 = scmp.eq.s32.totalorder %s14, 0
    %p56 = por %p54, %p55
    %p57 = scmp.ne.s32.totalorder %s45, %s46
    %p58 = scmp.eq.s32.totalorder %s15, 1
    %p59 = por %p57, %p58
    %p61 = scmp.ne.s32.totalorder %s46, %s60
    %p62 = scmp.eq.s32.totalorder %s15, 0
    %p63 = por %p61, %p62
    %s65 = sadd.s32 %s64, 1
    %p68 = scmp.eq.s32.totalorder %s9, 1
    %p69 = scmp.ne.s32.totalorder %s64, %s66
    %p70 = scmp.eq.s32.totalorder %s9, 0
    %p71 = por %p69, %p70
    %p72 = scmp.ne.s32.totalorder %s64, %s66
    %p73 = scmp.eq.s32.totalorder %s14, 1
    %p74 = por %p72, %p73
    %p75 = scmp.ne.s32.totalorder %s66, %s67
    %p76 = scmp.eq.s32.totalorder %s14, 0
    %p77 = por %p75, %p76
    %p78 = scmp.ne.s32.totalorder %s66, %s67
    %p79 = scmp.eq.s32.totalorder %s15, 1
    %p80 = por %p78, %p79
    %p82 = scmp.ne.s32.totalorder %s67, %s81
    %p83 = scmp.eq.s32.totalorder %s15, 0
    %p84 = por %p82, %p83
    %s85 = ssub.s32 %s9, %s16
    %p86 = scmp.eq.s32.totalorder %s85, 0
    %s88 = sadd.s32 %s87, 1
    %s89 = scalar_select %p86, %s87, %s88
    %p92 = pneg %p86
    %p93 = scmp.eq.s32.totalorder %s9, 1
    %p94 = por %p92, %p93
    %p95 = scmp.ne.s32.totalorder %s87, %s90
    %p96 = scmp.eq.s32.totalorder %s9, 0
    %p97 = por %p95, %p96
    %p98 = scmp.ne.s32.totalorder %s87, %s90
    %p99 = scmp.eq.s32.totalorder %s14, 1
    %p100 = por %p98, %p99
    %p101 = scmp.ne.s32.totalorder %s90, %s91
    %p102 = scmp.eq.s32.totalorder %s14, 0
    %p103 = por %p101, %p102
    %p104 = scmp.ne.s32.totalorder %s90, %s91
    %p105 = scmp.eq.s32.totalorder %s15, 1
    %p106 = por %p104, %p105
    %p108 = scmp.ne.s32.totalorder %s91, %s107
    %p109 = scmp.eq.s32.totalorder %s15, 0
    %p110 = por %p108, %p109
    %p111 = scmp.le.s32.totalorder 1, %s9
    %p112 = scmp.lt.s32.totalorder %s9, 3
    %p113 = pnand %p111, %p112
    %p114 = pneg %p113
    // Predicated region
    $region9: #{_lambda_.13} parent=5 // pred_check
      _
    $region10: #{_lambda_.13} parent=5 // pred_check_branch
      %116 = sbr.rel (%p113) target = $region12
    $region11: #{_lambda_.13} parent=5 // pred_region
      %s117 = ssub.s32 %s9, 1
      // Predicated region
      $region13: #{_lambda_.13} parent=11 // pred_check
        %p118 = pneg %p56
      $region14: #{_lambda_.13} parent=11 // pred_check_branch
        %120 = sbr.rel (%p118) target = $region16
      $region15: #{_lambda_.13} parent=11 // pred_region
        _
      $region16: #{_lambda_.13} parent=11 // pred_fallthru
        _
      // Predicated region
      $region17: #{_lambda_.13} parent=11 // pred_check
        %p121 = pneg %p77
      $region18: #{_lambda_.13} parent=11 // pred_check_branch
        %123 = sbr.rel (%p121) target = $region20
      $region19: #{_lambda_.13} parent=11 // pred_region
        _
      $region20: #{_lambda_.13} parent=11 // pred_fallthru
        _
    $region12: #{_lambda_.13} parent=5 // pred_fallthru
      _
    %p124 = scmp.lt.s32.totalorder %s9, 2
    // Predicated region
    $region21: #{_lambda_.13} parent=5 // pred_check
      %p125 = pneg %p124
    $region22: #{_lambda_.13} parent=5 // pred_check_branch
      %127 = sbr.rel (%p125) target = $region24
    $region23: #{_lambda_.13} parent=5 // pred_region
      // Predicated region
      $region25: #{_lambda_.13} parent=23 // pred_check
        %p128 = pneg %p29
      $region26: #{_lambda_.13} parent=23 // pred_check_branch
        %130 = sbr.rel (%p128) target = $region28
      $region27: #{_lambda_.13} parent=23 // pred_region
        %p131 = scmp.lt.s32.totalorder %s9, 1
        %s132 = scalar_select %p131, %s9, 1
        %s133 = smul.addr %s132, 8
        %s134 = smul.addr %s133, 4
        %s135 = scalar_lea.vmem %s0, %s134
      $region28: #{_lambda_.13} parent=23 // pred_fallthru
        _
    $region24: #{_lambda_.13} parent=5 // pred_fallthru
      _
    %p136 = scmp.le.s32.totalorder 1, %s9
    %p137 = scmp.lt.s32.totalorder %s9, 3
    %p138 = pnand %p136, %p137
    %p139 = pneg %p138
    // Predicated region
    $region29: #{_lambda_.13} parent=5 // pred_check
      _
    $region30: #{_lambda_.13} parent=5 // pred_check_branch
      %141 = sbr.rel (%p138) target = $region32
    $region31: #{_lambda_.13} parent=5 // pred_region
      %s142 = ssub.s32 %s9, 1
      %p143 = scmp.lt.s32.totalorder %s14, 1
      %s144 = scalar_select %p143, %s14, 1
      %s145 = smul.addr %s144, 8
      %s146 = smul.addr %s145, 4
      %s147 = scalar_lea.vmem %s0, %s146
      %p148 = pneg %p35
      %p149 = pneg %p32
      %p150 = pneg %p56
      %p151 = pneg %p53
      %p152 = pneg %p77
      %p153 = pneg %p74
      %p154 = pneg %p103
      %p155 = pneg %p100
      %p156 = scmp.lt.s32.totalorder %s14, 1
      %s157 = scalar_select %p156, %s14, 1
      %s158 = smul.addr %s157, 8
      %s159 = smul.addr %s158, 8
      %s160 = scalar_lea.vmem %s3, %s159
      %p161 = scmp.lt.s32.totalorder %s14, 1
      %s162 = scalar_select %p161, %s14, 1
      %s163 = smul.addr %s162, 8
      %s164 = smul.addr %s163, 4
      %s165 = scalar_lea.vmem %s0, %s164
      %p166 = scmp.lt.s32.totalorder %s14, 1
      %s167 = scalar_select %p166, %s14, 1
      %s168 = smul.addr %s167, 8
      %s169 = smul.addr %s168, 8
      %s170 = scalar_lea.vmem %s3, %s169
      %v172 = vld [vmem:[%s165] sm:$0xf]
      %v173 = vld [vmem:[%s165 + $0x4] sm:$0xf]
      %v174 = vld [vmem:[%s165 + $0x8] sm:$0xf]
      %v175 = vld [vmem:[%s165 + $0xc] sm:$0xf]
      %v176 = vld [vmem:[%s165 + $0x10] sm:$0xf]
      %v177 = vld [vmem:[%s165 + $0x14] sm:$0xf]
      %v178 = vld [vmem:[%s165 + $0x18] sm:$0xf]
      %v179 = vld [vmem:[%s165 + $0x1c] sm:$0xf]
      %v180 = vunpack.c.l.bf16 %v172
      %v181 = vunpack.c.l.bf16 %v173
      %v182 = vunpack.c.l.bf16 %v174
      %v183 = vunpack.c.l.bf16 %v175
      %v184 = vunpack.c.l.bf16 %v176
      %v185 = vunpack.c.l.bf16 %v177
      %v186 = vunpack.c.l.bf16 %v178
      %v187 = vunpack.c.l.bf16 %v179
      %v188 = vpack.c.bf16 %v181, %v180
      %v189 = vpack.c.bf16 %v183, %v182
      %v190 = vpack.c.bf16 %v185, %v184
      %v191 = vpack.c.bf16 %v187, %v186
      %v192 = vld [vmem:[%s1] sm:$0xf]
      %v193 = vld [vmem:[%s1 + $0x4] sm:$0xf]
      %v194 = vld [vmem:[%s1 + $0x8] sm:$0xf]
      %v195 = vld [vmem:[%s1 + $0xc] sm:$0xf]
      %v196 = vld [vmem:[%s2] sm:$0x1]
      %v198 = vlaneseq
      %v199 = vshrl.u32 %v198, 7
      %v200 = vsub.s32 0, %v199
      %v201 = vrot.slane %v196, %v200
      %v207 = vunpack.c.l.b16 %v192
      %v208 = vunpack.c.l.b16 %v193
      %v209 = vunpack.c.l.b16 %v194
      %v210 = vunpack.c.l.b16 %v195
      %v211 = vpack.c.b16 %v208, %v207
      %v212 = vpack.c.b16 %v210, %v209
      %vm215 = vcmask 261120
      %v217 = vsel %vm215, %v188, 0
      %v220 = vsel %vm215, %v189, 0
      %v223 = vsel %vm215, %v190, 0
      %v226 = vsel %vm215, %v191, 0
      %228 = vmatprep.subr.bf16.mxu0 0
      %229 = vmatpush1.bf16.msra.mxu0 0
      %230 = vmatprep.subr.bf16.mxu0 0
      %231 = vmatpush1.bf16.msra.mxu0 0
      %232 = vmatprep.subr.bf16.mxu0 0
      %233 = vmatpush1.bf16.msra.mxu0 0
      %234 = vmatprep.subr.bf16.mxu0 0
      %235 = vmatpush1.bf16.msra.mxu0 0
      %236 = vmatprep.subr.bf16.mxu0 0
      %237 = vmatpush1.bf16.msra.mxu0 0
      %238 = vmatprep.subr.bf16.mxu0 0
      %239 = vmatpush1.bf16.msra.mxu0 0
      %240 = vmatprep.subr.bf16.mxu0 0
      %241 = vmatpush1.bf16.msra.mxu0 %v212
      %242 = vmatprep.subr.bf16.mxu0 0
      %243 = vmatpush1.bf16.msra.mxu0 %v211
      %244 = vmatprep.subr.bf16.mxu0 0
      %245 = vmatpush2.bf16.msra.mxu0 0
      %246 = vmatprep.subr.bf16.mxu0 0
      %247 = vmatpush2.bf16.msra.mxu0 0
      %248 = vmatprep.subr.bf16.mxu0 0
      %249 = vmatpush2.bf16.msra.mxu0 0
      %250 = vmatprep.subr.bf16.mxu0 0
      %251 = vmatpush2.bf16.msra.mxu0 0
      %252 = vmatprep.subr.bf16.mxu0 0
      %253 = vmatpush2.bf16.msra.mxu0 0
      %254 = vmatprep.subr.bf16.mxu0 0
      %255 = vmatpush2.bf16.msra.mxu0 0
      %256 = vmatprep.subr.bf16.mxu0 0
      %257 = vmatpush2.bf16.msra.mxu0 0
      %258 = vmatprep.subr.bf16.mxu0 0
      %259 = vmatpush2.bf16.msra.mxu0 0
      %260 = vmatprep.mubr.bf16.mxu0 0
      %261 = vmatmul.mubr.bf16.gmra.mxu0 %v217
      %v262 = vpop.f32.mrf.mxu0
      %v263 = vadd.f32 %v201, %v262
      %v264 = vpop.f32.mrf.mxu0
      %v265 = vpop.f32.mrf.mxu0
      %v266 = vadd.f32 %v201, %v265
      %v267 = vpop.f32.mrf.mxu0
      %268 = vmatprep.mubr.bf16.mxu0 0
      %269 = vmatmul.mubr.bf16.gmra.mxu0 %v220
      %v270 = vpop.f32.mrf.mxu0
      %v271 = vadd.f32 %v201, %v270
      %v272 = vpop.f32.mrf.mxu0
      %v273 = vpop.f32.mrf.mxu0
      %v274 = vadd.f32 %v201, %v273
      %v275 = vpop.f32.mrf.mxu0
      %276 = vmatprep.mubr.bf16.mxu0 0
      %277 = vmatmul.mubr.bf16.gmra.mxu0 %v223
      %v278 = vpop.f32.mrf.mxu0
      %v279 = vadd.f32 %v201, %v278
      %v280 = vpop.f32.mrf.mxu0
      %v281 = vpop.f32.mrf.mxu0
      %v282 = vadd.f32 %v201, %v281
      %v283 = vpop.f32.mrf.mxu0
      %284 = vmatprep.mubr.bf16.mxu0 0
      %285 = vmatmul.mubr.bf16.gmra.mxu0 %v226
      %v286 = vpop.f32.mrf.mxu0
      %v287 = vadd.f32 %v201, %v286
      %v288 = vpop.f32.mrf.mxu0
      %v289 = vpop.f32.mrf.mxu0
      %v290 = vadd.f32 %v201, %v289
      %v291 = vpop.f32.mrf.mxu0
      %292 = vdwg.mxu0
      %vm293 = vcmask 23552
      %294 = vst.msk [vmem:[%s170] sm:$0xff] %vm293, %v263
      %295 = vst.msk [vmem:[%s170 + $0x8] sm:$0xff] %vm293, %v266
      %296 = vst.msk [vmem:[%s170 + $0x10] sm:$0xff] %vm293, %v271
      %297 = vst.msk [vmem:[%s170 + $0x18] sm:$0xff] %vm293, %v274
      %298 = vst.msk [vmem:[%s170 + $0x20] sm:$0xff] %vm293, %v279
      %299 = vst.msk [vmem:[%s170 + $0x28] sm:$0xff] %vm293, %v282
      %300 = vst.msk [vmem:[%s170 + $0x30] sm:$0xff] %vm293, %v287
      %301 = vst.msk [vmem:[%s170 + $0x38] sm:$0xff] %vm293, %v290
      %p302 = scmp.lt.s32.totalorder %s14, 1
      %s303 = scalar_select %p302, %s14, 1
      %s304 = smul.addr %s303, 8
      %s305 = smul.addr %s304, 8
      %s306 = scalar_lea.vmem %s3, %s305
      // Predicated region
      $region33: #{_lambda_.13} parent=31 // pred_check
        %p307 = pneg %p100
      $region34: #{_lambda_.13} parent=31 // pred_check_branch
        %309 = sbr.rel (%p307) target = $region36
      $region35: #{_lambda_.13} parent=31 // pred_region
        _
      $region36: #{_lambda_.13} parent=31 // pred_fallthru
        _
    $region32: #{_lambda_.13} parent=5 // pred_fallthru
      _
    %p310 = scmp.le.s32.totalorder 2, %s9
    // Predicated region
    $region37: #{_lambda_.13} parent=5 // pred_check
      %p311 = pneg %p310
    $region38: #{_lambda_.13} parent=5 // pred_check_branch
      %313 = sbr.rel (%p311) target = $region40
    $region39: #{_lambda_.13} parent=5 // pred_region
      %s314 = ssub.s32 %s9, 2
      // Predicated region
      $region41: #{_lambda_.13} parent=39 // pred_check
        %p315 = pneg %p106
      $region42: #{_lambda_.13} parent=39 // pred_check_branch
        %317 = sbr.rel (%p315) target = $region44
      $region43: #{_lambda_.13} parent=39 // pred_region
        %p318 = scmp.lt.s32.totalorder %s15, 1
        %s319 = scalar_select %p318, %s15, 1
        %s320 = smul.addr %s319, 8
        %s321 = smul.addr %s320, 8
        %s322 = scalar_lea.vmem %s3, %s321
      $region44: #{_lambda_.13} parent=39 // pred_fallthru
        _
    $region40: #{_lambda_.13} parent=5 // pred_fallthru
      _
  $region6: #{_lambda_.13} parent=0 // loop_footer
    %s13 = sadd.s32 1, %s9
  $region7: #{_lambda_.13} parent=0 // loop_footer_branch
    %8 = sbr.rel target = $region3
  $region8: #{_lambda_.13} parent=0 // loop_exit
    _

</llo_original>
